<compile_context>
chip_gen: v5e
topology: v5e:2x2
jax: 0.10.0
libtpu: 0.0.40
codegen_flags: <defaults>
</compile_context>

<pallas_src>
import functools

import jax
import jax.numpy as jnp
from jax import lax
from jax.experimental import pallas as pl
from jax.experimental.pallas import tpu as pltpu

LANE = 128  # lane-padded channel width used for every activation / weight


# ---------------------------------------------------------------------------
# In-kernel 3x3 "same" conv on a flattened (H*W, 128) activation.
# Spatial shifts = sublane rotations (XLU) + boundary masks -> no relayout
# copies; 9 lane-dense MXU dots accumulated in f32.
# ---------------------------------------------------------------------------
def _conv3x3_taps(h_f32, w9_ref, masks, H, W):
    HW = H * W
    m_top, m_bot, m_left, m_right = masks
    acc = None
    for dy in range(3):
        for dx in range(3):
            s = (dy - 1) * W + (dx - 1)          # source row offset (flattened)
            tap = h_f32 if s == 0 else pltpu.roll(h_f32, (-s) % HW, 0)
            mask = None
            if dy == 0:
                mask = m_top
            elif dy == 2:
                mask = m_bot
            if dx == 0:
                mask = m_left if mask is None else (mask & m_left)
            elif dx == 2:
                mask = m_right if mask is None else (mask & m_right)
            if mask is not None:
                tap = jnp.where(mask, tap, 0.0)
            contrib = jnp.dot(tap.astype(jnp.bfloat16), w9_ref[3 * dy + dx],
                              preferred_element_type=jnp.float32)
            acc = contrib if acc is None else acc + contrib
    return acc


# ---------------------------------------------------------------------------
# Fully fused forward kernel (one grid step per batch element).
# ---------------------------------------------------------------------------
def _fused_kernel(x_ref, w11_ref, w12_ref, w13_ref,
                  w21_ref, w22_ref, w23_ref, wout_ref, o_ref, *, H, W):
    HW = H * W
    idx = lax.broadcasted_iota(jnp.int32, (HW, 1), 0)
    masks = (
        idx >= W,                 # tap reads h-1: invalid for h == 0
        idx < HW - W,             # tap reads h+1: invalid for h == H-1
        (idx % W) != 0,           # tap reads w-1: invalid for w == 0
        (idx % W) != (W - 1),     # tap reads w+1: invalid for w == W-1
    )

    x_bf = x_ref[0]                               # (HW, 128) bf16, lane-padded
    x_f32 = x_bf.astype(jnp.float32)

    def res_block(inp_bf, inp_f32, w1_ref, w9_ref, w3_ref):
        h = jnp.dot(inp_bf, w1_ref[...], preferred_element_type=jnp.float32)
        h = _conv3x3_taps(h, w9_ref, masks, H, W)
        h = jnp.dot(h.astype(jnp.bfloat16), w3_ref[...],
                    preferred_element_type=jnp.float32)
        return jnp.maximum(inp_f32 + h, 0.0)      # fused residual + ReLU (f32)

    t1 = res_block(x_bf, x_f32, w11_ref, w12_ref, w13_ref)
    t2 = res_block(t1.astype(jnp.bfloat16), t1, w21_ref, w22_ref, w23_ref)
    o_ref[0] = jnp.dot(t2.astype(jnp.bfloat16), wout_ref[...],
                       preferred_element_type=jnp.float32)


# ---------------------------------------------------------------------------
# Wrapper: NCHW boundary, lane-padding once on entry, logical slice once on exit.
# ---------------------------------------------------------------------------
def residual_block_layer_forward(prepared, x_nchw, c_out):
    B, Cin, H, W = x_nchw.shape
    HW = H * W
    Cp = LANE
    assert Cin <= Cp and c_out <= Cp and HW % 8 == 0

    x = jnp.transpose(x_nchw, (0, 2, 3, 1)).reshape(B, HW, Cin)
    x = jnp.pad(x.astype(jnp.bfloat16), ((0, 0), (0, 0), (0, Cp - Cin)))

    w_spec = pl.BlockSpec((Cp, Cp), lambda b: (0, 0))
    w9_spec = pl.BlockSpec((9, Cp, Cp), lambda b: (0, 0, 0))

    out = pl.pallas_call(
        functools.partial(_fused_kernel, H=H, W=W),
        out_shape=jax.ShapeDtypeStruct((B, HW, Cp), jnp.float32),
        grid=(B,),
        in_specs=[
            pl.BlockSpec((1, HW, Cp), lambda b: (b, 0, 0)),
            w_spec, w9_spec, w_spec,            # residual block 1
            w_spec, w9_spec, w_spec,            # residual block 2
            w_spec,                             # out conv
        ],
        out_specs=pl.BlockSpec((1, HW, Cp), lambda b: (b, 0, 0)),
        compiler_params=pltpu.CompilerParams(
            dimension_semantics=("parallel",)),
    )(x, prepared["b1_w1"], prepared["b1_w2"], prepared["b1_w3"],
      prepared["b2_w1"], prepared["b2_w2"], prepared["b2_w3"],
      prepared["out_w"])

    out = out[:, :, :c_out].reshape(B, H, W, c_out)
    return jnp.transpose(out, (0, 3, 1, 2))      # NHWC -> NCHW


# ---------------------------------------------------------------------------
# One-time weight preparation (bf16 cast + lane-128 pad + 3x3 tap reshape).
# Done OUTSIDE the jitted forward.
# ---------------------------------------------------------------------------
def prepare_params(params):
    Cp = LANE

    def pad1x1(w):
        cin, cout = w.shape
        return jnp.pad(w.astype(jnp.bfloat16), ((0, Cp - cin), (0, Cp - cout)))

    def pad3x3(w):
        _, _, cin, cout = w.shape
        w = jnp.pad(w.astype(jnp.bfloat16),
                    ((0, 0), (0, 0), (0, Cp - cin), (0, Cp - cout)))
        return w.reshape(9, Cp, Cp)

    return {
        "b1_w1": pad1x1(params["b1_w1"]), "b1_w2": pad3x3(params["b1_w2"]),
        "b1_w3": pad1x1(params["b1_w3"]),
        "b2_w1": pad1x1(params["b2_w1"]), "b2_w2": pad3x3(params["b2_w2"]),
        "b2_w3": pad1x1(params["b2_w3"]),
        "out_w": pad1x1(params["out_w"]),
    }


# ---------------------------------------------------------------------------
# Parameters + pure-JAX reference (lax.conv) for the correctness check.
# ---------------------------------------------------------------------------
def init_params(key, in_channels, out_channels):
    c4 = in_channels // 4
    ks = jax.random.split(key, 7)

    def w1x1(k, cin, cout):
        return jax.random.normal(k, (cin, cout), jnp.float32) * (2.0 / cin) ** 0.5

    def w3x3(k, cin, cout):
        return jax.random.normal(k, (3, 3, cin, cout), jnp.float32) * (2.0 / (9 * cin)) ** 0.5

    return {
        "b1_w1": w1x1(ks[0], in_channels, c4),
        "b1_w2": w3x3(ks[1], c4, c4),
        "b1_w3": w1x1(ks[2], c4, in_channels),
        "b2_w1": w1x1(ks[3], in_channels, c4),
        "b2_w2": w3x3(ks[4], c4, c4),
        "b2_w3": w1x1(ks[5], c4, in_channels),
        "out_w": w1x1(ks[6], in_channels, out_channels),
    }


def reference_forward(params, x_nchw):
    q = lambda a: a.astype(jnp.bfloat16).astype(jnp.float32)   # same bf16 quantization
    dn = ("NHWC", "HWIO", "NHWC")
    c1 = lambda xx, w: lax.conv_general_dilated(
        xx, q(w).reshape(1, 1, *w.shape), (1, 1), "VALID", dimension_numbers=dn)
    c3 = lambda xx, w: lax.conv_general_dilated(
        xx, q(w), (1, 1), "SAME", dimension_numbers=dn)

    x = q(jnp.transpose(x_nchw, (0, 2, 3, 1)))
    y = c1(x, params["b1_w1"]); y = c3(y, params["b1_w2"]); y = c1(y, params["b1_w3"])
    t = jnp.maximum(x + y, 0.0)
    y = c1(t, params["b2_w1"]); y = c3(y, params["b2_w2"]); y = c1(y, params["b2_w3"])
    t = jnp.maximum(t + y, 0.0)
    o = c1(t, params["out_w"])
    return jnp.transpose(o, (0, 3, 1, 2))


if __name__ == "__main__":
    key = jax.random.PRNGKey(0)
    kx, kp = jax.random.split(key)
    B, C_IN, C_OUT, H, W = 2, 64, 32, 16, 16

    params = init_params(kp, C_IN, C_OUT)
    x = jax.random.normal(kx, (B, C_IN, H, W), jnp.float32)    # NCHW like PyTorch

    prepared = prepare_params(params)
    fwd = jax.jit(functools.partial(residual_block_layer_forward, prepared,
                                    c_out=C_OUT))
    out = fwd(x)
    jax.block_until_ready(out)

    assert out.shape == (B, C_OUT, H, W)
    assert bool(jnp.all(jnp.isfinite(out)))

    ref = reference_forward(params, x)
    err = float(jnp.max(jnp.abs(out - ref)) / (jnp.max(jnp.abs(ref)) + 1e-6))
    assert err < 0.05, f"mismatch vs reference: relative-to-peak error {err}"

    print("KERNEL_OK")
</pallas_src>

<mosaic_0001>
module attributes {stable_mosaic.version = 11 : i64} {
  func.func @_fused_kernel(%arg0: i32, %arg1: memref<1x256x128xbf16, #tpu.memory_space<vmem>>, %arg2: memref<128x128xbf16, #tpu.memory_space<vmem>>, %arg3: memref<9x128x128xbf16, #tpu.memory_space<vmem>>, %arg4: memref<128x128xbf16, #tpu.memory_space<vmem>>, %arg5: memref<128x128xbf16, #tpu.memory_space<vmem>>, %arg6: memref<9x128x128xbf16, #tpu.memory_space<vmem>>, %arg7: memref<128x128xbf16, #tpu.memory_space<vmem>>, %arg8: memref<128x128xbf16, #tpu.memory_space<vmem>>, %arg9: memref<1x256x128xf32, #tpu.memory_space<vmem>>) attributes {dimension_semantics = [#tpu.dimension_semantics<parallel>], iteration_bounds = array<i64: 2>, scalar_prefetch = 0 : i64, scratch_operands = 0 : i64, tpu.core_type = #tpu.core_type<tc>, window_params = [{transform_indices = @transform_0, window_bounds = array<i64: 1, 256, 128>}, {pipeline_mode = #tpu.pipeline_mode<synchronous>, transform_indices = @transform_1, window_bounds = array<i64: 128, 128>}, {pipeline_mode = #tpu.pipeline_mode<synchronous>, transform_indices = @transform_2, window_bounds = array<i64: 9, 128, 128>}, {pipeline_mode = #tpu.pipeline_mode<synchronous>, transform_indices = @transform_3, window_bounds = array<i64: 128, 128>}, {pipeline_mode = #tpu.pipeline_mode<synchronous>, transform_indices = @transform_4, window_bounds = array<i64: 128, 128>}, {pipeline_mode = #tpu.pipeline_mode<synchronous>, transform_indices = @transform_5, window_bounds = array<i64: 9, 128, 128>}, {pipeline_mode = #tpu.pipeline_mode<synchronous>, transform_indices = @transform_6, window_bounds = array<i64: 128, 128>}, {pipeline_mode = #tpu.pipeline_mode<synchronous>, transform_indices = @transform_7, window_bounds = array<i64: 128, 128>}, {transform_indices = @transform_8, window_bounds = array<i64: 1, 256, 128>}]} {
    %0 = tpu.iota {dimensions = array<i32: 0>} : vector<256x1xi32>
    %c16_i32 = arith.constant 16 : i32
    %1 = vector.broadcast %c16_i32 : i32 to vector<256x1xi32>
    %2 = arith.cmpi sge, %0, %1 : vector<256x1xi32>
    %c240_i32 = arith.constant 240 : i32
    %3 = vector.broadcast %c240_i32 : i32 to vector<256x1xi32>
    %4 = arith.cmpi slt, %0, %3 : vector<256x1xi32>
    %c16_i32_0 = arith.constant 16 : i32
    %c0_i32 = arith.constant 0 : i32
    %5 = arith.cmpi eq, %c16_i32_0, %c0_i32 : i32
    %c1_i32 = arith.constant 1 : i32
    %6 = arith.select %5, %c1_i32, %c16_i32_0 : i32
    %7 = vector.broadcast %6 : i32 to vector<256x1xi32>
    %8 = arith.remsi %0, %7 : vector<256x1xi32>
    %c0_i32_1 = arith.constant 0 : i32
    %9 = vector.broadcast %c0_i32_1 : i32 to vector<256x1xi32>
    %10 = arith.cmpi ne, %8, %9 : vector<256x1xi32>
    %c0_i32_2 = arith.constant 0 : i32
    %11 = vector.broadcast %c0_i32_2 : i32 to vector<256x1xi32>
    %12 = arith.cmpi slt, %8, %11 : vector<256x1xi32>
    %c0_i32_3 = arith.constant 0 : i32
    %13 = arith.cmpi slt, %6, %c0_i32_3 : i32
    %14 = vector.broadcast %13 : i1 to vector<256x1xi1>
    %15 = vector.broadcast %14 : vector<256x1xi1> to vector<256x1xi1>
    %16 = arith.xori %12, %15 : vector<256x1xi1>
    %17 = arith.andi %16, %10 : vector<256x1xi1>
    %18 = vector.broadcast %6 : i32 to vector<256x1xi32>
    %19 = arith.addi %8, %18 : vector<256x1xi32>
    %20 = arith.select %17, %19, %8 : vector<256x1xi1>, vector<256x1xi32>
    %c0_i32_4 = arith.constant 0 : i32
    %21 = vector.broadcast %c0_i32_4 : i32 to vector<256x1xi32>
    %22 = arith.cmpi ne, %20, %21 : vector<256x1xi32>
    %c16_i32_5 = arith.constant 16 : i32
    %c0_i32_6 = arith.constant 0 : i32
    %23 = arith.cmpi eq, %c16_i32_5, %c0_i32_6 : i32
    %c1_i32_7 = arith.constant 1 : i32
    %24 = arith.select %23, %c1_i32_7, %c16_i32_5 : i32
    %25 = vector.broadcast %24 : i32 to vector<256x1xi32>
    %26 = arith.remsi %0, %25 : vector<256x1xi32>
    %c0_i32_8 = arith.constant 0 : i32
    %27 = vector.broadcast %c0_i32_8 : i32 to vector<256x1xi32>
    %28 = arith.cmpi ne, %26, %27 : vector<256x1xi32>
    %c0_i32_9 = arith.constant 0 : i32
    %29 = vector.broadcast %c0_i32_9 : i32 to vector<256x1xi32>
    %30 = arith.cmpi slt, %26, %29 : vector<256x1xi32>
    %c0_i32_10 = arith.constant 0 : i32
    %31 = arith.cmpi slt, %24, %c0_i32_10 : i32
    %32 = vector.broadcast %31 : i1 to vector<256x1xi1>
    %33 = vector.broadcast %32 : vector<256x1xi1> to vector<256x1xi1>
    %34 = arith.xori %30, %33 : vector<256x1xi1>
    %35 = arith.andi %34, %28 : vector<256x1xi1>
    %36 = vector.broadcast %24 : i32 to vector<256x1xi32>
    %37 = arith.addi %26, %36 : vector<256x1xi32>
    %38 = arith.select %35, %37, %26 : vector<256x1xi1>, vector<256x1xi32>
    %c15_i32 = arith.constant 15 : i32
    %39 = vector.broadcast %c15_i32 : i32 to vector<256x1xi32>
    %40 = arith.cmpi ne, %38, %39 : vector<256x1xi32>
    %c0 = arith.constant 0 : index
    %c0_11 = arith.constant 0 : index
    %c0_12 = arith.constant 0 : index
    %41 = vector.load %arg1[%c0, %c0_11, %c0_12] : memref<1x256x128xbf16, #tpu.memory_space<vmem>>, vector<1x256x128xbf16>
    %42 = vector.shape_cast %41 : vector<1x256x128xbf16> to vector<256x128xbf16>
    %43 = arith.extf %42 : vector<256x128xbf16> to vector<256x128xf32>
    %c0_13 = arith.constant 0 : index
    %c0_14 = arith.constant 0 : index
    %44 = vector.load %arg2[%c0_13, %c0_14] : memref<128x128xbf16, #tpu.memory_space<vmem>>, vector<128x128xbf16>
    %cst = arith.constant dense<0.000000e+00> : vector<256x128xf32>
    %45 = tpu.matmul %42, %44, %cst {dimension_numbers = #tpu.dot_dimension_numbers<[1], [0], [0], [1], [0, 0, 1, 1], [], []>} : vector<256x128xbf16>, vector<128x128xbf16>, vector<256x128xf32> -> vector<256x128xf32>
    %c17_i32 = arith.constant 17 : i32
    %46 = tpu.dynamic_rotate %45 by %c17_i32 dim 0 : vector<256x128xf32>, i32 -> vector<256x128xf32>
    %47 = arith.andi %2, %22 : vector<256x1xi1>
    %cst_15 = arith.constant 0.000000e+00 : f32
    %48 = vector.shape_cast %47 : vector<256x1xi1> to vector<256x1xi1>
    %49 = vector.broadcast %48 : vector<256x1xi1> to vector<256x128xi1>
    %50 = vector.broadcast %cst_15 : f32 to vector<256x128xf32>
    %51 = arith.select %49, %46, %50 : vector<256x128xi1>, vector<256x128xf32>
    %52 = arith.truncf %51 : vector<256x128xf32> to vector<256x128xbf16>
    %c0_16 = arith.constant 0 : index
    %c0_17 = arith.constant 0 : index
    %c0_18 = arith.constant 0 : index
    %53 = vector.load %arg3[%c0_16, %c0_17, %c0_18] : memref<9x128x128xbf16, #tpu.memory_space<vmem>>, vector<1x128x128xbf16>
    %54 = vector.shape_cast %53 : vector<1x128x128xbf16> to vector<128x128xbf16>
    %cst_19 = arith.constant dense<0.000000e+00> : vector<256x128xf32>
    %55 = tpu.matmul %52, %54, %cst_19 {dimension_numbers = #tpu.dot_dimension_numbers<[1], [0], [0], [1], [0, 0, 1, 1], [], []>} : vector<256x128xbf16>, vector<128x128xbf16>, vector<256x128xf32> -> vector<256x128xf32>
    %c16_i32_20 = arith.constant 16 : i32
    %56 = tpu.dynamic_rotate %45 by %c16_i32_20 dim 0 : vector<256x128xf32>, i32 -> vector<256x128xf32>
    %cst_21 = arith.constant 0.000000e+00 : f32
    %57 = vector.shape_cast %2 : vector<256x1xi1> to vector<256x1xi1>
    %58 = vector.broadcast %57 : vector<256x1xi1> to vector<256x128xi1>
    %59 = vector.broadcast %cst_21 : f32 to vector<256x128xf32>
    %60 = arith.select %58, %56, %59 : vector<256x128xi1>, vector<256x128xf32>
    %61 = arith.truncf %60 : vector<256x128xf32> to vector<256x128xbf16>
    %c1 = arith.constant 1 : index
    %c0_22 = arith.constant 0 : index
    %c0_23 = arith.constant 0 : index
    %62 = vector.load %arg3[%c1, %c0_22, %c0_23] : memref<9x128x128xbf16, #tpu.memory_space<vmem>>, vector<1x128x128xbf16>
    %63 = vector.shape_cast %62 : vector<1x128x128xbf16> to vector<128x128xbf16>
    %cst_24 = arith.constant dense<0.000000e+00> : vector<256x128xf32>
    %64 = tpu.matmul %61, %63, %cst_24 {dimension_numbers = #tpu.dot_dimension_numbers<[1], [0], [0], [1], [0, 0, 1, 1], [], []>} : vector<256x128xbf16>, vector<128x128xbf16>, vector<256x128xf32> -> vector<256x128xf32>
    %65 = arith.addf %55, %64 : vector<256x128xf32>
    %c15_i32_25 = arith.constant 15 : i32
    %66 = tpu.dynamic_rotate %45 by %c15_i32_25 dim 0 : vector<256x128xf32>, i32 -> vector<256x128xf32>
    %67 = arith.andi %2, %40 : vector<256x1xi1>
    %cst_26 = arith.constant 0.000000e+00 : f32
    %68 = vector.shape_cast %67 : vector<256x1xi1> to vector<256x1xi1>
    %69 = vector.broadcast %68 : vector<256x1xi1> to vector<256x128xi1>
    %70 = vector.broadcast %cst_26 : f32 to vector<256x128xf32>
    %71 = arith.select %69, %66, %70 : vector<256x128xi1>, vector<256x128xf32>
    %72 = arith.truncf %71 : vector<256x128xf32> to vector<256x128xbf16>
    %c2 = arith.constant 2 : index
    %c0_27 = arith.constant 0 : index
    %c0_28 = arith.constant 0 : index
    %73 = vector.load %arg3[%c2, %c0_27, %c0_28] : memref<9x128x128xbf16, #tpu.memory_space<vmem>>, vector<1x128x128xbf16>
    %74 = vector.shape_cast %73 : vector<1x128x128xbf16> to vector<128x128xbf16>
    %cst_29 = arith.constant dense<0.000000e+00> : vector<256x128xf32>
    %75 = tpu.matmul %72, %74, %cst_29 {dimension_numbers = #tpu.dot_dimension_numbers<[1], [0], [0], [1], [0, 0, 1, 1], [], []>} : vector<256x128xbf16>, vector<128x128xbf16>, vector<256x128xf32> -> vector<256x128xf32>
    %76 = arith.addf %65, %75 : vector<256x128xf32>
    %c1_i32_30 = arith.constant 1 : i32
    %77 = tpu.dynamic_rotate %45 by %c1_i32_30 dim 0 : vector<256x128xf32>, i32 -> vector<256x128xf32>
    %cst_31 = arith.constant 0.000000e+00 : f32
    %78 = vector.shape_cast %22 : vector<256x1xi1> to vector<256x1xi1>
    %79 = vector.broadcast %78 : vector<256x1xi1> to vector<256x128xi1>
    %80 = vector.broadcast %cst_31 : f32 to vector<256x128xf32>
    %81 = arith.select %79, %77, %80 : vector<256x128xi1>, vector<256x128xf32>
    %82 = arith.truncf %81 : vector<256x128xf32> to vector<256x128xbf16>
    %c3 = arith.constant 3 : index
    %c0_32 = arith.constant 0 : index
    %c0_33 = arith.constant 0 : index
    %83 = vector.load %arg3[%c3, %c0_32, %c0_33] : memref<9x128x128xbf16, #tpu.memory_space<vmem>>, vector<1x128x128xbf16>
    %84 = vector.shape_cast %83 : vector<1x128x128xbf16> to vector<128x128xbf16>
    %cst_34 = arith.constant dense<0.000000e+00> : vector<256x128xf32>
    %85 = tpu.matmul %82, %84, %cst_34 {dimension_numbers = #tpu.dot_dimension_numbers<[1], [0], [0], [1], [0, 0, 1, 1], [], []>} : vector<256x128xbf16>, vector<128x128xbf16>, vector<256x128xf32> -> vector<256x128xf32>
    %86 = arith.addf %76, %85 : vector<256x128xf32>
    %87 = arith.truncf %45 : vector<256x128xf32> to vector<256x128xbf16>
    %c4 = arith.constant 4 : index
    %c0_35 = arith.constant 0 : index
    %c0_36 = arith.constant 0 : index
    %88 = vector.load %arg3[%c4, %c0_35, %c0_36] : memref<9x128x128xbf16, #tpu.memory_space<vmem>>, vector<1x128x128xbf16>
    %89 = vector.shape_cast %88 : vector<1x128x128xbf16> to vector<128x128xbf16>
    %cst_37 = arith.constant dense<0.000000e+00> : vector<256x128xf32>
    %90 = tpu.matmul %87, %89, %cst_37 {dimension_numbers = #tpu.dot_dimension_numbers<[1], [0], [0], [1], [0, 0, 1, 1], [], []>} : vector<256x128xbf16>, vector<128x128xbf16>, vector<256x128xf32> -> vector<256x128xf32>
    %91 = arith.addf %86, %90 : vector<256x128xf32>
    %c255_i32 = arith.constant 255 : i32
    %92 = tpu.dynamic_rotate %45 by %c255_i32 dim 0 : vector<256x128xf32>, i32 -> vector<256x128xf32>
    %cst_38 = arith.constant 0.000000e+00 : f32
    %93 = vector.shape_cast %40 : vector<256x1xi1> to vector<256x1xi1>
    %94 = vector.broadcast %93 : vector<256x1xi1> to vector<256x128xi1>
    %95 = vector.broadcast %cst_38 : f32 to vector<256x128xf32>
    %96 = arith.select %94, %92, %95 : vector<256x128xi1>, vector<256x128xf32>
    %97 = arith.truncf %96 : vector<256x128xf32> to vector<256x128xbf16>
    %c5 = arith.constant 5 : index
    %c0_39 = arith.constant 0 : index
    %c0_40 = arith.constant 0 : index
    %98 = vector.load %arg3[%c5, %c0_39, %c0_40] : memref<9x128x128xbf16, #tpu.memory_space<vmem>>, vector<1x128x128xbf16>
    %99 = vector.shape_cast %98 : vector<1x128x128xbf16> to vector<128x128xbf16>
    %cst_41 = arith.constant dense<0.000000e+00> : vector<256x128xf32>
    %100 = tpu.matmul %97, %99, %cst_41 {dimension_numbers = #tpu.dot_dimension_numbers<[1], [0], [0], [1], [0, 0, 1, 1], [], []>} : vector<256x128xbf16>, vector<128x128xbf16>, vector<256x128xf32> -> vector<256x128xf32>
    %101 = arith.addf %91, %100 : vector<256x128xf32>
    %c241_i32 = arith.constant 241 : i32
    %102 = tpu.dynamic_rotate %45 by %c241_i32 dim 0 : vector<256x128xf32>, i32 -> vector<256x128xf32>
    %103 = arith.andi %4, %22 : vector<256x1xi1>
    %cst_42 = arith.constant 0.000000e+00 : f32
    %104 = vector.shape_cast %103 : vector<256x1xi1> to vector<256x1xi1>
    %105 = vector.broadcast %104 : vector<256x1xi1> to vector<256x128xi1>
    %106 = vector.broadcast %cst_42 : f32 to vector<256x128xf32>
    %107 = arith.select %105, %102, %106 : vector<256x128xi1>, vector<256x128xf32>
    %108 = arith.truncf %107 : vector<256x128xf32> to vector<256x128xbf16>
    %c6 = arith.constant 6 : index
    %c0_43 = arith.constant 0 : index
    %c0_44 = arith.constant 0 : index
    %109 = vector.load %arg3[%c6, %c0_43, %c0_44] : memref<9x128x128xbf16, #tpu.memory_space<vmem>>, vector<1x128x128xbf16>
    %110 = vector.shape_cast %109 : vector<1x128x128xbf16> to vector<128x128xbf16>
    %cst_45 = arith.constant dense<0.000000e+00> : vector<256x128xf32>
    %111 = tpu.matmul %108, %110, %cst_45 {dimension_numbers = #tpu.dot_dimension_numbers<[1], [0], [0], [1], [0, 0, 1, 1], [], []>} : vector<256x128xbf16>, vector<128x128xbf16>, vector<256x128xf32> -> vector<256x128xf32>
    %112 = arith.addf %101, %111 : vector<256x128xf32>
    %c240_i32_46 = arith.constant 240 : i32
    %113 = tpu.dynamic_rotate %45 by %c240_i32_46 dim 0 : vector<256x128xf32>, i32 -> vector<256x128xf32>
    %cst_47 = arith.constant 0.000000e+00 : f32
    %114 = vector.shape_cast %4 : vector<256x1xi1> to vector<256x1xi1>
    %115 = vector.broadcast %114 : vector<256x1xi1> to vector<256x128xi1>
    %116 = vector.broadcast %cst_47 : f32 to vector<256x128xf32>
    %117 = arith.select %115, %113, %116 : vector<256x128xi1>, vector<256x128xf32>
    %118 = arith.truncf %117 : vector<256x128xf32> to vector<256x128xbf16>
    %c7 = arith.constant 7 : index
    %c0_48 = arith.constant 0 : index
    %c0_49 = arith.constant 0 : index
    %119 = vector.load %arg3[%c7, %c0_48, %c0_49] : memref<9x128x128xbf16, #tpu.memory_space<vmem>>, vector<1x128x128xbf16>
    %120 = vector.shape_cast %119 : vector<1x128x128xbf16> to vector<128x128xbf16>
    %cst_50 = arith.constant dense<0.000000e+00> : vector<256x128xf32>
    %121 = tpu.matmul %118, %120, %cst_50 {dimension_numbers = #tpu.dot_dimension_numbers<[1], [0], [0], [1], [0, 0, 1, 1], [], []>} : vector<256x128xbf16>, vector<128x128xbf16>, vector<256x128xf32> -> vector<256x128xf32>
    %122 = arith.addf %112, %121 : vector<256x128xf32>
    %c239_i32 = arith.constant 239 : i32
    %123 = tpu.dynamic_rotate %45 by %c239_i32 dim 0 : vector<256x128xf32>, i32 -> vector<256x128xf32>
    %124 = arith.andi %4, %40 : vector<256x1xi1>
    %cst_51 = arith.constant 0.000000e+00 : f32
    %125 = vector.shape_cast %124 : vector<256x1xi1> to vector<256x1xi1>
    %126 = vector.broadcast %125 : vector<256x1xi1> to vector<256x128xi1>
    %127 = vector.broadcast %cst_51 : f32 to vector<256x128xf32>
    %128 = arith.select %126, %123, %127 : vector<256x128xi1>, vector<256x128xf32>
    %129 = arith.truncf %128 : vector<256x128xf32> to vector<256x128xbf16>
    %c8 = arith.constant 8 : index
    %c0_52 = arith.constant 0 : index
    %c0_53 = arith.constant 0 : index
    %130 = vector.load %arg3[%c8, %c0_52, %c0_53] : memref<9x128x128xbf16, #tpu.memory_space<vmem>>, vector<1x128x128xbf16>
    %131 = vector.shape_cast %130 : vector<1x128x128xbf16> to vector<128x128xbf16>
    %cst_54 = arith.constant dense<0.000000e+00> : vector<256x128xf32>
    %132 = tpu.matmul %129, %131, %cst_54 {dimension_numbers = #tpu.dot_dimension_numbers<[1], [0], [0], [1], [0, 0, 1, 1], [], []>} : vector<256x128xbf16>, vector<128x128xbf16>, vector<256x128xf32> -> vector<256x128xf32>
    %133 = arith.addf %122, %132 : vector<256x128xf32>
    %134 = arith.truncf %133 : vector<256x128xf32> to vector<256x128xbf16>
    %c0_55 = arith.constant 0 : index
    %c0_56 = arith.constant 0 : index
    %135 = vector.load %arg4[%c0_55, %c0_56] : memref<128x128xbf16, #tpu.memory_space<vmem>>, vector<128x128xbf16>
    %cst_57 = arith.constant dense<0.000000e+00> : vector<256x128xf32>
    %136 = tpu.matmul %134, %135, %cst_57 {dimension_numbers = #tpu.dot_dimension_numbers<[1], [0], [0], [1], [0, 0, 1, 1], [], []>} : vector<256x128xbf16>, vector<128x128xbf16>, vector<256x128xf32> -> vector<256x128xf32>
    %137 = arith.addf %43, %136 : vector<256x128xf32>
    %cst_58 = arith.constant 0.000000e+00 : f32
    %138 = vector.broadcast %cst_58 : f32 to vector<256x128xf32>
    %139 = arith.maximumf %137, %138 : vector<256x128xf32>
    %140 = arith.truncf %139 : vector<256x128xf32> to vector<256x128xbf16>
    %c0_59 = arith.constant 0 : index
    %c0_60 = arith.constant 0 : index
    %141 = vector.load %arg5[%c0_59, %c0_60] : memref<128x128xbf16, #tpu.memory_space<vmem>>, vector<128x128xbf16>
    %cst_61 = arith.constant dense<0.000000e+00> : vector<256x128xf32>
    %142 = tpu.matmul %140, %141, %cst_61 {dimension_numbers = #tpu.dot_dimension_numbers<[1], [0], [0], [1], [0, 0, 1, 1], [], []>} : vector<256x128xbf16>, vector<128x128xbf16>, vector<256x128xf32> -> vector<256x128xf32>
    %c17_i32_62 = arith.constant 17 : i32
    %143 = tpu.dynamic_rotate %142 by %c17_i32_62 dim 0 : vector<256x128xf32>, i32 -> vector<256x128xf32>
    %144 = arith.andi %2, %22 : vector<256x1xi1>
    %cst_63 = arith.constant 0.000000e+00 : f32
    %145 = vector.shape_cast %144 : vector<256x1xi1> to vector<256x1xi1>
    %146 = vector.broadcast %145 : vector<256x1xi1> to vector<256x128xi1>
    %147 = vector.broadcast %cst_63 : f32 to vector<256x128xf32>
    %148 = arith.select %146, %143, %147 : vector<256x128xi1>, vector<256x128xf32>
    %149 = arith.truncf %148 : vector<256x128xf32> to vector<256x128xbf16>
    %c0_64 = arith.constant 0 : index
    %c0_65 = arith.constant 0 : index
    %c0_66 = arith.constant 0 : index
    %150 = vector.load %arg6[%c0_64, %c0_65, %c0_66] : memref<9x128x128xbf16, #tpu.memory_space<vmem>>, vector<1x128x128xbf16>
    %151 = vector.shape_cast %150 : vector<1x128x128xbf16> to vector<128x128xbf16>
    %cst_67 = arith.constant dense<0.000000e+00> : vector<256x128xf32>
    %152 = tpu.matmul %149, %151, %cst_67 {dimension_numbers = #tpu.dot_dimension_numbers<[1], [0], [0], [1], [0, 0, 1, 1], [], []>} : vector<256x128xbf16>, vector<128x128xbf16>, vector<256x128xf32> -> vector<256x128xf32>
    %c16_i32_68 = arith.constant 16 : i32
    %153 = tpu.dynamic_rotate %142 by %c16_i32_68 dim 0 : vector<256x128xf32>, i32 -> vector<256x128xf32>
    %cst_69 = arith.constant 0.000000e+00 : f32
    %154 = vector.shape_cast %2 : vector<256x1xi1> to vector<256x1xi1>
    %155 = vector.broadcast %154 : vector<256x1xi1> to vector<256x128xi1>
    %156 = vector.broadcast %cst_69 : f32 to vector<256x128xf32>
    %157 = arith.select %155, %153, %156 : vector<256x128xi1>, vector<256x128xf32>
    %158 = arith.truncf %157 : vector<256x128xf32> to vector<256x128xbf16>
    %c1_70 = arith.constant 1 : index
    %c0_71 = arith.constant 0 : index
    %c0_72 = arith.constant 0 : index
    %159 = vector.load %arg6[%c1_70, %c0_71, %c0_72] : memref<9x128x128xbf16, #tpu.memory_space<vmem>>, vector<1x128x128xbf16>
    %160 = vector.shape_cast %159 : vector<1x128x128xbf16> to vector<128x128xbf16>
    %cst_73 = arith.constant dense<0.000000e+00> : vector<256x128xf32>
    %161 = tpu.matmul %158, %160, %cst_73 {dimension_numbers = #tpu.dot_dimension_numbers<[1], [0], [0], [1], [0, 0, 1, 1], [], []>} : vector<256x128xbf16>, vector<128x128xbf16>, vector<256x128xf32> -> vector<256x128xf32>
    %162 = arith.addf %152, %161 : vector<256x128xf32>
    %c15_i32_74 = arith.constant 15 : i32
    %163 = tpu.dynamic_rotate %142 by %c15_i32_74 dim 0 : vector<256x128xf32>, i32 -> vector<256x128xf32>
    %164 = arith.andi %2, %40 : vector<256x1xi1>
    %cst_75 = arith.constant 0.000000e+00 : f32
    %165 = vector.shape_cast %164 : vector<256x1xi1> to vector<256x1xi1>
    %166 = vector.broadcast %165 : vector<256x1xi1> to vector<256x128xi1>
    %167 = vector.broadcast %cst_75 : f32 to vector<256x128xf32>
    %168 = arith.select %166, %163, %167 : vector<256x128xi1>, vector<256x128xf32>
    %169 = arith.truncf %168 : vector<256x128xf32> to vector<256x128xbf16>
    %c2_76 = arith.constant 2 : index
    %c0_77 = arith.constant 0 : index
    %c0_78 = arith.constant 0 : index
    %170 = vector.load %arg6[%c2_76, %c0_77, %c0_78] : memref<9x128x128xbf16, #tpu.memory_space<vmem>>, vector<1x128x128xbf16>
    %171 = vector.shape_cast %170 : vector<1x128x128xbf16> to vector<128x128xbf16>
    %cst_79 = arith.constant dense<0.000000e+00> : vector<256x128xf32>
    %172 = tpu.matmul %169, %171, %cst_79 {dimension_numbers = #tpu.dot_dimension_numbers<[1], [0], [0], [1], [0, 0, 1, 1], [], []>} : vector<256x128xbf16>, vector<128x128xbf16>, vector<256x128xf32> -> vector<256x128xf32>
    %173 = arith.addf %162, %172 : vector<256x128xf32>
    %c1_i32_80 = arith.constant 1 : i32
    %174 = tpu.dynamic_rotate %142 by %c1_i32_80 dim 0 : vector<256x128xf32>, i32 -> vector<256x128xf32>
    %cst_81 = arith.constant 0.000000e+00 : f32
    %175 = vector.shape_cast %22 : vector<256x1xi1> to vector<256x1xi1>
    %176 = vector.broadcast %175 : vector<256x1xi1> to vector<256x128xi1>
    %177 = vector.broadcast %cst_81 : f32 to vector<256x128xf32>
    %178 = arith.select %176, %174, %177 : vector<256x128xi1>, vector<256x128xf32>
    %179 = arith.truncf %178 : vector<256x128xf32> to vector<256x128xbf16>
    %c3_82 = arith.constant 3 : index
    %c0_83 = arith.constant 0 : index
    %c0_84 = arith.constant 0 : index
    %180 = vector.load %arg6[%c3_82, %c0_83, %c0_84] : memref<9x128x128xbf16, #tpu.memory_space<vmem>>, vector<1x128x128xbf16>
    %181 = vector.shape_cast %180 : vector<1x128x128xbf16> to vector<128x128xbf16>
    %cst_85 = arith.constant dense<0.000000e+00> : vector<256x128xf32>
    %182 = tpu.matmul %179, %181, %cst_85 {dimension_numbers = #tpu.dot_dimension_numbers<[1], [0], [0], [1], [0, 0, 1, 1], [], []>} : vector<256x128xbf16>, vector<128x128xbf16>, vector<256x128xf32> -> vector<256x128xf32>
    %183 = arith.addf %173, %182 : vector<256x128xf32>
    %184 = arith.truncf %142 : vector<256x128xf32> to vector<256x128xbf16>
    %c4_86 = arith.constant 4 : index
    %c0_87 = arith.constant 0 : index
    %c0_88 = arith.constant 0 : index
    %185 = vector.load %arg6[%c4_86, %c0_87, %c0_88] : memref<9x128x128xbf16, #tpu.memory_space<vmem>>, vector<1x128x128xbf16>
    %186 = vector.shape_cast %185 : vector<1x128x128xbf16> to vector<128x128xbf16>
    %cst_89 = arith.constant dense<0.000000e+00> : vector<256x128xf32>
    %187 = tpu.matmul %184, %186, %cst_89 {dimension_numbers = #tpu.dot_dimension_numbers<[1], [0], [0], [1], [0, 0, 1, 1], [], []>} : vector<256x128xbf16>, vector<128x128xbf16>, vector<256x128xf32> -> vector<256x128xf32>
    %188 = arith.addf %183, %187 : vector<256x128xf32>
    %c255_i32_90 = arith.constant 255 : i32
    %189 = tpu.dynamic_rotate %142 by %c255_i32_90 dim 0 : vector<256x128xf32>, i32 -> vector<256x128xf32>
    %cst_91 = arith.constant 0.000000e+00 : f32
    %190 = vector.shape_cast %40 : vector<256x1xi1> to vector<256x1xi1>
    %191 = vector.broadcast %190 : vector<256x1xi1> to vector<256x128xi1>
    %192 = vector.broadcast %cst_91 : f32 to vector<256x128xf32>
    %193 = arith.select %191, %189, %192 : vector<256x128xi1>, vector<256x128xf32>
    %194 = arith.truncf %193 : vector<256x128xf32> to vector<256x128xbf16>
    %c5_92 = arith.constant 5 : index
    %c0_93 = arith.constant 0 : index
    %c0_94 = arith.constant 0 : index
    %195 = vector.load %arg6[%c5_92, %c0_93, %c0_94] : memref<9x128x128xbf16, #tpu.memory_space<vmem>>, vector<1x128x128xbf16>
    %196 = vector.shape_cast %195 : vector<1x128x128xbf16> to vector<128x128xbf16>
    %cst_95 = arith.constant dense<0.000000e+00> : vector<256x128xf32>
    %197 = tpu.matmul %194, %196, %cst_95 {dimension_numbers = #tpu.dot_dimension_numbers<[1], [0], [0], [1], [0, 0, 1, 1], [], []>} : vector<256x128xbf16>, vector<128x128xbf16>, vector<256x128xf32> -> vector<256x128xf32>
    %198 = arith.addf %188, %197 : vector<256x128xf32>
    %c241_i32_96 = arith.constant 241 : i32
    %199 = tpu.dynamic_rotate %142 by %c241_i32_96 dim 0 : vector<256x128xf32>, i32 -> vector<256x128xf32>
    %200 = arith.andi %4, %22 : vector<256x1xi1>
    %cst_97 = arith.constant 0.000000e+00 : f32
    %201 = vector.shape_cast %200 : vector<256x1xi1> to vector<256x1xi1>
    %202 = vector.broadcast %201 : vector<256x1xi1> to vector<256x128xi1>
    %203 = vector.broadcast %cst_97 : f32 to vector<256x128xf32>
    %204 = arith.select %202, %199, %203 : vector<256x128xi1>, vector<256x128xf32>
    %205 = arith.truncf %204 : vector<256x128xf32> to vector<256x128xbf16>
    %c6_98 = arith.constant 6 : index
    %c0_99 = arith.constant 0 : index
    %c0_100 = arith.constant 0 : index
    %206 = vector.load %arg6[%c6_98, %c0_99, %c0_100] : memref<9x128x128xbf16, #tpu.memory_space<vmem>>, vector<1x128x128xbf16>
    %207 = vector.shape_cast %206 : vector<1x128x128xbf16> to vector<128x128xbf16>
    %cst_101 = arith.constant dense<0.000000e+00> : vector<256x128xf32>
    %208 = tpu.matmul %205, %207, %cst_101 {dimension_numbers = #tpu.dot_dimension_numbers<[1], [0], [0], [1], [0, 0, 1, 1], [], []>} : vector<256x128xbf16>, vector<128x128xbf16>, vector<256x128xf32> -> vector<256x128xf32>
    %209 = arith.addf %198, %208 : vector<256x128xf32>
    %c240_i32_102 = arith.constant 240 : i32
    %210 = tpu.dynamic_rotate %142 by %c240_i32_102 dim 0 : vector<256x128xf32>, i32 -> vector<256x128xf32>
    %cst_103 = arith.constant 0.000000e+00 : f32
    %211 = vector.shape_cast %4 : vector<256x1xi1> to vector<256x1xi1>
    %212 = vector.broadcast %211 : vector<256x1xi1> to vector<256x128xi1>
    %213 = vector.broadcast %cst_103 : f32 to vector<256x128xf32>
    %214 = arith.select %212, %210, %213 : vector<256x128xi1>, vector<256x128xf32>
    %215 = arith.truncf %214 : vector<256x128xf32> to vector<256x128xbf16>
    %c7_104 = arith.constant 7 : index
    %c0_105 = arith.constant 0 : index
    %c0_106 = arith.constant 0 : index
    %216 = vector.load %arg6[%c7_104, %c0_105, %c0_106] : memref<9x128x128xbf16, #tpu.memory_space<vmem>>, vector<1x128x128xbf16>
    %217 = vector.shape_cast %216 : vector<1x128x128xbf16> to vector<128x128xbf16>
    %cst_107 = arith.constant dense<0.000000e+00> : vector<256x128xf32>
    %218 = tpu.matmul %215, %217, %cst_107 {dimension_numbers = #tpu.dot_dimension_numbers<[1], [0], [0], [1], [0, 0, 1, 1], [], []>} : vector<256x128xbf16>, vector<128x128xbf16>, vector<256x128xf32> -> vector<256x128xf32>
    %219 = arith.addf %209, %218 : vector<256x128xf32>
    %c239_i32_108 = arith.constant 239 : i32
    %220 = tpu.dynamic_rotate %142 by %c239_i32_108 dim 0 : vector<256x128xf32>, i32 -> vector<256x128xf32>
    %221 = arith.andi %4, %40 : vector<256x1xi1>
    %cst_109 = arith.constant 0.000000e+00 : f32
    %222 = vector.shape_cast %221 : vector<256x1xi1> to vector<256x1xi1>
    %223 = vector.broadcast %222 : vector<256x1xi1> to vector<256x128xi1>
    %224 = vector.broadcast %cst_109 : f32 to vector<256x128xf32>
    %225 = arith.select %223, %220, %224 : vector<256x128xi1>, vector<256x128xf32>
    %226 = arith.truncf %225 : vector<256x128xf32> to vector<256x128xbf16>
    %c8_110 = arith.constant 8 : index
    %c0_111 = arith.constant 0 : index
    %c0_112 = arith.constant 0 : index
    %227 = vector.load %arg6[%c8_110, %c0_111, %c0_112] : memref<9x128x128xbf16, #tpu.memory_space<vmem>>, vector<1x128x128xbf16>
    %228 = vector.shape_cast %227 : vector<1x128x128xbf16> to vector<128x128xbf16>
    %cst_113 = arith.constant dense<0.000000e+00> : vector<256x128xf32>
    %229 = tpu.matmul %226, %228, %cst_113 {dimension_numbers = #tpu.dot_dimension_numbers<[1], [0], [0], [1], [0, 0, 1, 1], [], []>} : vector<256x128xbf16>, vector<128x128xbf16>, vector<256x128xf32> -> vector<256x128xf32>
    %230 = arith.addf %219, %229 : vector<256x128xf32>
    %231 = arith.truncf %230 : vector<256x128xf32> to vector<256x128xbf16>
    %c0_114 = arith.constant 0 : index
    %c0_115 = arith.constant 0 : index
    %232 = vector.load %arg7[%c0_114, %c0_115] : memref<128x128xbf16, #tpu.memory_space<vmem>>, vector<128x128xbf16>
    %cst_116 = arith.constant dense<0.000000e+00> : vector<256x128xf32>
    %233 = tpu.matmul %231, %232, %cst_116 {dimension_numbers = #tpu.dot_dimension_numbers<[1], [0], [0], [1], [0, 0, 1, 1], [], []>} : vector<256x128xbf16>, vector<128x128xbf16>, vector<256x128xf32> -> vector<256x128xf32>
    %234 = arith.addf %139, %233 : vector<256x128xf32>
    %cst_117 = arith.constant 0.000000e+00 : f32
    %235 = vector.broadcast %cst_117 : f32 to vector<256x128xf32>
    %236 = arith.maximumf %234, %235 : vector<256x128xf32>
    %237 = arith.truncf %236 : vector<256x128xf32> to vector<256x128xbf16>
    %c0_118 = arith.constant 0 : index
    %c0_119 = arith.constant 0 : index
    %238 = vector.load %arg8[%c0_118, %c0_119] : memref<128x128xbf16, #tpu.memory_space<vmem>>, vector<128x128xbf16>
    %cst_120 = arith.constant dense<0.000000e+00> : vector<256x128xf32>
    %239 = tpu.matmul %237, %238, %cst_120 {dimension_numbers = #tpu.dot_dimension_numbers<[1], [0], [0], [1], [0, 0, 1, 1], [], []>} : vector<256x128xbf16>, vector<128x128xbf16>, vector<256x128xf32> -> vector<256x128xf32>
    %c0_121 = arith.constant 0 : index
    %c0_122 = arith.constant 0 : index
    %c0_123 = arith.constant 0 : index
    %240 = vector.load %arg9[%c0_121, %c0_122, %c0_123] : memref<1x256x128xf32, #tpu.memory_space<vmem>>, vector<1x256x128xf32>
    %241 = vector.shape_cast %240 : vector<1x256x128xf32> to vector<256x128xf32>
    %242 = vector.shape_cast %239 : vector<256x128xf32> to vector<1x256x128xf32>
    tpu.vector_store %arg9[%c0_121, %c0_122, %c0_123], %242 {strides = array<i32>} : memref<1x256x128xf32, #tpu.memory_space<vmem>>, vector<1x256x128xf32>,
    return
  }
  func.func @transform_0(%arg0: i32) -> (i32, i32, i32) {
    %c0_i32 = arith.constant 0 : i32
    %c0_i32_0 = arith.constant 0 : i32
    %c0_i32_1 = arith.constant 0 : i32
    return %arg0, %c0_i32, %c0_i32_0 : i32, i32, i32
  }
  func.func @transform_1(%arg0: i32) -> (i32, i32) {
    %c0_i32 = arith.constant 0 : i32
    %c0_i32_0 = arith.constant 0 : i32
    %c0_i32_1 = arith.constant 0 : i32
    return %c0_i32, %c0_i32_0 : i32, i32
  }
  func.func @transform_2(%arg0: i32) -> (i32, i32, i32) {
    %c0_i32 = arith.constant 0 : i32
    %c0_i32_0 = arith.constant 0 : i32
    %c0_i32_1 = arith.constant 0 : i32
    %c0_i32_2 = arith.constant 0 : i32
    return %c0_i32, %c0_i32_0, %c0_i32_1 : i32, i32, i32
  }
  func.func @transform_3(%arg0: i32) -> (i32, i32) {
    %c0_i32 = arith.constant 0 : i32
    %c0_i32_0 = arith.constant 0 : i32
    %c0_i32_1 = arith.constant 0 : i32
    return %c0_i32, %c0_i32_0 : i32, i32
  }
  func.func @transform_4(%arg0: i32) -> (i32, i32) {
    %c0_i32 = arith.constant 0 : i32
    %c0_i32_0 = arith.constant 0 : i32
    %c0_i32_1 = arith.constant 0 : i32
    return %c0_i32, %c0_i32_0 : i32, i32
  }
  func.func @transform_5(%arg0: i32) -> (i32, i32, i32) {
    %c0_i32 = arith.constant 0 : i32
    %c0_i32_0 = arith.constant 0 : i32
    %c0_i32_1 = arith.constant 0 : i32
    %c0_i32_2 = arith.constant 0 : i32
    return %c0_i32, %c0_i32_0, %c0_i32_1 : i32, i32, i32
  }
  func.func @transform_6(%arg0: i32) -> (i32, i32) {
    %c0_i32 = arith.constant 0 : i32
    %c0_i32_0 = arith.constant 0 : i32
    %c0_i32_1 = arith.constant 0 : i32
    return %c0_i32, %c0_i32_0 : i32, i32
  }
  func.func @transform_7(%arg0: i32) -> (i32, i32) {
    %c0_i32 = arith.constant 0 : i32
    %c0_i32_0 = arith.constant 0 : i32
    %c0_i32_1 = arith.constant 0 : i32
    return %c0_i32, %c0_i32_0 : i32, i32
  }
  func.func @transform_8(%arg0: i32) -> (i32, i32, i32) {
    %c0_i32 = arith.constant 0 : i32
    %c0_i32_0 = arith.constant 0 : i32
    %c0_i32_1 = arith.constant 0 : i32
    return %arg0, %c0_i32, %c0_i32_0 : i32, i32, i32
  }
}

</mosaic_0001>

<llo_original>
// kernel: residual_block_layer_forward.1
$region0: #{residual_block_layer_forward.1}
  #allocation0 [shape = 'u32[]', space=smem, size = 0x4, offset = 0x4, fixed_abs, tag = 'smem constant byte address 0x4 - core index']
  #allocation1 [shape = 'u32[72,128]{1,0:T(1,128)}', space=vmem, size = 0x9000, scoped, tag = 'internal scratch']
  %s0 = inlined_call_operand.vmem [shape: bf16[2,256,128], index: 0, kind: input, shape index: {}]
  %s1 = inlined_call_operand.hbm [shape: bf16[128,128], index: 1, kind: input, shape index: {}]
  %s2 = inlined_call_operand.vmem [shape: bf16[9,128,128], index: 2, kind: input, shape index: {}]
  %s3 = inlined_call_operand.hbm [shape: bf16[128,128], index: 3, kind: input, shape index: {}]
  %s4 = inlined_call_operand.hbm [shape: bf16[128,128], index: 4, kind: input, shape index: {}]
  %s5 = inlined_call_operand.vmem [shape: bf16[9,128,128], index: 5, kind: input, shape index: {}]
  %s6 = inlined_call_operand.vmem [shape: bf16[128,128], index: 6, kind: input, shape index: {}]
  %s7 = inlined_call_operand.vmem [shape: bf16[128,128], index: 7, kind: input, shape index: {}]
  %s8 = inlined_call_operand.hbm [shape: f32[2,256,128], index: 8, kind: output, shape index: {}]
  %s9 = sld [smem:[#allocation0]]
  $region77: #{residual_block_layer_forward.1} parent=0
    _
  %s11 = ssub.s32 1, %s9
  %s12 = scalar_select 0, %s11, %s9
  $region1: #{residual_block_layer_forward.1} parent=0
    #allocation2 [shape = 'u8[32768]{0}', space=vmem, size = 0x8000, scoped, tag = 'input window, operand 1, single buffered']
    #allocation3 [shape = 's32[2]{0}', space=sflag, size = 0x8, scoped, tag = 'scoped memory for residual_block_layer_forward.1']
    #allocation4 [shape = 's32[2]{0}', space=sflag, size = 0x8, scoped, tag = 'scoped memory for residual_block_layer_forward.1']
    #allocation5 [shape = 'u8[32768]{0}', space=vmem, size = 0x8000, scoped, tag = 'input window, operand 3, single buffered']
    #allocation6 [shape = 's32[1]{0}', space=sflag, size = 0x4, scoped, tag = 'scoped memory for residual_block_layer_forward.1']
    #allocation7 [shape = 'u8[32768]{0}', space=vmem, size = 0x8000, scoped, tag = 'input window, operand 4, single buffered']
    #allocation8 [shape = 'u8[262144]{0}', space=vmem, size = 0x40000, scoped, tag = 'output window, operand 0']
    %13 = vsyncpa [#allocation3], 0
    %14 = vsyncpa [#allocation6], 0
    %15 = vsyncpa [#allocation4], 0
    %s16 = scalar_lea.sflag [#allocation4], 1
    %17 = vsyncpa %s16, 0
    loop: start=0, step=1, limit=4
    $region2: #{residual_block_layer_forward.1} parent=1 // loop_pre_header
      _
    $region3: #{residual_block_layer_forward.1} parent=1 // loop_header
      %s19 = sphi 0, %s23
      %p20 = scmp.ge.s32.totalorder %s19, 4
      %s29 = sphi 0, %s31
      %s32 = sphi 0, %s29
      %s33 = sphi 0, %s32
      %s49 = sphi 0, %s33
      %s53 = sphi 0, %s53
      %s55 = sphi 0, %s53
      %s56 = sphi 0, %s55
      %s70 = sphi 0, %s56
      %s74 = sphi 0, %s74
      %s76 = sphi 0, %s74
      %s77 = sphi 0, %s76
      %s91 = sphi 0, %s77
      %s95 = sphi 0, %s95
      %s97 = sphi 0, %s95
      %s98 = sphi 0, %s97
      %s112 = sphi 0, %s98
      %s116 = sphi 0, %s116
      %s118 = sphi 0, %s116
      %s119 = sphi 0, %s118
      %s133 = sphi 0, %s119
      %s137 = sphi 0, %s137
      %s139 = sphi 0, %s137
      %s140 = sphi 0, %s139
      %s154 = sphi 0, %s140
      %s158 = sphi 0, %s158
      %s160 = sphi 0, %s158
      %s161 = sphi 0, %s160
      %s175 = sphi 0, %s161
      %s179 = sphi 0, %s179
      %s181 = sphi 0, %s179
      %s182 = sphi 0, %s181
      %s196 = sphi 0, %s182
      %s202 = sphi 0, %s204
      %s205 = sphi 0, %s202
      %s206 = sphi 0, %s205
      %s222 = sphi 0, %s206
    $region4: #{residual_block_layer_forward.1} parent=1 // loop_header_branch
      %22 = sbr.rel (%p20) target = $region8
    $region5: #{residual_block_layer_forward.1} parent=1 // loop_body
      %s24 = ssub.s32 %s19, 1
      %s25 = ssub.s32 %s19, 2
      %s26 = sadd.s32 %s19, 1
      %s27 = ssub.s32 %s19, %s26
      %p28 = scmp.eq.s32.totalorder %s27, 0
      %s30 = sadd.s32 %s29, 1
      %s31 = scalar_select %p28, %s29, %s30
      %p34 = pneg %p28
      %p35 = scmp.eq.s32.totalorder %s19, 1
      %p36 = por %p34, %p35
      %p37 = scmp.ne.s32.totalorder %s29, %s32
      %p38 = scmp.eq.s32.totalorder %s19, 0
      %p39 = por %p37, %p38
      %p40 = scmp.ne.s32.totalorder %s29, %s32
      %p41 = scmp.eq.s32.totalorder %s24, 1
      %p42 = por %p40, %p41
      %p43 = scmp.ne.s32.totalorder %s32, %s33
      %p44 = scmp.eq.s32.totalorder %s24, 0
      %p45 = por %p43, %p44
      %p46 = scmp.ne.s32.totalorder %s32, %s33
      %p47 = scmp.eq.s32.totalorder %s25, 1
      %p48 = por %p46, %p47
      %p50 = scmp.ne.s32.totalorder %s33, %s49
      %p51 = scmp.eq.s32.totalorder %s25, 0
      %p52 = por %p50, %p51
      %s54 = sadd.s32 %s53, 1
      %p57 = scmp.eq.s32.totalorder %s19, 1
      %p58 = scmp.ne.s32.totalorder %s53, %s55
      %p59 = scmp.eq.s32.totalorder %s19, 0
      %p60 = por %p58, %p59
      %p61 = scmp.ne.s32.totalorder %s53, %s55
      %p62 = scmp.eq.s32.totalorder %s24, 1
      %p63 = por %p61, %p62
      %p64 = scmp.ne.s32.totalorder %s55, %s56
      %p65 = scmp.eq.s32.totalorder %s24, 0
      %p66 = por %p64, %p65
      %p67 = scmp.ne.s32.totalorder %s55, %s56
      %p68 = scmp.eq.s32.totalorder %s25, 1
      %p69 = por %p67, %p68
      %p71 = scmp.ne.s32.totalorder %s56, %s70
      %p72 = scmp.eq.s32.totalorder %s25, 0
      %p73 = por %p71, %p72
      %s75 = sadd.s32 %s74, 1
      %p78 = scmp.eq.s32.totalorder %s19, 1
      %p79 = scmp.ne.s32.totalorder %s74, %s76
      %p80 = scmp.eq.s32.totalorder %s19, 0
      %p81 = por %p79, %p80
      %p82 = scmp.ne.s32.totalorder %s74, %s76
      %p83 = scmp.eq.s32.totalorder %s24, 1
      %p84 = por %p82, %p83
      %p85 = scmp.ne.s32.totalorder %s76, %s77
      %p86 = scmp.eq.s32.totalorder %s24, 0
      %p87 = por %p85, %p86
      %p88 = scmp.ne.s32.totalorder %s76, %s77
      %p89 = scmp.eq.s32.totalorder %s25, 1
      %p90 = por %p88, %p89
      %p92 = scmp.ne.s32.totalorder %s77, %s91
      %p93 = scmp.eq.s32.totalorder %s25, 0
      %p94 = por %p92, %p93
      %s96 = sadd.s32 %s95, 1
      %p99 = scmp.eq.s32.totalorder %s19, 1
      %p100 = scmp.ne.s32.totalorder %s95, %s97
      %p101 = scmp.eq.s32.totalorder %s19, 0
      %p102 = por %p100, %p101
      %p103 = scmp.ne.s32.totalorder %s95, %s97
      %p104 = scmp.eq.s32.totalorder %s24, 1
      %p105 = por %p103, %p104
      %p106 = scmp.ne.s32.totalorder %s97, %s98
      %p107 = scmp.eq.s32.totalorder %s24, 0
      %p108 = por %p106, %p107
      %p109 = scmp.ne.s32.totalorder %s97, %s98
      %p110 = scmp.eq.s32.totalorder %s25, 1
      %p111 = por %p109, %p110
      %p113 = scmp.ne.s32.totalorder %s98, %s112
      %p114 = scmp.eq.s32.totalorder %s25, 0
      %p115 = por %p113, %p114
      %s117 = sadd.s32 %s116, 1
      %p120 = scmp.eq.s32.totalorder %s19, 1
      %p121 = scmp.ne.s32.totalorder %s116, %s118
      %p122 = scmp.eq.s32.totalorder %s19, 0
      %p123 = por %p121, %p122
      %p124 = scmp.ne.s32.totalorder %s116, %s118
      %p125 = scmp.eq.s32.totalorder %s24, 1
      %p126 = por %p124, %p125
      %p127 = scmp.ne.s32.totalorder %s118, %s119
      %p128 = scmp.eq.s32.totalorder %s24, 0
      %p129 = por %p127, %p128
      %p130 = scmp.ne.s32.totalorder %s118, %s119
      %p131 = scmp.eq.s32.totalorder %s25, 1
      %p132 = por %p130, %p131
      %p134 = scmp.ne.s32.totalorder %s119, %s133
      %p135 = scmp.eq.s32.totalorder %s25, 0
      %p136 = por %p134, %p135
      %s138 = sadd.s32 %s137, 1
      %p141 = scmp.eq.s32.totalorder %s19, 1
      %p142 = scmp.ne.s32.totalorder %s137, %s139
      %p143 = scmp.eq.s32.totalorder %s19, 0
      %p144 = por %p142, %p143
      %p145 = scmp.ne.s32.totalorder %s137, %s139
      %p146 = scmp.eq.s32.totalorder %s24, 1
      %p147 = por %p145, %p146
      %p148 = scmp.ne.s32.totalorder %s139, %s140
      %p149 = scmp.eq.s32.totalorder %s24, 0
      %p150 = por %p148, %p149
      %p151 = scmp.ne.s32.totalorder %s139, %s140
      %p152 = scmp.eq.s32.totalorder %s25, 1
      %p153 = por %p151, %p152
      %p155 = scmp.ne.s32.totalorder %s140, %s154
      %p156 = scmp.eq.s32.totalorder %s25, 0
      %p157 = por %p155, %p156
      %s159 = sadd.s32 %s158, 1
      %p162 = scmp.eq.s32.totalorder %s19, 1
      %p163 = scmp.ne.s32.totalorder %s158, %s160
      %p164 = scmp.eq.s32.totalorder %s19, 0
      %p165 = por %p163, %p164
      %p166 = scmp.ne.s32.totalorder %s158, %s160
      %p167 = scmp.eq.s32.totalorder %s24, 1
      %p168 = por %p166, %p167
      %p169 = scmp.ne.s32.totalorder %s160, %s161
      %p170 = scmp.eq.s32.totalorder %s24, 0
      %p171 = por %p169, %p170
      %p172 = scmp.ne.s32.totalorder %s160, %s161
      %p173 = scmp.eq.s32.totalorder %s25, 1
      %p174 = por %p172, %p173
      %p176 = scmp.ne.s32.totalorder %s161, %s175
      %p177 = scmp.eq.s32.totalorder %s25, 0
      %p178 = por %p176, %p177
      %s180 = sadd.s32 %s179, 1
      %p183 = scmp.eq.s32.totalorder %s19, 1
      %p184 = scmp.ne.s32.totalorder %s179, %s181
      %p185 = scmp.eq.s32.totalorder %s19, 0
      %p186 = por %p184, %p185
      %p187 = scmp.ne.s32.totalorder %s179, %s181
      %p188 = scmp.eq.s32.totalorder %s24, 1
      %p189 = por %p187, %p188
      %p190 = scmp.ne.s32.totalorder %s181, %s182
      %p191 = scmp.eq.s32.totalorder %s24, 0
      %p192 = por %p190, %p191
      %p193 = scmp.ne.s32.totalorder %s181, %s182
      %p194 = scmp.eq.s32.totalorder %s25, 1
      %p195 = por %p193, %p194
      %p197 = scmp.ne.s32.totalorder %s182, %s196
      %p198 = scmp.eq.s32.totalorder %s25, 0
      %p199 = por %p197, %p198
      %s200 = ssub.s32 %s19, %s26
      %p201 = scmp.eq.s32.totalorder %s200, 0
      %s203 = sadd.s32 %s202, 1
      %s204 = scalar_select %p201, %s202, %s203
      %p207 = pneg %p201
      %p208 = scmp.eq.s32.totalorder %s19, 1
      %p209 = por %p207, %p208
      %p210 = scmp.ne.s32.totalorder %s202, %s205
      %p211 = scmp.eq.s32.totalorder %s19, 0
      %p212 = por %p210, %p211
      %p213 = scmp.ne.s32.totalorder %s202, %s205
      %p214 = scmp.eq.s32.totalorder %s24, 1
      %p215 = por %p213, %p214
      %p216 = scmp.ne.s32.totalorder %s205, %s206
      %p217 = scmp.eq.s32.totalorder %s24, 0
      %p218 = por %p216, %p217
      %p219 = scmp.ne.s32.totalorder %s205, %s206
      %p220 = scmp.eq.s32.totalorder %s25, 1
      %p221 = por %p219, %p220
      %p223 = scmp.ne.s32.totalorder %s206, %s222
      %p224 = scmp.eq.s32.totalorder %s25, 0
      %p225 = por %p223, %p224
      %p226 = scmp.le.s32.totalorder 1, %s19
      %p227 = scmp.lt.s32.totalorder %s19, 3
      %p228 = pnand %p226, %p227
      %p229 = pneg %p228
      // Predicated region
      $region9: #{residual_block_layer_forward.1} parent=5 // pred_check
        _
      $region10: #{residual_block_layer_forward.1} parent=5 // pred_check_branch
        %231 = sbr.rel (%p228) target = $region12
      $region11: #{residual_block_layer_forward.1} parent=5 // pred_region
        %s232 = ssub.s32 %s19, 1
        // Predicated region
        $region13: #{residual_block_layer_forward.1} parent=11 // pred_check
          %p233 = pneg %p66
        $region14: #{residual_block_layer_forward.1} parent=11 // pred_check_branch
          %235 = sbr.rel (%p233) target = $region16
        $region15: #{residual_block_layer_forward.1} parent=11 // pred_region
          %237 = vsyncadd [#allocation3], 0
          %s238 = sshll.u32 %s1, 4
          %s239 = int_to_ptr.hbm [resolvable:$true] %s238
          %s240 = sshll.u32 [#allocation2], 4
          %s241 = int_to_ptr.vmem [resolvable:$true] %s240
          %246 = dma.hbm_to_vmem [thread:$0]  %s239, 1024, %s241, [#allocation3], 64, 64, 4
        $region16: #{residual_block_layer_forward.1} parent=11 // pred_fallthru
          _
        // Predicated region
        $region17: #{residual_block_layer_forward.1} parent=11 // pred_check
          %p247 = pneg %p87
        $region18: #{residual_block_layer_forward.1} parent=11 // pred_check_branch
          %249 = sbr.rel (%p247) target = $region20
        $region19: #{residual_block_layer_forward.1} parent=11 // pred_region
          _
        $region20: #{residual_block_layer_forward.1} parent=11 // pred_fallthru
          _
        // Predicated region
        $region21: #{residual_block_layer_forward.1} parent=11 // pred_check
          %p250 = pneg %p108
        $region22: #{residual_block_layer_forward.1} parent=11 // pred_check_branch
          %252 = sbr.rel (%p250) target = $region24
        $region23: #{residual_block_layer_forward.1} parent=11 // pred_region
          %254 = vsyncadd [#allocation6], 0
          %s255 = sshll.u32 %s3, 4
          %s256 = int_to_ptr.hbm [resolvable:$true] %s255
          %s257 = sshll.u32 [#allocation5], 4
          %s258 = int_to_ptr.vmem [resolvable:$true] %s257
          %263 = dma.hbm_to_vmem [thread:$0]  %s256, 1024, %s258, [#allocation6], 64, 64, 4
        $region24: #{residual_block_layer_forward.1} parent=11 // pred_fallthru
          _
        // Predicated region
        $region25: #{residual_block_layer_forward.1} parent=11 // pred_check
          %p264 = pneg %p129
        $region26: #{residual_block_layer_forward.1} parent=11 // pred_check_branch
          %266 = sbr.rel (%p264) target = $region28
        $region27: #{residual_block_layer_forward.1} parent=11 // pred_region
          %268 = vsyncadd [#allocation6], 0
          %s269 = sshll.u32 %s4, 4
          %s270 = int_to_ptr.hbm [resolvable:$true] %s269
          %s271 = sshll.u32 [#allocation7], 4
          %s272 = int_to_ptr.vmem [resolvable:$true] %s271
          %277 = dma.hbm_to_vmem [thread:$0]  %s270, 1024, %s272, [#allocation6], 64, 64, 4
        $region28: #{residual_block_layer_forward.1} parent=11 // pred_fallthru
          _
        // Predicated region
        $region29: #{residual_block_layer_forward.1} parent=11 // pred_check
          %p278 = pneg %p150
        $region30: #{residual_block_layer_forward.1} parent=11 // pred_check_branch
          %280 = sbr.rel (%p278) target = $region32
        $region31: #{residual_block_layer_forward.1} parent=11 // pred_region
          _
        $region32: #{residual_block_layer_forward.1} parent=11 // pred_fallthru
          _
        // Predicated region
        $region33: #{residual_block_layer_forward.1} parent=11 // pred_check
          %p281 = pneg %p171
        $region34: #{residual_block_layer_forward.1} parent=11 // pred_check_branch
          %283 = sbr.rel (%p281) target = $region36
        $region35: #{residual_block_layer_forward.1} parent=11 // pred_region
          _
        $region36: #{residual_block_layer_forward.1} parent=11 // pred_fallthru
          _
        // Predicated region
        $region37: #{residual_block_layer_forward.1} parent=11 // pred_check
          %p284 = pneg %p192
        $region38: #{residual_block_layer_forward.1} parent=11 // pred_check_branch
          %286 = sbr.rel (%p284) target = $region40
        $region39: #{residual_block_layer_forward.1} parent=11 // pred_region
          _
        $region40: #{residual_block_layer_forward.1} parent=11 // pred_fallthru
          _
      $region12: #{residual_block_layer_forward.1} parent=5 // pred_fallthru
        _
      %p287 = scmp.lt.s32.totalorder %s19, 2
      // Predicated region
      $region41: #{residual_block_layer_forward.1} parent=5 // pred_check
        %p288 = pneg %p287
      $region42: #{residual_block_layer_forward.1} parent=5 // pred_check_branch
        %290 = sbr.rel (%p288) target = $region44
      $region43: #{residual_block_layer_forward.1} parent=5 // pred_region
        // Predicated region
        $region45: #{residual_block_layer_forward.1} parent=43 // pred_check
          %p291 = pneg %p39
        $region46: #{residual_block_layer_forward.1} parent=43 // pred_check_branch
          %293 = sbr.rel (%p291) target = $region48
        $region47: #{residual_block_layer_forward.1} parent=43 // pred_region
          %p294 = scmp.lt.s32.totalorder %s19, 1
          %s295 = scalar_select %p294, %s19, 1
          %s296 = smul.addr %s295, 32
          %s297 = smul.addr %s296, 4
          %s298 = scalar_lea.vmem %s0, %s297
        $region48: #{residual_block_layer_forward.1} parent=43 // pred_fallthru
          _
      $region44: #{residual_block_layer_forward.1} parent=5 // pred_fallthru
        _
      %p299 = scmp.le.s32.totalorder 1, %s19
      %p300 = scmp.lt.s32.totalorder %s19, 3
      %p301 = pnand %p299, %p300
      %p302 = pneg %p301
      // Predicated region
      $region49: #{residual_block_layer_forward.1} parent=5 // pred_check
        _
      $region50: #{residual_block_layer_forward.1} parent=5 // pred_check_branch
        %304 = sbr.rel (%p301) target = $region52
      $region51: #{residual_block_layer_forward.1} parent=5 // pred_region
        %s305 = ssub.s32 %s19, 1
        // Predicated region
        $region53: #{residual_block_layer_forward.1} parent=51 // pred_check
          %p306 = pneg %p66
        $region54: #{residual_block_layer_forward.1} parent=51 // pred_check_branch
          %308 = sbr.rel (%p306) target = $region56
        $region55: #{residual_block_layer_forward.1} parent=51 // pred_region
          %310 = dma.done [#allocation3], 1024
        $region56: #{residual_block_layer_forward.1} parent=51 // pred_fallthru
          _
        // Predicated region
        $region57: #{residual_block_layer_forward.1} parent=51 // pred_check
          %p311 = pneg %p108
        $region58: #{residual_block_layer_forward.1} parent=51 // pred_check_branch
          %313 = sbr.rel (%p311) target = $region60
        $region59: #{residual_block_layer_forward.1} parent=51 // pred_region
          %315 = dma.done [#allocation6], 1024
        $region60: #{residual_block_layer_forward.1} parent=51 // pred_fallthru
          _
        // Predicated region
        $region61: #{residual_block_layer_forward.1} parent=51 // pred_check
          %p316 = pneg %p129
        $region62: #{residual_block_layer_forward.1} parent=51 // pred_check_branch
          %318 = sbr.rel (%p316) target = $region64
        $region63: #{residual_block_layer_forward.1} parent=51 // pred_region
          %320 = dma.done [#allocation6], 1024
        $region64: #{residual_block_layer_forward.1} parent=51 // pred_fallthru
          _
        %p321 = scmp.lt.s32.totalorder %s24, 1
        %s322 = scalar_select %p321, %s24, 1
        %s323 = smul.addr %s322, 32
        %s324 = smul.addr %s323, 4
        %s325 = scalar_lea.vmem %s0, %s324
        %p326 = pneg %p45
        %p327 = pneg %p42
        %p328 = pneg %p66
        %p329 = pneg %p63
        %p330 = pneg %p87
        %p331 = pneg %p84
        %p332 = pneg %p108
        %p333 = pneg %p105
        %p334 = pneg %p129
        %p335 = pneg %p126
        %p336 = pneg %p150
        %p337 = pneg %p147
        %p338 = pneg %p171
        %p339 = pneg %p168
        %p340 = pneg %p192
        %p341 = pneg %p189
        %p342 = pneg %p218
        %p343 = pneg %p215
        %s344 = sand.u32 %s205, 1
        %s345 = scalar_lea.sflag [#allocation4], %s344
        %s346 = sand.u32 %s205, 1
        %s347 = smul.addr %s346, 256
        %s348 = scalar_lea.vmem [#allocation8], %s347
        %p349 = scmp.lt.s32.totalorder %s24, 1
        %s350 = scalar_select %p349, %s24, 1
        %s351 = smul.addr %s350, 32
        %s352 = smul.addr %s351, 4
        %s353 = scalar_lea.vmem %s0, %s352
        %v354 = vlaneseq
        %v355 = vshrl.u32 %v354, 7
        %v356 = vadd.s32 %v355, 8
        %v357 = vadd.s32 %v355, 16
        %v358 = vadd.s32 %v355, 24
        %v359 = vadd.s32 %v355, 32
        %v360 = vadd.s32 %v355, 40
        %v361 = vadd.s32 %v355, 48
        %v362 = vadd.s32 %v355, 56
        %v363 = vadd.s32 %v355, 64
        %v364 = vadd.s32 %v355, 72
        %v365 = vadd.s32 %v355, 80
        %v366 = vadd.s32 %v355, 88
        %v367 = vadd.s32 %v355, 96
        %v368 = vadd.s32 %v355, 104
        %v369 = vadd.s32 %v355, 112
        %v370 = vadd.s32 %v355, 120
        %v371 = vadd.s32 %v355, 128
        %v372 = vadd.s32 %v355, 136
        %v373 = vadd.s32 %v355, 144
        %v374 = vadd.s32 %v355, 152
        %v375 = vadd.s32 %v355, 160
        %v376 = vadd.s32 %v355, 168
        %v377 = vadd.s32 %v355, 176
        %v378 = vadd.s32 %v355, 184
        %v379 = vadd.s32 %v355, 192
        %v380 = vadd.s32 %v355, 200
        %v381 = vadd.s32 %v355, 208
        %v382 = vadd.s32 %v355, 216
        %v383 = vadd.s32 %v355, 224
        %v384 = vadd.s32 %v355, 232
        %v385 = vadd.s32 %v355, 240
        %v386 = vadd.s32 %v355, 248
        %vm387 = vcmp.ge.s32.totalorder %v355, 16
        %vm388 = vcmp.ge.s32.totalorder %v356, 16
        %vm389 = vcmp.ge.s32.totalorder %v357, 16
        %vm390 = vcmp.ge.s32.totalorder %v358, 16
        %vm391 = vcmp.ge.s32.totalorder %v359, 16
        %vm392 = vcmp.ge.s32.totalorder %v360, 16
        %vm393 = vcmp.ge.s32.totalorder %v361, 16
        %vm394 = vcmp.ge.s32.totalorder %v362, 16
        %vm395 = vcmp.ge.s32.totalorder %v363, 16
        %vm396 = vcmp.ge.s32.totalorder %v364, 16
        %vm397 = vcmp.ge.s32.totalorder %v365, 16
        %vm398 = vcmp.ge.s32.totalorder %v366, 16
        %vm399 = vcmp.ge.s32.totalorder %v367, 16
        %vm400 = vcmp.ge.s32.totalorder %v368, 16
        %vm401 = vcmp.ge.s32.totalorder %v369, 16
        %vm402 = vcmp.ge.s32.totalorder %v370, 16
        %vm403 = vcmp.ge.s32.totalorder %v371, 16
        %vm404 = vcmp.ge.s32.totalorder %v372, 16
        %vm405 = vcmp.ge.s32.totalorder %v373, 16
        %vm406 = vcmp.ge.s32.totalorder %v374, 16
        %vm407 = vcmp.ge.s32.totalorder %v375, 16
        %vm408 = vcmp.ge.s32.totalorder %v376, 16
        %vm409 = vcmp.ge.s32.totalorder %v377, 16
        %vm410 = vcmp.ge.s32.totalorder %v378, 16
        %vm411 = vcmp.ge.s32.totalorder %v379, 16
        %vm412 = vcmp.ge.s32.totalorder %v380, 16
        %vm413 = vcmp.ge.s32.totalorder %v381, 16
        %vm414 = vcmp.ge.s32.totalorder %v382, 16
        %vm415 = vcmp.ge.s32.totalorder %v383, 16
        %vm416 = vcmp.ge.s32.totalorder %v384, 16
        %vm417 = vcmp.ge.s32.totalorder %v385, 16
        %vm418 = vcmp.ge.s32.totalorder %v386, 16
        %vm419 = vcmp.lt.s32.totalorder %v355, 240
        %vm420 = vcmp.lt.s32.totalorder %v356, 240
        %vm421 = vcmp.lt.s32.totalorder %v357, 240
        %vm422 = vcmp.lt.s32.totalorder %v358, 240
        %vm423 = vcmp.lt.s32.totalorder %v359, 240
        %vm424 = vcmp.lt.s32.totalorder %v360, 240
        %vm425 = vcmp.lt.s32.totalorder %v361, 240
        %vm426 = vcmp.lt.s32.totalorder %v362, 240
        %vm427 = vcmp.lt.s32.totalorder %v363, 240
        %vm428 = vcmp.lt.s32.totalorder %v364, 240
        %vm429 = vcmp.lt.s32.totalorder %v365, 240
        %vm430 = vcmp.lt.s32.totalorder %v366, 240
        %vm431 = vcmp.lt.s32.totalorder %v367, 240
        %vm432 = vcmp.lt.s32.totalorder %v368, 240
        %vm433 = vcmp.lt.s32.totalorder %v369, 240
        %vm434 = vcmp.lt.s32.totalorder %v370, 240
        %vm435 = vcmp.lt.s32.totalorder %v371, 240
        %vm436 = vcmp.lt.s32.totalorder %v372, 240
        %vm437 = vcmp.lt.s32.totalorder %v373, 240
        %vm438 = vcmp.lt.s32.totalorder %v374, 240
        %vm439 = vcmp.lt.s32.totalorder %v375, 240
        %vm440 = vcmp.lt.s32.totalorder %v376, 240
        %vm441 = vcmp.lt.s32.totalorder %v377, 240
        %vm442 = vcmp.lt.s32.totalorder %v378, 240
        %vm443 = vcmp.lt.s32.totalorder %v379, 240
        %vm444 = vcmp.lt.s32.totalorder %v380, 240
        %vm445 = vcmp.lt.s32.totalorder %v381, 240
        %vm446 = vcmp.lt.s32.totalorder %v382, 240
        %vm447 = vcmp.lt.s32.totalorder %v383, 240
        %vm448 = vcmp.lt.s32.totalorder %v384, 240
        %vm449 = vcmp.lt.s32.totalorder %v385, 240
        %vm450 = vcmp.lt.s32.totalorder %v386, 240
        %vm451 = vcmp.lt.s32.totalorder %v355, 0
        %v452 = vsub.s32 0, %v355
        %v453 = vsel %vm451, %v452, %v355
        %v454 = vshrl.u32 %v453, 4
        %v455 = vand.u32 %v453, 15
        %v456 = vsub.s32 0, %v455
        %v457 = vsel %vm451, %v456, %v455
        %vm458 = vcmp.lt.s32.totalorder %v356, 0
        %v459 = vsub.s32 0, %v356
        %v460 = vsel %vm458, %v459, %v356
        %v461 = vshrl.u32 %v460, 4
        %v462 = vand.u32 %v460, 15
        %v463 = vsub.s32 0, %v462
        %v464 = vsel %vm458, %v463, %v462
        %vm465 = vcmp.lt.s32.totalorder %v357, 0
        %v466 = vsub.s32 0, %v357
        %v467 = vsel %vm465, %v466, %v357
        %v468 = vshrl.u32 %v467, 4
        %v469 = vand.u32 %v467, 15
        %v470 = vsub.s32 0, %v469
        %v471 = vsel %vm465, %v470, %v469
        %vm472 = vcmp.lt.s32.totalorder %v358, 0
        %v473 = vsub.s32 0, %v358
        %v474 = vsel %vm472, %v473, %v358
        %v475 = vshrl.u32 %v474, 4
        %v476 = vand.u32 %v474, 15
        %v477 = vsub.s32 0, %v476
        %v478 = vsel %vm472, %v477, %v476
        %vm479 = vcmp.lt.s32.totalorder %v359, 0
        %v480 = vsub.s32 0, %v359
        %v481 = vsel %vm479, %v480, %v359
        %v482 = vshrl.u32 %v481, 4
        %v483 = vand.u32 %v481, 15
        %v484 = vsub.s32 0, %v483
        %v485 = vsel %vm479, %v484, %v483
        %vm486 = vcmp.lt.s32.totalorder %v360, 0
        %v487 = vsub.s32 0, %v360
        %v488 = vsel %vm486, %v487, %v360
        %v489 = vshrl.u32 %v488, 4
        %v490 = vand.u32 %v488, 15
        %v491 = vsub.s32 0, %v490
        %v492 = vsel %vm486, %v491, %v490
        %vm493 = vcmp.lt.s32.totalorder %v361, 0
        %v494 = vsub.s32 0, %v361
        %v495 = vsel %vm493, %v494, %v361
        %v496 = vshrl.u32 %v495, 4
        %v497 = vand.u32 %v495, 15
        %v498 = vsub.s32 0, %v497
        %v499 = vsel %vm493, %v498, %v497
        %vm500 = vcmp.lt.s32.totalorder %v362, 0
        %v501 = vsub.s32 0, %v362
        %v502 = vsel %vm500, %v501, %v362
        %v503 = vshrl.u32 %v502, 4
        %v504 = vand.u32 %v502, 15
        %v505 = vsub.s32 0, %v504
        %v506 = vsel %vm500, %v505, %v504
        %vm507 = vcmp.lt.s32.totalorder %v363, 0
        %v508 = vsub.s32 0, %v363
        %v509 = vsel %vm507, %v508, %v363
        %v510 = vshrl.u32 %v509, 4
        %v511 = vand.u32 %v509, 15
        %v512 = vsub.s32 0, %v511
        %v513 = vsel %vm507, %v512, %v511
        %vm514 = vcmp.lt.s32.totalorder %v364, 0
        %v515 = vsub.s32 0, %v364
        %v516 = vsel %vm514, %v515, %v364
        %v517 = vshrl.u32 %v516, 4
        %v518 = vand.u32 %v516, 15
        %v519 = vsub.s32 0, %v518
        %v520 = vsel %vm514, %v519, %v518
        %vm521 = vcmp.lt.s32.totalorder %v365, 0
        %v522 = vsub.s32 0, %v365
        %v523 = vsel %vm521, %v522, %v365
        %v524 = vshrl.u32 %v523, 4
        %v525 = vand.u32 %v523, 15
        %v526 = vsub.s32 0, %v525
        %v527 = vsel %vm521, %v526, %v525
        %vm528 = vcmp.lt.s32.totalorder %v366, 0
        %v529 = vsub.s32 0, %v366
        %v530 = vsel %vm528, %v529, %v366
        %v531 = vshrl.u32 %v530, 4
        %v532 = vand.u32 %v530, 15
        %v533 = vsub.s32 0, %v532
        %v534 = vsel %vm528, %v533, %v532
        %vm535 = vcmp.lt.s32.totalorder %v367, 0
        %v536 = vsub.s32 0, %v367
        %v537 = vsel %vm535, %v536, %v367
        %v538 = vshrl.u32 %v537, 4
        %v539 = vand.u32 %v537, 15
        %v540 = vsub.s32 0, %v539
        %v541 = vsel %vm535, %v540, %v539
        %vm542 = vcmp.lt.s32.totalorder %v368, 0
        %v543 = vsub.s32 0, %v368
        %v544 = vsel %vm542, %v543, %v368
        %v545 = vshrl.u32 %v544, 4
        %v546 = vand.u32 %v544, 15
        %v547 = vsub.s32 0, %v546
        %v548 = vsel %vm542, %v547, %v546
        %vm549 = vcmp.lt.s32.totalorder %v369, 0
        %v550 = vsub.s32 0, %v369
        %v551 = vsel %vm549, %v550, %v369
        %v552 = vshrl.u32 %v551, 4
        %v553 = vand.u32 %v551, 15
        %v554 = vsub.s32 0, %v553
        %v555 = vsel %vm549, %v554, %v553
        %vm556 = vcmp.lt.s32.totalorder %v370, 0
        %v557 = vsub.s32 0, %v370
        %v558 = vsel %vm556, %v557, %v370
        %v559 = vshrl.u32 %v558, 4
        %v560 = vand.u32 %v558, 15
        %v561 = vsub.s32 0, %v560
        %v562 = vsel %vm556, %v561, %v560
        %vm563 = vcmp.lt.s32.totalorder %v371, 0
        %v564 = vsub.s32 0, %v371
        %v565 = vsel %vm563, %v564, %v371
        %v566 = vshrl.u32 %v565, 4
        %v567 = vand.u32 %v565, 15
        %v568 = vsub.s32 0, %v567
        %v569 = vsel %vm563, %v568, %v567
        %vm570 = vcmp.lt.s32.totalorder %v372, 0
        %v571 = vsub.s32 0, %v372
        %v572 = vsel %vm570, %v571, %v372
        %v573 = vshrl.u32 %v572, 4
        %v574 = vand.u32 %v572, 15
        %v575 = vsub.s32 0, %v574
        %v576 = vsel %vm570, %v575, %v574
        %vm577 = vcmp.lt.s32.totalorder %v373, 0
        %v578 = vsub.s32 0, %v373
        %v579 = vsel %vm577, %v578, %v373
        %v580 = vshrl.u32 %v579, 4
        %v581 = vand.u32 %v579, 15
        %v582 = vsub.s32 0, %v581
        %v583 = vsel %vm577, %v582, %v581
        %vm584 = vcmp.lt.s32.totalorder %v374, 0
        %v585 = vsub.s32 0, %v374
        %v586 = vsel %vm584, %v585, %v374
        %v587 = vshrl.u32 %v586, 4
        %v588 = vand.u32 %v586, 15
        %v589 = vsub.s32 0, %v588
        %v590 = vsel %vm584, %v589, %v588
        %vm591 = vcmp.lt.s32.totalorder %v375, 0
        %v592 = vsub.s32 0, %v375
        %v593 = vsel %vm591, %v592, %v375
        %v594 = vshrl.u32 %v593, 4
        %v595 = vand.u32 %v593, 15
        %v596 = vsub.s32 0, %v595
        %v597 = vsel %vm591, %v596, %v595
        %vm598 = vcmp.lt.s32.totalorder %v376, 0
        %v599 = vsub.s32 0, %v376
        %v600 = vsel %vm598, %v599, %v376
        %v601 = vshrl.u32 %v600, 4
        %v602 = vand.u32 %v600, 15
        %v603 = vsub.s32 0, %v602
        %v604 = vsel %vm598, %v603, %v602
        %vm605 = vcmp.lt.s32.totalorder %v377, 0
        %v606 = vsub.s32 0, %v377
        %v607 = vsel %vm605, %v606, %v377
        %v608 = vshrl.u32 %v607, 4
        %v609 = vand.u32 %v607, 15
        %v610 = vsub.s32 0, %v609
        %v611 = vsel %vm605, %v610, %v609
        %vm612 = vcmp.lt.s32.totalorder %v378, 0
        %v613 = vsub.s32 0, %v378
        %v614 = vsel %vm612, %v613, %v378
        %v615 = vshrl.u32 %v614, 4
        %v616 = vand.u32 %v614, 15
        %v617 = vsub.s32 0, %v616
        %v618 = vsel %vm612, %v617, %v616
        %vm619 = vcmp.lt.s32.totalorder %v379, 0
        %v620 = vsub.s32 0, %v379
        %v621 = vsel %vm619, %v620, %v379
        %v622 = vshrl.u32 %v621, 4
        %v623 = vand.u32 %v621, 15
        %v624 = vsub.s32 0, %v623
        %v625 = vsel %vm619, %v624, %v623
        %vm626 = vcmp.lt.s32.totalorder %v380, 0
        %v627 = vsub.s32 0, %v380
        %v628 = vsel %vm626, %v627, %v380
        %v629 = vshrl.u32 %v628, 4
        %v630 = vand.u32 %v628, 15
        %v631 = vsub.s32 0, %v630
        %v632 = vsel %vm626, %v631, %v630
        %vm633 = vcmp.lt.s32.totalorder %v381, 0
        %v634 = vsub.s32 0, %v381
        %v635 = vsel %vm633, %v634, %v381
        %v636 = vshrl.u32 %v635, 4
        %v637 = vand.u32 %v635, 15
        %v638 = vsub.s32 0, %v637
        %v639 = vsel %vm633, %v638, %v637
        %vm640 = vcmp.lt.s32.totalorder %v382, 0
        %v641 = vsub.s32 0, %v382
        %v642 = vsel %vm640, %v641, %v382
        %v643 = vshrl.u32 %v642, 4
        %v644 = vand.u32 %v642, 15
        %v645 = vsub.s32 0, %v644
        %v646 = vsel %vm640, %v645, %v644
        %vm647 = vcmp.lt.s32.totalorder %v383, 0
        %v648 = vsub.s32 0, %v383
        %v649 = vsel %vm647, %v648, %v383
        %v650 = vshrl.u32 %v649, 4
        %v651 = vand.u32 %v649, 15
        %v652 = vsub.s32 0, %v651
        %v653 = vsel %vm647, %v652, %v651
        %vm654 = vcmp.lt.s32.totalorder %v384, 0
        %v655 = vsub.s32 0, %v384
        %v656 = vsel %vm654, %v655, %v384
        %v657 = vshrl.u32 %v656, 4
        %v658 = vand.u32 %v656, 15
        %v659 = vsub.s32 0, %v658
        %v660 = vsel %vm654, %v659, %v658
        %vm661 = vcmp.lt.s32.totalorder %v385, 0
        %v662 = vsub.s32 0, %v385
        %v663 = vsel %vm661, %v662, %v385
        %v664 = vshrl.u32 %v663, 4
        %v665 = vand.u32 %v663, 15
        %v666 = vsub.s32 0, %v665
        %v667 = vsel %vm661, %v666, %v665
        %vm668 = vcmp.lt.s32.totalorder %v386, 0
        %v669 = vsub.s32 0, %v386
        %v670 = vsel %vm668, %v669, %v386
        %v671 = vshrl.u32 %v670, 4
        %v672 = vand.u32 %v670, 15
        %v673 = vsub.s32 0, %v672
        %v674 = vsel %vm668, %v673, %v672
        %vm675 = vcmp.ne.s32.totalorder %v457, 0
        %vm676 = vcmp.ne.s32.totalorder %v464, 0
        %vm677 = vcmp.ne.s32.totalorder %v471, 0
        %vm678 = vcmp.ne.s32.totalorder %v478, 0
        %vm679 = vcmp.ne.s32.totalorder %v485, 0
        %vm680 = vcmp.ne.s32.totalorder %v492, 0
        %vm681 = vcmp.ne.s32.totalorder %v499, 0
        %vm682 = vcmp.ne.s32.totalorder %v506, 0
        %vm683 = vcmp.ne.s32.totalorder %v513, 0
        %vm684 = vcmp.ne.s32.totalorder %v520, 0
        %vm685 = vcmp.ne.s32.totalorder %v527, 0
        %vm686 = vcmp.ne.s32.totalorder %v534, 0
        %vm687 = vcmp.ne.s32.totalorder %v541, 0
        %vm688 = vcmp.ne.s32.totalorder %v548, 0
        %vm689 = vcmp.ne.s32.totalorder %v555, 0
        %vm690 = vcmp.ne.s32.totalorder %v562, 0
        %vm691 = vcmp.ne.s32.totalorder %v569, 0
        %vm692 = vcmp.ne.s32.totalorder %v576, 0
        %vm693 = vcmp.ne.s32.totalorder %v583, 0
        %vm694 = vcmp.ne.s32.totalorder %v590, 0
        %vm695 = vcmp.ne.s32.totalorder %v597, 0
        %vm696 = vcmp.ne.s32.totalorder %v604, 0
        %vm697 = vcmp.ne.s32.totalorder %v611, 0
        %vm698 = vcmp.ne.s32.totalorder %v618, 0
        %vm699 = vcmp.ne.s32.totalorder %v625, 0
        %vm700 = vcmp.ne.s32.totalorder %v632, 0
        %vm701 = vcmp.ne.s32.totalorder %v639, 0
        %vm702 = vcmp.ne.s32.totalorder %v646, 0
        %vm703 = vcmp.ne.s32.totalorder %v653, 0
        %vm704 = vcmp.ne.s32.totalorder %v660, 0
        %vm705 = vcmp.ne.s32.totalorder %v667, 0
        %vm706 = vcmp.ne.s32.totalorder %v674, 0
        %vm707 = vcmp.lt.s32.totalorder %v457, 0
        %vm708 = vcmp.lt.s32.totalorder %v464, 0
        %vm709 = vcmp.lt.s32.totalorder %v471, 0
        %vm710 = vcmp.lt.s32.totalorder %v478, 0
        %vm711 = vcmp.lt.s32.totalorder %v485, 0
        %vm712 = vcmp.lt.s32.totalorder %v492, 0
        %vm713 = vcmp.lt.s32.totalorder %v499, 0
        %vm714 = vcmp.lt.s32.totalorder %v506, 0
        %vm715 = vcmp.lt.s32.totalorder %v513, 0
        %vm716 = vcmp.lt.s32.totalorder %v520, 0
        %vm717 = vcmp.lt.s32.totalorder %v527, 0
        %vm718 = vcmp.lt.s32.totalorder %v534, 0
        %vm719 = vcmp.lt.s32.totalorder %v541, 0
        %vm720 = vcmp.lt.s32.totalorder %v548, 0
        %vm721 = vcmp.lt.s32.totalorder %v555, 0
        %vm722 = vcmp.lt.s32.totalorder %v562, 0
        %vm723 = vcmp.lt.s32.totalorder %v569, 0
        %vm724 = vcmp.lt.s32.totalorder %v576, 0
        %vm725 = vcmp.lt.s32.totalorder %v583, 0
        %vm726 = vcmp.lt.s32.totalorder %v590, 0
        %vm727 = vcmp.lt.s32.totalorder %v597, 0
        %vm728 = vcmp.lt.s32.totalorder %v604, 0
        %vm729 = vcmp.lt.s32.totalorder %v611, 0
        %vm730 = vcmp.lt.s32.totalorder %v618, 0
        %vm731 = vcmp.lt.s32.totalorder %v625, 0
        %vm732 = vcmp.lt.s32.totalorder %v632, 0
        %vm733 = vcmp.lt.s32.totalorder %v639, 0
        %vm734 = vcmp.lt.s32.totalorder %v646, 0
        %vm735 = vcmp.lt.s32.totalorder %v653, 0
        %vm736 = vcmp.lt.s32.totalorder %v660, 0
        %vm737 = vcmp.lt.s32.totalorder %v667, 0
        %vm738 = vcmp.lt.s32.totalorder %v674, 0
        %vm739 = vmand %vm707, %vm675
        %vm740 = vmand %vm708, %vm676
        %vm741 = vmand %vm709, %vm677
        %vm742 = vmand %vm710, %vm678
        %vm743 = vmand %vm711, %vm679
        %vm744 = vmand %vm712, %vm680
        %vm745 = vmand %vm713, %vm681
        %vm746 = vmand %vm714, %vm682
        %vm747 = vmand %vm715, %vm683
        %vm748 = vmand %vm716, %vm684
        %vm749 = vmand %vm717, %vm685
        %vm750 = vmand %vm718, %vm686
        %vm751 = vmand %vm719, %vm687
        %vm752 = vmand %vm720, %vm688
        %vm753 = vmand %vm721, %vm689
        %vm754 = vmand %vm722, %vm690
        %vm755 = vmand %vm723, %vm691
        %vm756 = vmand %vm724, %vm692
        %vm757 = vmand %vm725, %vm693
        %vm758 = vmand %vm726, %vm694
        %vm759 = vmand %vm727, %vm695
        %vm760 = vmand %vm728, %vm696
        %vm761 = vmand %vm729, %vm697
        %vm762 = vmand %vm730, %vm698
        %vm763 = vmand %vm731, %vm699
        %vm764 = vmand %vm732, %vm700
        %vm765 = vmand %vm733, %vm701
        %vm766 = vmand %vm734, %vm702
        %vm767 = vmand %vm735, %vm703
        %vm768 = vmand %vm736, %vm704
        %vm769 = vmand %vm737, %vm705
        %vm770 = vmand %vm738, %vm706
        %v771 = vadd.s32 %v457, 16
        %v772 = vadd.s32 %v464, 16
        %v773 = vadd.s32 %v471, 16
        %v774 = vadd.s32 %v478, 16
        %v775 = vadd.s32 %v485, 16
        %v776 = vadd.s32 %v492, 16
        %v777 = vadd.s32 %v499, 16
        %v778 = vadd.s32 %v506, 16
        %v779 = vadd.s32 %v513, 16
        %v780 = vadd.s32 %v520, 16
        %v781 = vadd.s32 %v527, 16
        %v782 = vadd.s32 %v534, 16
        %v783 = vadd.s32 %v541, 16
        %v784 = vadd.s32 %v548, 16
        %v785 = vadd.s32 %v555, 16
        %v786 = vadd.s32 %v562, 16
        %v787 = vadd.s32 %v569, 16
        %v788 = vadd.s32 %v576, 16
        %v789 = vadd.s32 %v583, 16
        %v790 = vadd.s32 %v590, 16
        %v791 = vadd.s32 %v597, 16
        %v792 = vadd.s32 %v604, 16
        %v793 = vadd.s32 %v611, 16
        %v794 = vadd.s32 %v618, 16
        %v795 = vadd.s32 %v625, 16
        %v796 = vadd.s32 %v632, 16
        %v797 = vadd.s32 %v639, 16
        %v798 = vadd.s32 %v646, 16
        %v799 = vadd.s32 %v653, 16
        %v800 = vadd.s32 %v660, 16
        %v801 = vadd.s32 %v667, 16
        %v802 = vadd.s32 %v674, 16
        %v803 = vsel %vm739, %v771, %v457
        %v804 = vsel %vm740, %v772, %v464
        %v805 = vsel %vm741, %v773, %v471
        %v806 = vsel %vm742, %v774, %v478
        %v807 = vsel %vm743, %v775, %v485
        %v808 = vsel %vm744, %v776, %v492
        %v809 = vsel %vm745, %v777, %v499
        %v810 = vsel %vm746, %v778, %v506
        %v811 = vsel %vm747, %v779, %v513
        %v812 = vsel %vm748, %v780, %v520
        %v813 = vsel %vm749, %v781, %v527
        %v814 = vsel %vm750, %v782, %v534
        %v815 = vsel %vm751, %v783, %v541
        %v816 = vsel %vm752, %v784, %v548
        %v817 = vsel %vm753, %v785, %v555
        %v818 = vsel %vm754, %v786, %v562
        %v819 = vsel %vm755, %v787, %v569
        %v820 = vsel %vm756, %v788, %v576
        %v821 = vsel %vm757, %v789, %v583
        %v822 = vsel %vm758, %v790, %v590
        %v823 = vsel %vm759, %v791, %v597
        %v824 = vsel %vm760, %v792, %v604
        %v825 = vsel %vm761, %v793, %v611
        %v826 = vsel %vm762, %v794, %v618
        %v827 = vsel %vm763, %v795, %v625
        %v828 = vsel %vm764, %v796, %v632
        %v829 = vsel %vm765, %v797, %v639
        %v830 = vsel %vm766, %v798, %v646
        %v831 = vsel %vm767, %v799, %v653
        %v832 = vsel %vm768, %v800, %v660
        %v833 = vsel %vm769, %v801, %v667
        %v834 = vsel %vm770, %v802, %v674
        %vm835 = vcmp.ne.s32.totalorder %v803, 0
        %vm836 = vcmp.ne.s32.totalorder %v804, 0
        %vm837 = vcmp.ne.s32.totalorder %v805, 0
        %vm838 = vcmp.ne.s32.totalorder %v806, 0
        %vm839 = vcmp.ne.s32.totalorder %v807, 0
        %vm840 = vcmp.ne.s32.totalorder %v808, 0
        %vm841 = vcmp.ne.s32.totalorder %v809, 0
        %vm842 = vcmp.ne.s32.totalorder %v810, 0
        %vm843 = vcmp.ne.s32.totalorder %v811, 0
        %vm844 = vcmp.ne.s32.totalorder %v812, 0
        %vm845 = vcmp.ne.s32.totalorder %v813, 0
        %vm846 = vcmp.ne.s32.totalorder %v814, 0
        %vm847 = vcmp.ne.s32.totalorder %v815, 0
        %vm848 = vcmp.ne.s32.totalorder %v816, 0
        %vm849 = vcmp.ne.s32.totalorder %v817, 0
        %vm850 = vcmp.ne.s32.totalorder %v818, 0
        %vm851 = vcmp.ne.s32.totalorder %v819, 0
        %vm852 = vcmp.ne.s32.totalorder %v820, 0
        %vm853 = vcmp.ne.s32.totalorder %v821, 0
        %vm854 = vcmp.ne.s32.totalorder %v822, 0
        %vm855 = vcmp.ne.s32.totalorder %v823, 0
        %vm856 = vcmp.ne.s32.totalorder %v824, 0
        %vm857 = vcmp.ne.s32.totalorder %v825, 0
        %vm858 = vcmp.ne.s32.totalorder %v826, 0
        %vm859 = vcmp.ne.s32.totalorder %v827, 0
        %vm860 = vcmp.ne.s32.totalorder %v828, 0
        %vm861 = vcmp.ne.s32.totalorder %v829, 0
        %vm862 = vcmp.ne.s32.totalorder %v830, 0
        %vm863 = vcmp.ne.s32.totalorder %v831, 0
        %vm864 = vcmp.ne.s32.totalorder %v832, 0
        %vm865 = vcmp.ne.s32.totalorder %v833, 0
        %vm866 = vcmp.ne.s32.totalorder %v834, 0
        %vm867 = vcmp.ne.s32.totalorder %v803, 15
        %vm868 = vcmp.ne.s32.totalorder %v804, 15
        %vm869 = vcmp.ne.s32.totalorder %v805, 15
        %vm870 = vcmp.ne.s32.totalorder %v806, 15
        %vm871 = vcmp.ne.s32.totalorder %v807, 15
        %vm872 = vcmp.ne.s32.totalorder %v808, 15
        %vm873 = vcmp.ne.s32.totalorder %v809, 15
        %vm874 = vcmp.ne.s32.totalorder %v810, 15
        %vm875 = vcmp.ne.s32.totalorder %v811, 15
        %vm876 = vcmp.ne.s32.totalorder %v812, 15
        %vm877 = vcmp.ne.s32.totalorder %v813, 15
        %vm878 = vcmp.ne.s32.totalorder %v814, 15
        %vm879 = vcmp.ne.s32.totalorder %v815, 15
        %vm880 = vcmp.ne.s32.totalorder %v816, 15
        %vm881 = vcmp.ne.s32.totalorder %v817, 15
        %vm882 = vcmp.ne.s32.totalorder %v818, 15
        %vm883 = vcmp.ne.s32.totalorder %v819, 15
        %vm884 = vcmp.ne.s32.totalorder %v820, 15
        %vm885 = vcmp.ne.s32.totalorder %v821, 15
        %vm886 = vcmp.ne.s32.totalorder %v822, 15
        %vm887 = vcmp.ne.s32.totalorder %v823, 15
        %vm888 = vcmp.ne.s32.totalorder %v824, 15
        %vm889 = vcmp.ne.s32.totalorder %v825, 15
        %vm890 = vcmp.ne.s32.totalorder %v826, 15
        %vm891 = vcmp.ne.s32.totalorder %v827, 15
        %vm892 = vcmp.ne.s32.totalorder %v828, 15
        %vm893 = vcmp.ne.s32.totalorder %v829, 15
        %vm894 = vcmp.ne.s32.totalorder %v830, 15
        %vm895 = vcmp.ne.s32.totalorder %v831, 15
        %vm896 = vcmp.ne.s32.totalorder %v832, 15
        %vm897 = vcmp.ne.s32.totalorder %v833, 15
        %vm898 = vcmp.ne.s32.totalorder %v834, 15
        %v899 = vld [vmem:[%s353] sm:$0xf]
        %v900 = vld [vmem:[%s353 + $0x4] sm:$0xf]
        %v901 = vld [vmem:[%s353 + $0x8] sm:$0xf]
        %v902 = vld [vmem:[%s353 + $0xc] sm:$0xf]
        %v903 = vld [vmem:[%s353 + $0x10] sm:$0xf]
        %v904 = vld [vmem:[%s353 + $0x14] sm:$0xf]
        %v905 = vld [vmem:[%s353 + $0x18] sm:$0xf]
        %v906 = vld [vmem:[%s353 + $0x1c] sm:$0xf]
        %v907 = vld [vmem:[%s353 + $0x20] sm:$0xf]
        %v908 = vld [vmem:[%s353 + $0x24] sm:$0xf]
        %v909 = vld [vmem:[%s353 + $0x28] sm:$0xf]
        %v910 = vld [vmem:[%s353 + $0x2c] sm:$0xf]
        %v911 = vld [vmem:[%s353 + $0x30] sm:$0xf]
        %v912 = vld [vmem:[%s353 + $0x34] sm:$0xf]
        %v913 = vld [vmem:[%s353 + $0x38] sm:$0xf]
        %v914 = vld [vmem:[%s353 + $0x3c] sm:$0xf]
        %v915 = vld [vmem:[%s353 + $0x40] sm:$0xf]
        %v916 = vld [vmem:[%s353 + $0x44] sm:$0xf]
        %v917 = vld [vmem:[%s353 + $0x48] sm:$0xf]
        %v918 = vld [vmem:[%s353 + $0x4c] sm:$0xf]
        %v919 = vld [vmem:[%s353 + $0x50] sm:$0xf]
        %v920 = vld [vmem:[%s353 + $0x54] sm:$0xf]
        %v921 = vld [vmem:[%s353 + $0x58] sm:$0xf]
        %v922 = vld [vmem:[%s353 + $0x5c] sm:$0xf]
        %v923 = vld [vmem:[%s353 + $0x60] sm:$0xf]
        %v924 = vld [vmem:[%s353 + $0x64] sm:$0xf]
        %v925 = vld [vmem:[%s353 + $0x68] sm:$0xf]
        %v926 = vld [vmem:[%s353 + $0x6c] sm:$0xf]
        %v927 = vld [vmem:[%s353 + $0x70] sm:$0xf]
        %v928 = vld [vmem:[%s353 + $0x74] sm:$0xf]
        %v929 = vld [vmem:[%s353 + $0x78] sm:$0xf]
        %v930 = vld [vmem:[%s353 + $0x7c] sm:$0xf]
        %v931 = vunpack.c.l.bf16 %v899
        %v932 = vunpack.c.l.bf16 %v900
        %v933 = vunpack.c.l.bf16 %v901
        %v934 = vunpack.c.l.bf16 %v902
        %v935 = vunpack.c.l.bf16 %v903
        %v936 = vunpack.c.l.bf16 %v904
        %v937 = vunpack.c.l.bf16 %v905
        %v938 = vunpack.c.l.bf16 %v906
        %v939 = vunpack.c.l.bf16 %v907
        %v940 = vunpack.c.l.bf16 %v908
        %v941 = vunpack.c.l.bf16 %v909
        %v942 = vunpack.c.l.bf16 %v910
        %v943 = vunpack.c.l.bf16 %v911
        %v944 = vunpack.c.l.bf16 %v912
        %v945 = vunpack.c.l.bf16 %v913
        %v946 = vunpack.c.l.bf16 %v914
        %v947 = vunpack.c.l.bf16 %v915
        %v948 = vunpack.c.l.bf16 %v916
        %v949 = vunpack.c.l.bf16 %v917
        %v950 = vunpack.c.l.bf16 %v918
        %v951 = vunpack.c.l.bf16 %v919
        %v952 = vunpack.c.l.bf16 %v920
        %v953 = vunpack.c.l.bf16 %v921
        %v954 = vunpack.c.l.bf16 %v922
        %v955 = vunpack.c.l.bf16 %v923
        %v956 = vunpack.c.l.bf16 %v924
        %v957 = vunpack.c.l.bf16 %v925
        %v958 = vunpack.c.l.bf16 %v926
        %v959 = vunpack.c.l.bf16 %v927
        %v960 = vunpack.c.l.bf16 %v928
        %v961 = vunpack.c.l.bf16 %v929
        %v962 = vunpack.c.l.bf16 %v930
        %v963 = vld [vmem:[#allocation2] sm:$0xf]
        %v964 = vld [vmem:[#allocation2 + $0x4] sm:$0xf]
        %v965 = vld [vmem:[#allocation2 + $0x8] sm:$0xf]
        %v966 = vld [vmem:[#allocation2 + $0xc] sm:$0xf]
        %v967 = vld [vmem:[#allocation2 + $0x10] sm:$0xf]
        %v968 = vld [vmem:[#allocation2 + $0x14] sm:$0xf]
        %v969 = vld [vmem:[#allocation2 + $0x18] sm:$0xf]
        %v970 = vld [vmem:[#allocation2 + $0x1c] sm:$0xf]
        %v971 = vld [vmem:[#allocation2 + $0x20] sm:$0xf]
        %v972 = vld [vmem:[#allocation2 + $0x24] sm:$0xf]
        %v973 = vld [vmem:[#allocation2 + $0x28] sm:$0xf]
        %v974 = vld [vmem:[#allocation2 + $0x2c] sm:$0xf]
        %v975 = vld [vmem:[#allocation2 + $0x30] sm:$0xf]
        %v976 = vld [vmem:[#allocation2 + $0x34] sm:$0xf]
        %v977 = vld [vmem:[#allocation2 + $0x38] sm:$0xf]
        %v978 = vld [vmem:[#allocation2 + $0x3c] sm:$0xf]
        %v1011 = vunpack.c.l.b16 %v899
        %v1012 = vunpack.c.l.b16 %v900
        %v1013 = vunpack.c.l.b16 %v901
        %v1014 = vunpack.c.l.b16 %v902
        %v1015 = vunpack.c.l.b16 %v903
        %v1016 = vunpack.c.l.b16 %v904
        %v1017 = vunpack.c.l.b16 %v905
        %v1018 = vunpack.c.l.b16 %v906
        %v1019 = vunpack.c.l.b16 %v907
        %v1020 = vunpack.c.l.b16 %v908
        %v1021 = vunpack.c.l.b16 %v909
        %v1022 = vunpack.c.l.b16 %v910
        %v1023 = vunpack.c.l.b16 %v911
        %v1024 = vunpack.c.l.b16 %v912
        %v1025 = vunpack.c.l.b16 %v913
        %v1026 = vunpack.c.l.b16 %v914
        %v1027 = vunpack.c.l.b16 %v915
        %v1028 = vunpack.c.l.b16 %v916
        %v1029 = vunpack.c.l.b16 %v917
        %v1030 = vunpack.c.l.b16 %v918
        %v1031 = vunpack.c.l.b16 %v919
        %v1032 = vunpack.c.l.b16 %v920
        %v1033 = vunpack.c.l.b16 %v921
        %v1034 = vunpack.c.l.b16 %v922
        %v1035 = vunpack.c.l.b16 %v923
        %v1036 = vunpack.c.l.b16 %v924
        %v1037 = vunpack.c.l.b16 %v925
        %v1038 = vunpack.c.l.b16 %v926
        %v1039 = vunpack.c.l.b16 %v927
        %v1040 = vunpack.c.l.b16 %v928
        %v1041 = vunpack.c.l.b16 %v929
        %v1042 = vunpack.c.l.b16 %v930
        %v1043 = vpack.c.b16 %v1012, %v1011
        %v1044 = vpack.c.b16 %v1014, %v1013
        %v1045 = vpack.c.b16 %v1016, %v1015
        %v1046 = vpack.c.b16 %v1018, %v1017
        %v1047 = vpack.c.b16 %v1020, %v1019
        %v1048 = vpack.c.b16 %v1022, %v1021
        %v1049 = vpack.c.b16 %v1024, %v1023
        %v1050 = vpack.c.b16 %v1026, %v1025
        %v1051 = vpack.c.b16 %v1028, %v1027
        %v1052 = vpack.c.b16 %v1030, %v1029
        %v1053 = vpack.c.b16 %v1032, %v1031
        %v1054 = vpack.c.b16 %v1034, %v1033
        %v1055 = vpack.c.b16 %v1036, %v1035
        %v1056 = vpack.c.b16 %v1038, %v1037
        %v1057 = vpack.c.b16 %v1040, %v1039
        %v1058 = vpack.c.b16 %v1042, %v1041
        %v1091 = vunpack.c.l.b16 %v963
        %v1092 = vunpack.c.l.b16 %v964
        %v1093 = vunpack.c.l.b16 %v965
        %v1094 = vunpack.c.l.b16 %v966
        %v1095 = vunpack.c.l.b16 %v967
        %v1096 = vunpack.c.l.b16 %v968
        %v1097 = vunpack.c.l.b16 %v969
        %v1098 = vunpack.c.l.b16 %v970
        %v1099 = vunpack.c.l.b16 %v971
        %v1100 = vunpack.c.l.b16 %v972
        %v1101 = vunpack.c.l.b16 %v973
        %v1102 = vunpack.c.l.b16 %v974
        %v1103 = vunpack.c.l.b16 %v975
        %v1104 = vunpack.c.l.b16 %v976
        %v1105 = vunpack.c.l.b16 %v977
        %v1106 = vunpack.c.l.b16 %v978
        %v1107 = vpack.c.b16 %v1092, %v1091
        %v1108 = vpack.c.b16 %v1094, %v1093
        %v1109 = vpack.c.b16 %v1096, %v1095
        %v1110 = vpack.c.b16 %v1098, %v1097
        %v1111 = vpack.c.b16 %v1100, %v1099
        %v1112 = vpack.c.b16 %v1102, %v1101
        %v1113 = vpack.c.b16 %v1104, %v1103
        %v1114 = vpack.c.b16 %v1106, %v1105
        %1123 = vmatpush.bf16.msra.mxu0 %v1114
        %1124 = vmatpush.bf16.msra.mxu0 %v1113
        %1125 = vmatpush.bf16.msra.mxu0 %v1112
        %1126 = vmatpush.bf16.msra.mxu0 %v1111
        %1127 = vmatpush.bf16.msra.mxu0 %v1110
        %1128 = vmatpush.bf16.msra.mxu0 %v1109
        %1129 = vmatpush.bf16.msra.mxu0 %v1108
        %1130 = vmatpush.bf16.msra.mxu0 %v1107
        %1131 = vmatmul.bf16.gmra.mxu0 %v1043
        %v1132 = vpop.f32.mrf.mxu0
        %v1133 = vadd.f32 0.0, %v1132
        %v1134 = vpop.f32.mrf.mxu0
        %v1135 = vadd.f32 0.0, %v1134
        %1136 = vmatmul.bf16.gmra.mxu0 %v1044
        %v1137 = vpop.f32.mrf.mxu0
        %v1138 = vadd.f32 0.0, %v1137
        %v1139 = vpop.f32.mrf.mxu0
        %v1140 = vadd.f32 0.0, %v1139
        %1141 = vmatmul.bf16.gmra.mxu0 %v1045
        %v1142 = vpop.f32.mrf.mxu0
        %v1143 = vadd.f32 0.0, %v1142
        %v1144 = vpop.f32.mrf.mxu0
        %v1145 = vadd.f32 0.0, %v1144
        %1146 = vmatmul.bf16.gmra.mxu0 %v1046
        %v1147 = vpop.f32.mrf.mxu0
        %v1148 = vadd.f32 0.0, %v1147
        %v1149 = vpop.f32.mrf.mxu0
        %v1150 = vadd.f32 0.0, %v1149
        %1151 = vmatmul.bf16.gmra.mxu0 %v1047
        %v1152 = vpop.f32.mrf.mxu0
        %v1153 = vadd.f32 0.0, %v1152
        %v1154 = vpop.f32.mrf.mxu0
        %v1155 = vadd.f32 0.0, %v1154
        %1156 = vmatmul.bf16.gmra.mxu0 %v1048
        %v1157 = vpop.f32.mrf.mxu0
        %v1158 = vadd.f32 0.0, %v1157
        %v1159 = vpop.f32.mrf.mxu0
        %v1160 = vadd.f32 0.0, %v1159
        %1161 = vmatmul.bf16.gmra.mxu0 %v1049
        %v1162 = vpop.f32.mrf.mxu0
        %v1163 = vadd.f32 0.0, %v1162
        %v1164 = vpop.f32.mrf.mxu0
        %v1165 = vadd.f32 0.0, %v1164
        %1166 = vmatmul.bf16.gmra.mxu0 %v1050
        %v1167 = vpop.f32.mrf.mxu0
        %v1168 = vadd.f32 0.0, %v1167
        %v1169 = vpop.f32.mrf.mxu0
        %v1170 = vadd.f32 0.0, %v1169
        %1171 = vmatmul.bf16.gmra.mxu0 %v1051
        %v1172 = vpop.f32.mrf.mxu0
        %v1173 = vadd.f32 0.0, %v1172
        %v1174 = vpop.f32.mrf.mxu0
        %v1175 = vadd.f32 0.0, %v1174
        %1176 = vmatmul.bf16.gmra.mxu0 %v1052
        %v1177 = vpop.f32.mrf.mxu0
        %v1178 = vadd.f32 0.0, %v1177
        %v1179 = vpop.f32.mrf.mxu0
        %v1180 = vadd.f32 0.0, %v1179
        %1181 = vmatmul.bf16.gmra.mxu0 %v1053
        %v1182 = vpop.f32.mrf.mxu0
        %v1183 = vadd.f32 0.0, %v1182
        %v1184 = vpop.f32.mrf.mxu0
        %v1185 = vadd.f32 0.0, %v1184
        %1186 = vmatmul.bf16.gmra.mxu0 %v1054
        %v1187 = vpop.f32.mrf.mxu0
        %v1188 = vadd.f32 0.0, %v1187
        %v1189 = vpop.f32.mrf.mxu0
        %v1190 = vadd.f32 0.0, %v1189
        %1191 = vmatmul.bf16.gmra.mxu0 %v1055
        %v1192 = vpop.f32.mrf.mxu0
        %v1193 = vadd.f32 0.0, %v1192
        %v1194 = vpop.f32.mrf.mxu0
        %v1195 = vadd.f32 0.0, %v1194
        %1196 = vmatmul.bf16.gmra.mxu0 %v1056
        %v1197 = vpop.f32.mrf.mxu0
        %v1198 = vadd.f32 0.0, %v1197
        %v1199 = vpop.f32.mrf.mxu0
        %v1200 = vadd.f32 0.0, %v1199
        %1201 = vmatmul.bf16.gmra.mxu0 %v1057
        %v1202 = vpop.f32.mrf.mxu0
        %v1203 = vadd.f32 0.0, %v1202
        %v1204 = vpop.f32.mrf.mxu0
        %v1205 = vadd.f32 0.0, %v1204
        %1206 = vmatmul.bf16.gmra.mxu0 %v1058
        %v1207 = vpop.f32.mrf.mxu0
        %v1208 = vadd.f32 0.0, %v1207
        %v1209 = vpop.f32.mrf.mxu0
        %v1210 = vadd.f32 0.0, %v1209
        %1211 = vdwg.mxu0
        %v1212 = vrot.slane %v1133, 7
        %v1213 = vrot.slane %v1135, 7
        %v1214 = vrot.slane %v1138, 7
        %v1215 = vrot.slane %v1140, 7
        %v1216 = vrot.slane %v1143, 7
        %v1217 = vrot.slane %v1145, 7
        %v1218 = vrot.slane %v1148, 7
        %v1219 = vrot.slane %v1150, 7
        %v1220 = vrot.slane %v1153, 7
        %v1221 = vrot.slane %v1155, 7
        %v1222 = vrot.slane %v1158, 7
        %v1223 = vrot.slane %v1160, 7
        %v1224 = vrot.slane %v1163, 7
        %v1225 = vrot.slane %v1165, 7
        %v1226 = vrot.slane %v1168, 7
        %v1227 = vrot.slane %v1170, 7
        %v1228 = vrot.slane %v1173, 7
        %v1229 = vrot.slane %v1175, 7
        %v1230 = vrot.slane %v1178, 7
        %v1231 = vrot.slane %v1180, 7
        %v1232 = vrot.slane %v1183, 7
        %v1233 = vrot.slane %v1185, 7
        %v1234 = vrot.slane %v1188, 7
        %v1235 = vrot.slane %v1190, 7
        %v1236 = vrot.slane %v1193, 7
        %v1237 = vrot.slane %v1195, 7
        %v1238 = vrot.slane %v1198, 7
        %v1239 = vrot.slane %v1200, 7
        %v1240 = vrot.slane %v1203, 7
        %v1241 = vrot.slane %v1205, 7
        %v1242 = vrot.slane %v1208, 7
        %v1243 = vrot.slane %v1210, 7
        %vm1244 = vcmp.lt.s32.totalorder %v355, 1
        %v1245 = vsel %vm1244, %v1242, %v1243
        %v1246 = vsel %vm1244, %v1241, %v1242
        %v1247 = vsel %vm1244, %v1240, %v1241
        %v1248 = vsel %vm1244, %v1239, %v1240
        %v1249 = vsel %vm1244, %v1238, %v1239
        %v1250 = vsel %vm1244, %v1237, %v1238
        %v1251 = vsel %vm1244, %v1236, %v1237
        %v1252 = vsel %vm1244, %v1235, %v1236
        %v1253 = vsel %vm1244, %v1234, %v1235
        %v1254 = vsel %vm1244, %v1233, %v1234
        %v1255 = vsel %vm1244, %v1232, %v1233
        %v1256 = vsel %vm1244, %v1231, %v1232
        %v1257 = vsel %vm1244, %v1230, %v1231
        %v1258 = vsel %vm1244, %v1229, %v1230
        %v1259 = vsel %vm1244, %v1228, %v1229
        %v1260 = vsel %vm1244, %v1227, %v1228
        %v1261 = vsel %vm1244, %v1226, %v1227
        %v1262 = vsel %vm1244, %v1225, %v1226
        %v1263 = vsel %vm1244, %v1224, %v1225
        %v1264 = vsel %vm1244, %v1223, %v1224
        %v1265 = vsel %vm1244, %v1222, %v1223
        %v1266 = vsel %vm1244, %v1221, %v1222
        %v1267 = vsel %vm1244, %v1220, %v1221
        %v1268 = vsel %vm1244, %v1219, %v1220
        %v1269 = vsel %vm1244, %v1218, %v1219
        %v1270 = vsel %vm1244, %v1217, %v1218
        %v1271 = vsel %vm1244, %v1216, %v1217
        %v1272 = vsel %vm1244, %v1215, %v1216
        %v1273 = vsel %vm1244, %v1214, %v1215
        %v1274 = vsel %vm1244, %v1213, %v1214
        %v1275 = vsel %vm1244, %v1212, %v1213
        %v1276 = vsel %vm1244, %v1243, %v1212
        %vm1277 = vmand %vm387, %vm835
        %vm1278 = vmand %vm388, %vm836
        %vm1279 = vmand %vm389, %vm837
        %vm1280 = vmand %vm390, %vm838
        %vm1281 = vmand %vm391, %vm839
        %vm1282 = vmand %vm392, %vm840
        %vm1283 = vmand %vm393, %vm841
        %vm1284 = vmand %vm394, %vm842
        %vm1285 = vmand %vm395, %vm843
        %vm1286 = vmand %vm396, %vm844
        %vm1287 = vmand %vm397, %vm845
        %vm1288 = vmand %vm398, %vm846
        %vm1289 = vmand %vm399, %vm847
        %vm1290 = vmand %vm400, %vm848
        %vm1291 = vmand %vm401, %vm849
        %vm1292 = vmand %vm402, %vm850
        %vm1293 = vmand %vm403, %vm851
        %vm1294 = vmand %vm404, %vm852
        %vm1295 = vmand %vm405, %vm853
        %vm1296 = vmand %vm406, %vm854
        %vm1297 = vmand %vm407, %vm855
        %vm1298 = vmand %vm408, %vm856
        %vm1299 = vmand %vm409, %vm857
        %vm1300 = vmand %vm410, %vm858
        %vm1301 = vmand %vm411, %vm859
        %vm1302 = vmand %vm412, %vm860
        %vm1303 = vmand %vm413, %vm861
        %vm1304 = vmand %vm414, %vm862
        %vm1305 = vmand %vm415, %vm863
        %vm1306 = vmand %vm416, %vm864
        %vm1307 = vmand %vm417, %vm865
        %vm1308 = vmand %vm418, %vm866
        %v1309 = vsel %vm1277, 1, 0
        %v1310 = vsel %vm1278, 1, 0
        %v1311 = vsel %vm1279, 1, 0
        %v1312 = vsel %vm1280, 1, 0
        %v1313 = vsel %vm1281, 1, 0
        %v1314 = vsel %vm1282, 1, 0
        %v1315 = vsel %vm1283, 1, 0
        %v1316 = vsel %vm1284, 1, 0
        %v1317 = vsel %vm1285, 1, 0
        %v1318 = vsel %vm1286, 1, 0
        %v1319 = vsel %vm1287, 1, 0
        %v1320 = vsel %vm1288, 1, 0
        %v1321 = vsel %vm1289, 1, 0
        %v1322 = vsel %vm1290, 1, 0
        %v1323 = vsel %vm1291, 1, 0
        %v1324 = vsel %vm1292, 1, 0
        %v1325 = vsel %vm1293, 1, 0
        %v1326 = vsel %vm1294, 1, 0
        %v1327 = vsel %vm1295, 1, 0
        %v1328 = vsel %vm1296, 1, 0
        %v1329 = vsel %vm1297, 1, 0
        %v1330 = vsel %vm1298, 1, 0
        %v1331 = vsel %vm1299, 1, 0
        %v1332 = vsel %vm1300, 1, 0
        %v1333 = vsel %vm1301, 1, 0
        %v1334 = vsel %vm1302, 1, 0
        %v1335 = vsel %vm1303, 1, 0
        %v1336 = vsel %vm1304, 1, 0
        %v1337 = vsel %vm1305, 1, 0
        %v1338 = vsel %vm1306, 1, 0
        %v1339 = vsel %vm1307, 1, 0
        %v1340 = vsel %vm1308, 1, 0
        %vm1341 = vcmp.eq.s32.totalorder %v1309, 1
        %vm1342 = vcmp.eq.s32.totalorder %v1310, 1
        %vm1343 = vcmp.eq.s32.totalorder %v1311, 1
        %vm1344 = vcmp.eq.s32.totalorder %v1312, 1
        %vm1345 = vcmp.eq.s32.totalorder %v1313, 1
        %vm1346 = vcmp.eq.s32.totalorder %v1314, 1
        %vm1347 = vcmp.eq.s32.totalorder %v1315, 1
        %vm1348 = vcmp.eq.s32.totalorder %v1316, 1
        %vm1349 = vcmp.eq.s32.totalorder %v1317, 1
        %vm1350 = vcmp.eq.s32.totalorder %v1318, 1
        %vm1351 = vcmp.eq.s32.totalorder %v1319, 1
        %vm1352 = vcmp.eq.s32.totalorder %v1320, 1
        %vm1353 = vcmp.eq.s32.totalorder %v1321, 1
        %vm1354 = vcmp.eq.s32.totalorder %v1322, 1
        %vm1355 = vcmp.eq.s32.totalorder %v1323, 1
        %vm1356 = vcmp.eq.s32.totalorder %v1324, 1
        %vm1357 = vcmp.eq.s32.totalorder %v1325, 1
        %vm1358 = vcmp.eq.s32.totalorder %v1326, 1
        %vm1359 = vcmp.eq.s32.totalorder %v1327, 1
        %vm1360 = vcmp.eq.s32.totalorder %v1328, 1
        %vm1361 = vcmp.eq.s32.totalorder %v1329, 1
        %vm1362 = vcmp.eq.s32.totalorder %v1330, 1
        %vm1363 = vcmp.eq.s32.totalorder %v1331, 1
        %vm1364 = vcmp.eq.s32.totalorder %v1332, 1
        %vm1365 = vcmp.eq.s32.totalorder %v1333, 1
        %vm1366 = vcmp.eq.s32.totalorder %v1334, 1
        %vm1367 = vcmp.eq.s32.totalorder %v1335, 1
        %vm1368 = vcmp.eq.s32.totalorder %v1336, 1
        %vm1369 = vcmp.eq.s32.totalorder %v1337, 1
        %vm1370 = vcmp.eq.s32.totalorder %v1338, 1
        %vm1371 = vcmp.eq.s32.totalorder %v1339, 1
        %vm1372 = vcmp.eq.s32.totalorder %v1340, 1
        %v1373 = vsel %vm1341, %v1246, 0.0
        %v1374 = vsel %vm1342, %v1245, 0.0
        %v1375 = vsel %vm1343, %v1276, 0.0
        %v1376 = vsel %vm1344, %v1275, 0.0
        %v1377 = vsel %vm1345, %v1274, 0.0
        %v1378 = vsel %vm1346, %v1273, 0.0
        %v1379 = vsel %vm1347, %v1272, 0.0
        %v1380 = vsel %vm1348, %v1271, 0.0
        %v1381 = vsel %vm1349, %v1270, 0.0
        %v1382 = vsel %vm1350, %v1269, 0.0
        %v1383 = vsel %vm1351, %v1268, 0.0
        %v1384 = vsel %vm1352, %v1267, 0.0
        %v1385 = vsel %vm1353, %v1266, 0.0
        %v1386 = vsel %vm1354, %v1265, 0.0
        %v1387 = vsel %vm1355, %v1264, 0.0
        %v1388 = vsel %vm1356, %v1263, 0.0
        %v1389 = vsel %vm1357, %v1262, 0.0
        %v1390 = vsel %vm1358, %v1261, 0.0
        %v1391 = vsel %vm1359, %v1260, 0.0
        %v1392 = vsel %vm1360, %v1259, 0.0
        %v1393 = vsel %vm1361, %v1258, 0.0
        %v1394 = vsel %vm1362, %v1257, 0.0
        %v1395 = vsel %vm1363, %v1256, 0.0
        %v1396 = vsel %vm1364, %v1255, 0.0
        %v1397 = vsel %vm1365, %v1254, 0.0
        %v1398 = vsel %vm1366, %v1253, 0.0
        %v1399 = vsel %vm1367, %v1252, 0.0
        %v1400 = vsel %vm1368, %v1251, 0.0
        %v1401 = vsel %vm1369, %v1250, 0.0
        %v1402 = vsel %vm1370, %v1249, 0.0
        %v1403 = vsel %vm1371, %v1248, 0.0
        %v1404 = vsel %vm1372, %v1247, 0.0
        %v1405 = vpack.c.bf16 %v1374, %v1373
        %v1406 = vpack.c.bf16 %v1376, %v1375
        %v1407 = vpack.c.bf16 %v1378, %v1377
        %v1408 = vpack.c.bf16 %v1380, %v1379
        %v1409 = vpack.c.bf16 %v1382, %v1381
        %v1410 = vpack.c.bf16 %v1384, %v1383
        %v1411 = vpack.c.bf16 %v1386, %v1385
        %v1412 = vpack.c.bf16 %v1388, %v1387
        %v1413 = vpack.c.bf16 %v1390, %v1389
        %v1414 = vpack.c.bf16 %v1392, %v1391
        %v1415 = vpack.c.bf16 %v1394, %v1393
        %v1416 = vpack.c.bf16 %v1396, %v1395
        %v1417 = vpack.c.bf16 %v1398, %v1397
        %v1418 = vpack.c.bf16 %v1400, %v1399
        %v1419 = vpack.c.bf16 %v1402, %v1401
        %v1420 = vpack.c.bf16 %v1404, %v1403
        %v1421 = vld [vmem:[%s2] sm:$0xf]
        %v1422 = vld [vmem:[%s2 + $0x4] sm:$0xf]
        %v1423 = vld [vmem:[%s2 + $0x8] sm:$0xf]
        %v1424 = vld [vmem:[%s2 + $0xc] sm:$0xf]
        %v1425 = vld [vmem:[%s2 + $0x10] sm:$0xf]
        %v1426 = vld [vmem:[%s2 + $0x14] sm:$0xf]
        %v1427 = vld [vmem:[%s2 + $0x18] sm:$0xf]
        %v1428 = vld [vmem:[%s2 + $0x1c] sm:$0xf]
        %v1429 = vld [vmem:[%s2 + $0x20] sm:$0xf]
        %v1430 = vld [vmem:[%s2 + $0x24] sm:$0xf]
        %v1431 = vld [vmem:[%s2 + $0x28] sm:$0xf]
        %v1432 = vld [vmem:[%s2 + $0x2c] sm:$0xf]
        %v1433 = vld [vmem:[%s2 + $0x30] sm:$0xf]
        %v1434 = vld [vmem:[%s2 + $0x34] sm:$0xf]
        %v1435 = vld [vmem:[%s2 + $0x38] sm:$0xf]
        %v1436 = vld [vmem:[%s2 + $0x3c] sm:$0xf]
        %v1437 = vsel %vm387, 1, 0
        %v1438 = vsel %vm388, 1, 0
        %v1439 = vsel %vm389, 1, 0
        %v1440 = vsel %vm390, 1, 0
        %v1441 = vsel %vm391, 1, 0
        %v1442 = vsel %vm392, 1, 0
        %v1443 = vsel %vm393, 1, 0
        %v1444 = vsel %vm394, 1, 0
        %v1445 = vsel %vm395, 1, 0
        %v1446 = vsel %vm396, 1, 0
        %v1447 = vsel %vm397, 1, 0
        %v1448 = vsel %vm398, 1, 0
        %v1449 = vsel %vm399, 1, 0
        %v1450 = vsel %vm400, 1, 0
        %v1451 = vsel %vm401, 1, 0
        %v1452 = vsel %vm402, 1, 0
        %v1453 = vsel %vm403, 1, 0
        %v1454 = vsel %vm404, 1, 0
        %v1455 = vsel %vm405, 1, 0
        %v1456 = vsel %vm406, 1, 0
        %v1457 = vsel %vm407, 1, 0
        %v1458 = vsel %vm408, 1, 0
        %v1459 = vsel %vm409, 1, 0
        %v1460 = vsel %vm410, 1, 0
        %v1461 = vsel %vm411, 1, 0
        %v1462 = vsel %vm412, 1, 0
        %v1463 = vsel %vm413, 1, 0
        %v1464 = vsel %vm414, 1, 0
        %v1465 = vsel %vm415, 1, 0
        %v1466 = vsel %vm416, 1, 0
        %v1467 = vsel %vm417, 1, 0
        %v1468 = vsel %vm418, 1, 0
        %vm1469 = vcmp.eq.s32.totalorder %v1437, 1
        %vm1470 = vcmp.eq.s32.totalorder %v1438, 1
        %vm1471 = vcmp.eq.s32.totalorder %v1439, 1
        %vm1472 = vcmp.eq.s32.totalorder %v1440, 1
        %vm1473 = vcmp.eq.s32.totalorder %v1441, 1
        %vm1474 = vcmp.eq.s32.totalorder %v1442, 1
        %vm1475 = vcmp.eq.s32.totalorder %v1443, 1
        %vm1476 = vcmp.eq.s32.totalorder %v1444, 1
        %vm1477 = vcmp.eq.s32.totalorder %v1445, 1
        %vm1478 = vcmp.eq.s32.totalorder %v1446, 1
        %vm1479 = vcmp.eq.s32.totalorder %v1447, 1
        %vm1480 = vcmp.eq.s32.totalorder %v1448, 1
        %vm1481 = vcmp.eq.s32.totalorder %v1449, 1
        %vm1482 = vcmp.eq.s32.totalorder %v1450, 1
        %vm1483 = vcmp.eq.s32.totalorder %v1451, 1
        %vm1484 = vcmp.eq.s32.totalorder %v1452, 1
        %vm1485 = vcmp.eq.s32.totalorder %v1453, 1
        %vm1486 = vcmp.eq.s32.totalorder %v1454, 1
        %vm1487 = vcmp.eq.s32.totalorder %v1455, 1
        %vm1488 = vcmp.eq.s32.totalorder %v1456, 1
        %vm1489 = vcmp.eq.s32.totalorder %v1457, 1
        %vm1490 = vcmp.eq.s32.totalorder %v1458, 1
        %vm1491 = vcmp.eq.s32.totalorder %v1459, 1
        %vm1492 = vcmp.eq.s32.totalorder %v1460, 1
        %vm1493 = vcmp.eq.s32.totalorder %v1461, 1
        %vm1494 = vcmp.eq.s32.totalorder %v1462, 1
        %vm1495 = vcmp.eq.s32.totalorder %v1463, 1
        %vm1496 = vcmp.eq.s32.totalorder %v1464, 1
        %vm1497 = vcmp.eq.s32.totalorder %v1465, 1
        %vm1498 = vcmp.eq.s32.totalorder %v1466, 1
        %vm1499 = vcmp.eq.s32.totalorder %v1467, 1
        %vm1500 = vcmp.eq.s32.totalorder %v1468, 1
        %v1501 = vsel %vm1469, %v1208, 0.0
        %v1502 = vsel %vm1470, %v1210, 0.0
        %v1503 = vsel %vm1471, %v1133, 0.0
        %v1504 = vsel %vm1472, %v1135, 0.0
        %v1505 = vsel %vm1473, %v1138, 0.0
        %v1506 = vsel %vm1474, %v1140, 0.0
        %v1507 = vsel %vm1475, %v1143, 0.0
        %v1508 = vsel %vm1476, %v1145, 0.0
        %v1509 = vsel %vm1477, %v1148, 0.0
        %v1510 = vsel %vm1478, %v1150, 0.0
        %v1511 = vsel %vm1479, %v1153, 0.0
        %v1512 = vsel %vm1480, %v1155, 0.0
        %v1513 = vsel %vm1481, %v1158, 0.0
        %v1514 = vsel %vm1482, %v1160, 0.0
        %v1515 = vsel %vm1483, %v1163, 0.0
        %v1516 = vsel %vm1484, %v1165, 0.0
        %v1517 = vsel %vm1485, %v1168, 0.0
        %v1518 = vsel %vm1486, %v1170, 0.0
        %v1519 = vsel %vm1487, %v1173, 0.0
        %v1520 = vsel %vm1488, %v1175, 0.0
        %v1521 = vsel %vm1489, %v1178, 0.0
        %v1522 = vsel %vm1490, %v1180, 0.0
        %v1523 = vsel %vm1491, %v1183, 0.0
        %v1524 = vsel %vm1492, %v1185, 0.0
        %v1525 = vsel %vm1493, %v1188, 0.0
        %v1526 = vsel %vm1494, %v1190, 0.0
        %v1527 = vsel %vm1495, %v1193, 0.0
        %v1528 = vsel %vm1496, %v1195, 0.0
        %v1529 = vsel %vm1497, %v1198, 0.0
        %v1530 = vsel %vm1498, %v1200, 0.0
        %v1531 = vsel %vm1499, %v1203, 0.0
        %v1532 = vsel %vm1500, %v1205, 0.0
        %v1533 = vpack.c.bf16 %v1502, %v1501
        %v1534 = vpack.c.bf16 %v1504, %v1503
        %v1535 = vpack.c.bf16 %v1506, %v1505
        %v1536 = vpack.c.bf16 %v1508, %v1507
        %v1537 = vpack.c.bf16 %v1510, %v1509
        %v1538 = vpack.c.bf16 %v1512, %v1511
        %v1539 = vpack.c.bf16 %v1514, %v1513
        %v1540 = vpack.c.bf16 %v1516, %v1515
        %v1541 = vpack.c.bf16 %v1518, %v1517
        %v1542 = vpack.c.bf16 %v1520, %v1519
        %v1543 = vpack.c.bf16 %v1522, %v1521
        %v1544 = vpack.c.bf16 %v1524, %v1523
        %v1545 = vpack.c.bf16 %v1526, %v1525
        %v1546 = vpack.c.bf16 %v1528, %v1527
        %v1547 = vpack.c.bf16 %v1530, %v1529
        %v1548 = vpack.c.bf16 %v1532, %v1531
        %s1549 = scalar_lea.vmem %s2, 64
        %v1550 = vld [vmem:[%s1549] sm:$0xf]
        %v1551 = vld [vmem:[%s1549 + $0x4] sm:$0xf]
        %v1552 = vld [vmem:[%s1549 + $0x8] sm:$0xf]
        %v1553 = vld [vmem:[%s1549 + $0xc] sm:$0xf]
        %v1554 = vld [vmem:[%s1549 + $0x10] sm:$0xf]
        %v1555 = vld [vmem:[%s1549 + $0x14] sm:$0xf]
        %v1556 = vld [vmem:[%s1549 + $0x18] sm:$0xf]
        %v1557 = vld [vmem:[%s1549 + $0x1c] sm:$0xf]
        %v1558 = vld [vmem:[%s1549 + $0x20] sm:$0xf]
        %v1559 = vld [vmem:[%s1549 + $0x24] sm:$0xf]
        %v1560 = vld [vmem:[%s1549 + $0x28] sm:$0xf]
        %v1561 = vld [vmem:[%s1549 + $0x2c] sm:$0xf]
        %v1562 = vld [vmem:[%s1549 + $0x30] sm:$0xf]
        %v1563 = vld [vmem:[%s1549 + $0x34] sm:$0xf]
        %v1564 = vld [vmem:[%s1549 + $0x38] sm:$0xf]
        %v1565 = vld [vmem:[%s1549 + $0x3c] sm:$0xf]
        %v1582 = vunpack.c.l.b16 %v1550
        %v1583 = vunpack.c.l.b16 %v1551
        %v1584 = vunpack.c.l.b16 %v1552
        %v1585 = vunpack.c.l.b16 %v1553
        %v1586 = vunpack.c.l.b16 %v1554
        %v1587 = vunpack.c.l.b16 %v1555
        %v1588 = vunpack.c.l.b16 %v1556
        %v1589 = vunpack.c.l.b16 %v1557
        %v1590 = vunpack.c.l.b16 %v1558
        %v1591 = vunpack.c.l.b16 %v1559
        %v1592 = vunpack.c.l.b16 %v1560
        %v1593 = vunpack.c.l.b16 %v1561
        %v1594 = vunpack.c.l.b16 %v1562
        %v1595 = vunpack.c.l.b16 %v1563
        %v1596 = vunpack.c.l.b16 %v1564
        %v1597 = vunpack.c.l.b16 %v1565
        %v1598 = vpack.c.b16 %v1583, %v1582
        %v1599 = vpack.c.b16 %v1585, %v1584
        %v1600 = vpack.c.b16 %v1587, %v1586
        %v1601 = vpack.c.b16 %v1589, %v1588
        %v1602 = vpack.c.b16 %v1591, %v1590
        %v1603 = vpack.c.b16 %v1593, %v1592
        %v1604 = vpack.c.b16 %v1595, %v1594
        %v1605 = vpack.c.b16 %v1597, %v1596
        %1614 = vmatpush.bf16.msra.mxu0 %v1605
        %1615 = vmatpush.bf16.msra.mxu0 %v1604
        %1616 = vmatpush.bf16.msra.mxu0 %v1603
        %1617 = vmatpush.bf16.msra.mxu0 %v1602
        %1618 = vmatpush.bf16.msra.mxu0 %v1601
        %1619 = vmatpush.bf16.msra.mxu0 %v1600
        %1620 = vmatpush.bf16.msra.mxu0 %v1599
        %1621 = vmatpush.bf16.msra.mxu0 %v1598
        %1622 = vmatmul.bf16.gmra.mxu0 %v1533
        %v1623 = vpop.f32.mrf.mxu0
        %v1624 = vadd.f32 0.0, %v1623
        %v1625 = vpop.f32.mrf.mxu0
        %v1626 = vadd.f32 0.0, %v1625
        %1627 = vmatmul.bf16.gmra.mxu0 %v1534
        %v1628 = vpop.f32.mrf.mxu0
        %v1629 = vadd.f32 0.0, %v1628
        %v1630 = vpop.f32.mrf.mxu0
        %v1631 = vadd.f32 0.0, %v1630
        %1632 = vmatmul.bf16.gmra.mxu0 %v1535
        %v1633 = vpop.f32.mrf.mxu0
        %v1634 = vadd.f32 0.0, %v1633
        %v1635 = vpop.f32.mrf.mxu0
        %v1636 = vadd.f32 0.0, %v1635
        %1637 = vmatmul.bf16.gmra.mxu0 %v1536
        %v1638 = vpop.f32.mrf.mxu0
        %v1639 = vadd.f32 0.0, %v1638
        %v1640 = vpop.f32.mrf.mxu0
        %v1641 = vadd.f32 0.0, %v1640
        %1642 = vmatmul.bf16.gmra.mxu0 %v1537
        %v1643 = vpop.f32.mrf.mxu0
        %v1644 = vadd.f32 0.0, %v1643
        %v1645 = vpop.f32.mrf.mxu0
        %v1646 = vadd.f32 0.0, %v1645
        %1647 = vmatmul.bf16.gmra.mxu0 %v1538
        %v1648 = vpop.f32.mrf.mxu0
        %v1649 = vadd.f32 0.0, %v1648
        %v1650 = vpop.f32.mrf.mxu0
        %v1651 = vadd.f32 0.0, %v1650
        %1652 = vmatmul.bf16.gmra.mxu0 %v1539
        %v1653 = vpop.f32.mrf.mxu0
        %v1654 = vadd.f32 0.0, %v1653
        %v1655 = vpop.f32.mrf.mxu0
        %v1656 = vadd.f32 0.0, %v1655
        %1657 = vmatmul.bf16.gmra.mxu0 %v1540
        %v1658 = vpop.f32.mrf.mxu0
        %v1659 = vadd.f32 0.0, %v1658
        %v1660 = vpop.f32.mrf.mxu0
        %v1661 = vadd.f32 0.0, %v1660
        %1662 = vmatmul.bf16.gmra.mxu0 %v1541
        %v1663 = vpop.f32.mrf.mxu0
        %v1664 = vadd.f32 0.0, %v1663
        %v1665 = vpop.f32.mrf.mxu0
        %v1666 = vadd.f32 0.0, %v1665
        %1667 = vmatmul.bf16.gmra.mxu0 %v1542
        %v1668 = vpop.f32.mrf.mxu0
        %v1669 = vadd.f32 0.0, %v1668
        %v1670 = vpop.f32.mrf.mxu0
        %v1671 = vadd.f32 0.0, %v1670
        %1672 = vmatmul.bf16.gmra.mxu0 %v1543
        %v1673 = vpop.f32.mrf.mxu0
        %v1674 = vadd.f32 0.0, %v1673
        %v1675 = vpop.f32.mrf.mxu0
        %v1676 = vadd.f32 0.0, %v1675
        %1677 = vmatmul.bf16.gmra.mxu0 %v1544
        %v1678 = vpop.f32.mrf.mxu0
        %v1679 = vadd.f32 0.0, %v1678
        %v1680 = vpop.f32.mrf.mxu0
        %v1681 = vadd.f32 0.0, %v1680
        %1682 = vmatmul.bf16.gmra.mxu0 %v1545
        %v1683 = vpop.f32.mrf.mxu0
        %v1684 = vadd.f32 0.0, %v1683
        %v1685 = vpop.f32.mrf.mxu0
        %v1686 = vadd.f32 0.0, %v1685
        %1687 = vmatmul.bf16.gmra.mxu0 %v1546
        %v1688 = vpop.f32.mrf.mxu0
        %v1689 = vadd.f32 0.0, %v1688
        %v1690 = vpop.f32.mrf.mxu0
        %v1691 = vadd.f32 0.0, %v1690
        %1692 = vmatmul.bf16.gmra.mxu0 %v1547
        %v1693 = vpop.f32.mrf.mxu0
        %v1694 = vadd.f32 0.0, %v1693
        %v1695 = vpop.f32.mrf.mxu0
        %v1696 = vadd.f32 0.0, %v1695
        %1697 = vmatmul.bf16.gmra.mxu0 %v1548
        %v1698 = vpop.f32.mrf.mxu0
        %v1699 = vadd.f32 0.0, %v1698
        %v1700 = vpop.f32.mrf.mxu0
        %v1701 = vadd.f32 0.0, %v1700
        %1702 = vdwg.mxu0
        %v1719 = vunpack.c.l.b16 %v1421
        %v1720 = vunpack.c.l.b16 %v1422
        %v1721 = vunpack.c.l.b16 %v1423
        %v1722 = vunpack.c.l.b16 %v1424
        %v1723 = vunpack.c.l.b16 %v1425
        %v1724 = vunpack.c.l.b16 %v1426
        %v1725 = vunpack.c.l.b16 %v1427
        %v1726 = vunpack.c.l.b16 %v1428
        %v1727 = vunpack.c.l.b16 %v1429
        %v1728 = vunpack.c.l.b16 %v1430
        %v1729 = vunpack.c.l.b16 %v1431
        %v1730 = vunpack.c.l.b16 %v1432
        %v1731 = vunpack.c.l.b16 %v1433
        %v1732 = vunpack.c.l.b16 %v1434
        %v1733 = vunpack.c.l.b16 %v1435
        %v1734 = vunpack.c.l.b16 %v1436
        %v1735 = vpack.c.b16 %v1720, %v1719
        %v1736 = vpack.c.b16 %v1722, %v1721
        %v1737 = vpack.c.b16 %v1724, %v1723
        %v1738 = vpack.c.b16 %v1726, %v1725
        %v1739 = vpack.c.b16 %v1728, %v1727
        %v1740 = vpack.c.b16 %v1730, %v1729
        %v1741 = vpack.c.b16 %v1732, %v1731
        %v1742 = vpack.c.b16 %v1734, %v1733
        %1751 = vmatpush.bf16.msra.mxu0 %v1742
        %1752 = vmatpush.bf16.msra.mxu0 %v1741
        %1753 = vmatpush.bf16.msra.mxu0 %v1740
        %1754 = vmatpush.bf16.msra.mxu0 %v1739
        %1755 = vmatpush.bf16.msra.mxu0 %v1738
        %1756 = vmatpush.bf16.msra.mxu0 %v1737
        %1757 = vmatpush.bf16.msra.mxu0 %v1736
        %1758 = vmatpush.bf16.msra.mxu0 %v1735
        %1759 = vmatmul.bf16.gmra.mxu0 %v1405
        %v1760 = vpop.f32.mrf.mxu0
        %v1761 = vadd.f32 %v1624, %v1760
        %v1762 = vpop.f32.mrf.mxu0
        %v1763 = vadd.f32 %v1626, %v1762
        %1764 = vmatmul.bf16.gmra.mxu0 %v1406
        %v1765 = vpop.f32.mrf.mxu0
        %v1766 = vadd.f32 %v1629, %v1765
        %v1767 = vpop.f32.mrf.mxu0
        %v1768 = vadd.f32 %v1631, %v1767
        %1769 = vmatmul.bf16.gmra.mxu0 %v1407
        %v1770 = vpop.f32.mrf.mxu0
        %v1771 = vadd.f32 %v1634, %v1770
        %v1772 = vpop.f32.mrf.mxu0
        %v1773 = vadd.f32 %v1636, %v1772
        %1774 = vmatmul.bf16.gmra.mxu0 %v1408
        %v1775 = vpop.f32.mrf.mxu0
        %v1776 = vadd.f32 %v1639, %v1775
        %v1777 = vpop.f32.mrf.mxu0
        %v1778 = vadd.f32 %v1641, %v1777
        %1779 = vmatmul.bf16.gmra.mxu0 %v1409
        %v1780 = vpop.f32.mrf.mxu0
        %v1781 = vadd.f32 %v1644, %v1780
        %v1782 = vpop.f32.mrf.mxu0
        %v1783 = vadd.f32 %v1646, %v1782
        %1784 = vmatmul.bf16.gmra.mxu0 %v1410
        %v1785 = vpop.f32.mrf.mxu0
        %v1786 = vadd.f32 %v1649, %v1785
        %v1787 = vpop.f32.mrf.mxu0
        %v1788 = vadd.f32 %v1651, %v1787
        %1789 = vmatmul.bf16.gmra.mxu0 %v1411
        %v1790 = vpop.f32.mrf.mxu0
        %v1791 = vadd.f32 %v1654, %v1790
        %v1792 = vpop.f32.mrf.mxu0
        %v1793 = vadd.f32 %v1656, %v1792
        %1794 = vmatmul.bf16.gmra.mxu0 %v1412
        %v1795 = vpop.f32.mrf.mxu0
        %v1796 = vadd.f32 %v1659, %v1795
        %v1797 = vpop.f32.mrf.mxu0
        %v1798 = vadd.f32 %v1661, %v1797
        %1799 = vmatmul.bf16.gmra.mxu0 %v1413
        %v1800 = vpop.f32.mrf.mxu0
        %v1801 = vadd.f32 %v1664, %v1800
        %v1802 = vpop.f32.mrf.mxu0
        %v1803 = vadd.f32 %v1666, %v1802
        %1804 = vmatmul.bf16.gmra.mxu0 %v1414
        %v1805 = vpop.f32.mrf.mxu0
        %v1806 = vadd.f32 %v1669, %v1805
        %v1807 = vpop.f32.mrf.mxu0
        %v1808 = vadd.f32 %v1671, %v1807
        %1809 = vmatmul.bf16.gmra.mxu0 %v1415
        %v1810 = vpop.f32.mrf.mxu0
        %v1811 = vadd.f32 %v1674, %v1810
        %v1812 = vpop.f32.mrf.mxu0
        %v1813 = vadd.f32 %v1676, %v1812
        %1814 = vmatmul.bf16.gmra.mxu0 %v1416
        %v1815 = vpop.f32.mrf.mxu0
        %v1816 = vadd.f32 %v1679, %v1815
        %v1817 = vpop.f32.mrf.mxu0
        %v1818 = vadd.f32 %v1681, %v1817
        %1819 = vmatmul.bf16.gmra.mxu0 %v1417
        %v1820 = vpop.f32.mrf.mxu0
        %v1821 = vadd.f32 %v1684, %v1820
        %v1822 = vpop.f32.mrf.mxu0
        %v1823 = vadd.f32 %v1686, %v1822
        %1824 = vmatmul.bf16.gmra.mxu0 %v1418
        %v1825 = vpop.f32.mrf.mxu0
        %v1826 = vadd.f32 %v1689, %v1825
        %v1827 = vpop.f32.mrf.mxu0
        %v1828 = vadd.f32 %v1691, %v1827
        %1829 = vmatmul.bf16.gmra.mxu0 %v1419
        %v1830 = vpop.f32.mrf.mxu0
        %v1831 = vadd.f32 %v1694, %v1830
        %v1832 = vpop.f32.mrf.mxu0
        %v1833 = vadd.f32 %v1696, %v1832
        %1834 = vmatmul.bf16.gmra.mxu0 %v1420
        %v1835 = vpop.f32.mrf.mxu0
        %v1836 = vadd.f32 %v1699, %v1835
        %v1837 = vpop.f32.mrf.mxu0
        %v1838 = vadd.f32 %v1701, %v1837
        %1839 = vdwg.mxu0
        %v1840 = vrot.slane %v1133, 1
        %v1841 = vrot.slane %v1135, 1
        %v1842 = vrot.slane %v1138, 1
        %v1843 = vrot.slane %v1140, 1
        %v1844 = vrot.slane %v1143, 1
        %v1845 = vrot.slane %v1145, 1
        %v1846 = vrot.slane %v1148, 1
        %v1847 = vrot.slane %v1150, 1
        %v1848 = vrot.slane %v1153, 1
        %v1849 = vrot.slane %v1155, 1
        %v1850 = vrot.slane %v1158, 1
        %v1851 = vrot.slane %v1160, 1
        %v1852 = vrot.slane %v1163, 1
        %v1853 = vrot.slane %v1165, 1
        %v1854 = vrot.slane %v1168, 1
        %v1855 = vrot.slane %v1170, 1
        %v1856 = vrot.slane %v1173, 1
        %v1857 = vrot.slane %v1175, 1
        %v1858 = vrot.slane %v1178, 1
        %v1859 = vrot.slane %v1180, 1
        %v1860 = vrot.slane %v1183, 1
        %v1861 = vrot.slane %v1185, 1
        %v1862 = vrot.slane %v1188, 1
        %v1863 = vrot.slane %v1190, 1
        %v1864 = vrot.slane %v1193, 1
        %v1865 = vrot.slane %v1195, 1
        %v1866 = vrot.slane %v1198, 1
        %v1867 = vrot.slane %v1200, 1
        %v1868 = vrot.slane %v1203, 1
        %v1869 = vrot.slane %v1205, 1
        %v1870 = vrot.slane %v1208, 1
        %v1871 = vrot.slane %v1210, 1
        %vm1872 = vcmp.lt.s32.totalorder %v355, 7
        %v1873 = vsel %vm1872, %v1870, %v1871
        %v1874 = vsel %vm1872, %v1869, %v1870
        %v1875 = vsel %vm1872, %v1868, %v1869
        %v1876 = vsel %vm1872, %v1867, %v1868
        %v1877 = vsel %vm1872, %v1866, %v1867
        %v1878 = vsel %vm1872, %v1865, %v1866
        %v1879 = vsel %vm1872, %v1864, %v1865
        %v1880 = vsel %vm1872, %v1863, %v1864
        %v1881 = vsel %vm1872, %v1862, %v1863
        %v1882 = vsel %vm1872, %v1861, %v1862
        %v1883 = vsel %vm1872, %v1860, %v1861
        %v1884 = vsel %vm1872, %v1859, %v1860
        %v1885 = vsel %vm1872, %v1858, %v1859
        %v1886 = vsel %vm1872, %v1857, %v1858
        %v1887 = vsel %vm1872, %v1856, %v1857
        %v1888 = vsel %vm1872, %v1855, %v1856
        %v1889 = vsel %vm1872, %v1854, %v1855
        %v1890 = vsel %vm1872, %v1853, %v1854
        %v1891 = vsel %vm1872, %v1852, %v1853
        %v1892 = vsel %vm1872, %v1851, %v1852
        %v1893 = vsel %vm1872, %v1850, %v1851
        %v1894 = vsel %vm1872, %v1849, %v1850
        %v1895 = vsel %vm1872, %v1848, %v1849
        %v1896 = vsel %vm1872, %v1847, %v1848
        %v1897 = vsel %vm1872, %v1846, %v1847
        %v1898 = vsel %vm1872, %v1845, %v1846
        %v1899 = vsel %vm1872, %v1844, %v1845
        %v1900 = vsel %vm1872, %v1843, %v1844
        %v1901 = vsel %vm1872, %v1842, %v1843
        %v1902 = vsel %vm1872, %v1841, %v1842
        %v1903 = vsel %vm1872, %v1840, %v1841
        %v1904 = vsel %vm1872, %v1871, %v1840
        %vm1905 = vmand %vm387, %vm867
        %vm1906 = vmand %vm388, %vm868
        %vm1907 = vmand %vm389, %vm869
        %vm1908 = vmand %vm390, %vm870
        %vm1909 = vmand %vm391, %vm871
        %vm1910 = vmand %vm392, %vm872
        %vm1911 = vmand %vm393, %vm873
        %vm1912 = vmand %vm394, %vm874
        %vm1913 = vmand %vm395, %vm875
        %vm1914 = vmand %vm396, %vm876
        %vm1915 = vmand %vm397, %vm877
        %vm1916 = vmand %vm398, %vm878
        %vm1917 = vmand %vm399, %vm879
        %vm1918 = vmand %vm400, %vm880
        %vm1919 = vmand %vm401, %vm881
        %vm1920 = vmand %vm402, %vm882
        %vm1921 = vmand %vm403, %vm883
        %vm1922 = vmand %vm404, %vm884
        %vm1923 = vmand %vm405, %vm885
        %vm1924 = vmand %vm406, %vm886
        %vm1925 = vmand %vm407, %vm887
        %vm1926 = vmand %vm408, %vm888
        %vm1927 = vmand %vm409, %vm889
        %vm1928 = vmand %vm410, %vm890
        %vm1929 = vmand %vm411, %vm891
        %vm1930 = vmand %vm412, %vm892
        %vm1931 = vmand %vm413, %vm893
        %vm1932 = vmand %vm414, %vm894
        %vm1933 = vmand %vm415, %vm895
        %vm1934 = vmand %vm416, %vm896
        %vm1935 = vmand %vm417, %vm897
        %vm1936 = vmand %vm418, %vm898
        %v1937 = vsel %vm1905, 1, 0
        %v1938 = vsel %vm1906, 1, 0
        %v1939 = vsel %vm1907, 1, 0
        %v1940 = vsel %vm1908, 1, 0
        %v1941 = vsel %vm1909, 1, 0
        %v1942 = vsel %vm1910, 1, 0
        %v1943 = vsel %vm1911, 1, 0
        %v1944 = vsel %vm1912, 1, 0
        %v1945 = vsel %vm1913, 1, 0
        %v1946 = vsel %vm1914, 1, 0
        %v1947 = vsel %vm1915, 1, 0
        %v1948 = vsel %vm1916, 1, 0
        %v1949 = vsel %vm1917, 1, 0
        %v1950 = vsel %vm1918, 1, 0
        %v1951 = vsel %vm1919, 1, 0
        %v1952 = vsel %vm1920, 1, 0
        %v1953 = vsel %vm1921, 1, 0
        %v1954 = vsel %vm1922, 1, 0
        %v1955 = vsel %vm1923, 1, 0
        %v1956 = vsel %vm1924, 1, 0
        %v1957 = vsel %vm1925, 1, 0
        %v1958 = vsel %vm1926, 1, 0
        %v1959 = vsel %vm1927, 1, 0
        %v1960 = vsel %vm1928, 1, 0
        %v1961 = vsel %vm1929, 1, 0
        %v1962 = vsel %vm1930, 1, 0
        %v1963 = vsel %vm1931, 1, 0
        %v1964 = vsel %vm1932, 1, 0
        %v1965 = vsel %vm1933, 1, 0
        %v1966 = vsel %vm1934, 1, 0
        %v1967 = vsel %vm1935, 1, 0
        %v1968 = vsel %vm1936, 1, 0
        %vm1969 = vcmp.eq.s32.totalorder %v1937, 1
        %vm1970 = vcmp.eq.s32.totalorder %v1938, 1
        %vm1971 = vcmp.eq.s32.totalorder %v1939, 1
        %vm1972 = vcmp.eq.s32.totalorder %v1940, 1
        %vm1973 = vcmp.eq.s32.totalorder %v1941, 1
        %vm1974 = vcmp.eq.s32.totalorder %v1942, 1
        %vm1975 = vcmp.eq.s32.totalorder %v1943, 1
        %vm1976 = vcmp.eq.s32.totalorder %v1944, 1
        %vm1977 = vcmp.eq.s32.totalorder %v1945, 1
        %vm1978 = vcmp.eq.s32.totalorder %v1946, 1
        %vm1979 = vcmp.eq.s32.totalorder %v1947, 1
        %vm1980 = vcmp.eq.s32.totalorder %v1948, 1
        %vm1981 = vcmp.eq.s32.totalorder %v1949, 1
        %vm1982 = vcmp.eq.s32.totalorder %v1950, 1
        %vm1983 = vcmp.eq.s32.totalorder %v1951, 1
        %vm1984 = vcmp.eq.s32.totalorder %v1952, 1
        %vm1985 = vcmp.eq.s32.totalorder %v1953, 1
        %vm1986 = vcmp.eq.s32.totalorder %v1954, 1
        %vm1987 = vcmp.eq.s32.totalorder %v1955, 1
        %vm1988 = vcmp.eq.s32.totalorder %v1956, 1
        %vm1989 = vcmp.eq.s32.totalorder %v1957, 1
        %vm1990 = vcmp.eq.s32.totalorder %v1958, 1
        %vm1991 = vcmp.eq.s32.totalorder %v1959, 1
        %vm1992 = vcmp.eq.s32.totalorder %v1960, 1
        %vm1993 = vcmp.eq.s32.totalorder %v1961, 1
        %vm1994 = vcmp.eq.s32.totalorder %v1962, 1
        %vm1995 = vcmp.eq.s32.totalorder %v1963, 1
        %vm1996 = vcmp.eq.s32.totalorder %v1964, 1
        %vm1997 = vcmp.eq.s32.totalorder %v1965, 1
        %vm1998 = vcmp.eq.s32.totalorder %v1966, 1
        %vm1999 = vcmp.eq.s32.totalorder %v1967, 1
        %vm2000 = vcmp.eq.s32.totalorder %v1968, 1
        %v2001 = vsel %vm1969, %v1873, 0.0
        %v2002 = vsel %vm1970, %v1904, 0.0
        %v2003 = vsel %vm1971, %v1903, 0.0
        %v2004 = vsel %vm1972, %v1902, 0.0
        %v2005 = vsel %vm1973, %v1901, 0.0
        %v2006 = vsel %vm1974, %v1900, 0.0
        %v2007 = vsel %vm1975, %v1899, 0.0
        %v2008 = vsel %vm1976, %v1898, 0.0
        %v2009 = vsel %vm1977, %v1897, 0.0
        %v2010 = vsel %vm1978, %v1896, 0.0
        %v2011 = vsel %vm1979, %v1895, 0.0
        %v2012 = vsel %vm1980, %v1894, 0.0
        %v2013 = vsel %vm1981, %v1893, 0.0
        %v2014 = vsel %vm1982, %v1892, 0.0
        %v2015 = vsel %vm1983, %v1891, 0.0
        %v2016 = vsel %vm1984, %v1890, 0.0
        %v2017 = vsel %vm1985, %v1889, 0.0
        %v2018 = vsel %vm1986, %v1888, 0.0
        %v2019 = vsel %vm1987, %v1887, 0.0
        %v2020 = vsel %vm1988, %v1886, 0.0
        %v2021 = vsel %vm1989, %v1885, 0.0
        %v2022 = vsel %vm1990, %v1884, 0.0
        %v2023 = vsel %vm1991, %v1883, 0.0
        %v2024 = vsel %vm1992, %v1882, 0.0
        %v2025 = vsel %vm1993, %v1881, 0.0
        %v2026 = vsel %vm1994, %v1880, 0.0
        %v2027 = vsel %vm1995, %v1879, 0.0
        %v2028 = vsel %vm1996, %v1878, 0.0
        %v2029 = vsel %vm1997, %v1877, 0.0
        %v2030 = vsel %vm1998, %v1876, 0.0
        %v2031 = vsel %vm1999, %v1875, 0.0
        %v2032 = vsel %vm2000, %v1874, 0.0
        %v2033 = vpack.c.bf16 %v2002, %v2001
        %v2034 = vpack.c.bf16 %v2004, %v2003
        %v2035 = vpack.c.bf16 %v2006, %v2005
        %v2036 = vpack.c.bf16 %v2008, %v2007
        %v2037 = vpack.c.bf16 %v2010, %v2009
        %v2038 = vpack.c.bf16 %v2012, %v2011
        %v2039 = vpack.c.bf16 %v2014, %v2013
        %v2040 = vpack.c.bf16 %v2016, %v2015
        %v2041 = vpack.c.bf16 %v2018, %v2017
        %v2042 = vpack.c.bf16 %v2020, %v2019
        %v2043 = vpack.c.bf16 %v2022, %v2021
        %v2044 = vpack.c.bf16 %v2024, %v2023
        %v2045 = vpack.c.bf16 %v2026, %v2025
        %v2046 = vpack.c.bf16 %v2028, %v2027
        %v2047 = vpack.c.bf16 %v2030, %v2029
        %v2048 = vpack.c.bf16 %v2032, %v2031
        %s2049 = scalar_lea.vmem %s2, 128
        %v2050 = vld [vmem:[%s2049] sm:$0xf]
        %v2051 = vld [vmem:[%s2049 + $0x4] sm:$0xf]
        %v2052 = vld [vmem:[%s2049 + $0x8] sm:$0xf]
        %v2053 = vld [vmem:[%s2049 + $0xc] sm:$0xf]
        %v2054 = vld [vmem:[%s2049 + $0x10] sm:$0xf]
        %v2055 = vld [vmem:[%s2049 + $0x14] sm:$0xf]
        %v2056 = vld [vmem:[%s2049 + $0x18] sm:$0xf]
        %v2057 = vld [vmem:[%s2049 + $0x1c] sm:$0xf]
        %v2058 = vld [vmem:[%s2049 + $0x20] sm:$0xf]
        %v2059 = vld [vmem:[%s2049 + $0x24] sm:$0xf]
        %v2060 = vld [vmem:[%s2049 + $0x28] sm:$0xf]
        %v2061 = vld [vmem:[%s2049 + $0x2c] sm:$0xf]
        %v2062 = vld [vmem:[%s2049 + $0x30] sm:$0xf]
        %v2063 = vld [vmem:[%s2049 + $0x34] sm:$0xf]
        %v2064 = vld [vmem:[%s2049 + $0x38] sm:$0xf]
        %v2065 = vld [vmem:[%s2049 + $0x3c] sm:$0xf]
        %v2082 = vunpack.c.l.b16 %v2050
        %v2083 = vunpack.c.l.b16 %v2051
        %v2084 = vunpack.c.l.b16 %v2052
        %v2085 = vunpack.c.l.b16 %v2053
        %v2086 = vunpack.c.l.b16 %v2054
        %v2087 = vunpack.c.l.b16 %v2055
        %v2088 = vunpack.c.l.b16 %v2056
        %v2089 = vunpack.c.l.b16 %v2057
        %v2090 = vunpack.c.l.b16 %v2058
        %v2091 = vunpack.c.l.b16 %v2059
        %v2092 = vunpack.c.l.b16 %v2060
        %v2093 = vunpack.c.l.b16 %v2061
        %v2094 = vunpack.c.l.b16 %v2062
        %v2095 = vunpack.c.l.b16 %v2063
        %v2096 = vunpack.c.l.b16 %v2064
        %v2097 = vunpack.c.l.b16 %v2065
        %v2098 = vpack.c.b16 %v2083, %v2082
        %v2099 = vpack.c.b16 %v2085, %v2084
        %v2100 = vpack.c.b16 %v2087, %v2086
        %v2101 = vpack.c.b16 %v2089, %v2088
        %v2102 = vpack.c.b16 %v2091, %v2090
        %v2103 = vpack.c.b16 %v2093, %v2092
        %v2104 = vpack.c.b16 %v2095, %v2094
        %v2105 = vpack.c.b16 %v2097, %v2096
        %2114 = vmatpush.bf16.msra.mxu0 %v2105
        %2115 = vmatpush.bf16.msra.mxu0 %v2104
        %2116 = vmatpush.bf16.msra.mxu0 %v2103
        %2117 = vmatpush.bf16.msra.mxu0 %v2102
        %2118 = vmatpush.bf16.msra.mxu0 %v2101
        %2119 = vmatpush.bf16.msra.mxu0 %v2100
        %2120 = vmatpush.bf16.msra.mxu0 %v2099
        %2121 = vmatpush.bf16.msra.mxu0 %v2098
        %2122 = vmatmul.bf16.gmra.mxu0 %v2033
        %v2123 = vpop.f32.mrf.mxu0
        %v2124 = vadd.f32 0.0, %v2123
        %v2125 = vpop.f32.mrf.mxu0
        %v2126 = vadd.f32 0.0, %v2125
        %2127 = vmatmul.bf16.gmra.mxu0 %v2034
        %v2128 = vpop.f32.mrf.mxu0
        %v2129 = vadd.f32 0.0, %v2128
        %v2130 = vpop.f32.mrf.mxu0
        %v2131 = vadd.f32 0.0, %v2130
        %2132 = vmatmul.bf16.gmra.mxu0 %v2035
        %v2133 = vpop.f32.mrf.mxu0
        %v2134 = vadd.f32 0.0, %v2133
        %v2135 = vpop.f32.mrf.mxu0
        %v2136 = vadd.f32 0.0, %v2135
        %2137 = vmatmul.bf16.gmra.mxu0 %v2036
        %v2138 = vpop.f32.mrf.mxu0
        %v2139 = vadd.f32 0.0, %v2138
        %v2140 = vpop.f32.mrf.mxu0
        %v2141 = vadd.f32 0.0, %v2140
        %2142 = vmatmul.bf16.gmra.mxu0 %v2037
        %v2143 = vpop.f32.mrf.mxu0
        %v2144 = vadd.f32 0.0, %v2143
        %v2145 = vpop.f32.mrf.mxu0
        %v2146 = vadd.f32 0.0, %v2145
        %2147 = vmatmul.bf16.gmra.mxu0 %v2038
        %v2148 = vpop.f32.mrf.mxu0
        %v2149 = vadd.f32 0.0, %v2148
        %v2150 = vpop.f32.mrf.mxu0
        %v2151 = vadd.f32 0.0, %v2150
        %2152 = vmatmul.bf16.gmra.mxu0 %v2039
        %v2153 = vpop.f32.mrf.mxu0
        %v2154 = vadd.f32 0.0, %v2153
        %v2155 = vpop.f32.mrf.mxu0
        %v2156 = vadd.f32 0.0, %v2155
        %2157 = vmatmul.bf16.gmra.mxu0 %v2040
        %v2158 = vpop.f32.mrf.mxu0
        %v2159 = vadd.f32 0.0, %v2158
        %v2160 = vpop.f32.mrf.mxu0
        %v2161 = vadd.f32 0.0, %v2160
        %2162 = vmatmul.bf16.gmra.mxu0 %v2041
        %v2163 = vpop.f32.mrf.mxu0
        %v2164 = vadd.f32 0.0, %v2163
        %v2165 = vpop.f32.mrf.mxu0
        %v2166 = vadd.f32 0.0, %v2165
        %2167 = vmatmul.bf16.gmra.mxu0 %v2042
        %v2168 = vpop.f32.mrf.mxu0
        %v2169 = vadd.f32 0.0, %v2168
        %v2170 = vpop.f32.mrf.mxu0
        %v2171 = vadd.f32 0.0, %v2170
        %2172 = vmatmul.bf16.gmra.mxu0 %v2043
        %v2173 = vpop.f32.mrf.mxu0
        %v2174 = vadd.f32 0.0, %v2173
        %v2175 = vpop.f32.mrf.mxu0
        %v2176 = vadd.f32 0.0, %v2175
        %2177 = vmatmul.bf16.gmra.mxu0 %v2044
        %v2178 = vpop.f32.mrf.mxu0
        %v2179 = vadd.f32 0.0, %v2178
        %v2180 = vpop.f32.mrf.mxu0
        %v2181 = vadd.f32 0.0, %v2180
        %2182 = vmatmul.bf16.gmra.mxu0 %v2045
        %v2183 = vpop.f32.mrf.mxu0
        %v2184 = vadd.f32 0.0, %v2183
        %v2185 = vpop.f32.mrf.mxu0
        %v2186 = vadd.f32 0.0, %v2185
        %2187 = vmatmul.bf16.gmra.mxu0 %v2046
        %v2188 = vpop.f32.mrf.mxu0
        %v2189 = vadd.f32 0.0, %v2188
        %v2190 = vpop.f32.mrf.mxu0
        %v2191 = vadd.f32 0.0, %v2190
        %2192 = vmatmul.bf16.gmra.mxu0 %v2047
        %v2193 = vpop.f32.mrf.mxu0
        %v2194 = vadd.f32 0.0, %v2193
        %v2195 = vpop.f32.mrf.mxu0
        %v2196 = vadd.f32 0.0, %v2195
        %2197 = vmatmul.bf16.gmra.mxu0 %v2048
        %v2198 = vpop.f32.mrf.mxu0
        %v2199 = vadd.f32 0.0, %v2198
        %v2200 = vpop.f32.mrf.mxu0
        %v2201 = vadd.f32 0.0, %v2200
        %2202 = vdwg.mxu0
        %v2203 = vadd.f32 %v1761, %v2124
        %v2204 = vadd.f32 %v1763, %v2126
        %v2205 = vadd.f32 %v1766, %v2129
        %v2206 = vadd.f32 %v1768, %v2131
        %v2207 = vadd.f32 %v1771, %v2134
        %v2208 = vadd.f32 %v1773, %v2136
        %v2209 = vadd.f32 %v1776, %v2139
        %v2210 = vadd.f32 %v1778, %v2141
        %v2211 = vadd.f32 %v1781, %v2144
        %v2212 = vadd.f32 %v1783, %v2146
        %v2213 = vadd.f32 %v1786, %v2149
        %v2214 = vadd.f32 %v1788, %v2151
        %v2215 = vadd.f32 %v1791, %v2154
        %v2216 = vadd.f32 %v1793, %v2156
        %v2217 = vadd.f32 %v1796, %v2159
        %v2218 = vadd.f32 %v1798, %v2161
        %v2219 = vadd.f32 %v1801, %v2164
        %v2220 = vadd.f32 %v1803, %v2166
        %v2221 = vadd.f32 %v1806, %v2169
        %v2222 = vadd.f32 %v1808, %v2171
        %v2223 = vadd.f32 %v1811, %v2174
        %v2224 = vadd.f32 %v1813, %v2176
        %v2225 = vadd.f32 %v1816, %v2179
        %v2226 = vadd.f32 %v1818, %v2181
        %v2227 = vadd.f32 %v1821, %v2184
        %v2228 = vadd.f32 %v1823, %v2186
        %v2229 = vadd.f32 %v1826, %v2189
        %v2230 = vadd.f32 %v1828, %v2191
        %v2231 = vadd.f32 %v1831, %v2194
        %v2232 = vadd.f32 %v1833, %v2196
        %v2233 = vadd.f32 %v1836, %v2199
        %v2234 = vadd.f32 %v1838, %v2201
        %v2235 = vsel %vm835, 1, 0
        %v2236 = vsel %vm836, 1, 0
        %v2237 = vsel %vm837, 1, 0
        %v2238 = vsel %vm838, 1, 0
        %v2239 = vsel %vm839, 1, 0
        %v2240 = vsel %vm840, 1, 0
        %v2241 = vsel %vm841, 1, 0
        %v2242 = vsel %vm842, 1, 0
        %v2243 = vsel %vm843, 1, 0
        %v2244 = vsel %vm844, 1, 0
        %v2245 = vsel %vm845, 1, 0
        %v2246 = vsel %vm846, 1, 0
        %v2247 = vsel %vm847, 1, 0
        %v2248 = vsel %vm848, 1, 0
        %v2249 = vsel %vm849, 1, 0
        %v2250 = vsel %vm850, 1, 0
        %v2251 = vsel %vm851, 1, 0
        %v2252 = vsel %vm852, 1, 0
        %v2253 = vsel %vm853, 1, 0
        %v2254 = vsel %vm854, 1, 0
        %v2255 = vsel %vm855, 1, 0
        %v2256 = vsel %vm856, 1, 0
        %v2257 = vsel %vm857, 1, 0
        %v2258 = vsel %vm858, 1, 0
        %v2259 = vsel %vm859, 1, 0
        %v2260 = vsel %vm860, 1, 0
        %v2261 = vsel %vm861, 1, 0
        %v2262 = vsel %vm862, 1, 0
        %v2263 = vsel %vm863, 1, 0
        %v2264 = vsel %vm864, 1, 0
        %v2265 = vsel %vm865, 1, 0
        %v2266 = vsel %vm866, 1, 0
        %vm2267 = vcmp.eq.s32.totalorder %v2235, 1
        %vm2268 = vcmp.eq.s32.totalorder %v2236, 1
        %vm2269 = vcmp.eq.s32.totalorder %v2237, 1
        %vm2270 = vcmp.eq.s32.totalorder %v2238, 1
        %vm2271 = vcmp.eq.s32.totalorder %v2239, 1
        %vm2272 = vcmp.eq.s32.totalorder %v2240, 1
        %vm2273 = vcmp.eq.s32.totalorder %v2241, 1
        %vm2274 = vcmp.eq.s32.totalorder %v2242, 1
        %vm2275 = vcmp.eq.s32.totalorder %v2243, 1
        %vm2276 = vcmp.eq.s32.totalorder %v2244, 1
        %vm2277 = vcmp.eq.s32.totalorder %v2245, 1
        %vm2278 = vcmp.eq.s32.totalorder %v2246, 1
        %vm2279 = vcmp.eq.s32.totalorder %v2247, 1
        %vm2280 = vcmp.eq.s32.totalorder %v2248, 1
        %vm2281 = vcmp.eq.s32.totalorder %v2249, 1
        %vm2282 = vcmp.eq.s32.totalorder %v2250, 1
        %vm2283 = vcmp.eq.s32.totalorder %v2251, 1
        %vm2284 = vcmp.eq.s32.totalorder %v2252, 1
        %vm2285 = vcmp.eq.s32.totalorder %v2253, 1
        %vm2286 = vcmp.eq.s32.totalorder %v2254, 1
        %vm2287 = vcmp.eq.s32.totalorder %v2255, 1
        %vm2288 = vcmp.eq.s32.totalorder %v2256, 1
        %vm2289 = vcmp.eq.s32.totalorder %v2257, 1
        %vm2290 = vcmp.eq.s32.totalorder %v2258, 1
        %vm2291 = vcmp.eq.s32.totalorder %v2259, 1
        %vm2292 = vcmp.eq.s32.totalorder %v2260, 1
        %vm2293 = vcmp.eq.s32.totalorder %v2261, 1
        %vm2294 = vcmp.eq.s32.totalorder %v2262, 1
        %vm2295 = vcmp.eq.s32.totalorder %v2263, 1
        %vm2296 = vcmp.eq.s32.totalorder %v2264, 1
        %vm2297 = vcmp.eq.s32.totalorder %v2265, 1
        %vm2298 = vcmp.eq.s32.totalorder %v2266, 1
        %v2299 = vsel %vm2267, %v1276, 0.0
        %v2300 = vsel %vm2268, %v1275, 0.0
        %v2301 = vsel %vm2269, %v1274, 0.0
        %v2302 = vsel %vm2270, %v1273, 0.0
        %v2303 = vsel %vm2271, %v1272, 0.0
        %v2304 = vsel %vm2272, %v1271, 0.0
        %v2305 = vsel %vm2273, %v1270, 0.0
        %v2306 = vsel %vm2274, %v1269, 0.0
        %v2307 = vsel %vm2275, %v1268, 0.0
        %v2308 = vsel %vm2276, %v1267, 0.0
        %v2309 = vsel %vm2277, %v1266, 0.0
        %v2310 = vsel %vm2278, %v1265, 0.0
        %v2311 = vsel %vm2279, %v1264, 0.0
        %v2312 = vsel %vm2280, %v1263, 0.0
        %v2313 = vsel %vm2281, %v1262, 0.0
        %v2314 = vsel %vm2282, %v1261, 0.0
        %v2315 = vsel %vm2283, %v1260, 0.0
        %v2316 = vsel %vm2284, %v1259, 0.0
        %v2317 = vsel %vm2285, %v1258, 0.0
        %v2318 = vsel %vm2286, %v1257, 0.0
        %v2319 = vsel %vm2287, %v1256, 0.0
        %v2320 = vsel %vm2288, %v1255, 0.0
        %v2321 = vsel %vm2289, %v1254, 0.0
        %v2322 = vsel %vm2290, %v1253, 0.0
        %v2323 = vsel %vm2291, %v1252, 0.0
        %v2324 = vsel %vm2292, %v1251, 0.0
        %v2325 = vsel %vm2293, %v1250, 0.0
        %v2326 = vsel %vm2294, %v1249, 0.0
        %v2327 = vsel %vm2295, %v1248, 0.0
        %v2328 = vsel %vm2296, %v1247, 0.0
        %v2329 = vsel %vm2297, %v1246, 0.0
        %v2330 = vsel %vm2298, %v1245, 0.0
        %v2331 = vpack.c.bf16 %v2300, %v2299
        %v2332 = vpack.c.bf16 %v2302, %v2301
        %v2333 = vpack.c.bf16 %v2304, %v2303
        %v2334 = vpack.c.bf16 %v2306, %v2305
        %v2335 = vpack.c.bf16 %v2308, %v2307
        %v2336 = vpack.c.bf16 %v2310, %v2309
        %v2337 = vpack.c.bf16 %v2312, %v2311
        %v2338 = vpack.c.bf16 %v2314, %v2313
        %v2339 = vpack.c.bf16 %v2316, %v2315
        %v2340 = vpack.c.bf16 %v2318, %v2317
        %v2341 = vpack.c.bf16 %v2320, %v2319
        %v2342 = vpack.c.bf16 %v2322, %v2321
        %v2343 = vpack.c.bf16 %v2324, %v2323
        %v2344 = vpack.c.bf16 %v2326, %v2325
        %v2345 = vpack.c.bf16 %v2328, %v2327
        %v2346 = vpack.c.bf16 %v2330, %v2329
        %s2347 = scalar_lea.vmem %s2, 192
        %v2348 = vld [vmem:[%s2347] sm:$0xf]
        %v2349 = vld [vmem:[%s2347 + $0x4] sm:$0xf]
        %v2350 = vld [vmem:[%s2347 + $0x8] sm:$0xf]
        %v2351 = vld [vmem:[%s2347 + $0xc] sm:$0xf]
        %v2352 = vld [vmem:[%s2347 + $0x10] sm:$0xf]
        %v2353 = vld [vmem:[%s2347 + $0x14] sm:$0xf]
        %v2354 = vld [vmem:[%s2347 + $0x18] sm:$0xf]
        %v2355 = vld [vmem:[%s2347 + $0x1c] sm:$0xf]
        %v2356 = vld [vmem:[%s2347 + $0x20] sm:$0xf]
        %v2357 = vld [vmem:[%s2347 + $0x24] sm:$0xf]
        %v2358 = vld [vmem:[%s2347 + $0x28] sm:$0xf]
        %v2359 = vld [vmem:[%s2347 + $0x2c] sm:$0xf]
        %v2360 = vld [vmem:[%s2347 + $0x30] sm:$0xf]
        %v2361 = vld [vmem:[%s2347 + $0x34] sm:$0xf]
        %v2362 = vld [vmem:[%s2347 + $0x38] sm:$0xf]
        %v2363 = vld [vmem:[%s2347 + $0x3c] sm:$0xf]
        %v2380 = vunpack.c.l.b16 %v2348
        %v2381 = vunpack.c.l.b16 %v2349
        %v2382 = vunpack.c.l.b16 %v2350
        %v2383 = vunpack.c.l.b16 %v2351
        %v2384 = vunpack.c.l.b16 %v2352
        %v2385 = vunpack.c.l.b16 %v2353
        %v2386 = vunpack.c.l.b16 %v2354
        %v2387 = vunpack.c.l.b16 %v2355
        %v2388 = vunpack.c.l.b16 %v2356
        %v2389 = vunpack.c.l.b16 %v2357
        %v2390 = vunpack.c.l.b16 %v2358
        %v2391 = vunpack.c.l.b16 %v2359
        %v2392 = vunpack.c.l.b16 %v2360
        %v2393 = vunpack.c.l.b16 %v2361
        %v2394 = vunpack.c.l.b16 %v2362
        %v2395 = vunpack.c.l.b16 %v2363
        %v2396 = vpack.c.b16 %v2381, %v2380
        %v2397 = vpack.c.b16 %v2383, %v2382
        %v2398 = vpack.c.b16 %v2385, %v2384
        %v2399 = vpack.c.b16 %v2387, %v2386
        %v2400 = vpack.c.b16 %v2389, %v2388
        %v2401 = vpack.c.b16 %v2391, %v2390
        %v2402 = vpack.c.b16 %v2393, %v2392
        %v2403 = vpack.c.b16 %v2395, %v2394
        %2412 = vmatpush.bf16.msra.mxu0 %v2403
        %2413 = vmatpush.bf16.msra.mxu0 %v2402
        %2414 = vmatpush.bf16.msra.mxu0 %v2401
        %2415 = vmatpush.bf16.msra.mxu0 %v2400
        %2416 = vmatpush.bf16.msra.mxu0 %v2399
        %2417 = vmatpush.bf16.msra.mxu0 %v2398
        %2418 = vmatpush.bf16.msra.mxu0 %v2397
        %2419 = vmatpush.bf16.msra.mxu0 %v2396
        %2420 = vmatmul.bf16.gmra.mxu0 %v2331
        %v2421 = vpop.f32.mrf.mxu0
        %v2422 = vadd.f32 0.0, %v2421
        %v2423 = vpop.f32.mrf.mxu0
        %v2424 = vadd.f32 0.0, %v2423
        %2425 = vmatmul.bf16.gmra.mxu0 %v2332
        %v2426 = vpop.f32.mrf.mxu0
        %v2427 = vadd.f32 0.0, %v2426
        %v2428 = vpop.f32.mrf.mxu0
        %v2429 = vadd.f32 0.0, %v2428
        %2430 = vmatmul.bf16.gmra.mxu0 %v2333
        %v2431 = vpop.f32.mrf.mxu0
        %v2432 = vadd.f32 0.0, %v2431
        %v2433 = vpop.f32.mrf.mxu0
        %v2434 = vadd.f32 0.0, %v2433
        %2435 = vmatmul.bf16.gmra.mxu0 %v2334
        %v2436 = vpop.f32.mrf.mxu0
        %v2437 = vadd.f32 0.0, %v2436
        %v2438 = vpop.f32.mrf.mxu0
        %v2439 = vadd.f32 0.0, %v2438
        %2440 = vmatmul.bf16.gmra.mxu0 %v2335
        %v2441 = vpop.f32.mrf.mxu0
        %v2442 = vadd.f32 0.0, %v2441
        %v2443 = vpop.f32.mrf.mxu0
        %v2444 = vadd.f32 0.0, %v2443
        %2445 = vmatmul.bf16.gmra.mxu0 %v2336
        %v2446 = vpop.f32.mrf.mxu0
        %v2447 = vadd.f32 0.0, %v2446
        %v2448 = vpop.f32.mrf.mxu0
        %v2449 = vadd.f32 0.0, %v2448
        %2450 = vmatmul.bf16.gmra.mxu0 %v2337
        %v2451 = vpop.f32.mrf.mxu0
        %v2452 = vadd.f32 0.0, %v2451
        %v2453 = vpop.f32.mrf.mxu0
        %v2454 = vadd.f32 0.0, %v2453
        %2455 = vmatmul.bf16.gmra.mxu0 %v2338
        %v2456 = vpop.f32.mrf.mxu0
        %v2457 = vadd.f32 0.0, %v2456
        %v2458 = vpop.f32.mrf.mxu0
        %v2459 = vadd.f32 0.0, %v2458
        %2460 = vmatmul.bf16.gmra.mxu0 %v2339
        %v2461 = vpop.f32.mrf.mxu0
        %v2462 = vadd.f32 0.0, %v2461
        %v2463 = vpop.f32.mrf.mxu0
        %v2464 = vadd.f32 0.0, %v2463
        %2465 = vmatmul.bf16.gmra.mxu0 %v2340
        %v2466 = vpop.f32.mrf.mxu0
        %v2467 = vadd.f32 0.0, %v2466
        %v2468 = vpop.f32.mrf.mxu0
        %v2469 = vadd.f32 0.0, %v2468
        %2470 = vmatmul.bf16.gmra.mxu0 %v2341
        %v2471 = vpop.f32.mrf.mxu0
        %v2472 = vadd.f32 0.0, %v2471
        %v2473 = vpop.f32.mrf.mxu0
        %v2474 = vadd.f32 0.0, %v2473
        %2475 = vmatmul.bf16.gmra.mxu0 %v2342
        %v2476 = vpop.f32.mrf.mxu0
        %v2477 = vadd.f32 0.0, %v2476
        %v2478 = vpop.f32.mrf.mxu0
        %v2479 = vadd.f32 0.0, %v2478
        %2480 = vmatmul.bf16.gmra.mxu0 %v2343
        %v2481 = vpop.f32.mrf.mxu0
        %v2482 = vadd.f32 0.0, %v2481
        %v2483 = vpop.f32.mrf.mxu0
        %v2484 = vadd.f32 0.0, %v2483
        %2485 = vmatmul.bf16.gmra.mxu0 %v2344
        %v2486 = vpop.f32.mrf.mxu0
        %v2487 = vadd.f32 0.0, %v2486
        %v2488 = vpop.f32.mrf.mxu0
        %v2489 = vadd.f32 0.0, %v2488
        %2490 = vmatmul.bf16.gmra.mxu0 %v2345
        %v2491 = vpop.f32.mrf.mxu0
        %v2492 = vadd.f32 0.0, %v2491
        %v2493 = vpop.f32.mrf.mxu0
        %v2494 = vadd.f32 0.0, %v2493
        %2495 = vmatmul.bf16.gmra.mxu0 %v2346
        %v2496 = vpop.f32.mrf.mxu0
        %v2497 = vadd.f32 0.0, %v2496
        %v2498 = vpop.f32.mrf.mxu0
        %v2499 = vadd.f32 0.0, %v2498
        %2500 = vdwg.mxu0
        %v2501 = vadd.f32 %v2203, %v2422
        %v2502 = vadd.f32 %v2204, %v2424
        %v2503 = vadd.f32 %v2205, %v2427
        %v2504 = vadd.f32 %v2206, %v2429
        %v2505 = vadd.f32 %v2207, %v2432
        %v2506 = vadd.f32 %v2208, %v2434
        %v2507 = vadd.f32 %v2209, %v2437
        %v2508 = vadd.f32 %v2210, %v2439
        %v2509 = vadd.f32 %v2211, %v2442
        %v2510 = vadd.f32 %v2212, %v2444
        %v2511 = vadd.f32 %v2213, %v2447
        %v2512 = vadd.f32 %v2214, %v2449
        %v2513 = vadd.f32 %v2215, %v2452
        %v2514 = vadd.f32 %v2216, %v2454
        %v2515 = vadd.f32 %v2217, %v2457
        %v2516 = vadd.f32 %v2218, %v2459
        %v2517 = vadd.f32 %v2219, %v2462
        %v2518 = vadd.f32 %v2220, %v2464
        %v2519 = vadd.f32 %v2221, %v2467
        %v2520 = vadd.f32 %v2222, %v2469
        %v2521 = vadd.f32 %v2223, %v2472
        %v2522 = vadd.f32 %v2224, %v2474
        %v2523 = vadd.f32 %v2225, %v2477
        %v2524 = vadd.f32 %v2226, %v2479
        %v2525 = vadd.f32 %v2227, %v2482
        %v2526 = vadd.f32 %v2228, %v2484
        %v2527 = vadd.f32 %v2229, %v2487
        %v2528 = vadd.f32 %v2230, %v2489
        %v2529 = vadd.f32 %v2231, %v2492
        %v2530 = vadd.f32 %v2232, %v2494
        %v2531 = vadd.f32 %v2233, %v2497
        %v2532 = vadd.f32 %v2234, %v2499
        %v2533 = vpack.c.bf16 %v1135, %v1133
        %v2534 = vpack.c.bf16 %v1140, %v1138
        %v2535 = vpack.c.bf16 %v1145, %v1143
        %v2536 = vpack.c.bf16 %v1150, %v1148
        %v2537 = vpack.c.bf16 %v1155, %v1153
        %v2538 = vpack.c.bf16 %v1160, %v1158
        %v2539 = vpack.c.bf16 %v1165, %v1163
        %v2540 = vpack.c.bf16 %v1170, %v1168
        %v2541 = vpack.c.bf16 %v1175, %v1173
        %v2542 = vpack.c.bf16 %v1180, %v1178
        %v2543 = vpack.c.bf16 %v1185, %v1183
        %v2544 = vpack.c.bf16 %v1190, %v1188
        %v2545 = vpack.c.bf16 %v1195, %v1193
        %v2546 = vpack.c.bf16 %v1200, %v1198
        %v2547 = vpack.c.bf16 %v1205, %v1203
        %v2548 = vpack.c.bf16 %v1210, %v1208
        %s2549 = scalar_lea.vmem %s2, 256
        %v2550 = vld [vmem:[%s2549] sm:$0xf]
        %v2551 = vld [vmem:[%s2549 + $0x4] sm:$0xf]
        %v2552 = vld [vmem:[%s2549 + $0x8] sm:$0xf]
        %v2553 = vld [vmem:[%s2549 + $0xc] sm:$0xf]
        %v2554 = vld [vmem:[%s2549 + $0x10] sm:$0xf]
        %v2555 = vld [vmem:[%s2549 + $0x14] sm:$0xf]
        %v2556 = vld [vmem:[%s2549 + $0x18] sm:$0xf]
        %v2557 = vld [vmem:[%s2549 + $0x1c] sm:$0xf]
        %v2558 = vld [vmem:[%s2549 + $0x20] sm:$0xf]
        %v2559 = vld [vmem:[%s2549 + $0x24] sm:$0xf]
        %v2560 = vld [vmem:[%s2549 + $0x28] sm:$0xf]
        %v2561 = vld [vmem:[%s2549 + $0x2c] sm:$0xf]
        %v2562 = vld [vmem:[%s2549 + $0x30] sm:$0xf]
        %v2563 = vld [vmem:[%s2549 + $0x34] sm:$0xf]
        %v2564 = vld [vmem:[%s2549 + $0x38] sm:$0xf]
        %v2565 = vld [vmem:[%s2549 + $0x3c] sm:$0xf]
        %v2582 = vunpack.c.l.b16 %v2550
        %v2583 = vunpack.c.l.b16 %v2551
        %v2584 = vunpack.c.l.b16 %v2552
        %v2585 = vunpack.c.l.b16 %v2553
        %v2586 = vunpack.c.l.b16 %v2554
        %v2587 = vunpack.c.l.b16 %v2555
        %v2588 = vunpack.c.l.b16 %v2556
        %v2589 = vunpack.c.l.b16 %v2557
        %v2590 = vunpack.c.l.b16 %v2558
        %v2591 = vunpack.c.l.b16 %v2559
        %v2592 = vunpack.c.l.b16 %v2560
        %v2593 = vunpack.c.l.b16 %v2561
        %v2594 = vunpack.c.l.b16 %v2562
        %v2595 = vunpack.c.l.b16 %v2563
        %v2596 = vunpack.c.l.b16 %v2564
        %v2597 = vunpack.c.l.b16 %v2565
        %v2598 = vpack.c.b16 %v2583, %v2582
        %v2599 = vpack.c.b16 %v2585, %v2584
        %v2600 = vpack.c.b16 %v2587, %v2586
        %v2601 = vpack.c.b16 %v2589, %v2588
        %v2602 = vpack.c.b16 %v2591, %v2590
        %v2603 = vpack.c.b16 %v2593, %v2592
        %v2604 = vpack.c.b16 %v2595, %v2594
        %v2605 = vpack.c.b16 %v2597, %v2596
        %2614 = vmatpush.bf16.msra.mxu0 %v2605
        %2615 = vmatpush.bf16.msra.mxu0 %v2604
        %2616 = vmatpush.bf16.msra.mxu0 %v2603
        %2617 = vmatpush.bf16.msra.mxu0 %v2602
        %2618 = vmatpush.bf16.msra.mxu0 %v2601
        %2619 = vmatpush.bf16.msra.mxu0 %v2600
        %2620 = vmatpush.bf16.msra.mxu0 %v2599
        %2621 = vmatpush.bf16.msra.mxu0 %v2598
        %2622 = vmatmul.bf16.gmra.mxu0 %v2533
        %v2623 = vpop.f32.mrf.mxu0
        %v2624 = vadd.f32 0.0, %v2623
        %v2625 = vpop.f32.mrf.mxu0
        %v2626 = vadd.f32 0.0, %v2625
        %2627 = vmatmul.bf16.gmra.mxu0 %v2534
        %v2628 = vpop.f32.mrf.mxu0
        %v2629 = vadd.f32 0.0, %v2628
        %v2630 = vpop.f32.mrf.mxu0
        %v2631 = vadd.f32 0.0, %v2630
        %2632 = vmatmul.bf16.gmra.mxu0 %v2535
        %v2633 = vpop.f32.mrf.mxu0
        %v2634 = vadd.f32 0.0, %v2633
        %v2635 = vpop.f32.mrf.mxu0
        %v2636 = vadd.f32 0.0, %v2635
        %2637 = vmatmul.bf16.gmra.mxu0 %v2536
        %v2638 = vpop.f32.mrf.mxu0
        %v2639 = vadd.f32 0.0, %v2638
        %v2640 = vpop.f32.mrf.mxu0
        %v2641 = vadd.f32 0.0, %v2640
        %2642 = vmatmul.bf16.gmra.mxu0 %v2537
        %v2643 = vpop.f32.mrf.mxu0
        %v2644 = vadd.f32 0.0, %v2643
        %v2645 = vpop.f32.mrf.mxu0
        %v2646 = vadd.f32 0.0, %v2645
        %2647 = vmatmul.bf16.gmra.mxu0 %v2538
        %v2648 = vpop.f32.mrf.mxu0
        %v2649 = vadd.f32 0.0, %v2648
        %v2650 = vpop.f32.mrf.mxu0
        %v2651 = vadd.f32 0.0, %v2650
        %2652 = vmatmul.bf16.gmra.mxu0 %v2539
        %v2653 = vpop.f32.mrf.mxu0
        %v2654 = vadd.f32 0.0, %v2653
        %v2655 = vpop.f32.mrf.mxu0
        %v2656 = vadd.f32 0.0, %v2655
        %2657 = vmatmul.bf16.gmra.mxu0 %v2540
        %v2658 = vpop.f32.mrf.mxu0
        %v2659 = vadd.f32 0.0, %v2658
        %v2660 = vpop.f32.mrf.mxu0
        %v2661 = vadd.f32 0.0, %v2660
        %2662 = vmatmul.bf16.gmra.mxu0 %v2541
        %v2663 = vpop.f32.mrf.mxu0
        %v2664 = vadd.f32 0.0, %v2663
        %v2665 = vpop.f32.mrf.mxu0
        %v2666 = vadd.f32 0.0, %v2665
        %2667 = vmatmul.bf16.gmra.mxu0 %v2542
        %v2668 = vpop.f32.mrf.mxu0
        %v2669 = vadd.f32 0.0, %v2668
        %v2670 = vpop.f32.mrf.mxu0
        %v2671 = vadd.f32 0.0, %v2670
        %2672 = vmatmul.bf16.gmra.mxu0 %v2543
        %v2673 = vpop.f32.mrf.mxu0
        %v2674 = vadd.f32 0.0, %v2673
        %v2675 = vpop.f32.mrf.mxu0
        %v2676 = vadd.f32 0.0, %v2675
        %2677 = vmatmul.bf16.gmra.mxu0 %v2544
        %v2678 = vpop.f32.mrf.mxu0
        %v2679 = vadd.f32 0.0, %v2678
        %v2680 = vpop.f32.mrf.mxu0
        %v2681 = vadd.f32 0.0, %v2680
        %2682 = vmatmul.bf16.gmra.mxu0 %v2545
        %v2683 = vpop.f32.mrf.mxu0
        %v2684 = vadd.f32 0.0, %v2683
        %v2685 = vpop.f32.mrf.mxu0
        %v2686 = vadd.f32 0.0, %v2685
        %2687 = vmatmul.bf16.gmra.mxu0 %v2546
        %v2688 = vpop.f32.mrf.mxu0
        %v2689 = vadd.f32 0.0, %v2688
        %v2690 = vpop.f32.mrf.mxu0
        %v2691 = vadd.f32 0.0, %v2690
        %2692 = vmatmul.bf16.gmra.mxu0 %v2547
        %v2693 = vpop.f32.mrf.mxu0
        %v2694 = vadd.f32 0.0, %v2693
        %v2695 = vpop.f32.mrf.mxu0
        %v2696 = vadd.f32 0.0, %v2695
        %2697 = vmatmul.bf16.gmra.mxu0 %v2548
        %v2698 = vpop.f32.mrf.mxu0
        %v2699 = vadd.f32 0.0, %v2698
        %v2700 = vpop.f32.mrf.mxu0
        %v2701 = vadd.f32 0.0, %v2700
        %2702 = vdwg.mxu0
        %v2703 = vadd.f32 %v2501, %v2624
        %v2704 = vadd.f32 %v2502, %v2626
        %v2705 = vadd.f32 %v2503, %v2629
        %v2706 = vadd.f32 %v2504, %v2631
        %v2707 = vadd.f32 %v2505, %v2634
        %v2708 = vadd.f32 %v2506, %v2636
        %v2709 = vadd.f32 %v2507, %v2639
        %v2710 = vadd.f32 %v2508, %v2641
        %v2711 = vadd.f32 %v2509, %v2644
        %v2712 = vadd.f32 %v2510, %v2646
        %v2713 = vadd.f32 %v2511, %v2649
        %v2714 = vadd.f32 %v2512, %v2651
        %v2715 = vadd.f32 %v2513, %v2654
        %v2716 = vadd.f32 %v2514, %v2656
        %v2717 = vadd.f32 %v2515, %v2659
        %v2718 = vadd.f32 %v2516, %v2661
        %v2719 = vadd.f32 %v2517, %v2664
        %v2720 = vadd.f32 %v2518, %v2666
        %v2721 = vadd.f32 %v2519, %v2669
        %v2722 = vadd.f32 %v2520, %v2671
        %v2723 = vadd.f32 %v2521, %v2674
        %v2724 = vadd.f32 %v2522, %v2676
        %v2725 = vadd.f32 %v2523, %v2679
        %v2726 = vadd.f32 %v2524, %v2681
        %v2727 = vadd.f32 %v2525, %v2684
        %v2728 = vadd.f32 %v2526, %v2686
        %v2729 = vadd.f32 %v2527, %v2689
        %v2730 = vadd.f32 %v2528, %v2691
        %v2731 = vadd.f32 %v2529, %v2694
        %v2732 = vadd.f32 %v2530, %v2696
        %v2733 = vadd.f32 %v2531, %v2699
        %v2734 = vadd.f32 %v2532, %v2701
        %v2735 = vsel %vm867, 1, 0
        %v2736 = vsel %vm868, 1, 0
        %v2737 = vsel %vm869, 1, 0
        %v2738 = vsel %vm870, 1, 0
        %v2739 = vsel %vm871, 1, 0
        %v2740 = vsel %vm872, 1, 0
        %v2741 = vsel %vm873, 1, 0
        %v2742 = vsel %vm874, 1, 0
        %v2743 = vsel %vm875, 1, 0
        %v2744 = vsel %vm876, 1, 0
        %v2745 = vsel %vm877, 1, 0
        %v2746 = vsel %vm878, 1, 0
        %v2747 = vsel %vm879, 1, 0
        %v2748 = vsel %vm880, 1, 0
        %v2749 = vsel %vm881, 1, 0
        %v2750 = vsel %vm882, 1, 0
        %v2751 = vsel %vm883, 1, 0
        %v2752 = vsel %vm884, 1, 0
        %v2753 = vsel %vm885, 1, 0
        %v2754 = vsel %vm886, 1, 0
        %v2755 = vsel %vm887, 1, 0
        %v2756 = vsel %vm888, 1, 0
        %v2757 = vsel %vm889, 1, 0
        %v2758 = vsel %vm890, 1, 0
        %v2759 = vsel %vm891, 1, 0
        %v2760 = vsel %vm892, 1, 0
        %v2761 = vsel %vm893, 1, 0
        %v2762 = vsel %vm894, 1, 0
        %v2763 = vsel %vm895, 1, 0
        %v2764 = vsel %vm896, 1, 0
        %v2765 = vsel %vm897, 1, 0
        %v2766 = vsel %vm898, 1, 0
        %vm2767 = vcmp.eq.s32.totalorder %v2735, 1
        %vm2768 = vcmp.eq.s32.totalorder %v2736, 1
        %vm2769 = vcmp.eq.s32.totalorder %v2737, 1
        %vm2770 = vcmp.eq.s32.totalorder %v2738, 1
        %vm2771 = vcmp.eq.s32.totalorder %v2739, 1
        %vm2772 = vcmp.eq.s32.totalorder %v2740, 1
        %vm2773 = vcmp.eq.s32.totalorder %v2741, 1
        %vm2774 = vcmp.eq.s32.totalorder %v2742, 1
        %vm2775 = vcmp.eq.s32.totalorder %v2743, 1
        %vm2776 = vcmp.eq.s32.totalorder %v2744, 1
        %vm2777 = vcmp.eq.s32.totalorder %v2745, 1
        %vm2778 = vcmp.eq.s32.totalorder %v2746, 1
        %vm2779 = vcmp.eq.s32.totalorder %v2747, 1
        %vm2780 = vcmp.eq.s32.totalorder %v2748, 1
        %vm2781 = vcmp.eq.s32.totalorder %v2749, 1
        %vm2782 = vcmp.eq.s32.totalorder %v2750, 1
        %vm2783 = vcmp.eq.s32.totalorder %v2751, 1
        %vm2784 = vcmp.eq.s32.totalorder %v2752, 1
        %vm2785 = vcmp.eq.s32.totalorder %v2753, 1
        %vm2786 = vcmp.eq.s32.totalorder %v2754, 1
        %vm2787 = vcmp.eq.s32.totalorder %v2755, 1
        %vm2788 = vcmp.eq.s32.totalorder %v2756, 1
        %vm2789 = vcmp.eq.s32.totalorder %v2757, 1
        %vm2790 = vcmp.eq.s32.totalorder %v2758, 1
        %vm2791 = vcmp.eq.s32.totalorder %v2759, 1
        %vm2792 = vcmp.eq.s32.totalorder %v2760, 1
        %vm2793 = vcmp.eq.s32.totalorder %v2761, 1
        %vm2794 = vcmp.eq.s32.totalorder %v2762, 1
        %vm2795 = vcmp.eq.s32.totalorder %v2763, 1
        %vm2796 = vcmp.eq.s32.totalorder %v2764, 1
        %vm2797 = vcmp.eq.s32.totalorder %v2765, 1
        %vm2798 = vcmp.eq.s32.totalorder %v2766, 1
        %v2799 = vsel %vm2767, %v1903, 0.0
        %v2800 = vsel %vm2768, %v1902, 0.0
        %v2801 = vsel %vm2769, %v1901, 0.0
        %v2802 = vsel %vm2770, %v1900, 0.0
        %v2803 = vsel %vm2771, %v1899, 0.0
        %v2804 = vsel %vm2772, %v1898, 0.0
        %v2805 = vsel %vm2773, %v1897, 0.0
        %v2806 = vsel %vm2774, %v1896, 0.0
        %v2807 = vsel %vm2775, %v1895, 0.0
        %v2808 = vsel %vm2776, %v1894, 0.0
        %v2809 = vsel %vm2777, %v1893, 0.0
        %v2810 = vsel %vm2778, %v1892, 0.0
        %v2811 = vsel %vm2779, %v1891, 0.0
        %v2812 = vsel %vm2780, %v1890, 0.0
        %v2813 = vsel %vm2781, %v1889, 0.0
        %v2814 = vsel %vm2782, %v1888, 0.0
        %v2815 = vsel %vm2783, %v1887, 0.0
        %v2816 = vsel %vm2784, %v1886, 0.0
        %v2817 = vsel %vm2785, %v1885, 0.0
        %v2818 = vsel %vm2786, %v1884, 0.0
        %v2819 = vsel %vm2787, %v1883, 0.0
        %v2820 = vsel %vm2788, %v1882, 0.0
        %v2821 = vsel %vm2789, %v1881, 0.0
        %v2822 = vsel %vm2790, %v1880, 0.0
        %v2823 = vsel %vm2791, %v1879, 0.0
        %v2824 = vsel %vm2792, %v1878, 0.0
        %v2825 = vsel %vm2793, %v1877, 0.0
        %v2826 = vsel %vm2794, %v1876, 0.0
        %v2827 = vsel %vm2795, %v1875, 0.0
        %v2828 = vsel %vm2796, %v1874, 0.0
        %v2829 = vsel %vm2797, %v1873, 0.0
        %v2830 = vsel %vm2798, %v1904, 0.0
        %v2831 = vpack.c.bf16 %v2800, %v2799
        %v2832 = vpack.c.bf16 %v2802, %v2801
        %v2833 = vpack.c.bf16 %v2804, %v2803
        %v2834 = vpack.c.bf16 %v2806, %v2805
        %v2835 = vpack.c.bf16 %v2808, %v2807
        %v2836 = vpack.c.bf16 %v2810, %v2809
        %v2837 = vpack.c.bf16 %v2812, %v2811
        %v2838 = vpack.c.bf16 %v2814, %v2813
        %v2839 = vpack.c.bf16 %v2816, %v2815
        %v2840 = vpack.c.bf16 %v2818, %v2817
        %v2841 = vpack.c.bf16 %v2820, %v2819
        %v2842 = vpack.c.bf16 %v2822, %v2821
        %v2843 = vpack.c.bf16 %v2824, %v2823
        %v2844 = vpack.c.bf16 %v2826, %v2825
        %v2845 = vpack.c.bf16 %v2828, %v2827
        %v2846 = vpack.c.bf16 %v2830, %v2829
        %s2847 = scalar_lea.vmem %s2, 320
        %v2848 = vld [vmem:[%s2847] sm:$0xf]
        %v2849 = vld [vmem:[%s2847 + $0x4] sm:$0xf]
        %v2850 = vld [vmem:[%s2847 + $0x8] sm:$0xf]
        %v2851 = vld [vmem:[%s2847 + $0xc] sm:$0xf]
        %v2852 = vld [vmem:[%s2847 + $0x10] sm:$0xf]
        %v2853 = vld [vmem:[%s2847 + $0x14] sm:$0xf]
        %v2854 = vld [vmem:[%s2847 + $0x18] sm:$0xf]
        %v2855 = vld [vmem:[%s2847 + $0x1c] sm:$0xf]
        %v2856 = vld [vmem:[%s2847 + $0x20] sm:$0xf]
        %v2857 = vld [vmem:[%s2847 + $0x24] sm:$0xf]
        %v2858 = vld [vmem:[%s2847 + $0x28] sm:$0xf]
        %v2859 = vld [vmem:[%s2847 + $0x2c] sm:$0xf]
        %v2860 = vld [vmem:[%s2847 + $0x30] sm:$0xf]
        %v2861 = vld [vmem:[%s2847 + $0x34] sm:$0xf]
        %v2862 = vld [vmem:[%s2847 + $0x38] sm:$0xf]
        %v2863 = vld [vmem:[%s2847 + $0x3c] sm:$0xf]
        %v2880 = vunpack.c.l.b16 %v2848
        %v2881 = vunpack.c.l.b16 %v2849
        %v2882 = vunpack.c.l.b16 %v2850
        %v2883 = vunpack.c.l.b16 %v2851
        %v2884 = vunpack.c.l.b16 %v2852
        %v2885 = vunpack.c.l.b16 %v2853
        %v2886 = vunpack.c.l.b16 %v2854
        %v2887 = vunpack.c.l.b16 %v2855
        %v2888 = vunpack.c.l.b16 %v2856
        %v2889 = vunpack.c.l.b16 %v2857
        %v2890 = vunpack.c.l.b16 %v2858
        %v2891 = vunpack.c.l.b16 %v2859
        %v2892 = vunpack.c.l.b16 %v2860
        %v2893 = vunpack.c.l.b16 %v2861
        %v2894 = vunpack.c.l.b16 %v2862
        %v2895 = vunpack.c.l.b16 %v2863
        %v2896 = vpack.c.b16 %v2881, %v2880
        %v2897 = vpack.c.b16 %v2883, %v2882
        %v2898 = vpack.c.b16 %v2885, %v2884
        %v2899 = vpack.c.b16 %v2887, %v2886
        %v2900 = vpack.c.b16 %v2889, %v2888
        %v2901 = vpack.c.b16 %v2891, %v2890
        %v2902 = vpack.c.b16 %v2893, %v2892
        %v2903 = vpack.c.b16 %v2895, %v2894
        %2912 = vmatpush.bf16.msra.mxu0 %v2903
        %2913 = vmatpush.bf16.msra.mxu0 %v2902
        %2914 = vmatpush.bf16.msra.mxu0 %v2901
        %2915 = vmatpush.bf16.msra.mxu0 %v2900
        %2916 = vmatpush.bf16.msra.mxu0 %v2899
        %2917 = vmatpush.bf16.msra.mxu0 %v2898
        %2918 = vmatpush.bf16.msra.mxu0 %v2897
        %2919 = vmatpush.bf16.msra.mxu0 %v2896
        %2920 = vmatmul.bf16.gmra.mxu0 %v2831
        %v2921 = vpop.f32.mrf.mxu0
        %v2922 = vadd.f32 0.0, %v2921
        %v2923 = vpop.f32.mrf.mxu0
        %v2924 = vadd.f32 0.0, %v2923
        %2925 = vmatmul.bf16.gmra.mxu0 %v2832
        %v2926 = vpop.f32.mrf.mxu0
        %v2927 = vadd.f32 0.0, %v2926
        %v2928 = vpop.f32.mrf.mxu0
        %v2929 = vadd.f32 0.0, %v2928
        %2930 = vmatmul.bf16.gmra.mxu0 %v2833
        %v2931 = vpop.f32.mrf.mxu0
        %v2932 = vadd.f32 0.0, %v2931
        %v2933 = vpop.f32.mrf.mxu0
        %v2934 = vadd.f32 0.0, %v2933
        %2935 = vmatmul.bf16.gmra.mxu0 %v2834
        %v2936 = vpop.f32.mrf.mxu0
        %v2937 = vadd.f32 0.0, %v2936
        %v2938 = vpop.f32.mrf.mxu0
        %v2939 = vadd.f32 0.0, %v2938
        %2940 = vmatmul.bf16.gmra.mxu0 %v2835
        %v2941 = vpop.f32.mrf.mxu0
        %v2942 = vadd.f32 0.0, %v2941
        %v2943 = vpop.f32.mrf.mxu0
        %v2944 = vadd.f32 0.0, %v2943
        %2945 = vmatmul.bf16.gmra.mxu0 %v2836
        %v2946 = vpop.f32.mrf.mxu0
        %v2947 = vadd.f32 0.0, %v2946
        %v2948 = vpop.f32.mrf.mxu0
        %v2949 = vadd.f32 0.0, %v2948
        %2950 = vmatmul.bf16.gmra.mxu0 %v2837
        %v2951 = vpop.f32.mrf.mxu0
        %v2952 = vadd.f32 0.0, %v2951
        %v2953 = vpop.f32.mrf.mxu0
        %v2954 = vadd.f32 0.0, %v2953
        %2955 = vmatmul.bf16.gmra.mxu0 %v2838
        %v2956 = vpop.f32.mrf.mxu0
        %v2957 = vadd.f32 0.0, %v2956
        %v2958 = vpop.f32.mrf.mxu0
        %v2959 = vadd.f32 0.0, %v2958
        %2960 = vmatmul.bf16.gmra.mxu0 %v2839
        %v2961 = vpop.f32.mrf.mxu0
        %v2962 = vadd.f32 0.0, %v2961
        %v2963 = vpop.f32.mrf.mxu0
        %v2964 = vadd.f32 0.0, %v2963
        %2965 = vmatmul.bf16.gmra.mxu0 %v2840
        %v2966 = vpop.f32.mrf.mxu0
        %v2967 = vadd.f32 0.0, %v2966
        %v2968 = vpop.f32.mrf.mxu0
        %v2969 = vadd.f32 0.0, %v2968
        %2970 = vmatmul.bf16.gmra.mxu0 %v2841
        %v2971 = vpop.f32.mrf.mxu0
        %v2972 = vadd.f32 0.0, %v2971
        %v2973 = vpop.f32.mrf.mxu0
        %v2974 = vadd.f32 0.0, %v2973
        %2975 = vmatmul.bf16.gmra.mxu0 %v2842
        %v2976 = vpop.f32.mrf.mxu0
        %v2977 = vadd.f32 0.0, %v2976
        %v2978 = vpop.f32.mrf.mxu0
        %v2979 = vadd.f32 0.0, %v2978
        %2980 = vmatmul.bf16.gmra.mxu0 %v2843
        %v2981 = vpop.f32.mrf.mxu0
        %v2982 = vadd.f32 0.0, %v2981
        %v2983 = vpop.f32.mrf.mxu0
        %v2984 = vadd.f32 0.0, %v2983
        %2985 = vmatmul.bf16.gmra.mxu0 %v2844
        %v2986 = vpop.f32.mrf.mxu0
        %v2987 = vadd.f32 0.0, %v2986
        %v2988 = vpop.f32.mrf.mxu0
        %v2989 = vadd.f32 0.0, %v2988
        %2990 = vmatmul.bf16.gmra.mxu0 %v2845
        %v2991 = vpop.f32.mrf.mxu0
        %v2992 = vadd.f32 0.0, %v2991
        %v2993 = vpop.f32.mrf.mxu0
        %v2994 = vadd.f32 0.0, %v2993
        %2995 = vmatmul.bf16.gmra.mxu0 %v2846
        %v2996 = vpop.f32.mrf.mxu0
        %v2997 = vadd.f32 0.0, %v2996
        %v2998 = vpop.f32.mrf.mxu0
        %v2999 = vadd.f32 0.0, %v2998
        %3000 = vdwg.mxu0
        %v3001 = vadd.f32 %v2703, %v2922
        %v3002 = vadd.f32 %v2704, %v2924
        %v3003 = vadd.f32 %v2705, %v2927
        %v3004 = vadd.f32 %v2706, %v2929
        %v3005 = vadd.f32 %v2707, %v2932
        %v3006 = vadd.f32 %v2708, %v2934
        %v3007 = vadd.f32 %v2709, %v2937
        %v3008 = vadd.f32 %v2710, %v2939
        %v3009 = vadd.f32 %v2711, %v2942
        %v3010 = vadd.f32 %v2712, %v2944
        %v3011 = vadd.f32 %v2713, %v2947
        %v3012 = vadd.f32 %v2714, %v2949
        %v3013 = vadd.f32 %v2715, %v2952
        %v3014 = vadd.f32 %v2716, %v2954
        %v3015 = vadd.f32 %v2717, %v2957
        %v3016 = vadd.f32 %v2718, %v2959
        %v3017 = vadd.f32 %v2719, %v2962
        %v3018 = vadd.f32 %v2720, %v2964
        %v3019 = vadd.f32 %v2721, %v2967
        %v3020 = vadd.f32 %v2722, %v2969
        %v3021 = vadd.f32 %v2723, %v2972
        %v3022 = vadd.f32 %v2724, %v2974
        %v3023 = vadd.f32 %v2725, %v2977
        %v3024 = vadd.f32 %v2726, %v2979
        %v3025 = vadd.f32 %v2727, %v2982
        %v3026 = vadd.f32 %v2728, %v2984
        %v3027 = vadd.f32 %v2729, %v2987
        %v3028 = vadd.f32 %v2730, %v2989
        %v3029 = vadd.f32 %v2731, %v2992
        %v3030 = vadd.f32 %v2732, %v2994
        %v3031 = vadd.f32 %v2733, %v2997
        %v3032 = vadd.f32 %v2734, %v2999
        %vm3033 = vmand %vm419, %vm835
        %vm3034 = vmand %vm420, %vm836
        %vm3035 = vmand %vm421, %vm837
        %vm3036 = vmand %vm422, %vm838
        %vm3037 = vmand %vm423, %vm839
        %vm3038 = vmand %vm424, %vm840
        %vm3039 = vmand %vm425, %vm841
        %vm3040 = vmand %vm426, %vm842
        %vm3041 = vmand %vm427, %vm843
        %vm3042 = vmand %vm428, %vm844
        %vm3043 = vmand %vm429, %vm845
        %vm3044 = vmand %vm430, %vm846
        %vm3045 = vmand %vm431, %vm847
        %vm3046 = vmand %vm432, %vm848
        %vm3047 = vmand %vm433, %vm849
        %vm3048 = vmand %vm434, %vm850
        %vm3049 = vmand %vm435, %vm851
        %vm3050 = vmand %vm436, %vm852
        %vm3051 = vmand %vm437, %vm853
        %vm3052 = vmand %vm438, %vm854
        %vm3053 = vmand %vm439, %vm855
        %vm3054 = vmand %vm440, %vm856
        %vm3055 = vmand %vm441, %vm857
        %vm3056 = vmand %vm442, %vm858
        %vm3057 = vmand %vm443, %vm859
        %vm3058 = vmand %vm444, %vm860
        %vm3059 = vmand %vm445, %vm861
        %vm3060 = vmand %vm446, %vm862
        %vm3061 = vmand %vm447, %vm863
        %vm3062 = vmand %vm448, %vm864
        %vm3063 = vmand %vm449, %vm865
        %vm3064 = vmand %vm450, %vm866
        %v3065 = vsel %vm3033, 1, 0
        %v3066 = vsel %vm3034, 1, 0
        %v3067 = vsel %vm3035, 1, 0
        %v3068 = vsel %vm3036, 1, 0
        %v3069 = vsel %vm3037, 1, 0
        %v3070 = vsel %vm3038, 1, 0
        %v3071 = vsel %vm3039, 1, 0
        %v3072 = vsel %vm3040, 1, 0
        %v3073 = vsel %vm3041, 1, 0
        %v3074 = vsel %vm3042, 1, 0
        %v3075 = vsel %vm3043, 1, 0
        %v3076 = vsel %vm3044, 1, 0
        %v3077 = vsel %vm3045, 1, 0
        %v3078 = vsel %vm3046, 1, 0
        %v3079 = vsel %vm3047, 1, 0
        %v3080 = vsel %vm3048, 1, 0
        %v3081 = vsel %vm3049, 1, 0
        %v3082 = vsel %vm3050, 1, 0
        %v3083 = vsel %vm3051, 1, 0
        %v3084 = vsel %vm3052, 1, 0
        %v3085 = vsel %vm3053, 1, 0
        %v3086 = vsel %vm3054, 1, 0
        %v3087 = vsel %vm3055, 1, 0
        %v3088 = vsel %vm3056, 1, 0
        %v3089 = vsel %vm3057, 1, 0
        %v3090 = vsel %vm3058, 1, 0
        %v3091 = vsel %vm3059, 1, 0
        %v3092 = vsel %vm3060, 1, 0
        %v3093 = vsel %vm3061, 1, 0
        %v3094 = vsel %vm3062, 1, 0
        %v3095 = vsel %vm3063, 1, 0
        %v3096 = vsel %vm3064, 1, 0
        %vm3097 = vcmp.eq.s32.totalorder %v3065, 1
        %vm3098 = vcmp.eq.s32.totalorder %v3066, 1
        %vm3099 = vcmp.eq.s32.totalorder %v3067, 1
        %vm3100 = vcmp.eq.s32.totalorder %v3068, 1
        %vm3101 = vcmp.eq.s32.totalorder %v3069, 1
        %vm3102 = vcmp.eq.s32.totalorder %v3070, 1
        %vm3103 = vcmp.eq.s32.totalorder %v3071, 1
        %vm3104 = vcmp.eq.s32.totalorder %v3072, 1
        %vm3105 = vcmp.eq.s32.totalorder %v3073, 1
        %vm3106 = vcmp.eq.s32.totalorder %v3074, 1
        %vm3107 = vcmp.eq.s32.totalorder %v3075, 1
        %vm3108 = vcmp.eq.s32.totalorder %v3076, 1
        %vm3109 = vcmp.eq.s32.totalorder %v3077, 1
        %vm3110 = vcmp.eq.s32.totalorder %v3078, 1
        %vm3111 = vcmp.eq.s32.totalorder %v3079, 1
        %vm3112 = vcmp.eq.s32.totalorder %v3080, 1
        %vm3113 = vcmp.eq.s32.totalorder %v3081, 1
        %vm3114 = vcmp.eq.s32.totalorder %v3082, 1
        %vm3115 = vcmp.eq.s32.totalorder %v3083, 1
        %vm3116 = vcmp.eq.s32.totalorder %v3084, 1
        %vm3117 = vcmp.eq.s32.totalorder %v3085, 1
        %vm3118 = vcmp.eq.s32.totalorder %v3086, 1
        %vm3119 = vcmp.eq.s32.totalorder %v3087, 1
        %vm3120 = vcmp.eq.s32.totalorder %v3088, 1
        %vm3121 = vcmp.eq.s32.totalorder %v3089, 1
        %vm3122 = vcmp.eq.s32.totalorder %v3090, 1
        %vm3123 = vcmp.eq.s32.totalorder %v3091, 1
        %vm3124 = vcmp.eq.s32.totalorder %v3092, 1
        %vm3125 = vcmp.eq.s32.totalorder %v3093, 1
        %vm3126 = vcmp.eq.s32.totalorder %v3094, 1
        %vm3127 = vcmp.eq.s32.totalorder %v3095, 1
        %vm3128 = vcmp.eq.s32.totalorder %v3096, 1
        %v3129 = vsel %vm3097, %v1274, 0.0
        %v3130 = vsel %vm3098, %v1273, 0.0
        %v3131 = vsel %vm3099, %v1272, 0.0
        %v3132 = vsel %vm3100, %v1271, 0.0
        %v3133 = vsel %vm3101, %v1270, 0.0
        %v3134 = vsel %vm3102, %v1269, 0.0
        %v3135 = vsel %vm3103, %v1268, 0.0
        %v3136 = vsel %vm3104, %v1267, 0.0
        %v3137 = vsel %vm3105, %v1266, 0.0
        %v3138 = vsel %vm3106, %v1265, 0.0
        %v3139 = vsel %vm3107, %v1264, 0.0
        %v3140 = vsel %vm3108, %v1263, 0.0
        %v3141 = vsel %vm3109, %v1262, 0.0
        %v3142 = vsel %vm3110, %v1261, 0.0
        %v3143 = vsel %vm3111, %v1260, 0.0
        %v3144 = vsel %vm3112, %v1259, 0.0
        %v3145 = vsel %vm3113, %v1258, 0.0
        %v3146 = vsel %vm3114, %v1257, 0.0
        %v3147 = vsel %vm3115, %v1256, 0.0
        %v3148 = vsel %vm3116, %v1255, 0.0
        %v3149 = vsel %vm3117, %v1254, 0.0
        %v3150 = vsel %vm3118, %v1253, 0.0
        %v3151 = vsel %vm3119, %v1252, 0.0
        %v3152 = vsel %vm3120, %v1251, 0.0
        %v3153 = vsel %vm3121, %v1250, 0.0
        %v3154 = vsel %vm3122, %v1249, 0.0
        %v3155 = vsel %vm3123, %v1248, 0.0
        %v3156 = vsel %vm3124, %v1247, 0.0
        %v3157 = vsel %vm3125, %v1246, 0.0
        %v3158 = vsel %vm3126, %v1245, 0.0
        %v3159 = vsel %vm3127, %v1276, 0.0
        %v3160 = vsel %vm3128, %v1275, 0.0
        %v3161 = vpack.c.bf16 %v3130, %v3129
        %v3162 = vpack.c.bf16 %v3132, %v3131
        %v3163 = vpack.c.bf16 %v3134, %v3133
        %v3164 = vpack.c.bf16 %v3136, %v3135
        %v3165 = vpack.c.bf16 %v3138, %v3137
        %v3166 = vpack.c.bf16 %v3140, %v3139
        %v3167 = vpack.c.bf16 %v3142, %v3141
        %v3168 = vpack.c.bf16 %v3144, %v3143
        %v3169 = vpack.c.bf16 %v3146, %v3145
        %v3170 = vpack.c.bf16 %v3148, %v3147
        %v3171 = vpack.c.bf16 %v3150, %v3149
        %v3172 = vpack.c.bf16 %v3152, %v3151
        %v3173 = vpack.c.bf16 %v3154, %v3153
        %v3174 = vpack.c.bf16 %v3156, %v3155
        %v3175 = vpack.c.bf16 %v3158, %v3157
        %v3176 = vpack.c.bf16 %v3160, %v3159
        %s3177 = scalar_lea.vmem %s2, 384
        %v3178 = vld [vmem:[%s3177] sm:$0xf]
        %v3179 = vld [vmem:[%s3177 + $0x4] sm:$0xf]
        %v3180 = vld [vmem:[%s3177 + $0x8] sm:$0xf]
        %v3181 = vld [vmem:[%s3177 + $0xc] sm:$0xf]
        %v3182 = vld [vmem:[%s3177 + $0x10] sm:$0xf]
        %v3183 = vld [vmem:[%s3177 + $0x14] sm:$0xf]
        %v3184 = vld [vmem:[%s3177 + $0x18] sm:$0xf]
        %v3185 = vld [vmem:[%s3177 + $0x1c] sm:$0xf]
        %v3186 = vld [vmem:[%s3177 + $0x20] sm:$0xf]
        %v3187 = vld [vmem:[%s3177 + $0x24] sm:$0xf]
        %v3188 = vld [vmem:[%s3177 + $0x28] sm:$0xf]
        %v3189 = vld [vmem:[%s3177 + $0x2c] sm:$0xf]
        %v3190 = vld [vmem:[%s3177 + $0x30] sm:$0xf]
        %v3191 = vld [vmem:[%s3177 + $0x34] sm:$0xf]
        %v3192 = vld [vmem:[%s3177 + $0x38] sm:$0xf]
        %v3193 = vld [vmem:[%s3177 + $0x3c] sm:$0xf]
        %v3210 = vunpack.c.l.b16 %v3178
        %v3211 = vunpack.c.l.b16 %v3179
        %v3212 = vunpack.c.l.b16 %v3180
        %v3213 = vunpack.c.l.b16 %v3181
        %v3214 = vunpack.c.l.b16 %v3182
        %v3215 = vunpack.c.l.b16 %v3183
        %v3216 = vunpack.c.l.b16 %v3184
        %v3217 = vunpack.c.l.b16 %v3185
        %v3218 = vunpack.c.l.b16 %v3186
        %v3219 = vunpack.c.l.b16 %v3187
        %v3220 = vunpack.c.l.b16 %v3188
        %v3221 = vunpack.c.l.b16 %v3189
        %v3222 = vunpack.c.l.b16 %v3190
        %v3223 = vunpack.c.l.b16 %v3191
        %v3224 = vunpack.c.l.b16 %v3192
        %v3225 = vunpack.c.l.b16 %v3193
        %v3226 = vpack.c.b16 %v3211, %v3210
        %v3227 = vpack.c.b16 %v3213, %v3212
        %v3228 = vpack.c.b16 %v3215, %v3214
        %v3229 = vpack.c.b16 %v3217, %v3216
        %v3230 = vpack.c.b16 %v3219, %v3218
        %v3231 = vpack.c.b16 %v3221, %v3220
        %v3232 = vpack.c.b16 %v3223, %v3222
        %v3233 = vpack.c.b16 %v3225, %v3224
        %3242 = vmatpush.bf16.msra.mxu0 %v3233
        %3243 = vmatpush.bf16.msra.mxu0 %v3232
        %3244 = vmatpush.bf16.msra.mxu0 %v3231
        %3245 = vmatpush.bf16.msra.mxu0 %v3230
        %3246 = vmatpush.bf16.msra.mxu0 %v3229
        %3247 = vmatpush.bf16.msra.mxu0 %v3228
        %3248 = vmatpush.bf16.msra.mxu0 %v3227
        %3249 = vmatpush.bf16.msra.mxu0 %v3226
        %3250 = vmatmul.bf16.gmra.mxu0 %v3161
        %v3251 = vpop.f32.mrf.mxu0
        %v3252 = vadd.f32 0.0, %v3251
        %v3253 = vpop.f32.mrf.mxu0
        %v3254 = vadd.f32 0.0, %v3253
        %3255 = vmatmul.bf16.gmra.mxu0 %v3162
        %v3256 = vpop.f32.mrf.mxu0
        %v3257 = vadd.f32 0.0, %v3256
        %v3258 = vpop.f32.mrf.mxu0
        %v3259 = vadd.f32 0.0, %v3258
        %3260 = vmatmul.bf16.gmra.mxu0 %v3163
        %v3261 = vpop.f32.mrf.mxu0
        %v3262 = vadd.f32 0.0, %v3261
        %v3263 = vpop.f32.mrf.mxu0
        %v3264 = vadd.f32 0.0, %v3263
        %3265 = vmatmul.bf16.gmra.mxu0 %v3164
        %v3266 = vpop.f32.mrf.mxu0
        %v3267 = vadd.f32 0.0, %v3266
        %v3268 = vpop.f32.mrf.mxu0
        %v3269 = vadd.f32 0.0, %v3268
        %3270 = vmatmul.bf16.gmra.mxu0 %v3165
        %v3271 = vpop.f32.mrf.mxu0
        %v3272 = vadd.f32 0.0, %v3271
        %v3273 = vpop.f32.mrf.mxu0
        %v3274 = vadd.f32 0.0, %v3273
        %3275 = vmatmul.bf16.gmra.mxu0 %v3166
        %v3276 = vpop.f32.mrf.mxu0
        %v3277 = vadd.f32 0.0, %v3276
        %v3278 = vpop.f32.mrf.mxu0
        %v3279 = vadd.f32 0.0, %v3278
        %3280 = vmatmul.bf16.gmra.mxu0 %v3167
        %v3281 = vpop.f32.mrf.mxu0
        %v3282 = vadd.f32 0.0, %v3281
        %v3283 = vpop.f32.mrf.mxu0
        %v3284 = vadd.f32 0.0, %v3283
        %3285 = vmatmul.bf16.gmra.mxu0 %v3168
        %v3286 = vpop.f32.mrf.mxu0
        %v3287 = vadd.f32 0.0, %v3286
        %v3288 = vpop.f32.mrf.mxu0
        %v3289 = vadd.f32 0.0, %v3288
        %3290 = vmatmul.bf16.gmra.mxu0 %v3169
        %v3291 = vpop.f32.mrf.mxu0
        %v3292 = vadd.f32 0.0, %v3291
        %v3293 = vpop.f32.mrf.mxu0
        %v3294 = vadd.f32 0.0, %v3293
        %3295 = vmatmul.bf16.gmra.mxu0 %v3170
        %v3296 = vpop.f32.mrf.mxu0
        %v3297 = vadd.f32 0.0, %v3296
        %v3298 = vpop.f32.mrf.mxu0
        %v3299 = vadd.f32 0.0, %v3298
        %3300 = vmatmul.bf16.gmra.mxu0 %v3171
        %v3301 = vpop.f32.mrf.mxu0
        %v3302 = vadd.f32 0.0, %v3301
        %v3303 = vpop.f32.mrf.mxu0
        %v3304 = vadd.f32 0.0, %v3303
        %3305 = vmatmul.bf16.gmra.mxu0 %v3172
        %v3306 = vpop.f32.mrf.mxu0
        %v3307 = vadd.f32 0.0, %v3306
        %v3308 = vpop.f32.mrf.mxu0
        %v3309 = vadd.f32 0.0, %v3308
        %3310 = vmatmul.bf16.gmra.mxu0 %v3173
        %v3311 = vpop.f32.mrf.mxu0
        %v3312 = vadd.f32 0.0, %v3311
        %v3313 = vpop.f32.mrf.mxu0
        %v3314 = vadd.f32 0.0, %v3313
        %3315 = vmatmul.bf16.gmra.mxu0 %v3174
        %v3316 = vpop.f32.mrf.mxu0
        %v3317 = vadd.f32 0.0, %v3316
        %v3318 = vpop.f32.mrf.mxu0
        %v3319 = vadd.f32 0.0, %v3318
        %3320 = vmatmul.bf16.gmra.mxu0 %v3175
        %v3321 = vpop.f32.mrf.mxu0
        %v3322 = vadd.f32 0.0, %v3321
        %v3323 = vpop.f32.mrf.mxu0
        %v3324 = vadd.f32 0.0, %v3323
        %3325 = vmatmul.bf16.gmra.mxu0 %v3176
        %v3326 = vpop.f32.mrf.mxu0
        %v3327 = vadd.f32 0.0, %v3326
        %v3328 = vpop.f32.mrf.mxu0
        %v3329 = vadd.f32 0.0, %v3328
        %3330 = vdwg.mxu0
        %v3331 = vadd.f32 %v3001, %v3252
        %v3332 = vadd.f32 %v3002, %v3254
        %v3333 = vadd.f32 %v3003, %v3257
        %v3334 = vadd.f32 %v3004, %v3259
        %v3335 = vadd.f32 %v3005, %v3262
        %v3336 = vadd.f32 %v3006, %v3264
        %v3337 = vadd.f32 %v3007, %v3267
        %v3338 = vadd.f32 %v3008, %v3269
        %v3339 = vadd.f32 %v3009, %v3272
        %v3340 = vadd.f32 %v3010, %v3274
        %v3341 = vadd.f32 %v3011, %v3277
        %v3342 = vadd.f32 %v3012, %v3279
        %v3343 = vadd.f32 %v3013, %v3282
        %v3344 = vadd.f32 %v3014, %v3284
        %v3345 = vadd.f32 %v3015, %v3287
        %v3346 = vadd.f32 %v3016, %v3289
        %v3347 = vadd.f32 %v3017, %v3292
        %v3348 = vadd.f32 %v3018, %v3294
        %v3349 = vadd.f32 %v3019, %v3297
        %v3350 = vadd.f32 %v3020, %v3299
        %v3351 = vadd.f32 %v3021, %v3302
        %v3352 = vadd.f32 %v3022, %v3304
        %v3353 = vadd.f32 %v3023, %v3307
        %v3354 = vadd.f32 %v3024, %v3309
        %v3355 = vadd.f32 %v3025, %v3312
        %v3356 = vadd.f32 %v3026, %v3314
        %v3357 = vadd.f32 %v3027, %v3317
        %v3358 = vadd.f32 %v3028, %v3319
        %v3359 = vadd.f32 %v3029, %v3322
        %v3360 = vadd.f32 %v3030, %v3324
        %v3361 = vadd.f32 %v3031, %v3327
        %v3362 = vadd.f32 %v3032, %v3329
        %v3363 = vsel %vm419, 1, 0
        %v3364 = vsel %vm420, 1, 0
        %v3365 = vsel %vm421, 1, 0
        %v3366 = vsel %vm422, 1, 0
        %v3367 = vsel %vm423, 1, 0
        %v3368 = vsel %vm424, 1, 0
        %v3369 = vsel %vm425, 1, 0
        %v3370 = vsel %vm426, 1, 0
        %v3371 = vsel %vm427, 1, 0
        %v3372 = vsel %vm428, 1, 0
        %v3373 = vsel %vm429, 1, 0
        %v3374 = vsel %vm430, 1, 0
        %v3375 = vsel %vm431, 1, 0
        %v3376 = vsel %vm432, 1, 0
        %v3377 = vsel %vm433, 1, 0
        %v3378 = vsel %vm434, 1, 0
        %v3379 = vsel %vm435, 1, 0
        %v3380 = vsel %vm436, 1, 0
        %v3381 = vsel %vm437, 1, 0
        %v3382 = vsel %vm438, 1, 0
        %v3383 = vsel %vm439, 1, 0
        %v3384 = vsel %vm440, 1, 0
        %v3385 = vsel %vm441, 1, 0
        %v3386 = vsel %vm442, 1, 0
        %v3387 = vsel %vm443, 1, 0
        %v3388 = vsel %vm444, 1, 0
        %v3389 = vsel %vm445, 1, 0
        %v3390 = vsel %vm446, 1, 0
        %v3391 = vsel %vm447, 1, 0
        %v3392 = vsel %vm448, 1, 0
        %v3393 = vsel %vm449, 1, 0
        %v3394 = vsel %vm450, 1, 0
        %vm3395 = vcmp.eq.s32.totalorder %v3363, 1
        %vm3396 = vcmp.eq.s32.totalorder %v3364, 1
        %vm3397 = vcmp.eq.s32.totalorder %v3365, 1
        %vm3398 = vcmp.eq.s32.totalorder %v3366, 1
        %vm3399 = vcmp.eq.s32.totalorder %v3367, 1
        %vm3400 = vcmp.eq.s32.totalorder %v3368, 1
        %vm3401 = vcmp.eq.s32.totalorder %v3369, 1
        %vm3402 = vcmp.eq.s32.totalorder %v3370, 1
        %vm3403 = vcmp.eq.s32.totalorder %v3371, 1
        %vm3404 = vcmp.eq.s32.totalorder %v3372, 1
        %vm3405 = vcmp.eq.s32.totalorder %v3373, 1
        %vm3406 = vcmp.eq.s32.totalorder %v3374, 1
        %vm3407 = vcmp.eq.s32.totalorder %v3375, 1
        %vm3408 = vcmp.eq.s32.totalorder %v3376, 1
        %vm3409 = vcmp.eq.s32.totalorder %v3377, 1
        %vm3410 = vcmp.eq.s32.totalorder %v3378, 1
        %vm3411 = vcmp.eq.s32.totalorder %v3379, 1
        %vm3412 = vcmp.eq.s32.totalorder %v3380, 1
        %vm3413 = vcmp.eq.s32.totalorder %v3381, 1
        %vm3414 = vcmp.eq.s32.totalorder %v3382, 1
        %vm3415 = vcmp.eq.s32.totalorder %v3383, 1
        %vm3416 = vcmp.eq.s32.totalorder %v3384, 1
        %vm3417 = vcmp.eq.s32.totalorder %v3385, 1
        %vm3418 = vcmp.eq.s32.totalorder %v3386, 1
        %vm3419 = vcmp.eq.s32.totalorder %v3387, 1
        %vm3420 = vcmp.eq.s32.totalorder %v3388, 1
        %vm3421 = vcmp.eq.s32.totalorder %v3389, 1
        %vm3422 = vcmp.eq.s32.totalorder %v3390, 1
        %vm3423 = vcmp.eq.s32.totalorder %v3391, 1
        %vm3424 = vcmp.eq.s32.totalorder %v3392, 1
        %vm3425 = vcmp.eq.s32.totalorder %v3393, 1
        %vm3426 = vcmp.eq.s32.totalorder %v3394, 1
        %v3427 = vsel %vm3395, %v1138, 0.0
        %v3428 = vsel %vm3396, %v1140, 0.0
        %v3429 = vsel %vm3397, %v1143, 0.0
        %v3430 = vsel %vm3398, %v1145, 0.0
        %v3431 = vsel %vm3399, %v1148, 0.0
        %v3432 = vsel %vm3400, %v1150, 0.0
        %v3433 = vsel %vm3401, %v1153, 0.0
        %v3434 = vsel %vm3402, %v1155, 0.0
        %v3435 = vsel %vm3403, %v1158, 0.0
        %v3436 = vsel %vm3404, %v1160, 0.0
        %v3437 = vsel %vm3405, %v1163, 0.0
        %v3438 = vsel %vm3406, %v1165, 0.0
        %v3439 = vsel %vm3407, %v1168, 0.0
        %v3440 = vsel %vm3408, %v1170, 0.0
        %v3441 = vsel %vm3409, %v1173, 0.0
        %v3442 = vsel %vm3410, %v1175, 0.0
        %v3443 = vsel %vm3411, %v1178, 0.0
        %v3444 = vsel %vm3412, %v1180, 0.0
        %v3445 = vsel %vm3413, %v1183, 0.0
        %v3446 = vsel %vm3414, %v1185, 0.0
        %v3447 = vsel %vm3415, %v1188, 0.0
        %v3448 = vsel %vm3416, %v1190, 0.0
        %v3449 = vsel %vm3417, %v1193, 0.0
        %v3450 = vsel %vm3418, %v1195, 0.0
        %v3451 = vsel %vm3419, %v1198, 0.0
        %v3452 = vsel %vm3420, %v1200, 0.0
        %v3453 = vsel %vm3421, %v1203, 0.0
        %v3454 = vsel %vm3422, %v1205, 0.0
        %v3455 = vsel %vm3423, %v1208, 0.0
        %v3456 = vsel %vm3424, %v1210, 0.0
        %v3457 = vsel %vm3425, %v1133, 0.0
        %v3458 = vsel %vm3426, %v1135, 0.0
        %v3459 = vpack.c.bf16 %v3428, %v3427
        %v3460 = vpack.c.bf16 %v3430, %v3429
        %v3461 = vpack.c.bf16 %v3432, %v3431
        %v3462 = vpack.c.bf16 %v3434, %v3433
        %v3463 = vpack.c.bf16 %v3436, %v3435
        %v3464 = vpack.c.bf16 %v3438, %v3437
        %v3465 = vpack.c.bf16 %v3440, %v3439
        %v3466 = vpack.c.bf16 %v3442, %v3441
        %v3467 = vpack.c.bf16 %v3444, %v3443
        %v3468 = vpack.c.bf16 %v3446, %v3445
        %v3469 = vpack.c.bf16 %v3448, %v3447
        %v3470 = vpack.c.bf16 %v3450, %v3449
        %v3471 = vpack.c.bf16 %v3452, %v3451
        %v3472 = vpack.c.bf16 %v3454, %v3453
        %v3473 = vpack.c.bf16 %v3456, %v3455
        %v3474 = vpack.c.bf16 %v3458, %v3457
        %s3475 = scalar_lea.vmem %s2, 448
        %v3476 = vld [vmem:[%s3475] sm:$0xf]
        %v3477 = vld [vmem:[%s3475 + $0x4] sm:$0xf]
        %v3478 = vld [vmem:[%s3475 + $0x8] sm:$0xf]
        %v3479 = vld [vmem:[%s3475 + $0xc] sm:$0xf]
        %v3480 = vld [vmem:[%s3475 + $0x10] sm:$0xf]
        %v3481 = vld [vmem:[%s3475 + $0x14] sm:$0xf]
        %v3482 = vld [vmem:[%s3475 + $0x18] sm:$0xf]
        %v3483 = vld [vmem:[%s3475 + $0x1c] sm:$0xf]
        %v3484 = vld [vmem:[%s3475 + $0x20] sm:$0xf]
        %v3485 = vld [vmem:[%s3475 + $0x24] sm:$0xf]
        %v3486 = vld [vmem:[%s3475 + $0x28] sm:$0xf]
        %v3487 = vld [vmem:[%s3475 + $0x2c] sm:$0xf]
        %v3488 = vld [vmem:[%s3475 + $0x30] sm:$0xf]
        %v3489 = vld [vmem:[%s3475 + $0x34] sm:$0xf]
        %v3490 = vld [vmem:[%s3475 + $0x38] sm:$0xf]
        %v3491 = vld [vmem:[%s3475 + $0x3c] sm:$0xf]
        %v3508 = vunpack.c.l.b16 %v3476
        %v3509 = vunpack.c.l.b16 %v3477
        %v3510 = vunpack.c.l.b16 %v3478
        %v3511 = vunpack.c.l.b16 %v3479
        %v3512 = vunpack.c.l.b16 %v3480
        %v3513 = vunpack.c.l.b16 %v3481
        %v3514 = vunpack.c.l.b16 %v3482
        %v3515 = vunpack.c.l.b16 %v3483
        %v3516 = vunpack.c.l.b16 %v3484
        %v3517 = vunpack.c.l.b16 %v3485
        %v3518 = vunpack.c.l.b16 %v3486
        %v3519 = vunpack.c.l.b16 %v3487
        %v3520 = vunpack.c.l.b16 %v3488
        %v3521 = vunpack.c.l.b16 %v3489
        %v3522 = vunpack.c.l.b16 %v3490
        %v3523 = vunpack.c.l.b16 %v3491
        %v3524 = vpack.c.b16 %v3509, %v3508
        %v3525 = vpack.c.b16 %v3511, %v3510
        %v3526 = vpack.c.b16 %v3513, %v3512
        %v3527 = vpack.c.b16 %v3515, %v3514
        %v3528 = vpack.c.b16 %v3517, %v3516
        %v3529 = vpack.c.b16 %v3519, %v3518
        %v3530 = vpack.c.b16 %v3521, %v3520
        %v3531 = vpack.c.b16 %v3523, %v3522
        %3540 = vmatpush.bf16.msra.mxu0 %v3531
        %3541 = vmatpush.bf16.msra.mxu0 %v3530
        %3542 = vmatpush.bf16.msra.mxu0 %v3529
        %3543 = vmatpush.bf16.msra.mxu0 %v3528
        %3544 = vmatpush.bf16.msra.mxu0 %v3527
        %3545 = vmatpush.bf16.msra.mxu0 %v3526
        %3546 = vmatpush.bf16.msra.mxu0 %v3525
        %3547 = vmatpush.bf16.msra.mxu0 %v3524
        %3548 = vmatmul.bf16.gmra.mxu0 %v3459
        %v3549 = vpop.f32.mrf.mxu0
        %v3550 = vadd.f32 0.0, %v3549
        %v3551 = vpop.f32.mrf.mxu0
        %v3552 = vadd.f32 0.0, %v3551
        %3553 = vmatmul.bf16.gmra.mxu0 %v3460
        %v3554 = vpop.f32.mrf.mxu0
        %v3555 = vadd.f32 0.0, %v3554
        %v3556 = vpop.f32.mrf.mxu0
        %v3557 = vadd.f32 0.0, %v3556
        %3558 = vmatmul.bf16.gmra.mxu0 %v3461
        %v3559 = vpop.f32.mrf.mxu0
        %v3560 = vadd.f32 0.0, %v3559
        %v3561 = vpop.f32.mrf.mxu0
        %v3562 = vadd.f32 0.0, %v3561
        %3563 = vmatmul.bf16.gmra.mxu0 %v3462
        %v3564 = vpop.f32.mrf.mxu0
        %v3565 = vadd.f32 0.0, %v3564
        %v3566 = vpop.f32.mrf.mxu0
        %v3567 = vadd.f32 0.0, %v3566
        %3568 = vmatmul.bf16.gmra.mxu0 %v3463
        %v3569 = vpop.f32.mrf.mxu0
        %v3570 = vadd.f32 0.0, %v3569
        %v3571 = vpop.f32.mrf.mxu0
        %v3572 = vadd.f32 0.0, %v3571
        %3573 = vmatmul.bf16.gmra.mxu0 %v3464
        %v3574 = vpop.f32.mrf.mxu0
        %v3575 = vadd.f32 0.0, %v3574
        %v3576 = vpop.f32.mrf.mxu0
        %v3577 = vadd.f32 0.0, %v3576
        %3578 = vmatmul.bf16.gmra.mxu0 %v3465
        %v3579 = vpop.f32.mrf.mxu0
        %v3580 = vadd.f32 0.0, %v3579
        %v3581 = vpop.f32.mrf.mxu0
        %v3582 = vadd.f32 0.0, %v3581
        %3583 = vmatmul.bf16.gmra.mxu0 %v3466
        %v3584 = vpop.f32.mrf.mxu0
        %v3585 = vadd.f32 0.0, %v3584
        %v3586 = vpop.f32.mrf.mxu0
        %v3587 = vadd.f32 0.0, %v3586
        %3588 = vmatmul.bf16.gmra.mxu0 %v3467
        %v3589 = vpop.f32.mrf.mxu0
        %v3590 = vadd.f32 0.0, %v3589
        %v3591 = vpop.f32.mrf.mxu0
        %v3592 = vadd.f32 0.0, %v3591
        %3593 = vmatmul.bf16.gmra.mxu0 %v3468
        %v3594 = vpop.f32.mrf.mxu0
        %v3595 = vadd.f32 0.0, %v3594
        %v3596 = vpop.f32.mrf.mxu0
        %v3597 = vadd.f32 0.0, %v3596
        %3598 = vmatmul.bf16.gmra.mxu0 %v3469
        %v3599 = vpop.f32.mrf.mxu0
        %v3600 = vadd.f32 0.0, %v3599
        %v3601 = vpop.f32.mrf.mxu0
        %v3602 = vadd.f32 0.0, %v3601
        %3603 = vmatmul.bf16.gmra.mxu0 %v3470
        %v3604 = vpop.f32.mrf.mxu0
        %v3605 = vadd.f32 0.0, %v3604
        %v3606 = vpop.f32.mrf.mxu0
        %v3607 = vadd.f32 0.0, %v3606
        %3608 = vmatmul.bf16.gmra.mxu0 %v3471
        %v3609 = vpop.f32.mrf.mxu0
        %v3610 = vadd.f32 0.0, %v3609
        %v3611 = vpop.f32.mrf.mxu0
        %v3612 = vadd.f32 0.0, %v3611
        %3613 = vmatmul.bf16.gmra.mxu0 %v3472
        %v3614 = vpop.f32.mrf.mxu0
        %v3615 = vadd.f32 0.0, %v3614
        %v3616 = vpop.f32.mrf.mxu0
        %v3617 = vadd.f32 0.0, %v3616
        %3618 = vmatmul.bf16.gmra.mxu0 %v3473
        %v3619 = vpop.f32.mrf.mxu0
        %v3620 = vadd.f32 0.0, %v3619
        %v3621 = vpop.f32.mrf.mxu0
        %v3622 = vadd.f32 0.0, %v3621
        %3623 = vmatmul.bf16.gmra.mxu0 %v3474
        %v3624 = vpop.f32.mrf.mxu0
        %v3625 = vadd.f32 0.0, %v3624
        %v3626 = vpop.f32.mrf.mxu0
        %v3627 = vadd.f32 0.0, %v3626
        %3628 = vdwg.mxu0
        %v3629 = vadd.f32 %v3331, %v3550
        %v3630 = vadd.f32 %v3332, %v3552
        %v3631 = vadd.f32 %v3333, %v3555
        %v3632 = vadd.f32 %v3334, %v3557
        %v3633 = vadd.f32 %v3335, %v3560
        %v3634 = vadd.f32 %v3336, %v3562
        %v3635 = vadd.f32 %v3337, %v3565
        %v3636 = vadd.f32 %v3338, %v3567
        %v3637 = vadd.f32 %v3339, %v3570
        %v3638 = vadd.f32 %v3340, %v3572
        %v3639 = vadd.f32 %v3341, %v3575
        %v3640 = vadd.f32 %v3342, %v3577
        %v3641 = vadd.f32 %v3343, %v3580
        %v3642 = vadd.f32 %v3344, %v3582
        %v3643 = vadd.f32 %v3345, %v3585
        %v3644 = vadd.f32 %v3346, %v3587
        %v3645 = vadd.f32 %v3347, %v3590
        %v3646 = vadd.f32 %v3348, %v3592
        %v3647 = vadd.f32 %v3349, %v3595
        %v3648 = vadd.f32 %v3350, %v3597
        %v3649 = vadd.f32 %v3351, %v3600
        %v3650 = vadd.f32 %v3352, %v3602
        %v3651 = vadd.f32 %v3353, %v3605
        %v3652 = vadd.f32 %v3354, %v3607
        %v3653 = vadd.f32 %v3355, %v3610
        %v3654 = vadd.f32 %v3356, %v3612
        %v3655 = vadd.f32 %v3357, %v3615
        %v3656 = vadd.f32 %v3358, %v3617
        %v3657 = vadd.f32 %v3359, %v3620
        %v3658 = vadd.f32 %v3360, %v3622
        %v3659 = vadd.f32 %v3361, %v3625
        %v3660 = vadd.f32 %v3362, %v3627
        %vm3661 = vmand %vm419, %vm867
        %vm3662 = vmand %vm420, %vm868
        %vm3663 = vmand %vm421, %vm869
        %vm3664 = vmand %vm422, %vm870
        %vm3665 = vmand %vm423, %vm871
        %vm3666 = vmand %vm424, %vm872
        %vm3667 = vmand %vm425, %vm873
        %vm3668 = vmand %vm426, %vm874
        %vm3669 = vmand %vm427, %vm875
        %vm3670 = vmand %vm428, %vm876
        %vm3671 = vmand %vm429, %vm877
        %vm3672 = vmand %vm430, %vm878
        %vm3673 = vmand %vm431, %vm879
        %vm3674 = vmand %vm432, %vm880
        %vm3675 = vmand %vm433, %vm881
        %vm3676 = vmand %vm434, %vm882
        %vm3677 = vmand %vm435, %vm883
        %vm3678 = vmand %vm436, %vm884
        %vm3679 = vmand %vm437, %vm885
        %vm3680 = vmand %vm438, %vm886
        %vm3681 = vmand %vm439, %vm887
        %vm3682 = vmand %vm440, %vm888
        %vm3683 = vmand %vm441, %vm889
        %vm3684 = vmand %vm442, %vm890
        %vm3685 = vmand %vm443, %vm891
        %vm3686 = vmand %vm444, %vm892
        %vm3687 = vmand %vm445, %vm893
        %vm3688 = vmand %vm446, %vm894
        %vm3689 = vmand %vm447, %vm895
        %vm3690 = vmand %vm448, %vm896
        %vm3691 = vmand %vm449, %vm897
        %vm3692 = vmand %vm450, %vm898
        %v3693 = vsel %vm3661, 1, 0
        %v3694 = vsel %vm3662, 1, 0
        %v3695 = vsel %vm3663, 1, 0
        %v3696 = vsel %vm3664, 1, 0
        %v3697 = vsel %vm3665, 1, 0
        %v3698 = vsel %vm3666, 1, 0
        %v3699 = vsel %vm3667, 1, 0
        %v3700 = vsel %vm3668, 1, 0
        %v3701 = vsel %vm3669, 1, 0
        %v3702 = vsel %vm3670, 1, 0
        %v3703 = vsel %vm3671, 1, 0
        %v3704 = vsel %vm3672, 1, 0
        %v3705 = vsel %vm3673, 1, 0
        %v3706 = vsel %vm3674, 1, 0
        %v3707 = vsel %vm3675, 1, 0
        %v3708 = vsel %vm3676, 1, 0
        %v3709 = vsel %vm3677, 1, 0
        %v3710 = vsel %vm3678, 1, 0
        %v3711 = vsel %vm3679, 1, 0
        %v3712 = vsel %vm3680, 1, 0
        %v3713 = vsel %vm3681, 1, 0
        %v3714 = vsel %vm3682, 1, 0
        %v3715 = vsel %vm3683, 1, 0
        %v3716 = vsel %vm3684, 1, 0
        %v3717 = vsel %vm3685, 1, 0
        %v3718 = vsel %vm3686, 1, 0
        %v3719 = vsel %vm3687, 1, 0
        %v3720 = vsel %vm3688, 1, 0
        %v3721 = vsel %vm3689, 1, 0
        %v3722 = vsel %vm3690, 1, 0
        %v3723 = vsel %vm3691, 1, 0
        %v3724 = vsel %vm3692, 1, 0
        %vm3725 = vcmp.eq.s32.totalorder %v3693, 1
        %vm3726 = vcmp.eq.s32.totalorder %v3694, 1
        %vm3727 = vcmp.eq.s32.totalorder %v3695, 1
        %vm3728 = vcmp.eq.s32.totalorder %v3696, 1
        %vm3729 = vcmp.eq.s32.totalorder %v3697, 1
        %vm3730 = vcmp.eq.s32.totalorder %v3698, 1
        %vm3731 = vcmp.eq.s32.totalorder %v3699, 1
        %vm3732 = vcmp.eq.s32.totalorder %v3700, 1
        %vm3733 = vcmp.eq.s32.totalorder %v3701, 1
        %vm3734 = vcmp.eq.s32.totalorder %v3702, 1
        %vm3735 = vcmp.eq.s32.totalorder %v3703, 1
        %vm3736 = vcmp.eq.s32.totalorder %v3704, 1
        %vm3737 = vcmp.eq.s32.totalorder %v3705, 1
        %vm3738 = vcmp.eq.s32.totalorder %v3706, 1
        %vm3739 = vcmp.eq.s32.totalorder %v3707, 1
        %vm3740 = vcmp.eq.s32.totalorder %v3708, 1
        %vm3741 = vcmp.eq.s32.totalorder %v3709, 1
        %vm3742 = vcmp.eq.s32.totalorder %v3710, 1
        %vm3743 = vcmp.eq.s32.totalorder %v3711, 1
        %vm3744 = vcmp.eq.s32.totalorder %v3712, 1
        %vm3745 = vcmp.eq.s32.totalorder %v3713, 1
        %vm3746 = vcmp.eq.s32.totalorder %v3714, 1
        %vm3747 = vcmp.eq.s32.totalorder %v3715, 1
        %vm3748 = vcmp.eq.s32.totalorder %v3716, 1
        %vm3749 = vcmp.eq.s32.totalorder %v3717, 1
        %vm3750 = vcmp.eq.s32.totalorder %v3718, 1
        %vm3751 = vcmp.eq.s32.totalorder %v3719, 1
        %vm3752 = vcmp.eq.s32.totalorder %v3720, 1
        %vm3753 = vcmp.eq.s32.totalorder %v3721, 1
        %vm3754 = vcmp.eq.s32.totalorder %v3722, 1
        %vm3755 = vcmp.eq.s32.totalorder %v3723, 1
        %vm3756 = vcmp.eq.s32.totalorder %v3724, 1
        %v3757 = vsel %vm3725, %v1901, 0.0
        %v3758 = vsel %vm3726, %v1900, 0.0
        %v3759 = vsel %vm3727, %v1899, 0.0
        %v3760 = vsel %vm3728, %v1898, 0.0
        %v3761 = vsel %vm3729, %v1897, 0.0
        %v3762 = vsel %vm3730, %v1896, 0.0
        %v3763 = vsel %vm3731, %v1895, 0.0
        %v3764 = vsel %vm3732, %v1894, 0.0
        %v3765 = vsel %vm3733, %v1893, 0.0
        %v3766 = vsel %vm3734, %v1892, 0.0
        %v3767 = vsel %vm3735, %v1891, 0.0
        %v3768 = vsel %vm3736, %v1890, 0.0
        %v3769 = vsel %vm3737, %v1889, 0.0
        %v3770 = vsel %vm3738, %v1888, 0.0
        %v3771 = vsel %vm3739, %v1887, 0.0
        %v3772 = vsel %vm3740, %v1886, 0.0
        %v3773 = vsel %vm3741, %v1885, 0.0
        %v3774 = vsel %vm3742, %v1884, 0.0
        %v3775 = vsel %vm3743, %v1883, 0.0
        %v3776 = vsel %vm3744, %v1882, 0.0
        %v3777 = vsel %vm3745, %v1881, 0.0
        %v3778 = vsel %vm3746, %v1880, 0.0
        %v3779 = vsel %vm3747, %v1879, 0.0
        %v3780 = vsel %vm3748, %v1878, 0.0
        %v3781 = vsel %vm3749, %v1877, 0.0
        %v3782 = vsel %vm3750, %v1876, 0.0
        %v3783 = vsel %vm3751, %v1875, 0.0
        %v3784 = vsel %vm3752, %v1874, 0.0
        %v3785 = vsel %vm3753, %v1873, 0.0
        %v3786 = vsel %vm3754, %v1904, 0.0
        %v3787 = vsel %vm3755, %v1903, 0.0
        %v3788 = vsel %vm3756, %v1902, 0.0
        %v3789 = vpack.c.bf16 %v3758, %v3757
        %v3790 = vpack.c.bf16 %v3760, %v3759
        %v3791 = vpack.c.bf16 %v3762, %v3761
        %v3792 = vpack.c.bf16 %v3764, %v3763
        %v3793 = vpack.c.bf16 %v3766, %v3765
        %v3794 = vpack.c.bf16 %v3768, %v3767
        %v3795 = vpack.c.bf16 %v3770, %v3769
        %v3796 = vpack.c.bf16 %v3772, %v3771
        %v3797 = vpack.c.bf16 %v3774, %v3773
        %v3798 = vpack.c.bf16 %v3776, %v3775
        %v3799 = vpack.c.bf16 %v3778, %v3777
        %v3800 = vpack.c.bf16 %v3780, %v3779
        %v3801 = vpack.c.bf16 %v3782, %v3781
        %v3802 = vpack.c.bf16 %v3784, %v3783
        %v3803 = vpack.c.bf16 %v3786, %v3785
        %v3804 = vpack.c.bf16 %v3788, %v3787
        %s3805 = scalar_lea.vmem %s2, 512
        %v3806 = vld [vmem:[%s3805] sm:$0xf]
        %v3807 = vld [vmem:[%s3805 + $0x4] sm:$0xf]
        %v3808 = vld [vmem:[%s3805 + $0x8] sm:$0xf]
        %v3809 = vld [vmem:[%s3805 + $0xc] sm:$0xf]
        %v3810 = vld [vmem:[%s3805 + $0x10] sm:$0xf]
        %v3811 = vld [vmem:[%s3805 + $0x14] sm:$0xf]
        %v3812 = vld [vmem:[%s3805 + $0x18] sm:$0xf]
        %v3813 = vld [vmem:[%s3805 + $0x1c] sm:$0xf]
        %v3814 = vld [vmem:[%s3805 + $0x20] sm:$0xf]
        %v3815 = vld [vmem:[%s3805 + $0x24] sm:$0xf]
        %v3816 = vld [vmem:[%s3805 + $0x28] sm:$0xf]
        %v3817 = vld [vmem:[%s3805 + $0x2c] sm:$0xf]
        %v3818 = vld [vmem:[%s3805 + $0x30] sm:$0xf]
        %v3819 = vld [vmem:[%s3805 + $0x34] sm:$0xf]
        %v3820 = vld [vmem:[%s3805 + $0x38] sm:$0xf]
        %v3821 = vld [vmem:[%s3805 + $0x3c] sm:$0xf]
        %v3838 = vunpack.c.l.b16 %v3806
        %v3839 = vunpack.c.l.b16 %v3807
        %v3840 = vunpack.c.l.b16 %v3808
        %v3841 = vunpack.c.l.b16 %v3809
        %v3842 = vunpack.c.l.b16 %v3810
        %v3843 = vunpack.c.l.b16 %v3811
        %v3844 = vunpack.c.l.b16 %v3812
        %v3845 = vunpack.c.l.b16 %v3813
        %v3846 = vunpack.c.l.b16 %v3814
        %v3847 = vunpack.c.l.b16 %v3815
        %v3848 = vunpack.c.l.b16 %v3816
        %v3849 = vunpack.c.l.b16 %v3817
        %v3850 = vunpack.c.l.b16 %v3818
        %v3851 = vunpack.c.l.b16 %v3819
        %v3852 = vunpack.c.l.b16 %v3820
        %v3853 = vunpack.c.l.b16 %v3821
        %v3854 = vpack.c.b16 %v3839, %v3838
        %v3855 = vpack.c.b16 %v3841, %v3840
        %v3856 = vpack.c.b16 %v3843, %v3842
        %v3857 = vpack.c.b16 %v3845, %v3844
        %v3858 = vpack.c.b16 %v3847, %v3846
        %v3859 = vpack.c.b16 %v3849, %v3848
        %v3860 = vpack.c.b16 %v3851, %v3850
        %v3861 = vpack.c.b16 %v3853, %v3852
        %3870 = vmatpush.bf16.msra.mxu0 %v3861
        %3871 = vmatpush.bf16.msra.mxu0 %v3860
        %3872 = vmatpush.bf16.msra.mxu0 %v3859
        %3873 = vmatpush.bf16.msra.mxu0 %v3858
        %3874 = vmatpush.bf16.msra.mxu0 %v3857
        %3875 = vmatpush.bf16.msra.mxu0 %v3856
        %3876 = vmatpush.bf16.msra.mxu0 %v3855
        %3877 = vmatpush.bf16.msra.mxu0 %v3854
        %3878 = vmatmul.bf16.gmra.mxu0 %v3789
        %v3879 = vpop.f32.mrf.mxu0
        %v3880 = vadd.f32 0.0, %v3879
        %v3881 = vpop.f32.mrf.mxu0
        %v3882 = vadd.f32 0.0, %v3881
        %3883 = vmatmul.bf16.gmra.mxu0 %v3790
        %v3884 = vpop.f32.mrf.mxu0
        %v3885 = vadd.f32 0.0, %v3884
        %v3886 = vpop.f32.mrf.mxu0
        %v3887 = vadd.f32 0.0, %v3886
        %3888 = vmatmul.bf16.gmra.mxu0 %v3791
        %v3889 = vpop.f32.mrf.mxu0
        %v3890 = vadd.f32 0.0, %v3889
        %v3891 = vpop.f32.mrf.mxu0
        %v3892 = vadd.f32 0.0, %v3891
        %3893 = vmatmul.bf16.gmra.mxu0 %v3792
        %v3894 = vpop.f32.mrf.mxu0
        %v3895 = vadd.f32 0.0, %v3894
        %v3896 = vpop.f32.mrf.mxu0
        %v3897 = vadd.f32 0.0, %v3896
        %3898 = vmatmul.bf16.gmra.mxu0 %v3793
        %v3899 = vpop.f32.mrf.mxu0
        %v3900 = vadd.f32 0.0, %v3899
        %v3901 = vpop.f32.mrf.mxu0
        %v3902 = vadd.f32 0.0, %v3901
        %3903 = vmatmul.bf16.gmra.mxu0 %v3794
        %v3904 = vpop.f32.mrf.mxu0
        %v3905 = vadd.f32 0.0, %v3904
        %v3906 = vpop.f32.mrf.mxu0
        %v3907 = vadd.f32 0.0, %v3906
        %3908 = vmatmul.bf16.gmra.mxu0 %v3795
        %v3909 = vpop.f32.mrf.mxu0
        %v3910 = vadd.f32 0.0, %v3909
        %v3911 = vpop.f32.mrf.mxu0
        %v3912 = vadd.f32 0.0, %v3911
        %3913 = vmatmul.bf16.gmra.mxu0 %v3796
        %v3914 = vpop.f32.mrf.mxu0
        %v3915 = vadd.f32 0.0, %v3914
        %v3916 = vpop.f32.mrf.mxu0
        %v3917 = vadd.f32 0.0, %v3916
        %3918 = vmatmul.bf16.gmra.mxu0 %v3797
        %v3919 = vpop.f32.mrf.mxu0
        %v3920 = vadd.f32 0.0, %v3919
        %v3921 = vpop.f32.mrf.mxu0
        %v3922 = vadd.f32 0.0, %v3921
        %3923 = vmatmul.bf16.gmra.mxu0 %v3798
        %v3924 = vpop.f32.mrf.mxu0
        %v3925 = vadd.f32 0.0, %v3924
        %v3926 = vpop.f32.mrf.mxu0
        %v3927 = vadd.f32 0.0, %v3926
        %3928 = vmatmul.bf16.gmra.mxu0 %v3799
        %v3929 = vpop.f32.mrf.mxu0
        %v3930 = vadd.f32 0.0, %v3929
        %v3931 = vpop.f32.mrf.mxu0
        %v3932 = vadd.f32 0.0, %v3931
        %3933 = vmatmul.bf16.gmra.mxu0 %v3800
        %v3934 = vpop.f32.mrf.mxu0
        %v3935 = vadd.f32 0.0, %v3934
        %v3936 = vpop.f32.mrf.mxu0
        %v3937 = vadd.f32 0.0, %v3936
        %3938 = vmatmul.bf16.gmra.mxu0 %v3801
        %v3939 = vpop.f32.mrf.mxu0
        %v3940 = vadd.f32 0.0, %v3939
        %v3941 = vpop.f32.mrf.mxu0
        %v3942 = vadd.f32 0.0, %v3941
        %3943 = vmatmul.bf16.gmra.mxu0 %v3802
        %v3944 = vpop.f32.mrf.mxu0
        %v3945 = vadd.f32 0.0, %v3944
        %v3946 = vpop.f32.mrf.mxu0
        %v3947 = vadd.f32 0.0, %v3946
        %3948 = vmatmul.bf16.gmra.mxu0 %v3803
        %v3949 = vpop.f32.mrf.mxu0
        %v3950 = vadd.f32 0.0, %v3949
        %v3951 = vpop.f32.mrf.mxu0
        %v3952 = vadd.f32 0.0, %v3951
        %3953 = vmatmul.bf16.gmra.mxu0 %v3804
        %v3954 = vpop.f32.mrf.mxu0
        %v3955 = vadd.f32 0.0, %v3954
        %v3956 = vpop.f32.mrf.mxu0
        %v3957 = vadd.f32 0.0, %v3956
        %3958 = vdwg.mxu0
        %v3959 = vadd.f32 %v3629, %v3880
        %v3960 = vadd.f32 %v3630, %v3882
        %v3961 = vadd.f32 %v3631, %v3885
        %v3962 = vadd.f32 %v3632, %v3887
        %v3963 = vadd.f32 %v3633, %v3890
        %v3964 = vadd.f32 %v3634, %v3892
        %v3965 = vadd.f32 %v3635, %v3895
        %v3966 = vadd.f32 %v3636, %v3897
        %v3967 = vadd.f32 %v3637, %v3900
        %v3968 = vadd.f32 %v3638, %v3902
        %v3969 = vadd.f32 %v3639, %v3905
        %v3970 = vadd.f32 %v3640, %v3907
        %v3971 = vadd.f32 %v3641, %v3910
        %v3972 = vadd.f32 %v3642, %v3912
        %v3973 = vadd.f32 %v3643, %v3915
        %v3974 = vadd.f32 %v3644, %v3917
        %v3975 = vadd.f32 %v3645, %v3920
        %v3976 = vadd.f32 %v3646, %v3922
        %v3977 = vadd.f32 %v3647, %v3925
        %v3978 = vadd.f32 %v3648, %v3927
        %v3979 = vadd.f32 %v3649, %v3930
        %v3980 = vadd.f32 %v3650, %v3932
        %v3981 = vadd.f32 %v3651, %v3935
        %v3982 = vadd.f32 %v3652, %v3937
        %v3983 = vadd.f32 %v3653, %v3940
        %v3984 = vadd.f32 %v3654, %v3942
        %v3985 = vadd.f32 %v3655, %v3945
        %v3986 = vadd.f32 %v3656, %v3947
        %v3987 = vadd.f32 %v3657, %v3950
        %v3988 = vadd.f32 %v3658, %v3952
        %v3989 = vadd.f32 %v3659, %v3955
        %v3990 = vadd.f32 %v3660, %v3957
        %v3991 = vpack.c.bf16 %v3960, %v3959
        %v3992 = vpack.c.bf16 %v3962, %v3961
        %v3993 = vpack.c.bf16 %v3964, %v3963
        %v3994 = vpack.c.bf16 %v3966, %v3965
        %v3995 = vpack.c.bf16 %v3968, %v3967
        %v3996 = vpack.c.bf16 %v3970, %v3969
        %v3997 = vpack.c.bf16 %v3972, %v3971
        %v3998 = vpack.c.bf16 %v3974, %v3973
        %v3999 = vpack.c.bf16 %v3976, %v3975
        %v4000 = vpack.c.bf16 %v3978, %v3977
        %v4001 = vpack.c.bf16 %v3980, %v3979
        %v4002 = vpack.c.bf16 %v3982, %v3981
        %v4003 = vpack.c.bf16 %v3984, %v3983
        %v4004 = vpack.c.bf16 %v3986, %v3985
        %v4005 = vpack.c.bf16 %v3988, %v3987
        %v4006 = vpack.c.bf16 %v3990, %v3989
        %v4007 = vld [vmem:[#allocation5] sm:$0xf]
        %v4008 = vld [vmem:[#allocation5 + $0x4] sm:$0xf]
        %v4009 = vld [vmem:[#allocation5 + $0x8] sm:$0xf]
        %v4010 = vld [vmem:[#allocation5 + $0xc] sm:$0xf]
        %v4011 = vld [vmem:[#allocation5 + $0x10] sm:$0xf]
        %v4012 = vld [vmem:[#allocation5 + $0x14] sm:$0xf]
        %v4013 = vld [vmem:[#allocation5 + $0x18] sm:$0xf]
        %v4014 = vld [vmem:[#allocation5 + $0x1c] sm:$0xf]
        %v4015 = vld [vmem:[#allocation5 + $0x20] sm:$0xf]
        %v4016 = vld [vmem:[#allocation5 + $0x24] sm:$0xf]
        %v4017 = vld [vmem:[#allocation5 + $0x28] sm:$0xf]
        %v4018 = vld [vmem:[#allocation5 + $0x2c] sm:$0xf]
        %v4019 = vld [vmem:[#allocation5 + $0x30] sm:$0xf]
        %v4020 = vld [vmem:[#allocation5 + $0x34] sm:$0xf]
        %v4021 = vld [vmem:[#allocation5 + $0x38] sm:$0xf]
        %v4022 = vld [vmem:[#allocation5 + $0x3c] sm:$0xf]
        %v4039 = vunpack.c.l.b16 %v4007
        %v4040 = vunpack.c.l.b16 %v4008
        %v4041 = vunpack.c.l.b16 %v4009
        %v4042 = vunpack.c.l.b16 %v4010
        %v4043 = vunpack.c.l.b16 %v4011
        %v4044 = vunpack.c.l.b16 %v4012
        %v4045 = vunpack.c.l.b16 %v4013
        %v4046 = vunpack.c.l.b16 %v4014
        %v4047 = vunpack.c.l.b16 %v4015
        %v4048 = vunpack.c.l.b16 %v4016
        %v4049 = vunpack.c.l.b16 %v4017
        %v4050 = vunpack.c.l.b16 %v4018
        %v4051 = vunpack.c.l.b16 %v4019
        %v4052 = vunpack.c.l.b16 %v4020
        %v4053 = vunpack.c.l.b16 %v4021
        %v4054 = vunpack.c.l.b16 %v4022
        %v4055 = vpack.c.b16 %v4040, %v4039
        %v4056 = vpack.c.b16 %v4042, %v4041
        %v4057 = vpack.c.b16 %v4044, %v4043
        %v4058 = vpack.c.b16 %v4046, %v4045
        %v4059 = vpack.c.b16 %v4048, %v4047
        %v4060 = vpack.c.b16 %v4050, %v4049
        %v4061 = vpack.c.b16 %v4052, %v4051
        %v4062 = vpack.c.b16 %v4054, %v4053
        %4071 = vmatpush.bf16.msra.mxu0 %v4062
        %4072 = vmatpush.bf16.msra.mxu0 %v4061
        %4073 = vmatpush.bf16.msra.mxu0 %v4060
        %4074 = vmatpush.bf16.msra.mxu0 %v4059
        %4075 = vmatpush.bf16.msra.mxu0 %v4058
        %4076 = vmatpush.bf16.msra.mxu0 %v4057
        %4077 = vmatpush.bf16.msra.mxu0 %v4056
        %4078 = vmatpush.bf16.msra.mxu0 %v4055
        %4079 = vmatmul.bf16.gmra.mxu0 %v3991
        %v4080 = vpop.f32.mrf.mxu0
        %v4081 = vadd.f32 0.0, %v4080
        %v4082 = vpop.f32.mrf.mxu0
        %v4083 = vadd.f32 0.0, %v4082
        %4084 = vmatmul.bf16.gmra.mxu0 %v3992
        %v4085 = vpop.f32.mrf.mxu0
        %v4086 = vadd.f32 0.0, %v4085
        %v4087 = vpop.f32.mrf.mxu0
        %v4088 = vadd.f32 0.0, %v4087
        %4089 = vmatmul.bf16.gmra.mxu0 %v3993
        %v4090 = vpop.f32.mrf.mxu0
        %v4091 = vadd.f32 0.0, %v4090
        %v4092 = vpop.f32.mrf.mxu0
        %v4093 = vadd.f32 0.0, %v4092
        %4094 = vmatmul.bf16.gmra.mxu0 %v3994
        %v4095 = vpop.f32.mrf.mxu0
        %v4096 = vadd.f32 0.0, %v4095
        %v4097 = vpop.f32.mrf.mxu0
        %v4098 = vadd.f32 0.0, %v4097
        %4099 = vmatmul.bf16.gmra.mxu0 %v3995
        %v4100 = vpop.f32.mrf.mxu0
        %v4101 = vadd.f32 0.0, %v4100
        %v4102 = vpop.f32.mrf.mxu0
        %v4103 = vadd.f32 0.0, %v4102
        %4104 = vmatmul.bf16.gmra.mxu0 %v3996
        %v4105 = vpop.f32.mrf.mxu0
        %v4106 = vadd.f32 0.0, %v4105
        %v4107 = vpop.f32.mrf.mxu0
        %v4108 = vadd.f32 0.0, %v4107
        %4109 = vmatmul.bf16.gmra.mxu0 %v3997
        %v4110 = vpop.f32.mrf.mxu0
        %v4111 = vadd.f32 0.0, %v4110
        %v4112 = vpop.f32.mrf.mxu0
        %v4113 = vadd.f32 0.0, %v4112
        %4114 = vmatmul.bf16.gmra.mxu0 %v3998
        %v4115 = vpop.f32.mrf.mxu0
        %v4116 = vadd.f32 0.0, %v4115
        %v4117 = vpop.f32.mrf.mxu0
        %v4118 = vadd.f32 0.0, %v4117
        %4119 = vmatmul.bf16.gmra.mxu0 %v3999
        %v4120 = vpop.f32.mrf.mxu0
        %v4121 = vadd.f32 0.0, %v4120
        %v4122 = vpop.f32.mrf.mxu0
        %v4123 = vadd.f32 0.0, %v4122
        %4124 = vmatmul.bf16.gmra.mxu0 %v4000
        %v4125 = vpop.f32.mrf.mxu0
        %v4126 = vadd.f32 0.0, %v4125
        %v4127 = vpop.f32.mrf.mxu0
        %v4128 = vadd.f32 0.0, %v4127
        %4129 = vmatmul.bf16.gmra.mxu0 %v4001
        %v4130 = vpop.f32.mrf.mxu0
        %v4131 = vadd.f32 0.0, %v4130
        %v4132 = vpop.f32.mrf.mxu0
        %v4133 = vadd.f32 0.0, %v4132
        %4134 = vmatmul.bf16.gmra.mxu0 %v4002
        %v4135 = vpop.f32.mrf.mxu0
        %v4136 = vadd.f32 0.0, %v4135
        %v4137 = vpop.f32.mrf.mxu0
        %v4138 = vadd.f32 0.0, %v4137
        %4139 = vmatmul.bf16.gmra.mxu0 %v4003
        %v4140 = vpop.f32.mrf.mxu0
        %v4141 = vadd.f32 0.0, %v4140
        %v4142 = vpop.f32.mrf.mxu0
        %v4143 = vadd.f32 0.0, %v4142
        %4144 = vmatmul.bf16.gmra.mxu0 %v4004
        %v4145 = vpop.f32.mrf.mxu0
        %v4146 = vadd.f32 0.0, %v4145
        %v4147 = vpop.f32.mrf.mxu0
        %v4148 = vadd.f32 0.0, %v4147
        %4149 = vmatmul.bf16.gmra.mxu0 %v4005
        %v4150 = vpop.f32.mrf.mxu0
        %v4151 = vadd.f32 0.0, %v4150
        %v4152 = vpop.f32.mrf.mxu0
        %v4153 = vadd.f32 0.0, %v4152
        %4154 = vmatmul.bf16.gmra.mxu0 %v4006
        %v4155 = vpop.f32.mrf.mxu0
        %v4156 = vadd.f32 0.0, %v4155
        %v4157 = vpop.f32.mrf.mxu0
        %v4158 = vadd.f32 0.0, %v4157
        %4159 = vdwg.mxu0
        %v4160 = vadd.f32 %v931, %v4081
        %v4161 = vadd.f32 %v932, %v4083
        %v4162 = vadd.f32 %v933, %v4086
        %v4163 = vadd.f32 %v934, %v4088
        %v4164 = vadd.f32 %v935, %v4091
        %v4165 = vadd.f32 %v936, %v4093
        %v4166 = vadd.f32 %v937, %v4096
        %v4167 = vadd.f32 %v938, %v4098
        %v4168 = vadd.f32 %v939, %v4101
        %v4169 = vadd.f32 %v940, %v4103
        %v4170 = vadd.f32 %v941, %v4106
        %v4171 = vadd.f32 %v942, %v4108
        %v4172 = vadd.f32 %v943, %v4111
        %v4173 = vadd.f32 %v944, %v4113
        %v4174 = vadd.f32 %v945, %v4116
        %v4175 = vadd.f32 %v946, %v4118
        %v4176 = vadd.f32 %v947, %v4121
        %v4177 = vadd.f32 %v948, %v4123
        %v4178 = vadd.f32 %v949, %v4126
        %v4179 = vadd.f32 %v950, %v4128
        %v4180 = vadd.f32 %v951, %v4131
        %v4181 = vadd.f32 %v952, %v4133
        %v4182 = vadd.f32 %v953, %v4136
        %v4183 = vadd.f32 %v954, %v4138
        %v4184 = vadd.f32 %v955, %v4141
        %v4185 = vadd.f32 %v956, %v4143
        %v4186 = vadd.f32 %v957, %v4146
        %v4187 = vadd.f32 %v958, %v4148
        %v4188 = vadd.f32 %v959, %v4151
        %v4189 = vadd.f32 %v960, %v4153
        %v4190 = vadd.f32 %v961, %v4156
        %v4191 = vadd.f32 %v962, %v4158
        %v4192 = vmax.f32 %v4160, 0.0
        %v4193 = vmax.f32 %v4161, 0.0
        %v4194 = vmax.f32 %v4162, 0.0
        %v4195 = vmax.f32 %v4163, 0.0
        %v4196 = vmax.f32 %v4164, 0.0
        %v4197 = vmax.f32 %v4165, 0.0
        %v4198 = vmax.f32 %v4166, 0.0
        %v4199 = vmax.f32 %v4167, 0.0
        %v4200 = vmax.f32 %v4168, 0.0
        %v4201 = vmax.f32 %v4169, 0.0
        %v4202 = vmax.f32 %v4170, 0.0
        %v4203 = vmax.f32 %v4171, 0.0
        %v4204 = vmax.f32 %v4172, 0.0
        %v4205 = vmax.f32 %v4173, 0.0
        %v4206 = vmax.f32 %v4174, 0.0
        %v4207 = vmax.f32 %v4175, 0.0
        %v4208 = vmax.f32 %v4176, 0.0
        %v4209 = vmax.f32 %v4177, 0.0
        %v4210 = vmax.f32 %v4178, 0.0
        %v4211 = vmax.f32 %v4179, 0.0
        %v4212 = vmax.f32 %v4180, 0.0
        %v4213 = vmax.f32 %v4181, 0.0
        %v4214 = vmax.f32 %v4182, 0.0
        %v4215 = vmax.f32 %v4183, 0.0
        %v4216 = vmax.f32 %v4184, 0.0
        %v4217 = vmax.f32 %v4185, 0.0
        %v4218 = vmax.f32 %v4186, 0.0
        %v4219 = vmax.f32 %v4187, 0.0
        %v4220 = vmax.f32 %v4188, 0.0
        %v4221 = vmax.f32 %v4189, 0.0
        %v4222 = vmax.f32 %v4190, 0.0
        %v4223 = vmax.f32 %v4191, 0.0
        %v4224 = vpack.c.bf16 %v4193, %v4192
        %v4225 = vpack.c.bf16 %v4195, %v4194
        %v4226 = vpack.c.bf16 %v4197, %v4196
        %v4227 = vpack.c.bf16 %v4199, %v4198
        %v4228 = vpack.c.bf16 %v4201, %v4200
        %v4229 = vpack.c.bf16 %v4203, %v4202
        %v4230 = vpack.c.bf16 %v4205, %v4204
        %v4231 = vpack.c.bf16 %v4207, %v4206
        %v4232 = vpack.c.bf16 %v4209, %v4208
        %v4233 = vpack.c.bf16 %v4211, %v4210
        %v4234 = vpack.c.bf16 %v4213, %v4212
        %v4235 = vpack.c.bf16 %v4215, %v4214
        %v4236 = vpack.c.bf16 %v4217, %v4216
        %v4237 = vpack.c.bf16 %v4219, %v4218
        %v4238 = vpack.c.bf16 %v4221, %v4220
        %v4239 = vpack.c.bf16 %v4223, %v4222
        %v4240 = vld [vmem:[#allocation7] sm:$0xf]
        %v4241 = vld [vmem:[#allocation7 + $0x4] sm:$0xf]
        %v4242 = vld [vmem:[#allocation7 + $0x8] sm:$0xf]
        %v4243 = vld [vmem:[#allocation7 + $0xc] sm:$0xf]
        %v4244 = vld [vmem:[#allocation7 + $0x10] sm:$0xf]
        %v4245 = vld [vmem:[#allocation7 + $0x14] sm:$0xf]
        %v4246 = vld [vmem:[#allocation7 + $0x18] sm:$0xf]
        %v4247 = vld [vmem:[#allocation7 + $0x1c] sm:$0xf]
        %v4248 = vld [vmem:[#allocation7 + $0x20] sm:$0xf]
        %v4249 = vld [vmem:[#allocation7 + $0x24] sm:$0xf]
        %v4250 = vld [vmem:[#allocation7 + $0x28] sm:$0xf]
        %v4251 = vld [vmem:[#allocation7 + $0x2c] sm:$0xf]
        %v4252 = vld [vmem:[#allocation7 + $0x30] sm:$0xf]
        %v4253 = vld [vmem:[#allocation7 + $0x34] sm:$0xf]
        %v4254 = vld [vmem:[#allocation7 + $0x38] sm:$0xf]
        %v4255 = vld [vmem:[#allocation7 + $0x3c] sm:$0xf]
        %v4272 = vunpack.c.l.b16 %v4240
        %v4273 = vunpack.c.l.b16 %v4241
        %v4274 = vunpack.c.l.b16 %v4242
        %v4275 = vunpack.c.l.b16 %v4243
        %v4276 = vunpack.c.l.b16 %v4244
        %v4277 = vunpack.c.l.b16 %v4245
        %v4278 = vunpack.c.l.b16 %v4246
        %v4279 = vunpack.c.l.b16 %v4247
        %v4280 = vunpack.c.l.b16 %v4248
        %v4281 = vunpack.c.l.b16 %v4249
        %v4282 = vunpack.c.l.b16 %v4250
        %v4283 = vunpack.c.l.b16 %v4251
        %v4284 = vunpack.c.l.b16 %v4252
        %v4285 = vunpack.c.l.b16 %v4253
        %v4286 = vunpack.c.l.b16 %v4254
        %v4287 = vunpack.c.l.b16 %v4255
        %v4288 = vpack.c.b16 %v4273, %v4272
        %v4289 = vpack.c.b16 %v4275, %v4274
        %v4290 = vpack.c.b16 %v4277, %v4276
        %v4291 = vpack.c.b16 %v4279, %v4278
        %v4292 = vpack.c.b16 %v4281, %v4280
        %v4293 = vpack.c.b16 %v4283, %v4282
        %v4294 = vpack.c.b16 %v4285, %v4284
        %v4295 = vpack.c.b16 %v4287, %v4286
        %4304 = vmatpush.bf16.msra.mxu0 %v4295
        %4305 = vmatpush.bf16.msra.mxu0 %v4294
        %4306 = vmatpush.bf16.msra.mxu0 %v4293
        %4307 = vmatpush.bf16.msra.mxu0 %v4292
        %4308 = vmatpush.bf16.msra.mxu0 %v4291
        %4309 = vmatpush.bf16.msra.mxu0 %v4290
        %4310 = vmatpush.bf16.msra.mxu0 %v4289
        %4311 = vmatpush.bf16.msra.mxu0 %v4288
        %4312 = vmatmul.bf16.gmra.mxu0 %v4224
        %v4313 = vpop.f32.mrf.mxu0
        %v4314 = vadd.f32 0.0, %v4313
        %v4315 = vpop.f32.mrf.mxu0
        %v4316 = vadd.f32 0.0, %v4315
        %4317 = vmatmul.bf16.gmra.mxu0 %v4225
        %v4318 = vpop.f32.mrf.mxu0
        %v4319 = vadd.f32 0.0, %v4318
        %v4320 = vpop.f32.mrf.mxu0
        %v4321 = vadd.f32 0.0, %v4320
        %4322 = vmatmul.bf16.gmra.mxu0 %v4226
        %v4323 = vpop.f32.mrf.mxu0
        %v4324 = vadd.f32 0.0, %v4323
        %v4325 = vpop.f32.mrf.mxu0
        %v4326 = vadd.f32 0.0, %v4325
        %4327 = vmatmul.bf16.gmra.mxu0 %v4227
        %v4328 = vpop.f32.mrf.mxu0
        %v4329 = vadd.f32 0.0, %v4328
        %v4330 = vpop.f32.mrf.mxu0
        %v4331 = vadd.f32 0.0, %v4330
        %4332 = vmatmul.bf16.gmra.mxu0 %v4228
        %v4333 = vpop.f32.mrf.mxu0
        %v4334 = vadd.f32 0.0, %v4333
        %v4335 = vpop.f32.mrf.mxu0
        %v4336 = vadd.f32 0.0, %v4335
        %4337 = vmatmul.bf16.gmra.mxu0 %v4229
        %v4338 = vpop.f32.mrf.mxu0
        %v4339 = vadd.f32 0.0, %v4338
        %v4340 = vpop.f32.mrf.mxu0
        %v4341 = vadd.f32 0.0, %v4340
        %4342 = vmatmul.bf16.gmra.mxu0 %v4230
        %v4343 = vpop.f32.mrf.mxu0
        %v4344 = vadd.f32 0.0, %v4343
        %v4345 = vpop.f32.mrf.mxu0
        %v4346 = vadd.f32 0.0, %v4345
        %4347 = vmatmul.bf16.gmra.mxu0 %v4231
        %v4348 = vpop.f32.mrf.mxu0
        %v4349 = vadd.f32 0.0, %v4348
        %v4350 = vpop.f32.mrf.mxu0
        %v4351 = vadd.f32 0.0, %v4350
        %4352 = vmatmul.bf16.gmra.mxu0 %v4232
        %v4353 = vpop.f32.mrf.mxu0
        %v4354 = vadd.f32 0.0, %v4353
        %v4355 = vpop.f32.mrf.mxu0
        %v4356 = vadd.f32 0.0, %v4355
        %4357 = vmatmul.bf16.gmra.mxu0 %v4233
        %v4358 = vpop.f32.mrf.mxu0
        %v4359 = vadd.f32 0.0, %v4358
        %v4360 = vpop.f32.mrf.mxu0
        %v4361 = vadd.f32 0.0, %v4360
        %4362 = vmatmul.bf16.gmra.mxu0 %v4234
        %v4363 = vpop.f32.mrf.mxu0
        %v4364 = vadd.f32 0.0, %v4363
        %v4365 = vpop.f32.mrf.mxu0
        %v4366 = vadd.f32 0.0, %v4365
        %4367 = vmatmul.bf16.gmra.mxu0 %v4235
        %v4368 = vpop.f32.mrf.mxu0
        %v4369 = vadd.f32 0.0, %v4368
        %v4370 = vpop.f32.mrf.mxu0
        %v4371 = vadd.f32 0.0, %v4370
        %4372 = vmatmul.bf16.gmra.mxu0 %v4236
        %v4373 = vpop.f32.mrf.mxu0
        %v4374 = vadd.f32 0.0, %v4373
        %v4375 = vpop.f32.mrf.mxu0
        %v4376 = vadd.f32 0.0, %v4375
        %4377 = vmatmul.bf16.gmra.mxu0 %v4237
        %v4378 = vpop.f32.mrf.mxu0
        %v4379 = vadd.f32 0.0, %v4378
        %v4380 = vpop.f32.mrf.mxu0
        %v4381 = vadd.f32 0.0, %v4380
        %4382 = vmatmul.bf16.gmra.mxu0 %v4238
        %v4383 = vpop.f32.mrf.mxu0
        %v4384 = vadd.f32 0.0, %v4383
        %v4385 = vpop.f32.mrf.mxu0
        %v4386 = vadd.f32 0.0, %v4385
        %4387 = vmatmul.bf16.gmra.mxu0 %v4239
        %v4388 = vpop.f32.mrf.mxu0
        %v4389 = vadd.f32 0.0, %v4388
        %v4390 = vpop.f32.mrf.mxu0
        %v4391 = vadd.f32 0.0, %v4390
        %4392 = vdwg.mxu0
        %v4393 = vrot.slane %v4314, 7
        %v4394 = vrot.slane %v4316, 7
        %v4395 = vrot.slane %v4319, 7
        %v4396 = vrot.slane %v4321, 7
        %v4397 = vrot.slane %v4324, 7
        %v4398 = vrot.slane %v4326, 7
        %v4399 = vrot.slane %v4329, 7
        %v4400 = vrot.slane %v4331, 7
        %v4401 = vrot.slane %v4334, 7
        %v4402 = vrot.slane %v4336, 7
        %v4403 = vrot.slane %v4339, 7
        %v4404 = vrot.slane %v4341, 7
        %v4405 = vrot.slane %v4344, 7
        %v4406 = vrot.slane %v4346, 7
        %v4407 = vrot.slane %v4349, 7
        %v4408 = vrot.slane %v4351, 7
        %v4409 = vrot.slane %v4354, 7
        %v4410 = vrot.slane %v4356, 7
        %v4411 = vrot.slane %v4359, 7
        %v4412 = vrot.slane %v4361, 7
        %v4413 = vrot.slane %v4364, 7
        %v4414 = vrot.slane %v4366, 7
        %v4415 = vrot.slane %v4369, 7
        %v4416 = vrot.slane %v4371, 7
        %v4417 = vrot.slane %v4374, 7
        %v4418 = vrot.slane %v4376, 7
        %v4419 = vrot.slane %v4379, 7
        %v4420 = vrot.slane %v4381, 7
        %v4421 = vrot.slane %v4384, 7
        %v4422 = vrot.slane %v4386, 7
        %v4423 = vrot.slane %v4389, 7
        %v4424 = vrot.slane %v4391, 7
        %v4425 = vsel %vm1244, %v4423, %v4424
        %v4426 = vsel %vm1244, %v4422, %v4423
        %v4427 = vsel %vm1244, %v4421, %v4422
        %v4428 = vsel %vm1244, %v4420, %v4421
        %v4429 = vsel %vm1244, %v4419, %v4420
        %v4430 = vsel %vm1244, %v4418, %v4419
        %v4431 = vsel %vm1244, %v4417, %v4418
        %v4432 = vsel %vm1244, %v4416, %v4417
        %v4433 = vsel %vm1244, %v4415, %v4416
        %v4434 = vsel %vm1244, %v4414, %v4415
        %v4435 = vsel %vm1244, %v4413, %v4414
        %v4436 = vsel %vm1244, %v4412, %v4413
        %v4437 = vsel %vm1244, %v4411, %v4412
        %v4438 = vsel %vm1244, %v4410, %v4411
        %v4439 = vsel %vm1244, %v4409, %v4410
        %v4440 = vsel %vm1244, %v4408, %v4409
        %v4441 = vsel %vm1244, %v4407, %v4408
        %v4442 = vsel %vm1244, %v4406, %v4407
        %v4443 = vsel %vm1244, %v4405, %v4406
        %v4444 = vsel %vm1244, %v4404, %v4405
        %v4445 = vsel %vm1244, %v4403, %v4404
        %v4446 = vsel %vm1244, %v4402, %v4403
        %v4447 = vsel %vm1244, %v4401, %v4402
        %v4448 = vsel %vm1244, %v4400, %v4401
        %v4449 = vsel %vm1244, %v4399, %v4400
        %v4450 = vsel %vm1244, %v4398, %v4399
        %v4451 = vsel %vm1244, %v4397, %v4398
        %v4452 = vsel %vm1244, %v4396, %v4397
        %v4453 = vsel %vm1244, %v4395, %v4396
        %v4454 = vsel %vm1244, %v4394, %v4395
        %v4455 = vsel %vm1244, %v4393, %v4394
        %v4456 = vsel %vm1244, %v4424, %v4393
        %v4457 = vsel %vm1341, %v4426, 0.0
        %v4458 = vsel %vm1342, %v4425, 0.0
        %v4459 = vsel %vm1343, %v4456, 0.0
        %v4460 = vsel %vm1344, %v4455, 0.0
        %v4461 = vsel %vm1345, %v4454, 0.0
        %v4462 = vsel %vm1346, %v4453, 0.0
        %v4463 = vsel %vm1347, %v4452, 0.0
        %v4464 = vsel %vm1348, %v4451, 0.0
        %v4465 = vsel %vm1349, %v4450, 0.0
        %v4466 = vsel %vm1350, %v4449, 0.0
        %v4467 = vsel %vm1351, %v4448, 0.0
        %v4468 = vsel %vm1352, %v4447, 0.0
        %v4469 = vsel %vm1353, %v4446, 0.0
        %v4470 = vsel %vm1354, %v4445, 0.0
        %v4471 = vsel %vm1355, %v4444, 0.0
        %v4472 = vsel %vm1356, %v4443, 0.0
        %v4473 = vsel %vm1357, %v4442, 0.0
        %v4474 = vsel %vm1358, %v4441, 0.0
        %v4475 = vsel %vm1359, %v4440, 0.0
        %v4476 = vsel %vm1360, %v4439, 0.0
        %v4477 = vsel %vm1361, %v4438, 0.0
        %v4478 = vsel %vm1362, %v4437, 0.0
        %v4479 = vsel %vm1363, %v4436, 0.0
        %v4480 = vsel %vm1364, %v4435, 0.0
        %v4481 = vsel %vm1365, %v4434, 0.0
        %v4482 = vsel %vm1366, %v4433, 0.0
        %v4483 = vsel %vm1367, %v4432, 0.0
        %v4484 = vsel %vm1368, %v4431, 0.0
        %v4485 = vsel %vm1369, %v4430, 0.0
        %v4486 = vsel %vm1370, %v4429, 0.0
        %v4487 = vsel %vm1371, %v4428, 0.0
        %v4488 = vsel %vm1372, %v4427, 0.0
        %v4489 = vpack.c.bf16 %v4458, %v4457
        %v4490 = vpack.c.bf16 %v4460, %v4459
        %v4491 = vpack.c.bf16 %v4462, %v4461
        %v4492 = vpack.c.bf16 %v4464, %v4463
        %v4493 = vpack.c.bf16 %v4466, %v4465
        %v4494 = vpack.c.bf16 %v4468, %v4467
        %v4495 = vpack.c.bf16 %v4470, %v4469
        %v4496 = vpack.c.bf16 %v4472, %v4471
        %v4497 = vpack.c.bf16 %v4474, %v4473
        %v4498 = vpack.c.bf16 %v4476, %v4475
        %v4499 = vpack.c.bf16 %v4478, %v4477
        %v4500 = vpack.c.bf16 %v4480, %v4479
        %v4501 = vpack.c.bf16 %v4482, %v4481
        %v4502 = vpack.c.bf16 %v4484, %v4483
        %v4503 = vpack.c.bf16 %v4486, %v4485
        %v4504 = vpack.c.bf16 %v4488, %v4487
        %v4505 = vld [vmem:[%s5] sm:$0xf]
        %v4506 = vld [vmem:[%s5 + $0x4] sm:$0xf]
        %v4507 = vld [vmem:[%s5 + $0x8] sm:$0xf]
        %v4508 = vld [vmem:[%s5 + $0xc] sm:$0xf]
        %v4509 = vld [vmem:[%s5 + $0x10] sm:$0xf]
        %v4510 = vld [vmem:[%s5 + $0x14] sm:$0xf]
        %v4511 = vld [vmem:[%s5 + $0x18] sm:$0xf]
        %v4512 = vld [vmem:[%s5 + $0x1c] sm:$0xf]
        %v4513 = vld [vmem:[%s5 + $0x20] sm:$0xf]
        %v4514 = vld [vmem:[%s5 + $0x24] sm:$0xf]
        %v4515 = vld [vmem:[%s5 + $0x28] sm:$0xf]
        %v4516 = vld [vmem:[%s5 + $0x2c] sm:$0xf]
        %v4517 = vld [vmem:[%s5 + $0x30] sm:$0xf]
        %v4518 = vld [vmem:[%s5 + $0x34] sm:$0xf]
        %v4519 = vld [vmem:[%s5 + $0x38] sm:$0xf]
        %v4520 = vld [vmem:[%s5 + $0x3c] sm:$0xf]
        %v4521 = vsel %vm1469, %v4389, 0.0
        %v4522 = vsel %vm1470, %v4391, 0.0
        %v4523 = vsel %vm1471, %v4314, 0.0
        %v4524 = vsel %vm1472, %v4316, 0.0
        %v4525 = vsel %vm1473, %v4319, 0.0
        %v4526 = vsel %vm1474, %v4321, 0.0
        %v4527 = vsel %vm1475, %v4324, 0.0
        %v4528 = vsel %vm1476, %v4326, 0.0
        %v4529 = vsel %vm1477, %v4329, 0.0
        %v4530 = vsel %vm1478, %v4331, 0.0
        %v4531 = vsel %vm1479, %v4334, 0.0
        %v4532 = vsel %vm1480, %v4336, 0.0
        %v4533 = vsel %vm1481, %v4339, 0.0
        %v4534 = vsel %vm1482, %v4341, 0.0
        %v4535 = vsel %vm1483, %v4344, 0.0
        %v4536 = vsel %vm1484, %v4346, 0.0
        %v4537 = vsel %vm1485, %v4349, 0.0
        %v4538 = vsel %vm1486, %v4351, 0.0
        %v4539 = vsel %vm1487, %v4354, 0.0
        %v4540 = vsel %vm1488, %v4356, 0.0
        %v4541 = vsel %vm1489, %v4359, 0.0
        %v4542 = vsel %vm1490, %v4361, 0.0
        %v4543 = vsel %vm1491, %v4364, 0.0
        %v4544 = vsel %vm1492, %v4366, 0.0
        %v4545 = vsel %vm1493, %v4369, 0.0
        %v4546 = vsel %vm1494, %v4371, 0.0
        %v4547 = vsel %vm1495, %v4374, 0.0
        %v4548 = vsel %vm1496, %v4376, 0.0
        %v4549 = vsel %vm1497, %v4379, 0.0
        %v4550 = vsel %vm1498, %v4381, 0.0
        %v4551 = vsel %vm1499, %v4384, 0.0
        %v4552 = vsel %vm1500, %v4386, 0.0
        %v4553 = vpack.c.bf16 %v4522, %v4521
        %v4554 = vpack.c.bf16 %v4524, %v4523
        %v4555 = vpack.c.bf16 %v4526, %v4525
        %v4556 = vpack.c.bf16 %v4528, %v4527
        %v4557 = vpack.c.bf16 %v4530, %v4529
        %v4558 = vpack.c.bf16 %v4532, %v4531
        %v4559 = vpack.c.bf16 %v4534, %v4533
        %v4560 = vpack.c.bf16 %v4536, %v4535
        %v4561 = vpack.c.bf16 %v4538, %v4537
        %v4562 = vpack.c.bf16 %v4540, %v4539
        %v4563 = vpack.c.bf16 %v4542, %v4541
        %v4564 = vpack.c.bf16 %v4544, %v4543
        %v4565 = vpack.c.bf16 %v4546, %v4545
        %v4566 = vpack.c.bf16 %v4548, %v4547
        %v4567 = vpack.c.bf16 %v4550, %v4549
        %v4568 = vpack.c.bf16 %v4552, %v4551
        %s4569 = scalar_lea.vmem %s5, 64
        %v4570 = vld [vmem:[%s4569] sm:$0xf]
        %v4571 = vld [vmem:[%s4569 + $0x4] sm:$0xf]
        %v4572 = vld [vmem:[%s4569 + $0x8] sm:$0xf]
        %v4573 = vld [vmem:[%s4569 + $0xc] sm:$0xf]
        %v4574 = vld [vmem:[%s4569 + $0x10] sm:$0xf]
        %v4575 = vld [vmem:[%s4569 + $0x14] sm:$0xf]
        %v4576 = vld [vmem:[%s4569 + $0x18] sm:$0xf]
        %v4577 = vld [vmem:[%s4569 + $0x1c] sm:$0xf]
        %v4578 = vld [vmem:[%s4569 + $0x20] sm:$0xf]
        %v4579 = vld [vmem:[%s4569 + $0x24] sm:$0xf]
        %v4580 = vld [vmem:[%s4569 + $0x28] sm:$0xf]
        %v4581 = vld [vmem:[%s4569 + $0x2c] sm:$0xf]
        %v4582 = vld [vmem:[%s4569 + $0x30] sm:$0xf]
        %v4583 = vld [vmem:[%s4569 + $0x34] sm:$0xf]
        %v4584 = vld [vmem:[%s4569 + $0x38] sm:$0xf]
        %v4585 = vld [vmem:[%s4569 + $0x3c] sm:$0xf]
        %v4602 = vunpack.c.l.b16 %v4570
        %v4603 = vunpack.c.l.b16 %v4571
        %v4604 = vunpack.c.l.b16 %v4572
        %v4605 = vunpack.c.l.b16 %v4573
        %v4606 = vunpack.c.l.b16 %v4574
        %v4607 = vunpack.c.l.b16 %v4575
        %v4608 = vunpack.c.l.b16 %v4576
        %v4609 = vunpack.c.l.b16 %v4577
        %v4610 = vunpack.c.l.b16 %v4578
        %v4611 = vunpack.c.l.b16 %v4579
        %v4612 = vunpack.c.l.b16 %v4580
        %v4613 = vunpack.c.l.b16 %v4581
        %v4614 = vunpack.c.l.b16 %v4582
        %v4615 = vunpack.c.l.b16 %v4583
        %v4616 = vunpack.c.l.b16 %v4584
        %v4617 = vunpack.c.l.b16 %v4585
        %v4618 = vpack.c.b16 %v4603, %v4602
        %v4619 = vpack.c.b16 %v4605, %v4604
        %v4620 = vpack.c.b16 %v4607, %v4606
        %v4621 = vpack.c.b16 %v4609, %v4608
        %v4622 = vpack.c.b16 %v4611, %v4610
        %v4623 = vpack.c.b16 %v4613, %v4612
        %v4624 = vpack.c.b16 %v4615, %v4614
        %v4625 = vpack.c.b16 %v4617, %v4616
        %4634 = vmatpush.bf16.msra.mxu0 %v4625
        %4635 = vmatpush.bf16.msra.mxu0 %v4624
        %4636 = vmatpush.bf16.msra.mxu0 %v4623
        %4637 = vmatpush.bf16.msra.mxu0 %v4622
        %4638 = vmatpush.bf16.msra.mxu0 %v4621
        %4639 = vmatpush.bf16.msra.mxu0 %v4620
        %4640 = vmatpush.bf16.msra.mxu0 %v4619
        %4641 = vmatpush.bf16.msra.mxu0 %v4618
        %4642 = vmatmul.bf16.gmra.mxu0 %v4553
        %v4643 = vpop.f32.mrf.mxu0
        %v4644 = vadd.f32 0.0, %v4643
        %v4645 = vpop.f32.mrf.mxu0
        %v4646 = vadd.f32 0.0, %v4645
        %4647 = vmatmul.bf16.gmra.mxu0 %v4554
        %v4648 = vpop.f32.mrf.mxu0
        %v4649 = vadd.f32 0.0, %v4648
        %v4650 = vpop.f32.mrf.mxu0
        %v4651 = vadd.f32 0.0, %v4650
        %4652 = vmatmul.bf16.gmra.mxu0 %v4555
        %v4653 = vpop.f32.mrf.mxu0
        %v4654 = vadd.f32 0.0, %v4653
        %v4655 = vpop.f32.mrf.mxu0
        %v4656 = vadd.f32 0.0, %v4655
        %4657 = vmatmul.bf16.gmra.mxu0 %v4556
        %v4658 = vpop.f32.mrf.mxu0
        %v4659 = vadd.f32 0.0, %v4658
        %v4660 = vpop.f32.mrf.mxu0
        %v4661 = vadd.f32 0.0, %v4660
        %4662 = vmatmul.bf16.gmra.mxu0 %v4557
        %v4663 = vpop.f32.mrf.mxu0
        %v4664 = vadd.f32 0.0, %v4663
        %v4665 = vpop.f32.mrf.mxu0
        %v4666 = vadd.f32 0.0, %v4665
        %4667 = vmatmul.bf16.gmra.mxu0 %v4558
        %v4668 = vpop.f32.mrf.mxu0
        %v4669 = vadd.f32 0.0, %v4668
        %v4670 = vpop.f32.mrf.mxu0
        %v4671 = vadd.f32 0.0, %v4670
        %4672 = vmatmul.bf16.gmra.mxu0 %v4559
        %v4673 = vpop.f32.mrf.mxu0
        %v4674 = vadd.f32 0.0, %v4673
        %v4675 = vpop.f32.mrf.mxu0
        %v4676 = vadd.f32 0.0, %v4675
        %4677 = vmatmul.bf16.gmra.mxu0 %v4560
        %v4678 = vpop.f32.mrf.mxu0
        %v4679 = vadd.f32 0.0, %v4678
        %v4680 = vpop.f32.mrf.mxu0
        %v4681 = vadd.f32 0.0, %v4680
        %4682 = vmatmul.bf16.gmra.mxu0 %v4561
        %v4683 = vpop.f32.mrf.mxu0
        %v4684 = vadd.f32 0.0, %v4683
        %v4685 = vpop.f32.mrf.mxu0
        %v4686 = vadd.f32 0.0, %v4685
        %4687 = vmatmul.bf16.gmra.mxu0 %v4562
        %v4688 = vpop.f32.mrf.mxu0
        %v4689 = vadd.f32 0.0, %v4688
        %v4690 = vpop.f32.mrf.mxu0
        %v4691 = vadd.f32 0.0, %v4690
        %4692 = vmatmul.bf16.gmra.mxu0 %v4563
        %v4693 = vpop.f32.mrf.mxu0
        %v4694 = vadd.f32 0.0, %v4693
        %v4695 = vpop.f32.mrf.mxu0
        %v4696 = vadd.f32 0.0, %v4695
        %4697 = vmatmul.bf16.gmra.mxu0 %v4564
        %v4698 = vpop.f32.mrf.mxu0
        %v4699 = vadd.f32 0.0, %v4698
        %v4700 = vpop.f32.mrf.mxu0
        %v4701 = vadd.f32 0.0, %v4700
        %4702 = vmatmul.bf16.gmra.mxu0 %v4565
        %v4703 = vpop.f32.mrf.mxu0
        %v4704 = vadd.f32 0.0, %v4703
        %v4705 = vpop.f32.mrf.mxu0
        %v4706 = vadd.f32 0.0, %v4705
        %4707 = vmatmul.bf16.gmra.mxu0 %v4566
        %v4708 = vpop.f32.mrf.mxu0
        %v4709 = vadd.f32 0.0, %v4708
        %v4710 = vpop.f32.mrf.mxu0
        %v4711 = vadd.f32 0.0, %v4710
        %4712 = vmatmul.bf16.gmra.mxu0 %v4567
        %v4713 = vpop.f32.mrf.mxu0
        %v4714 = vadd.f32 0.0, %v4713
        %v4715 = vpop.f32.mrf.mxu0
        %v4716 = vadd.f32 0.0, %v4715
        %4717 = vmatmul.bf16.gmra.mxu0 %v4568
        %v4718 = vpop.f32.mrf.mxu0
        %v4719 = vadd.f32 0.0, %v4718
        %v4720 = vpop.f32.mrf.mxu0
        %v4721 = vadd.f32 0.0, %v4720
        %4722 = vdwg.mxu0
        %v4739 = vunpack.c.l.b16 %v4505
        %v4740 = vunpack.c.l.b16 %v4506
        %v4741 = vunpack.c.l.b16 %v4507
        %v4742 = vunpack.c.l.b16 %v4508
        %v4743 = vunpack.c.l.b16 %v4509
        %v4744 = vunpack.c.l.b16 %v4510
        %v4745 = vunpack.c.l.b16 %v4511
        %v4746 = vunpack.c.l.b16 %v4512
        %v4747 = vunpack.c.l.b16 %v4513
        %v4748 = vunpack.c.l.b16 %v4514
        %v4749 = vunpack.c.l.b16 %v4515
        %v4750 = vunpack.c.l.b16 %v4516
        %v4751 = vunpack.c.l.b16 %v4517
        %v4752 = vunpack.c.l.b16 %v4518
        %v4753 = vunpack.c.l.b16 %v4519
        %v4754 = vunpack.c.l.b16 %v4520
        %v4755 = vpack.c.b16 %v4740, %v4739
        %v4756 = vpack.c.b16 %v4742, %v4741
        %v4757 = vpack.c.b16 %v4744, %v4743
        %v4758 = vpack.c.b16 %v4746, %v4745
        %v4759 = vpack.c.b16 %v4748, %v4747
        %v4760 = vpack.c.b16 %v4750, %v4749
        %v4761 = vpack.c.b16 %v4752, %v4751
        %v4762 = vpack.c.b16 %v4754, %v4753
        %4771 = vmatpush.bf16.msra.mxu0 %v4762
        %4772 = vmatpush.bf16.msra.mxu0 %v4761
        %4773 = vmatpush.bf16.msra.mxu0 %v4760
        %4774 = vmatpush.bf16.msra.mxu0 %v4759
        %4775 = vmatpush.bf16.msra.mxu0 %v4758
        %4776 = vmatpush.bf16.msra.mxu0 %v4757
        %4777 = vmatpush.bf16.msra.mxu0 %v4756
        %4778 = vmatpush.bf16.msra.mxu0 %v4755
        %4779 = vmatmul.bf16.gmra.mxu0 %v4489
        %v4780 = vpop.f32.mrf.mxu0
        %v4781 = vadd.f32 %v4644, %v4780
        %v4782 = vpop.f32.mrf.mxu0
        %v4783 = vadd.f32 %v4646, %v4782
        %4784 = vmatmul.bf16.gmra.mxu0 %v4490
        %v4785 = vpop.f32.mrf.mxu0
        %v4786 = vadd.f32 %v4649, %v4785
        %v4787 = vpop.f32.mrf.mxu0
        %v4788 = vadd.f32 %v4651, %v4787
        %4789 = vmatmul.bf16.gmra.mxu0 %v4491
        %v4790 = vpop.f32.mrf.mxu0
        %v4791 = vadd.f32 %v4654, %v4790
        %v4792 = vpop.f32.mrf.mxu0
        %v4793 = vadd.f32 %v4656, %v4792
        %4794 = vmatmul.bf16.gmra.mxu0 %v4492
        %v4795 = vpop.f32.mrf.mxu0
        %v4796 = vadd.f32 %v4659, %v4795
        %v4797 = vpop.f32.mrf.mxu0
        %v4798 = vadd.f32 %v4661, %v4797
        %4799 = vmatmul.bf16.gmra.mxu0 %v4493
        %v4800 = vpop.f32.mrf.mxu0
        %v4801 = vadd.f32 %v4664, %v4800
        %v4802 = vpop.f32.mrf.mxu0
        %v4803 = vadd.f32 %v4666, %v4802
        %4804 = vmatmul.bf16.gmra.mxu0 %v4494
        %v4805 = vpop.f32.mrf.mxu0
        %v4806 = vadd.f32 %v4669, %v4805
        %v4807 = vpop.f32.mrf.mxu0
        %v4808 = vadd.f32 %v4671, %v4807
        %4809 = vmatmul.bf16.gmra.mxu0 %v4495
        %v4810 = vpop.f32.mrf.mxu0
        %v4811 = vadd.f32 %v4674, %v4810
        %v4812 = vpop.f32.mrf.mxu0
        %v4813 = vadd.f32 %v4676, %v4812
        %4814 = vmatmul.bf16.gmra.mxu0 %v4496
        %v4815 = vpop.f32.mrf.mxu0
        %v4816 = vadd.f32 %v4679, %v4815
        %v4817 = vpop.f32.mrf.mxu0
        %v4818 = vadd.f32 %v4681, %v4817
        %4819 = vmatmul.bf16.gmra.mxu0 %v4497
        %v4820 = vpop.f32.mrf.mxu0
        %v4821 = vadd.f32 %v4684, %v4820
        %v4822 = vpop.f32.mrf.mxu0
        %v4823 = vadd.f32 %v4686, %v4822
        %4824 = vmatmul.bf16.gmra.mxu0 %v4498
        %v4825 = vpop.f32.mrf.mxu0
        %v4826 = vadd.f32 %v4689, %v4825
        %v4827 = vpop.f32.mrf.mxu0
        %v4828 = vadd.f32 %v4691, %v4827
        %4829 = vmatmul.bf16.gmra.mxu0 %v4499
        %v4830 = vpop.f32.mrf.mxu0
        %v4831 = vadd.f32 %v4694, %v4830
        %v4832 = vpop.f32.mrf.mxu0
        %v4833 = vadd.f32 %v4696, %v4832
        %4834 = vmatmul.bf16.gmra.mxu0 %v4500
        %v4835 = vpop.f32.mrf.mxu0
        %v4836 = vadd.f32 %v4699, %v4835
        %v4837 = vpop.f32.mrf.mxu0
        %v4838 = vadd.f32 %v4701, %v4837
        %4839 = vmatmul.bf16.gmra.mxu0 %v4501
        %v4840 = vpop.f32.mrf.mxu0
        %v4841 = vadd.f32 %v4704, %v4840
        %v4842 = vpop.f32.mrf.mxu0
        %v4843 = vadd.f32 %v4706, %v4842
        %4844 = vmatmul.bf16.gmra.mxu0 %v4502
        %v4845 = vpop.f32.mrf.mxu0
        %v4846 = vadd.f32 %v4709, %v4845
        %v4847 = vpop.f32.mrf.mxu0
        %v4848 = vadd.f32 %v4711, %v4847
        %4849 = vmatmul.bf16.gmra.mxu0 %v4503
        %v4850 = vpop.f32.mrf.mxu0
        %v4851 = vadd.f32 %v4714, %v4850
        %v4852 = vpop.f32.mrf.mxu0
        %v4853 = vadd.f32 %v4716, %v4852
        %4854 = vmatmul.bf16.gmra.mxu0 %v4504
        %v4855 = vpop.f32.mrf.mxu0
        %v4856 = vadd.f32 %v4719, %v4855
        %v4857 = vpop.f32.mrf.mxu0
        %v4858 = vadd.f32 %v4721, %v4857
        %4859 = vdwg.mxu0
        %v4860 = vrot.slane %v4314, 1
        %v4861 = vrot.slane %v4316, 1
        %v4862 = vrot.slane %v4319, 1
        %v4863 = vrot.slane %v4321, 1
        %v4864 = vrot.slane %v4324, 1
        %v4865 = vrot.slane %v4326, 1
        %v4866 = vrot.slane %v4329, 1
        %v4867 = vrot.slane %v4331, 1
        %v4868 = vrot.slane %v4334, 1
        %v4869 = vrot.slane %v4336, 1
        %v4870 = vrot.slane %v4339, 1
        %v4871 = vrot.slane %v4341, 1
        %v4872 = vrot.slane %v4344, 1
        %v4873 = vrot.slane %v4346, 1
        %v4874 = vrot.slane %v4349, 1
        %v4875 = vrot.slane %v4351, 1
        %v4876 = vrot.slane %v4354, 1
        %v4877 = vrot.slane %v4356, 1
        %v4878 = vrot.slane %v4359, 1
        %v4879 = vrot.slane %v4361, 1
        %v4880 = vrot.slane %v4364, 1
        %v4881 = vrot.slane %v4366, 1
        %v4882 = vrot.slane %v4369, 1
        %v4883 = vrot.slane %v4371, 1
        %v4884 = vrot.slane %v4374, 1
        %v4885 = vrot.slane %v4376, 1
        %v4886 = vrot.slane %v4379, 1
        %v4887 = vrot.slane %v4381, 1
        %v4888 = vrot.slane %v4384, 1
        %v4889 = vrot.slane %v4386, 1
        %v4890 = vrot.slane %v4389, 1
        %v4891 = vrot.slane %v4391, 1
        %v4892 = vsel %vm1872, %v4890, %v4891
        %v4893 = vsel %vm1872, %v4889, %v4890
        %v4894 = vsel %vm1872, %v4888, %v4889
        %v4895 = vsel %vm1872, %v4887, %v4888
        %v4896 = vsel %vm1872, %v4886, %v4887
        %v4897 = vsel %vm1872, %v4885, %v4886
        %v4898 = vsel %vm1872, %v4884, %v4885
        %v4899 = vsel %vm1872, %v4883, %v4884
        %v4900 = vsel %vm1872, %v4882, %v4883
        %v4901 = vsel %vm1872, %v4881, %v4882
        %v4902 = vsel %vm1872, %v4880, %v4881
        %v4903 = vsel %vm1872, %v4879, %v4880
        %v4904 = vsel %vm1872, %v4878, %v4879
        %v4905 = vsel %vm1872, %v4877, %v4878
        %v4906 = vsel %vm1872, %v4876, %v4877
        %v4907 = vsel %vm1872, %v4875, %v4876
        %v4908 = vsel %vm1872, %v4874, %v4875
        %v4909 = vsel %vm1872, %v4873, %v4874
        %v4910 = vsel %vm1872, %v4872, %v4873
        %v4911 = vsel %vm1872, %v4871, %v4872
        %v4912 = vsel %vm1872, %v4870, %v4871
        %v4913 = vsel %vm1872, %v4869, %v4870
        %v4914 = vsel %vm1872, %v4868, %v4869
        %v4915 = vsel %vm1872, %v4867, %v4868
        %v4916 = vsel %vm1872, %v4866, %v4867
        %v4917 = vsel %vm1872, %v4865, %v4866
        %v4918 = vsel %vm1872, %v4864, %v4865
        %v4919 = vsel %vm1872, %v4863, %v4864
        %v4920 = vsel %vm1872, %v4862, %v4863
        %v4921 = vsel %vm1872, %v4861, %v4862
        %v4922 = vsel %vm1872, %v4860, %v4861
        %v4923 = vsel %vm1872, %v4891, %v4860
        %v4924 = vsel %vm1969, %v4892, 0.0
        %v4925 = vsel %vm1970, %v4923, 0.0
        %v4926 = vsel %vm1971, %v4922, 0.0
        %v4927 = vsel %vm1972, %v4921, 0.0
        %v4928 = vsel %vm1973, %v4920, 0.0
        %v4929 = vsel %vm1974, %v4919, 0.0
        %v4930 = vsel %vm1975, %v4918, 0.0
        %v4931 = vsel %vm1976, %v4917, 0.0
        %v4932 = vsel %vm1977, %v4916, 0.0
        %v4933 = vsel %vm1978, %v4915, 0.0
        %v4934 = vsel %vm1979, %v4914, 0.0
        %v4935 = vsel %vm1980, %v4913, 0.0
        %v4936 = vsel %vm1981, %v4912, 0.0
        %v4937 = vsel %vm1982, %v4911, 0.0
        %v4938 = vsel %vm1983, %v4910, 0.0
        %v4939 = vsel %vm1984, %v4909, 0.0
        %v4940 = vsel %vm1985, %v4908, 0.0
        %v4941 = vsel %vm1986, %v4907, 0.0
        %v4942 = vsel %vm1987, %v4906, 0.0
        %v4943 = vsel %vm1988, %v4905, 0.0
        %v4944 = vsel %vm1989, %v4904, 0.0
        %v4945 = vsel %vm1990, %v4903, 0.0
        %v4946 = vsel %vm1991, %v4902, 0.0
        %v4947 = vsel %vm1992, %v4901, 0.0
        %v4948 = vsel %vm1993, %v4900, 0.0
        %v4949 = vsel %vm1994, %v4899, 0.0
        %v4950 = vsel %vm1995, %v4898, 0.0
        %v4951 = vsel %vm1996, %v4897, 0.0
        %v4952 = vsel %vm1997, %v4896, 0.0
        %v4953 = vsel %vm1998, %v4895, 0.0
        %v4954 = vsel %vm1999, %v4894, 0.0
        %v4955 = vsel %vm2000, %v4893, 0.0
        %v4956 = vpack.c.bf16 %v4925, %v4924
        %v4957 = vpack.c.bf16 %v4927, %v4926
        %v4958 = vpack.c.bf16 %v4929, %v4928
        %v4959 = vpack.c.bf16 %v4931, %v4930
        %v4960 = vpack.c.bf16 %v4933, %v4932
        %v4961 = vpack.c.bf16 %v4935, %v4934
        %v4962 = vpack.c.bf16 %v4937, %v4936
        %v4963 = vpack.c.bf16 %v4939, %v4938
        %v4964 = vpack.c.bf16 %v4941, %v4940
        %v4965 = vpack.c.bf16 %v4943, %v4942
        %v4966 = vpack.c.bf16 %v4945, %v4944
        %v4967 = vpack.c.bf16 %v4947, %v4946
        %v4968 = vpack.c.bf16 %v4949, %v4948
        %v4969 = vpack.c.bf16 %v4951, %v4950
        %v4970 = vpack.c.bf16 %v4953, %v4952
        %v4971 = vpack.c.bf16 %v4955, %v4954
        %s4972 = scalar_lea.vmem %s5, 128
        %v4973 = vld [vmem:[%s4972] sm:$0xf]
        %v4974 = vld [vmem:[%s4972 + $0x4] sm:$0xf]
        %v4975 = vld [vmem:[%s4972 + $0x8] sm:$0xf]
        %v4976 = vld [vmem:[%s4972 + $0xc] sm:$0xf]
        %v4977 = vld [vmem:[%s4972 + $0x10] sm:$0xf]
        %v4978 = vld [vmem:[%s4972 + $0x14] sm:$0xf]
        %v4979 = vld [vmem:[%s4972 + $0x18] sm:$0xf]
        %v4980 = vld [vmem:[%s4972 + $0x1c] sm:$0xf]
        %v4981 = vld [vmem:[%s4972 + $0x20] sm:$0xf]
        %v4982 = vld [vmem:[%s4972 + $0x24] sm:$0xf]
        %v4983 = vld [vmem:[%s4972 + $0x28] sm:$0xf]
        %v4984 = vld [vmem:[%s4972 + $0x2c] sm:$0xf]
        %v4985 = vld [vmem:[%s4972 + $0x30] sm:$0xf]
        %v4986 = vld [vmem:[%s4972 + $0x34] sm:$0xf]
        %v4987 = vld [vmem:[%s4972 + $0x38] sm:$0xf]
        %v4988 = vld [vmem:[%s4972 + $0x3c] sm:$0xf]
        %v5005 = vunpack.c.l.b16 %v4973
        %v5006 = vunpack.c.l.b16 %v4974
        %v5007 = vunpack.c.l.b16 %v4975
        %v5008 = vunpack.c.l.b16 %v4976
        %v5009 = vunpack.c.l.b16 %v4977
        %v5010 = vunpack.c.l.b16 %v4978
        %v5011 = vunpack.c.l.b16 %v4979
        %v5012 = vunpack.c.l.b16 %v4980
        %v5013 = vunpack.c.l.b16 %v4981
        %v5014 = vunpack.c.l.b16 %v4982
        %v5015 = vunpack.c.l.b16 %v4983
        %v5016 = vunpack.c.l.b16 %v4984
        %v5017 = vunpack.c.l.b16 %v4985
        %v5018 = vunpack.c.l.b16 %v4986
        %v5019 = vunpack.c.l.b16 %v4987
        %v5020 = vunpack.c.l.b16 %v4988
        %v5021 = vpack.c.b16 %v5006, %v5005
        %v5022 = vpack.c.b16 %v5008, %v5007
        %v5023 = vpack.c.b16 %v5010, %v5009
        %v5024 = vpack.c.b16 %v5012, %v5011
        %v5025 = vpack.c.b16 %v5014, %v5013
        %v5026 = vpack.c.b16 %v5016, %v5015
        %v5027 = vpack.c.b16 %v5018, %v5017
        %v5028 = vpack.c.b16 %v5020, %v5019
        %5037 = vmatpush.bf16.msra.mxu0 %v5028
        %5038 = vmatpush.bf16.msra.mxu0 %v5027
        %5039 = vmatpush.bf16.msra.mxu0 %v5026
        %5040 = vmatpush.bf16.msra.mxu0 %v5025
        %5041 = vmatpush.bf16.msra.mxu0 %v5024
        %5042 = vmatpush.bf16.msra.mxu0 %v5023
        %5043 = vmatpush.bf16.msra.mxu0 %v5022
        %5044 = vmatpush.bf16.msra.mxu0 %v5021
        %5045 = vmatmul.bf16.gmra.mxu0 %v4956
        %v5046 = vpop.f32.mrf.mxu0
        %v5047 = vadd.f32 0.0, %v5046
        %v5048 = vpop.f32.mrf.mxu0
        %v5049 = vadd.f32 0.0, %v5048
        %5050 = vmatmul.bf16.gmra.mxu0 %v4957
        %v5051 = vpop.f32.mrf.mxu0
        %v5052 = vadd.f32 0.0, %v5051
        %v5053 = vpop.f32.mrf.mxu0
        %v5054 = vadd.f32 0.0, %v5053
        %5055 = vmatmul.bf16.gmra.mxu0 %v4958
        %v5056 = vpop.f32.mrf.mxu0
        %v5057 = vadd.f32 0.0, %v5056
        %v5058 = vpop.f32.mrf.mxu0
        %v5059 = vadd.f32 0.0, %v5058
        %5060 = vmatmul.bf16.gmra.mxu0 %v4959
        %v5061 = vpop.f32.mrf.mxu0
        %v5062 = vadd.f32 0.0, %v5061
        %v5063 = vpop.f32.mrf.mxu0
        %v5064 = vadd.f32 0.0, %v5063
        %5065 = vmatmul.bf16.gmra.mxu0 %v4960
        %v5066 = vpop.f32.mrf.mxu0
        %v5067 = vadd.f32 0.0, %v5066
        %v5068 = vpop.f32.mrf.mxu0
        %v5069 = vadd.f32 0.0, %v5068
        %5070 = vmatmul.bf16.gmra.mxu0 %v4961
        %v5071 = vpop.f32.mrf.mxu0
        %v5072 = vadd.f32 0.0, %v5071
        %v5073 = vpop.f32.mrf.mxu0
        %v5074 = vadd.f32 0.0, %v5073
        %5075 = vmatmul.bf16.gmra.mxu0 %v4962
        %v5076 = vpop.f32.mrf.mxu0
        %v5077 = vadd.f32 0.0, %v5076
        %v5078 = vpop.f32.mrf.mxu0
        %v5079 = vadd.f32 0.0, %v5078
        %5080 = vmatmul.bf16.gmra.mxu0 %v4963
        %v5081 = vpop.f32.mrf.mxu0
        %v5082 = vadd.f32 0.0, %v5081
        %v5083 = vpop.f32.mrf.mxu0
        %v5084 = vadd.f32 0.0, %v5083
        %5085 = vmatmul.bf16.gmra.mxu0 %v4964
        %v5086 = vpop.f32.mrf.mxu0
        %v5087 = vadd.f32 0.0, %v5086
        %v5088 = vpop.f32.mrf.mxu0
        %v5089 = vadd.f32 0.0, %v5088
        %5090 = vmatmul.bf16.gmra.mxu0 %v4965
        %v5091 = vpop.f32.mrf.mxu0
        %v5092 = vadd.f32 0.0, %v5091
        %v5093 = vpop.f32.mrf.mxu0
        %v5094 = vadd.f32 0.0, %v5093
        %5095 = vmatmul.bf16.gmra.mxu0 %v4966
        %v5096 = vpop.f32.mrf.mxu0
        %v5097 = vadd.f32 0.0, %v5096
        %v5098 = vpop.f32.mrf.mxu0
        %v5099 = vadd.f32 0.0, %v5098
        %5100 = vmatmul.bf16.gmra.mxu0 %v4967
        %v5101 = vpop.f32.mrf.mxu0
        %v5102 = vadd.f32 0.0, %v5101
        %v5103 = vpop.f32.mrf.mxu0
        %v5104 = vadd.f32 0.0, %v5103
        %5105 = vmatmul.bf16.gmra.mxu0 %v4968
        %v5106 = vpop.f32.mrf.mxu0
        %v5107 = vadd.f32 0.0, %v5106
        %v5108 = vpop.f32.mrf.mxu0
        %v5109 = vadd.f32 0.0, %v5108
        %5110 = vmatmul.bf16.gmra.mxu0 %v4969
        %v5111 = vpop.f32.mrf.mxu0
        %v5112 = vadd.f32 0.0, %v5111
        %v5113 = vpop.f32.mrf.mxu0
        %v5114 = vadd.f32 0.0, %v5113
        %5115 = vmatmul.bf16.gmra.mxu0 %v4970
        %v5116 = vpop.f32.mrf.mxu0
        %v5117 = vadd.f32 0.0, %v5116
        %v5118 = vpop.f32.mrf.mxu0
        %v5119 = vadd.f32 0.0, %v5118
        %5120 = vmatmul.bf16.gmra.mxu0 %v4971
        %v5121 = vpop.f32.mrf.mxu0
        %v5122 = vadd.f32 0.0, %v5121
        %v5123 = vpop.f32.mrf.mxu0
        %v5124 = vadd.f32 0.0, %v5123
        %5125 = vdwg.mxu0
        %v5126 = vadd.f32 %v4781, %v5047
        %v5127 = vadd.f32 %v4783, %v5049
        %v5128 = vadd.f32 %v4786, %v5052
        %v5129 = vadd.f32 %v4788, %v5054
        %v5130 = vadd.f32 %v4791, %v5057
        %v5131 = vadd.f32 %v4793, %v5059
        %v5132 = vadd.f32 %v4796, %v5062
        %v5133 = vadd.f32 %v4798, %v5064
        %v5134 = vadd.f32 %v4801, %v5067
        %v5135 = vadd.f32 %v4803, %v5069
        %v5136 = vadd.f32 %v4806, %v5072
        %v5137 = vadd.f32 %v4808, %v5074
        %v5138 = vadd.f32 %v4811, %v5077
        %v5139 = vadd.f32 %v4813, %v5079
        %v5140 = vadd.f32 %v4816, %v5082
        %v5141 = vadd.f32 %v4818, %v5084
        %v5142 = vadd.f32 %v4821, %v5087
        %v5143 = vadd.f32 %v4823, %v5089
        %v5144 = vadd.f32 %v4826, %v5092
        %v5145 = vadd.f32 %v4828, %v5094
        %v5146 = vadd.f32 %v4831, %v5097
        %v5147 = vadd.f32 %v4833, %v5099
        %v5148 = vadd.f32 %v4836, %v5102
        %v5149 = vadd.f32 %v4838, %v5104
        %v5150 = vadd.f32 %v4841, %v5107
        %v5151 = vadd.f32 %v4843, %v5109
        %v5152 = vadd.f32 %v4846, %v5112
        %v5153 = vadd.f32 %v4848, %v5114
        %v5154 = vadd.f32 %v4851, %v5117
        %v5155 = vadd.f32 %v4853, %v5119
        %v5156 = vadd.f32 %v4856, %v5122
        %v5157 = vadd.f32 %v4858, %v5124
        %v5158 = vsel %vm2267, %v4456, 0.0
        %v5159 = vsel %vm2268, %v4455, 0.0
        %v5160 = vsel %vm2269, %v4454, 0.0
        %v5161 = vsel %vm2270, %v4453, 0.0
        %v5162 = vsel %vm2271, %v4452, 0.0
        %v5163 = vsel %vm2272, %v4451, 0.0
        %v5164 = vsel %vm2273, %v4450, 0.0
        %v5165 = vsel %vm2274, %v4449, 0.0
        %v5166 = vsel %vm2275, %v4448, 0.0
        %v5167 = vsel %vm2276, %v4447, 0.0
        %v5168 = vsel %vm2277, %v4446, 0.0
        %v5169 = vsel %vm2278, %v4445, 0.0
        %v5170 = vsel %vm2279, %v4444, 0.0
        %v5171 = vsel %vm2280, %v4443, 0.0
        %v5172 = vsel %vm2281, %v4442, 0.0
        %v5173 = vsel %vm2282, %v4441, 0.0
        %v5174 = vsel %vm2283, %v4440, 0.0
        %v5175 = vsel %vm2284, %v4439, 0.0
        %v5176 = vsel %vm2285, %v4438, 0.0
        %v5177 = vsel %vm2286, %v4437, 0.0
        %v5178 = vsel %vm2287, %v4436, 0.0
        %v5179 = vsel %vm2288, %v4435, 0.0
        %v5180 = vsel %vm2289, %v4434, 0.0
        %v5181 = vsel %vm2290, %v4433, 0.0
        %v5182 = vsel %vm2291, %v4432, 0.0
        %v5183 = vsel %vm2292, %v4431, 0.0
        %v5184 = vsel %vm2293, %v4430, 0.0
        %v5185 = vsel %vm2294, %v4429, 0.0
        %v5186 = vsel %vm2295, %v4428, 0.0
        %v5187 = vsel %vm2296, %v4427, 0.0
        %v5188 = vsel %vm2297, %v4426, 0.0
        %v5189 = vsel %vm2298, %v4425, 0.0
        %v5190 = vpack.c.bf16 %v5159, %v5158
        %v5191 = vpack.c.bf16 %v5161, %v5160
        %v5192 = vpack.c.bf16 %v5163, %v5162
        %v5193 = vpack.c.bf16 %v5165, %v5164
        %v5194 = vpack.c.bf16 %v5167, %v5166
        %v5195 = vpack.c.bf16 %v5169, %v5168
        %v5196 = vpack.c.bf16 %v5171, %v5170
        %v5197 = vpack.c.bf16 %v5173, %v5172
        %v5198 = vpack.c.bf16 %v5175, %v5174
        %v5199 = vpack.c.bf16 %v5177, %v5176
        %v5200 = vpack.c.bf16 %v5179, %v5178
        %v5201 = vpack.c.bf16 %v5181, %v5180
        %v5202 = vpack.c.bf16 %v5183, %v5182
        %v5203 = vpack.c.bf16 %v5185, %v5184
        %v5204 = vpack.c.bf16 %v5187, %v5186
        %v5205 = vpack.c.bf16 %v5189, %v5188
        %s5206 = scalar_lea.vmem %s5, 192
        %v5207 = vld [vmem:[%s5206] sm:$0xf]
        %v5208 = vld [vmem:[%s5206 + $0x4] sm:$0xf]
        %v5209 = vld [vmem:[%s5206 + $0x8] sm:$0xf]
        %v5210 = vld [vmem:[%s5206 + $0xc] sm:$0xf]
        %v5211 = vld [vmem:[%s5206 + $0x10] sm:$0xf]
        %v5212 = vld [vmem:[%s5206 + $0x14] sm:$0xf]
        %v5213 = vld [vmem:[%s5206 + $0x18] sm:$0xf]
        %v5214 = vld [vmem:[%s5206 + $0x1c] sm:$0xf]
        %v5215 = vld [vmem:[%s5206 + $0x20] sm:$0xf]
        %v5216 = vld [vmem:[%s5206 + $0x24] sm:$0xf]
        %v5217 = vld [vmem:[%s5206 + $0x28] sm:$0xf]
        %v5218 = vld [vmem:[%s5206 + $0x2c] sm:$0xf]
        %v5219 = vld [vmem:[%s5206 + $0x30] sm:$0xf]
        %v5220 = vld [vmem:[%s5206 + $0x34] sm:$0xf]
        %v5221 = vld [vmem:[%s5206 + $0x38] sm:$0xf]
        %v5222 = vld [vmem:[%s5206 + $0x3c] sm:$0xf]
        %v5239 = vunpack.c.l.b16 %v5207
        %v5240 = vunpack.c.l.b16 %v5208
        %v5241 = vunpack.c.l.b16 %v5209
        %v5242 = vunpack.c.l.b16 %v5210
        %v5243 = vunpack.c.l.b16 %v5211
        %v5244 = vunpack.c.l.b16 %v5212
        %v5245 = vunpack.c.l.b16 %v5213
        %v5246 = vunpack.c.l.b16 %v5214
        %v5247 = vunpack.c.l.b16 %v5215
        %v5248 = vunpack.c.l.b16 %v5216
        %v5249 = vunpack.c.l.b16 %v5217
        %v5250 = vunpack.c.l.b16 %v5218
        %v5251 = vunpack.c.l.b16 %v5219
        %v5252 = vunpack.c.l.b16 %v5220
        %v5253 = vunpack.c.l.b16 %v5221
        %v5254 = vunpack.c.l.b16 %v5222
        %v5255 = vpack.c.b16 %v5240, %v5239
        %v5256 = vpack.c.b16 %v5242, %v5241
        %v5257 = vpack.c.b16 %v5244, %v5243
        %v5258 = vpack.c.b16 %v5246, %v5245
        %v5259 = vpack.c.b16 %v5248, %v5247
        %v5260 = vpack.c.b16 %v5250, %v5249
        %v5261 = vpack.c.b16 %v5252, %v5251
        %v5262 = vpack.c.b16 %v5254, %v5253
        %5271 = vmatpush.bf16.msra.mxu0 %v5262
        %5272 = vmatpush.bf16.msra.mxu0 %v5261
        %5273 = vmatpush.bf16.msra.mxu0 %v5260
        %5274 = vmatpush.bf16.msra.mxu0 %v5259
        %5275 = vmatpush.bf16.msra.mxu0 %v5258
        %5276 = vmatpush.bf16.msra.mxu0 %v5257
        %5277 = vmatpush.bf16.msra.mxu0 %v5256
        %5278 = vmatpush.bf16.msra.mxu0 %v5255
        %5279 = vmatmul.bf16.gmra.mxu0 %v5190
        %v5280 = vpop.f32.mrf.mxu0
        %v5281 = vadd.f32 0.0, %v5280
        %v5282 = vpop.f32.mrf.mxu0
        %v5283 = vadd.f32 0.0, %v5282
        %5284 = vmatmul.bf16.gmra.mxu0 %v5191
        %v5285 = vpop.f32.mrf.mxu0
        %v5286 = vadd.f32 0.0, %v5285
        %v5287 = vpop.f32.mrf.mxu0
        %v5288 = vadd.f32 0.0, %v5287
        %5289 = vmatmul.bf16.gmra.mxu0 %v5192
        %v5290 = vpop.f32.mrf.mxu0
        %v5291 = vadd.f32 0.0, %v5290
        %v5292 = vpop.f32.mrf.mxu0
        %v5293 = vadd.f32 0.0, %v5292
        %5294 = vmatmul.bf16.gmra.mxu0 %v5193
        %v5295 = vpop.f32.mrf.mxu0
        %v5296 = vadd.f32 0.0, %v5295
        %v5297 = vpop.f32.mrf.mxu0
        %v5298 = vadd.f32 0.0, %v5297
        %5299 = vmatmul.bf16.gmra.mxu0 %v5194
        %v5300 = vpop.f32.mrf.mxu0
        %v5301 = vadd.f32 0.0, %v5300
        %v5302 = vpop.f32.mrf.mxu0
        %v5303 = vadd.f32 0.0, %v5302
        %5304 = vmatmul.bf16.gmra.mxu0 %v5195
        %v5305 = vpop.f32.mrf.mxu0
        %v5306 = vadd.f32 0.0, %v5305
        %v5307 = vpop.f32.mrf.mxu0
        %v5308 = vadd.f32 0.0, %v5307
        %5309 = vmatmul.bf16.gmra.mxu0 %v5196
        %v5310 = vpop.f32.mrf.mxu0
        %v5311 = vadd.f32 0.0, %v5310
        %v5312 = vpop.f32.mrf.mxu0
        %v5313 = vadd.f32 0.0, %v5312
        %5314 = vmatmul.bf16.gmra.mxu0 %v5197
        %v5315 = vpop.f32.mrf.mxu0
        %v5316 = vadd.f32 0.0, %v5315
        %v5317 = vpop.f32.mrf.mxu0
        %v5318 = vadd.f32 0.0, %v5317
        %5319 = vmatmul.bf16.gmra.mxu0 %v5198
        %v5320 = vpop.f32.mrf.mxu0
        %v5321 = vadd.f32 0.0, %v5320
        %v5322 = vpop.f32.mrf.mxu0
        %v5323 = vadd.f32 0.0, %v5322
        %5324 = vmatmul.bf16.gmra.mxu0 %v5199
        %v5325 = vpop.f32.mrf.mxu0
        %v5326 = vadd.f32 0.0, %v5325
        %v5327 = vpop.f32.mrf.mxu0
        %v5328 = vadd.f32 0.0, %v5327
        %5329 = vmatmul.bf16.gmra.mxu0 %v5200
        %v5330 = vpop.f32.mrf.mxu0
        %v5331 = vadd.f32 0.0, %v5330
        %v5332 = vpop.f32.mrf.mxu0
        %v5333 = vadd.f32 0.0, %v5332
        %5334 = vmatmul.bf16.gmra.mxu0 %v5201
        %v5335 = vpop.f32.mrf.mxu0
        %v5336 = vadd.f32 0.0, %v5335
        %v5337 = vpop.f32.mrf.mxu0
        %v5338 = vadd.f32 0.0, %v5337
        %5339 = vmatmul.bf16.gmra.mxu0 %v5202
        %v5340 = vpop.f32.mrf.mxu0
        %v5341 = vadd.f32 0.0, %v5340
        %v5342 = vpop.f32.mrf.mxu0
        %v5343 = vadd.f32 0.0, %v5342
        %5344 = vmatmul.bf16.gmra.mxu0 %v5203
        %v5345 = vpop.f32.mrf.mxu0
        %v5346 = vadd.f32 0.0, %v5345
        %v5347 = vpop.f32.mrf.mxu0
        %v5348 = vadd.f32 0.0, %v5347
        %5349 = vmatmul.bf16.gmra.mxu0 %v5204
        %v5350 = vpop.f32.mrf.mxu0
        %v5351 = vadd.f32 0.0, %v5350
        %v5352 = vpop.f32.mrf.mxu0
        %v5353 = vadd.f32 0.0, %v5352
        %5354 = vmatmul.bf16.gmra.mxu0 %v5205
        %v5355 = vpop.f32.mrf.mxu0
        %v5356 = vadd.f32 0.0, %v5355
        %v5357 = vpop.f32.mrf.mxu0
        %v5358 = vadd.f32 0.0, %v5357
        %5359 = vdwg.mxu0
        %v5360 = vadd.f32 %v5126, %v5281
        %v5361 = vadd.f32 %v5127, %v5283
        %v5362 = vadd.f32 %v5128, %v5286
        %v5363 = vadd.f32 %v5129, %v5288
        %v5364 = vadd.f32 %v5130, %v5291
        %v5365 = vadd.f32 %v5131, %v5293
        %v5366 = vadd.f32 %v5132, %v5296
        %v5367 = vadd.f32 %v5133, %v5298
        %v5368 = vadd.f32 %v5134, %v5301
        %v5369 = vadd.f32 %v5135, %v5303
        %v5370 = vadd.f32 %v5136, %v5306
        %v5371 = vadd.f32 %v5137, %v5308
        %v5372 = vadd.f32 %v5138, %v5311
        %v5373 = vadd.f32 %v5139, %v5313
        %v5374 = vadd.f32 %v5140, %v5316
        %v5375 = vadd.f32 %v5141, %v5318
        %v5376 = vadd.f32 %v5142, %v5321
        %v5377 = vadd.f32 %v5143, %v5323
        %v5378 = vadd.f32 %v5144, %v5326
        %v5379 = vadd.f32 %v5145, %v5328
        %v5380 = vadd.f32 %v5146, %v5331
        %v5381 = vadd.f32 %v5147, %v5333
        %v5382 = vadd.f32 %v5148, %v5336
        %v5383 = vadd.f32 %v5149, %v5338
        %v5384 = vadd.f32 %v5150, %v5341
        %v5385 = vadd.f32 %v5151, %v5343
        %v5386 = vadd.f32 %v5152, %v5346
        %v5387 = vadd.f32 %v5153, %v5348
        %v5388 = vadd.f32 %v5154, %v5351
        %v5389 = vadd.f32 %v5155, %v5353
        %v5390 = vadd.f32 %v5156, %v5356
        %v5391 = vadd.f32 %v5157, %v5358
        %v5392 = vpack.c.bf16 %v4316, %v4314
        %v5393 = vpack.c.bf16 %v4321, %v4319
        %v5394 = vpack.c.bf16 %v4326, %v4324
        %v5395 = vpack.c.bf16 %v4331, %v4329
        %v5396 = vpack.c.bf16 %v4336, %v4334
        %v5397 = vpack.c.bf16 %v4341, %v4339
        %v5398 = vpack.c.bf16 %v4346, %v4344
        %v5399 = vpack.c.bf16 %v4351, %v4349
        %v5400 = vpack.c.bf16 %v4356, %v4354
        %v5401 = vpack.c.bf16 %v4361, %v4359
        %v5402 = vpack.c.bf16 %v4366, %v4364
        %v5403 = vpack.c.bf16 %v4371, %v4369
        %v5404 = vpack.c.bf16 %v4376, %v4374
        %v5405 = vpack.c.bf16 %v4381, %v4379
        %v5406 = vpack.c.bf16 %v4386, %v4384
        %v5407 = vpack.c.bf16 %v4391, %v4389
        %s5408 = scalar_lea.vmem %s5, 256
        %v5409 = vld [vmem:[%s5408] sm:$0xf]
        %v5410 = vld [vmem:[%s5408 + $0x4] sm:$0xf]
        %v5411 = vld [vmem:[%s5408 + $0x8] sm:$0xf]
        %v5412 = vld [vmem:[%s5408 + $0xc] sm:$0xf]
        %v5413 = vld [vmem:[%s5408 + $0x10] sm:$0xf]
        %v5414 = vld [vmem:[%s5408 + $0x14] sm:$0xf]
        %v5415 = vld [vmem:[%s5408 + $0x18] sm:$0xf]
        %v5416 = vld [vmem:[%s5408 + $0x1c] sm:$0xf]
        %v5417 = vld [vmem:[%s5408 + $0x20] sm:$0xf]
        %v5418 = vld [vmem:[%s5408 + $0x24] sm:$0xf]
        %v5419 = vld [vmem:[%s5408 + $0x28] sm:$0xf]
        %v5420 = vld [vmem:[%s5408 + $0x2c] sm:$0xf]
        %v5421 = vld [vmem:[%s5408 + $0x30] sm:$0xf]
        %v5422 = vld [vmem:[%s5408 + $0x34] sm:$0xf]
        %v5423 = vld [vmem:[%s5408 + $0x38] sm:$0xf]
        %v5424 = vld [vmem:[%s5408 + $0x3c] sm:$0xf]
        %v5441 = vunpack.c.l.b16 %v5409
        %v5442 = vunpack.c.l.b16 %v5410
        %v5443 = vunpack.c.l.b16 %v5411
        %v5444 = vunpack.c.l.b16 %v5412
        %v5445 = vunpack.c.l.b16 %v5413
        %v5446 = vunpack.c.l.b16 %v5414
        %v5447 = vunpack.c.l.b16 %v5415
        %v5448 = vunpack.c.l.b16 %v5416
        %v5449 = vunpack.c.l.b16 %v5417
        %v5450 = vunpack.c.l.b16 %v5418
        %v5451 = vunpack.c.l.b16 %v5419
        %v5452 = vunpack.c.l.b16 %v5420
        %v5453 = vunpack.c.l.b16 %v5421
        %v5454 = vunpack.c.l.b16 %v5422
        %v5455 = vunpack.c.l.b16 %v5423
        %v5456 = vunpack.c.l.b16 %v5424
        %v5457 = vpack.c.b16 %v5442, %v5441
        %v5458 = vpack.c.b16 %v5444, %v5443
        %v5459 = vpack.c.b16 %v5446, %v5445
        %v5460 = vpack.c.b16 %v5448, %v5447
        %v5461 = vpack.c.b16 %v5450, %v5449
        %v5462 = vpack.c.b16 %v5452, %v5451
        %v5463 = vpack.c.b16 %v5454, %v5453
        %v5464 = vpack.c.b16 %v5456, %v5455
        %5473 = vmatpush.bf16.msra.mxu0 %v5464
        %5474 = vmatpush.bf16.msra.mxu0 %v5463
        %5475 = vmatpush.bf16.msra.mxu0 %v5462
        %5476 = vmatpush.bf16.msra.mxu0 %v5461
        %5477 = vmatpush.bf16.msra.mxu0 %v5460
        %5478 = vmatpush.bf16.msra.mxu0 %v5459
        %5479 = vmatpush.bf16.msra.mxu0 %v5458
        %5480 = vmatpush.bf16.msra.mxu0 %v5457
        %5481 = vmatmul.bf16.gmra.mxu0 %v5392
        %v5482 = vpop.f32.mrf.mxu0
        %v5483 = vadd.f32 0.0, %v5482
        %v5484 = vpop.f32.mrf.mxu0
        %v5485 = vadd.f32 0.0, %v5484
        %5486 = vmatmul.bf16.gmra.mxu0 %v5393
        %v5487 = vpop.f32.mrf.mxu0
        %v5488 = vadd.f32 0.0, %v5487
        %v5489 = vpop.f32.mrf.mxu0
        %v5490 = vadd.f32 0.0, %v5489
        %5491 = vmatmul.bf16.gmra.mxu0 %v5394
        %v5492 = vpop.f32.mrf.mxu0
        %v5493 = vadd.f32 0.0, %v5492
        %v5494 = vpop.f32.mrf.mxu0
        %v5495 = vadd.f32 0.0, %v5494
        %5496 = vmatmul.bf16.gmra.mxu0 %v5395
        %v5497 = vpop.f32.mrf.mxu0
        %v5498 = vadd.f32 0.0, %v5497
        %v5499 = vpop.f32.mrf.mxu0
        %v5500 = vadd.f32 0.0, %v5499
        %5501 = vmatmul.bf16.gmra.mxu0 %v5396
        %v5502 = vpop.f32.mrf.mxu0
        %v5503 = vadd.f32 0.0, %v5502
        %v5504 = vpop.f32.mrf.mxu0
        %v5505 = vadd.f32 0.0, %v5504
        %5506 = vmatmul.bf16.gmra.mxu0 %v5397
        %v5507 = vpop.f32.mrf.mxu0
        %v5508 = vadd.f32 0.0, %v5507
        %v5509 = vpop.f32.mrf.mxu0
        %v5510 = vadd.f32 0.0, %v5509
        %5511 = vmatmul.bf16.gmra.mxu0 %v5398
        %v5512 = vpop.f32.mrf.mxu0
        %v5513 = vadd.f32 0.0, %v5512
        %v5514 = vpop.f32.mrf.mxu0
        %v5515 = vadd.f32 0.0, %v5514
        %5516 = vmatmul.bf16.gmra.mxu0 %v5399
        %v5517 = vpop.f32.mrf.mxu0
        %v5518 = vadd.f32 0.0, %v5517
        %v5519 = vpop.f32.mrf.mxu0
        %v5520 = vadd.f32 0.0, %v5519
        %5521 = vmatmul.bf16.gmra.mxu0 %v5400
        %v5522 = vpop.f32.mrf.mxu0
        %v5523 = vadd.f32 0.0, %v5522
        %v5524 = vpop.f32.mrf.mxu0
        %v5525 = vadd.f32 0.0, %v5524
        %5526 = vmatmul.bf16.gmra.mxu0 %v5401
        %v5527 = vpop.f32.mrf.mxu0
        %v5528 = vadd.f32 0.0, %v5527
        %v5529 = vpop.f32.mrf.mxu0
        %v5530 = vadd.f32 0.0, %v5529
        %5531 = vmatmul.bf16.gmra.mxu0 %v5402
        %v5532 = vpop.f32.mrf.mxu0
        %v5533 = vadd.f32 0.0, %v5532
        %v5534 = vpop.f32.mrf.mxu0
        %v5535 = vadd.f32 0.0, %v5534
        %5536 = vmatmul.bf16.gmra.mxu0 %v5403
        %v5537 = vpop.f32.mrf.mxu0
        %v5538 = vadd.f32 0.0, %v5537
        %v5539 = vpop.f32.mrf.mxu0
        %v5540 = vadd.f32 0.0, %v5539
        %5541 = vmatmul.bf16.gmra.mxu0 %v5404
        %v5542 = vpop.f32.mrf.mxu0
        %v5543 = vadd.f32 0.0, %v5542
        %v5544 = vpop.f32.mrf.mxu0
        %v5545 = vadd.f32 0.0, %v5544
        %5546 = vmatmul.bf16.gmra.mxu0 %v5405
        %v5547 = vpop.f32.mrf.mxu0
        %v5548 = vadd.f32 0.0, %v5547
        %v5549 = vpop.f32.mrf.mxu0
        %v5550 = vadd.f32 0.0, %v5549
        %5551 = vmatmul.bf16.gmra.mxu0 %v5406
        %v5552 = vpop.f32.mrf.mxu0
        %v5553 = vadd.f32 0.0, %v5552
        %v5554 = vpop.f32.mrf.mxu0
        %v5555 = vadd.f32 0.0, %v5554
        %5556 = vmatmul.bf16.gmra.mxu0 %v5407
        %v5557 = vpop.f32.mrf.mxu0
        %v5558 = vadd.f32 0.0, %v5557
        %v5559 = vpop.f32.mrf.mxu0
        %v5560 = vadd.f32 0.0, %v5559
        %5561 = vdwg.mxu0
        %v5562 = vadd.f32 %v5360, %v5483
        %v5563 = vadd.f32 %v5361, %v5485
        %v5564 = vadd.f32 %v5362, %v5488
        %v5565 = vadd.f32 %v5363, %v5490
        %v5566 = vadd.f32 %v5364, %v5493
        %v5567 = vadd.f32 %v5365, %v5495
        %v5568 = vadd.f32 %v5366, %v5498
        %v5569 = vadd.f32 %v5367, %v5500
        %v5570 = vadd.f32 %v5368, %v5503
        %v5571 = vadd.f32 %v5369, %v5505
        %v5572 = vadd.f32 %v5370, %v5508
        %v5573 = vadd.f32 %v5371, %v5510
        %v5574 = vadd.f32 %v5372, %v5513
        %v5575 = vadd.f32 %v5373, %v5515
        %v5576 = vadd.f32 %v5374, %v5518
        %v5577 = vadd.f32 %v5375, %v5520
        %v5578 = vadd.f32 %v5376, %v5523
        %v5579 = vadd.f32 %v5377, %v5525
        %v5580 = vadd.f32 %v5378, %v5528
        %v5581 = vadd.f32 %v5379, %v5530
        %v5582 = vadd.f32 %v5380, %v5533
        %v5583 = vadd.f32 %v5381, %v5535
        %v5584 = vadd.f32 %v5382, %v5538
        %v5585 = vadd.f32 %v5383, %v5540
        %v5586 = vadd.f32 %v5384, %v5543
        %v5587 = vadd.f32 %v5385, %v5545
        %v5588 = vadd.f32 %v5386, %v5548
        %v5589 = vadd.f32 %v5387, %v5550
        %v5590 = vadd.f32 %v5388, %v5553
        %v5591 = vadd.f32 %v5389, %v5555
        %v5592 = vadd.f32 %v5390, %v5558
        %v5593 = vadd.f32 %v5391, %v5560
        %v5594 = vsel %vm2767, %v4922, 0.0
        %v5595 = vsel %vm2768, %v4921, 0.0
        %v5596 = vsel %vm2769, %v4920, 0.0
        %v5597 = vsel %vm2770, %v4919, 0.0
        %v5598 = vsel %vm2771, %v4918, 0.0
        %v5599 = vsel %vm2772, %v4917, 0.0
        %v5600 = vsel %vm2773, %v4916, 0.0
        %v5601 = vsel %vm2774, %v4915, 0.0
        %v5602 = vsel %vm2775, %v4914, 0.0
        %v5603 = vsel %vm2776, %v4913, 0.0
        %v5604 = vsel %vm2777, %v4912, 0.0
        %v5605 = vsel %vm2778, %v4911, 0.0
        %v5606 = vsel %vm2779, %v4910, 0.0
        %v5607 = vsel %vm2780, %v4909, 0.0
        %v5608 = vsel %vm2781, %v4908, 0.0
        %v5609 = vsel %vm2782, %v4907, 0.0
        %v5610 = vsel %vm2783, %v4906, 0.0
        %v5611 = vsel %vm2784, %v4905, 0.0
        %v5612 = vsel %vm2785, %v4904, 0.0
        %v5613 = vsel %vm2786, %v4903, 0.0
        %v5614 = vsel %vm2787, %v4902, 0.0
        %v5615 = vsel %vm2788, %v4901, 0.0
        %v5616 = vsel %vm2789, %v4900, 0.0
        %v5617 = vsel %vm2790, %v4899, 0.0
        %v5618 = vsel %vm2791, %v4898, 0.0
        %v5619 = vsel %vm2792, %v4897, 0.0
        %v5620 = vsel %vm2793, %v4896, 0.0
        %v5621 = vsel %vm2794, %v4895, 0.0
        %v5622 = vsel %vm2795, %v4894, 0.0
        %v5623 = vsel %vm2796, %v4893, 0.0
        %v5624 = vsel %vm2797, %v4892, 0.0
        %v5625 = vsel %vm2798, %v4923, 0.0
        %v5626 = vpack.c.bf16 %v5595, %v5594
        %v5627 = vpack.c.bf16 %v5597, %v5596
        %v5628 = vpack.c.bf16 %v5599, %v5598
        %v5629 = vpack.c.bf16 %v5601, %v5600
        %v5630 = vpack.c.bf16 %v5603, %v5602
        %v5631 = vpack.c.bf16 %v5605, %v5604
        %v5632 = vpack.c.bf16 %v5607, %v5606
        %v5633 = vpack.c.bf16 %v5609, %v5608
        %v5634 = vpack.c.bf16 %v5611, %v5610
        %v5635 = vpack.c.bf16 %v5613, %v5612
        %v5636 = vpack.c.bf16 %v5615, %v5614
        %v5637 = vpack.c.bf16 %v5617, %v5616
        %v5638 = vpack.c.bf16 %v5619, %v5618
        %v5639 = vpack.c.bf16 %v5621, %v5620
        %v5640 = vpack.c.bf16 %v5623, %v5622
        %v5641 = vpack.c.bf16 %v5625, %v5624
        %s5642 = scalar_lea.vmem %s5, 320
        %v5643 = vld [vmem:[%s5642] sm:$0xf]
        %v5644 = vld [vmem:[%s5642 + $0x4] sm:$0xf]
        %v5645 = vld [vmem:[%s5642 + $0x8] sm:$0xf]
        %v5646 = vld [vmem:[%s5642 + $0xc] sm:$0xf]
        %v5647 = vld [vmem:[%s5642 + $0x10] sm:$0xf]
        %v5648 = vld [vmem:[%s5642 + $0x14] sm:$0xf]
        %v5649 = vld [vmem:[%s5642 + $0x18] sm:$0xf]
        %v5650 = vld [vmem:[%s5642 + $0x1c] sm:$0xf]
        %v5651 = vld [vmem:[%s5642 + $0x20] sm:$0xf]
        %v5652 = vld [vmem:[%s5642 + $0x24] sm:$0xf]
        %v5653 = vld [vmem:[%s5642 + $0x28] sm:$0xf]
        %v5654 = vld [vmem:[%s5642 + $0x2c] sm:$0xf]
        %v5655 = vld [vmem:[%s5642 + $0x30] sm:$0xf]
        %v5656 = vld [vmem:[%s5642 + $0x34] sm:$0xf]
        %v5657 = vld [vmem:[%s5642 + $0x38] sm:$0xf]
        %v5658 = vld [vmem:[%s5642 + $0x3c] sm:$0xf]
        %v5675 = vunpack.c.l.b16 %v5643
        %v5676 = vunpack.c.l.b16 %v5644
        %v5677 = vunpack.c.l.b16 %v5645
        %v5678 = vunpack.c.l.b16 %v5646
        %v5679 = vunpack.c.l.b16 %v5647
        %v5680 = vunpack.c.l.b16 %v5648
        %v5681 = vunpack.c.l.b16 %v5649
        %v5682 = vunpack.c.l.b16 %v5650
        %v5683 = vunpack.c.l.b16 %v5651
        %v5684 = vunpack.c.l.b16 %v5652
        %v5685 = vunpack.c.l.b16 %v5653
        %v5686 = vunpack.c.l.b16 %v5654
        %v5687 = vunpack.c.l.b16 %v5655
        %v5688 = vunpack.c.l.b16 %v5656
        %v5689 = vunpack.c.l.b16 %v5657
        %v5690 = vunpack.c.l.b16 %v5658
        %v5691 = vpack.c.b16 %v5676, %v5675
        %v5692 = vpack.c.b16 %v5678, %v5677
        %v5693 = vpack.c.b16 %v5680, %v5679
        %v5694 = vpack.c.b16 %v5682, %v5681
        %v5695 = vpack.c.b16 %v5684, %v5683
        %v5696 = vpack.c.b16 %v5686, %v5685
        %v5697 = vpack.c.b16 %v5688, %v5687
        %v5698 = vpack.c.b16 %v5690, %v5689
        %5707 = vmatpush.bf16.msra.mxu0 %v5698
        %5708 = vmatpush.bf16.msra.mxu0 %v5697
        %5709 = vmatpush.bf16.msra.mxu0 %v5696
        %5710 = vmatpush.bf16.msra.mxu0 %v5695
        %5711 = vmatpush.bf16.msra.mxu0 %v5694
        %5712 = vmatpush.bf16.msra.mxu0 %v5693
        %5713 = vmatpush.bf16.msra.mxu0 %v5692
        %5714 = vmatpush.bf16.msra.mxu0 %v5691
        %5715 = vmatmul.bf16.gmra.mxu0 %v5626
        %v5716 = vpop.f32.mrf.mxu0
        %v5717 = vadd.f32 0.0, %v5716
        %v5718 = vpop.f32.mrf.mxu0
        %v5719 = vadd.f32 0.0, %v5718
        %5720 = vmatmul.bf16.gmra.mxu0 %v5627
        %v5721 = vpop.f32.mrf.mxu0
        %v5722 = vadd.f32 0.0, %v5721
        %v5723 = vpop.f32.mrf.mxu0
        %v5724 = vadd.f32 0.0, %v5723
        %5725 = vmatmul.bf16.gmra.mxu0 %v5628
        %v5726 = vpop.f32.mrf.mxu0
        %v5727 = vadd.f32 0.0, %v5726
        %v5728 = vpop.f32.mrf.mxu0
        %v5729 = vadd.f32 0.0, %v5728
        %5730 = vmatmul.bf16.gmra.mxu0 %v5629
        %v5731 = vpop.f32.mrf.mxu0
        %v5732 = vadd.f32 0.0, %v5731
        %v5733 = vpop.f32.mrf.mxu0
        %v5734 = vadd.f32 0.0, %v5733
        %5735 = vmatmul.bf16.gmra.mxu0 %v5630
        %v5736 = vpop.f32.mrf.mxu0
        %v5737 = vadd.f32 0.0, %v5736
        %v5738 = vpop.f32.mrf.mxu0
        %v5739 = vadd.f32 0.0, %v5738
        %5740 = vmatmul.bf16.gmra.mxu0 %v5631
        %v5741 = vpop.f32.mrf.mxu0
        %v5742 = vadd.f32 0.0, %v5741
        %v5743 = vpop.f32.mrf.mxu0
        %v5744 = vadd.f32 0.0, %v5743
        %5745 = vmatmul.bf16.gmra.mxu0 %v5632
        %v5746 = vpop.f32.mrf.mxu0
        %v5747 = vadd.f32 0.0, %v5746
        %v5748 = vpop.f32.mrf.mxu0
        %v5749 = vadd.f32 0.0, %v5748
        %5750 = vmatmul.bf16.gmra.mxu0 %v5633
        %v5751 = vpop.f32.mrf.mxu0
        %v5752 = vadd.f32 0.0, %v5751
        %v5753 = vpop.f32.mrf.mxu0
        %v5754 = vadd.f32 0.0, %v5753
        %5755 = vmatmul.bf16.gmra.mxu0 %v5634
        %v5756 = vpop.f32.mrf.mxu0
        %v5757 = vadd.f32 0.0, %v5756
        %v5758 = vpop.f32.mrf.mxu0
        %v5759 = vadd.f32 0.0, %v5758
        %5760 = vmatmul.bf16.gmra.mxu0 %v5635
        %v5761 = vpop.f32.mrf.mxu0
        %v5762 = vadd.f32 0.0, %v5761
        %v5763 = vpop.f32.mrf.mxu0
        %v5764 = vadd.f32 0.0, %v5763
        %5765 = vmatmul.bf16.gmra.mxu0 %v5636
        %v5766 = vpop.f32.mrf.mxu0
        %v5767 = vadd.f32 0.0, %v5766
        %v5768 = vpop.f32.mrf.mxu0
        %v5769 = vadd.f32 0.0, %v5768
        %5770 = vmatmul.bf16.gmra.mxu0 %v5637
        %v5771 = vpop.f32.mrf.mxu0
        %v5772 = vadd.f32 0.0, %v5771
        %v5773 = vpop.f32.mrf.mxu0
        %v5774 = vadd.f32 0.0, %v5773
        %5775 = vmatmul.bf16.gmra.mxu0 %v5638
        %v5776 = vpop.f32.mrf.mxu0
        %v5777 = vadd.f32 0.0, %v5776
        %v5778 = vpop.f32.mrf.mxu0
        %v5779 = vadd.f32 0.0, %v5778
        %5780 = vmatmul.bf16.gmra.mxu0 %v5639
        %v5781 = vpop.f32.mrf.mxu0
        %v5782 = vadd.f32 0.0, %v5781
        %v5783 = vpop.f32.mrf.mxu0
        %v5784 = vadd.f32 0.0, %v5783
        %5785 = vmatmul.bf16.gmra.mxu0 %v5640
        %v5786 = vpop.f32.mrf.mxu0
        %v5787 = vadd.f32 0.0, %v5786
        %v5788 = vpop.f32.mrf.mxu0
        %v5789 = vadd.f32 0.0, %v5788
        %5790 = vmatmul.bf16.gmra.mxu0 %v5641
        %v5791 = vpop.f32.mrf.mxu0
        %v5792 = vadd.f32 0.0, %v5791
        %v5793 = vpop.f32.mrf.mxu0
        %v5794 = vadd.f32 0.0, %v5793
        %5795 = vdwg.mxu0
        %v5796 = vadd.f32 %v5562, %v5717
        %v5797 = vadd.f32 %v5563, %v5719
        %v5798 = vadd.f32 %v5564, %v5722
        %v5799 = vadd.f32 %v5565, %v5724
        %v5800 = vadd.f32 %v5566, %v5727
        %v5801 = vadd.f32 %v5567, %v5729
        %v5802 = vadd.f32 %v5568, %v5732
        %v5803 = vadd.f32 %v5569, %v5734
        %v5804 = vadd.f32 %v5570, %v5737
        %v5805 = vadd.f32 %v5571, %v5739
        %v5806 = vadd.f32 %v5572, %v5742
        %v5807 = vadd.f32 %v5573, %v5744
        %v5808 = vadd.f32 %v5574, %v5747
        %v5809 = vadd.f32 %v5575, %v5749
        %v5810 = vadd.f32 %v5576, %v5752
        %v5811 = vadd.f32 %v5577, %v5754
        %v5812 = vadd.f32 %v5578, %v5757
        %v5813 = vadd.f32 %v5579, %v5759
        %v5814 = vadd.f32 %v5580, %v5762
        %v5815 = vadd.f32 %v5581, %v5764
        %v5816 = vadd.f32 %v5582, %v5767
        %v5817 = vadd.f32 %v5583, %v5769
        %v5818 = vadd.f32 %v5584, %v5772
        %v5819 = vadd.f32 %v5585, %v5774
        %v5820 = vadd.f32 %v5586, %v5777
        %v5821 = vadd.f32 %v5587, %v5779
        %v5822 = vadd.f32 %v5588, %v5782
        %v5823 = vadd.f32 %v5589, %v5784
        %v5824 = vadd.f32 %v5590, %v5787
        %v5825 = vadd.f32 %v5591, %v5789
        %v5826 = vadd.f32 %v5592, %v5792
        %v5827 = vadd.f32 %v5593, %v5794
        %v5828 = vsel %vm3097, %v4454, 0.0
        %v5829 = vsel %vm3098, %v4453, 0.0
        %v5830 = vsel %vm3099, %v4452, 0.0
        %v5831 = vsel %vm3100, %v4451, 0.0
        %v5832 = vsel %vm3101, %v4450, 0.0
        %v5833 = vsel %vm3102, %v4449, 0.0
        %v5834 = vsel %vm3103, %v4448, 0.0
        %v5835 = vsel %vm3104, %v4447, 0.0
        %v5836 = vsel %vm3105, %v4446, 0.0
        %v5837 = vsel %vm3106, %v4445, 0.0
        %v5838 = vsel %vm3107, %v4444, 0.0
        %v5839 = vsel %vm3108, %v4443, 0.0
        %v5840 = vsel %vm3109, %v4442, 0.0
        %v5841 = vsel %vm3110, %v4441, 0.0
        %v5842 = vsel %vm3111, %v4440, 0.0
        %v5843 = vsel %vm3112, %v4439, 0.0
        %v5844 = vsel %vm3113, %v4438, 0.0
        %v5845 = vsel %vm3114, %v4437, 0.0
        %v5846 = vsel %vm3115, %v4436, 0.0
        %v5847 = vsel %vm3116, %v4435, 0.0
        %v5848 = vsel %vm3117, %v4434, 0.0
        %v5849 = vsel %vm3118, %v4433, 0.0
        %v5850 = vsel %vm3119, %v4432, 0.0
        %v5851 = vsel %vm3120, %v4431, 0.0
        %v5852 = vsel %vm3121, %v4430, 0.0
        %v5853 = vsel %vm3122, %v4429, 0.0
        %v5854 = vsel %vm3123, %v4428, 0.0
        %v5855 = vsel %vm3124, %v4427, 0.0
        %v5856 = vsel %vm3125, %v4426, 0.0
        %v5857 = vsel %vm3126, %v4425, 0.0
        %v5858 = vsel %vm3127, %v4456, 0.0
        %v5859 = vsel %vm3128, %v4455, 0.0
        %v5860 = vpack.c.bf16 %v5829, %v5828
        %v5861 = vpack.c.bf16 %v5831, %v5830
        %v5862 = vpack.c.bf16 %v5833, %v5832
        %v5863 = vpack.c.bf16 %v5835, %v5834
        %v5864 = vpack.c.bf16 %v5837, %v5836
        %v5865 = vpack.c.bf16 %v5839, %v5838
        %v5866 = vpack.c.bf16 %v5841, %v5840
        %v5867 = vpack.c.bf16 %v5843, %v5842
        %v5868 = vpack.c.bf16 %v5845, %v5844
        %v5869 = vpack.c.bf16 %v5847, %v5846
        %v5870 = vpack.c.bf16 %v5849, %v5848
        %v5871 = vpack.c.bf16 %v5851, %v5850
        %v5872 = vpack.c.bf16 %v5853, %v5852
        %v5873 = vpack.c.bf16 %v5855, %v5854
        %v5874 = vpack.c.bf16 %v5857, %v5856
        %v5875 = vpack.c.bf16 %v5859, %v5858
        %s5876 = scalar_lea.vmem %s5, 384
        %v5877 = vld [vmem:[%s5876] sm:$0xf]
        %v5878 = vld [vmem:[%s5876 + $0x4] sm:$0xf]
        %v5879 = vld [vmem:[%s5876 + $0x8] sm:$0xf]
        %v5880 = vld [vmem:[%s5876 + $0xc] sm:$0xf]
        %v5881 = vld [vmem:[%s5876 + $0x10] sm:$0xf]
        %v5882 = vld [vmem:[%s5876 + $0x14] sm:$0xf]
        %v5883 = vld [vmem:[%s5876 + $0x18] sm:$0xf]
        %v5884 = vld [vmem:[%s5876 + $0x1c] sm:$0xf]
        %v5885 = vld [vmem:[%s5876 + $0x20] sm:$0xf]
        %v5886 = vld [vmem:[%s5876 + $0x24] sm:$0xf]
        %v5887 = vld [vmem:[%s5876 + $0x28] sm:$0xf]
        %v5888 = vld [vmem:[%s5876 + $0x2c] sm:$0xf]
        %v5889 = vld [vmem:[%s5876 + $0x30] sm:$0xf]
        %v5890 = vld [vmem:[%s5876 + $0x34] sm:$0xf]
        %v5891 = vld [vmem:[%s5876 + $0x38] sm:$0xf]
        %v5892 = vld [vmem:[%s5876 + $0x3c] sm:$0xf]
        %v5909 = vunpack.c.l.b16 %v5877
        %v5910 = vunpack.c.l.b16 %v5878
        %v5911 = vunpack.c.l.b16 %v5879
        %v5912 = vunpack.c.l.b16 %v5880
        %v5913 = vunpack.c.l.b16 %v5881
        %v5914 = vunpack.c.l.b16 %v5882
        %v5915 = vunpack.c.l.b16 %v5883
        %v5916 = vunpack.c.l.b16 %v5884
        %v5917 = vunpack.c.l.b16 %v5885
        %v5918 = vunpack.c.l.b16 %v5886
        %v5919 = vunpack.c.l.b16 %v5887
        %v5920 = vunpack.c.l.b16 %v5888
        %v5921 = vunpack.c.l.b16 %v5889
        %v5922 = vunpack.c.l.b16 %v5890
        %v5923 = vunpack.c.l.b16 %v5891
        %v5924 = vunpack.c.l.b16 %v5892
        %v5925 = vpack.c.b16 %v5910, %v5909
        %v5926 = vpack.c.b16 %v5912, %v5911
        %v5927 = vpack.c.b16 %v5914, %v5913
        %v5928 = vpack.c.b16 %v5916, %v5915
        %v5929 = vpack.c.b16 %v5918, %v5917
        %v5930 = vpack.c.b16 %v5920, %v5919
        %v5931 = vpack.c.b16 %v5922, %v5921
        %v5932 = vpack.c.b16 %v5924, %v5923
        %5941 = vmatpush.bf16.msra.mxu0 %v5932
        %5942 = vmatpush.bf16.msra.mxu0 %v5931
        %5943 = vmatpush.bf16.msra.mxu0 %v5930
        %5944 = vmatpush.bf16.msra.mxu0 %v5929
        %5945 = vmatpush.bf16.msra.mxu0 %v5928
        %5946 = vmatpush.bf16.msra.mxu0 %v5927
        %5947 = vmatpush.bf16.msra.mxu0 %v5926
        %5948 = vmatpush.bf16.msra.mxu0 %v5925
        %5949 = vmatmul.bf16.gmra.mxu0 %v5860
        %v5950 = vpop.f32.mrf.mxu0
        %v5951 = vadd.f32 0.0, %v5950
        %v5952 = vpop.f32.mrf.mxu0
        %v5953 = vadd.f32 0.0, %v5952
        %5954 = vmatmul.bf16.gmra.mxu0 %v5861
        %v5955 = vpop.f32.mrf.mxu0
        %v5956 = vadd.f32 0.0, %v5955
        %v5957 = vpop.f32.mrf.mxu0
        %v5958 = vadd.f32 0.0, %v5957
        %5959 = vmatmul.bf16.gmra.mxu0 %v5862
        %v5960 = vpop.f32.mrf.mxu0
        %v5961 = vadd.f32 0.0, %v5960
        %v5962 = vpop.f32.mrf.mxu0
        %v5963 = vadd.f32 0.0, %v5962
        %5964 = vmatmul.bf16.gmra.mxu0 %v5863
        %v5965 = vpop.f32.mrf.mxu0
        %v5966 = vadd.f32 0.0, %v5965
        %v5967 = vpop.f32.mrf.mxu0
        %v5968 = vadd.f32 0.0, %v5967
        %5969 = vmatmul.bf16.gmra.mxu0 %v5864
        %v5970 = vpop.f32.mrf.mxu0
        %v5971 = vadd.f32 0.0, %v5970
        %v5972 = vpop.f32.mrf.mxu0
        %v5973 = vadd.f32 0.0, %v5972
        %5974 = vmatmul.bf16.gmra.mxu0 %v5865
        %v5975 = vpop.f32.mrf.mxu0
        %v5976 = vadd.f32 0.0, %v5975
        %v5977 = vpop.f32.mrf.mxu0
        %v5978 = vadd.f32 0.0, %v5977
        %5979 = vmatmul.bf16.gmra.mxu0 %v5866
        %v5980 = vpop.f32.mrf.mxu0
        %v5981 = vadd.f32 0.0, %v5980
        %v5982 = vpop.f32.mrf.mxu0
        %v5983 = vadd.f32 0.0, %v5982
        %5984 = vmatmul.bf16.gmra.mxu0 %v5867
        %v5985 = vpop.f32.mrf.mxu0
        %v5986 = vadd.f32 0.0, %v5985
        %v5987 = vpop.f32.mrf.mxu0
        %v5988 = vadd.f32 0.0, %v5987
        %5989 = vmatmul.bf16.gmra.mxu0 %v5868
        %v5990 = vpop.f32.mrf.mxu0
        %v5991 = vadd.f32 0.0, %v5990
        %v5992 = vpop.f32.mrf.mxu0
        %v5993 = vadd.f32 0.0, %v5992
        %5994 = vmatmul.bf16.gmra.mxu0 %v5869
        %v5995 = vpop.f32.mrf.mxu0
        %v5996 = vadd.f32 0.0, %v5995
        %v5997 = vpop.f32.mrf.mxu0
        %v5998 = vadd.f32 0.0, %v5997
        %5999 = vmatmul.bf16.gmra.mxu0 %v5870
        %v6000 = vpop.f32.mrf.mxu0
        %v6001 = vadd.f32 0.0, %v6000
        %v6002 = vpop.f32.mrf.mxu0
        %v6003 = vadd.f32 0.0, %v6002
        %6004 = vmatmul.bf16.gmra.mxu0 %v5871
        %v6005 = vpop.f32.mrf.mxu0
        %v6006 = vadd.f32 0.0, %v6005
        %v6007 = vpop.f32.mrf.mxu0
        %v6008 = vadd.f32 0.0, %v6007
        %6009 = vmatmul.bf16.gmra.mxu0 %v5872
        %v6010 = vpop.f32.mrf.mxu0
        %v6011 = vadd.f32 0.0, %v6010
        %v6012 = vpop.f32.mrf.mxu0
        %v6013 = vadd.f32 0.0, %v6012
        %6014 = vmatmul.bf16.gmra.mxu0 %v5873
        %v6015 = vpop.f32.mrf.mxu0
        %v6016 = vadd.f32 0.0, %v6015
        %v6017 = vpop.f32.mrf.mxu0
        %v6018 = vadd.f32 0.0, %v6017
        %6019 = vmatmul.bf16.gmra.mxu0 %v5874
        %v6020 = vpop.f32.mrf.mxu0
        %v6021 = vadd.f32 0.0, %v6020
        %v6022 = vpop.f32.mrf.mxu0
        %v6023 = vadd.f32 0.0, %v6022
        %6024 = vmatmul.bf16.gmra.mxu0 %v5875
        %v6025 = vpop.f32.mrf.mxu0
        %v6026 = vadd.f32 0.0, %v6025
        %v6027 = vpop.f32.mrf.mxu0
        %v6028 = vadd.f32 0.0, %v6027
        %6029 = vdwg.mxu0
        %v6030 = vadd.f32 %v5796, %v5951
        %v6031 = vadd.f32 %v5797, %v5953
        %v6032 = vadd.f32 %v5798, %v5956
        %v6033 = vadd.f32 %v5799, %v5958
        %v6034 = vadd.f32 %v5800, %v5961
        %v6035 = vadd.f32 %v5801, %v5963
        %v6036 = vadd.f32 %v5802, %v5966
        %v6037 = vadd.f32 %v5803, %v5968
        %v6038 = vadd.f32 %v5804, %v5971
        %v6039 = vadd.f32 %v5805, %v5973
        %v6040 = vadd.f32 %v5806, %v5976
        %v6041 = vadd.f32 %v5807, %v5978
        %v6042 = vadd.f32 %v5808, %v5981
        %v6043 = vadd.f32 %v5809, %v5983
        %v6044 = vadd.f32 %v5810, %v5986
        %v6045 = vadd.f32 %v5811, %v5988
        %v6046 = vadd.f32 %v5812, %v5991
        %v6047 = vadd.f32 %v5813, %v5993
        %v6048 = vadd.f32 %v5814, %v5996
        %v6049 = vadd.f32 %v5815, %v5998
        %v6050 = vadd.f32 %v5816, %v6001
        %v6051 = vadd.f32 %v5817, %v6003
        %v6052 = vadd.f32 %v5818, %v6006
        %v6053 = vadd.f32 %v5819, %v6008
        %v6054 = vadd.f32 %v5820, %v6011
        %v6055 = vadd.f32 %v5821, %v6013
        %v6056 = vadd.f32 %v5822, %v6016
        %v6057 = vadd.f32 %v5823, %v6018
        %v6058 = vadd.f32 %v5824, %v6021
        %v6059 = vadd.f32 %v5825, %v6023
        %v6060 = vadd.f32 %v5826, %v6026
        %v6061 = vadd.f32 %v5827, %v6028
        %v6062 = vsel %vm3395, %v4319, 0.0
        %v6063 = vsel %vm3396, %v4321, 0.0
        %v6064 = vsel %vm3397, %v4324, 0.0
        %v6065 = vsel %vm3398, %v4326, 0.0
        %v6066 = vsel %vm3399, %v4329, 0.0
        %v6067 = vsel %vm3400, %v4331, 0.0
        %v6068 = vsel %vm3401, %v4334, 0.0
        %v6069 = vsel %vm3402, %v4336, 0.0
        %v6070 = vsel %vm3403, %v4339, 0.0
        %v6071 = vsel %vm3404, %v4341, 0.0
        %v6072 = vsel %vm3405, %v4344, 0.0
        %v6073 = vsel %vm3406, %v4346, 0.0
        %v6074 = vsel %vm3407, %v4349, 0.0
        %v6075 = vsel %vm3408, %v4351, 0.0
        %v6076 = vsel %vm3409, %v4354, 0.0
        %v6077 = vsel %vm3410, %v4356, 0.0
        %v6078 = vsel %vm3411, %v4359, 0.0
        %v6079 = vsel %vm3412, %v4361, 0.0
        %v6080 = vsel %vm3413, %v4364, 0.0
        %v6081 = vsel %vm3414, %v4366, 0.0
        %v6082 = vsel %vm3415, %v4369, 0.0
        %v6083 = vsel %vm3416, %v4371, 0.0
        %v6084 = vsel %vm3417, %v4374, 0.0
        %v6085 = vsel %vm3418, %v4376, 0.0
        %v6086 = vsel %vm3419, %v4379, 0.0
        %v6087 = vsel %vm3420, %v4381, 0.0
        %v6088 = vsel %vm3421, %v4384, 0.0
        %v6089 = vsel %vm3422, %v4386, 0.0
        %v6090 = vsel %vm3423, %v4389, 0.0
        %v6091 = vsel %vm3424, %v4391, 0.0
        %v6092 = vsel %vm3425, %v4314, 0.0
        %v6093 = vsel %vm3426, %v4316, 0.0
        %v6094 = vpack.c.bf16 %v6063, %v6062
        %v6095 = vpack.c.bf16 %v6065, %v6064
        %v6096 = vpack.c.bf16 %v6067, %v6066
        %v6097 = vpack.c.bf16 %v6069, %v6068
        %v6098 = vpack.c.bf16 %v6071, %v6070
        %v6099 = vpack.c.bf16 %v6073, %v6072
        %v6100 = vpack.c.bf16 %v6075, %v6074
        %v6101 = vpack.c.bf16 %v6077, %v6076
        %v6102 = vpack.c.bf16 %v6079, %v6078
        %v6103 = vpack.c.bf16 %v6081, %v6080
        %v6104 = vpack.c.bf16 %v6083, %v6082
        %v6105 = vpack.c.bf16 %v6085, %v6084
        %v6106 = vpack.c.bf16 %v6087, %v6086
        %v6107 = vpack.c.bf16 %v6089, %v6088
        %v6108 = vpack.c.bf16 %v6091, %v6090
        %v6109 = vpack.c.bf16 %v6093, %v6092
        %s6110 = scalar_lea.vmem %s5, 448
        %v6111 = vld [vmem:[%s6110] sm:$0xf]
        %v6112 = vld [vmem:[%s6110 + $0x4] sm:$0xf]
        %v6113 = vld [vmem:[%s6110 + $0x8] sm:$0xf]
        %v6114 = vld [vmem:[%s6110 + $0xc] sm:$0xf]
        %v6115 = vld [vmem:[%s6110 + $0x10] sm:$0xf]
        %v6116 = vld [vmem:[%s6110 + $0x14] sm:$0xf]
        %v6117 = vld [vmem:[%s6110 + $0x18] sm:$0xf]
        %v6118 = vld [vmem:[%s6110 + $0x1c] sm:$0xf]
        %v6119 = vld [vmem:[%s6110 + $0x20] sm:$0xf]
        %v6120 = vld [vmem:[%s6110 + $0x24] sm:$0xf]
        %v6121 = vld [vmem:[%s6110 + $0x28] sm:$0xf]
        %v6122 = vld [vmem:[%s6110 + $0x2c] sm:$0xf]
        %v6123 = vld [vmem:[%s6110 + $0x30] sm:$0xf]
        %v6124 = vld [vmem:[%s6110 + $0x34] sm:$0xf]
        %v6125 = vld [vmem:[%s6110 + $0x38] sm:$0xf]
        %v6126 = vld [vmem:[%s6110 + $0x3c] sm:$0xf]
        %v6143 = vunpack.c.l.b16 %v6111
        %v6144 = vunpack.c.l.b16 %v6112
        %v6145 = vunpack.c.l.b16 %v6113
        %v6146 = vunpack.c.l.b16 %v6114
        %v6147 = vunpack.c.l.b16 %v6115
        %v6148 = vunpack.c.l.b16 %v6116
        %v6149 = vunpack.c.l.b16 %v6117
        %v6150 = vunpack.c.l.b16 %v6118
        %v6151 = vunpack.c.l.b16 %v6119
        %v6152 = vunpack.c.l.b16 %v6120
        %v6153 = vunpack.c.l.b16 %v6121
        %v6154 = vunpack.c.l.b16 %v6122
        %v6155 = vunpack.c.l.b16 %v6123
        %v6156 = vunpack.c.l.b16 %v6124
        %v6157 = vunpack.c.l.b16 %v6125
        %v6158 = vunpack.c.l.b16 %v6126
        %v6159 = vpack.c.b16 %v6144, %v6143
        %v6160 = vpack.c.b16 %v6146, %v6145
        %v6161 = vpack.c.b16 %v6148, %v6147
        %v6162 = vpack.c.b16 %v6150, %v6149
        %v6163 = vpack.c.b16 %v6152, %v6151
        %v6164 = vpack.c.b16 %v6154, %v6153
        %v6165 = vpack.c.b16 %v6156, %v6155
        %v6166 = vpack.c.b16 %v6158, %v6157
        %6175 = vmatpush.bf16.msra.mxu0 %v6166
        %6176 = vmatpush.bf16.msra.mxu0 %v6165
        %6177 = vmatpush.bf16.msra.mxu0 %v6164
        %6178 = vmatpush.bf16.msra.mxu0 %v6163
        %6179 = vmatpush.bf16.msra.mxu0 %v6162
        %6180 = vmatpush.bf16.msra.mxu0 %v6161
        %6181 = vmatpush.bf16.msra.mxu0 %v6160
        %6182 = vmatpush.bf16.msra.mxu0 %v6159
        %6183 = vmatmul.bf16.gmra.mxu0 %v6094
        %v6184 = vpop.f32.mrf.mxu0
        %v6185 = vadd.f32 0.0, %v6184
        %v6186 = vpop.f32.mrf.mxu0
        %v6187 = vadd.f32 0.0, %v6186
        %6188 = vmatmul.bf16.gmra.mxu0 %v6095
        %v6189 = vpop.f32.mrf.mxu0
        %v6190 = vadd.f32 0.0, %v6189
        %v6191 = vpop.f32.mrf.mxu0
        %v6192 = vadd.f32 0.0, %v6191
        %6193 = vmatmul.bf16.gmra.mxu0 %v6096
        %v6194 = vpop.f32.mrf.mxu0
        %v6195 = vadd.f32 0.0, %v6194
        %v6196 = vpop.f32.mrf.mxu0
        %v6197 = vadd.f32 0.0, %v6196
        %6198 = vmatmul.bf16.gmra.mxu0 %v6097
        %v6199 = vpop.f32.mrf.mxu0
        %v6200 = vadd.f32 0.0, %v6199
        %v6201 = vpop.f32.mrf.mxu0
        %v6202 = vadd.f32 0.0, %v6201
        %6203 = vmatmul.bf16.gmra.mxu0 %v6098
        %v6204 = vpop.f32.mrf.mxu0
        %v6205 = vadd.f32 0.0, %v6204
        %v6206 = vpop.f32.mrf.mxu0
        %v6207 = vadd.f32 0.0, %v6206
        %6208 = vmatmul.bf16.gmra.mxu0 %v6099
        %v6209 = vpop.f32.mrf.mxu0
        %v6210 = vadd.f32 0.0, %v6209
        %v6211 = vpop.f32.mrf.mxu0
        %v6212 = vadd.f32 0.0, %v6211
        %6213 = vmatmul.bf16.gmra.mxu0 %v6100
        %v6214 = vpop.f32.mrf.mxu0
        %v6215 = vadd.f32 0.0, %v6214
        %v6216 = vpop.f32.mrf.mxu0
        %v6217 = vadd.f32 0.0, %v6216
        %6218 = vmatmul.bf16.gmra.mxu0 %v6101
        %v6219 = vpop.f32.mrf.mxu0
        %v6220 = vadd.f32 0.0, %v6219
        %v6221 = vpop.f32.mrf.mxu0
        %v6222 = vadd.f32 0.0, %v6221
        %6223 = vmatmul.bf16.gmra.mxu0 %v6102
        %v6224 = vpop.f32.mrf.mxu0
        %v6225 = vadd.f32 0.0, %v6224
        %v6226 = vpop.f32.mrf.mxu0
        %v6227 = vadd.f32 0.0, %v6226
        %6228 = vmatmul.bf16.gmra.mxu0 %v6103
        %v6229 = vpop.f32.mrf.mxu0
        %v6230 = vadd.f32 0.0, %v6229
        %v6231 = vpop.f32.mrf.mxu0
        %v6232 = vadd.f32 0.0, %v6231
        %6233 = vmatmul.bf16.gmra.mxu0 %v6104
        %v6234 = vpop.f32.mrf.mxu0
        %v6235 = vadd.f32 0.0, %v6234
        %v6236 = vpop.f32.mrf.mxu0
        %v6237 = vadd.f32 0.0, %v6236
        %6238 = vmatmul.bf16.gmra.mxu0 %v6105
        %v6239 = vpop.f32.mrf.mxu0
        %v6240 = vadd.f32 0.0, %v6239
        %v6241 = vpop.f32.mrf.mxu0
        %v6242 = vadd.f32 0.0, %v6241
        %6243 = vmatmul.bf16.gmra.mxu0 %v6106
        %v6244 = vpop.f32.mrf.mxu0
        %v6245 = vadd.f32 0.0, %v6244
        %v6246 = vpop.f32.mrf.mxu0
        %v6247 = vadd.f32 0.0, %v6246
        %6248 = vmatmul.bf16.gmra.mxu0 %v6107
        %v6249 = vpop.f32.mrf.mxu0
        %v6250 = vadd.f32 0.0, %v6249
        %v6251 = vpop.f32.mrf.mxu0
        %v6252 = vadd.f32 0.0, %v6251
        %6253 = vmatmul.bf16.gmra.mxu0 %v6108
        %v6254 = vpop.f32.mrf.mxu0
        %v6255 = vadd.f32 0.0, %v6254
        %v6256 = vpop.f32.mrf.mxu0
        %v6257 = vadd.f32 0.0, %v6256
        %6258 = vmatmul.bf16.gmra.mxu0 %v6109
        %v6259 = vpop.f32.mrf.mxu0
        %v6260 = vadd.f32 0.0, %v6259
        %v6261 = vpop.f32.mrf.mxu0
        %v6262 = vadd.f32 0.0, %v6261
        %6263 = vdwg.mxu0
        %v6264 = vadd.f32 %v6030, %v6185
        %v6265 = vadd.f32 %v6031, %v6187
        %v6266 = vadd.f32 %v6032, %v6190
        %v6267 = vadd.f32 %v6033, %v6192
        %v6268 = vadd.f32 %v6034, %v6195
        %v6269 = vadd.f32 %v6035, %v6197
        %v6270 = vadd.f32 %v6036, %v6200
        %v6271 = vadd.f32 %v6037, %v6202
        %v6272 = vadd.f32 %v6038, %v6205
        %v6273 = vadd.f32 %v6039, %v6207
        %v6274 = vadd.f32 %v6040, %v6210
        %v6275 = vadd.f32 %v6041, %v6212
        %v6276 = vadd.f32 %v6042, %v6215
        %v6277 = vadd.f32 %v6043, %v6217
        %v6278 = vadd.f32 %v6044, %v6220
        %v6279 = vadd.f32 %v6045, %v6222
        %v6280 = vadd.f32 %v6046, %v6225
        %v6281 = vadd.f32 %v6047, %v6227
        %v6282 = vadd.f32 %v6048, %v6230
        %v6283 = vadd.f32 %v6049, %v6232
        %v6284 = vadd.f32 %v6050, %v6235
        %v6285 = vadd.f32 %v6051, %v6237
        %v6286 = vadd.f32 %v6052, %v6240
        %v6287 = vadd.f32 %v6053, %v6242
        %v6288 = vadd.f32 %v6054, %v6245
        %v6289 = vadd.f32 %v6055, %v6247
        %v6290 = vadd.f32 %v6056, %v6250
        %v6291 = vadd.f32 %v6057, %v6252
        %v6292 = vadd.f32 %v6058, %v6255
        %v6293 = vadd.f32 %v6059, %v6257
        %v6294 = vadd.f32 %v6060, %v6260
        %v6295 = vadd.f32 %v6061, %v6262
        %v6296 = vsel %vm3725, %v4920, 0.0
        %v6297 = vsel %vm3726, %v4919, 0.0
        %v6298 = vsel %vm3727, %v4918, 0.0
        %v6299 = vsel %vm3728, %v4917, 0.0
        %v6300 = vsel %vm3729, %v4916, 0.0
        %v6301 = vsel %vm3730, %v4915, 0.0
        %v6302 = vsel %vm3731, %v4914, 0.0
        %v6303 = vsel %vm3732, %v4913, 0.0
        %v6304 = vsel %vm3733, %v4912, 0.0
        %v6305 = vsel %vm3734, %v4911, 0.0
        %v6306 = vsel %vm3735, %v4910, 0.0
        %v6307 = vsel %vm3736, %v4909, 0.0
        %v6308 = vsel %vm3737, %v4908, 0.0
        %v6309 = vsel %vm3738, %v4907, 0.0
        %v6310 = vsel %vm3739, %v4906, 0.0
        %v6311 = vsel %vm3740, %v4905, 0.0
        %v6312 = vsel %vm3741, %v4904, 0.0
        %v6313 = vsel %vm3742, %v4903, 0.0
        %v6314 = vsel %vm3743, %v4902, 0.0
        %v6315 = vsel %vm3744, %v4901, 0.0
        %v6316 = vsel %vm3745, %v4900, 0.0
        %v6317 = vsel %vm3746, %v4899, 0.0
        %v6318 = vsel %vm3747, %v4898, 0.0
        %v6319 = vsel %vm3748, %v4897, 0.0
        %v6320 = vsel %vm3749, %v4896, 0.0
        %v6321 = vsel %vm3750, %v4895, 0.0
        %v6322 = vsel %vm3751, %v4894, 0.0
        %v6323 = vsel %vm3752, %v4893, 0.0
        %v6324 = vsel %vm3753, %v4892, 0.0
        %v6325 = vsel %vm3754, %v4923, 0.0
        %v6326 = vsel %vm3755, %v4922, 0.0
        %v6327 = vsel %vm3756, %v4921, 0.0
        %v6328 = vpack.c.bf16 %v6297, %v6296
        %v6329 = vpack.c.bf16 %v6299, %v6298
        %v6330 = vpack.c.bf16 %v6301, %v6300
        %v6331 = vpack.c.bf16 %v6303, %v6302
        %v6332 = vpack.c.bf16 %v6305, %v6304
        %v6333 = vpack.c.bf16 %v6307, %v6306
        %v6334 = vpack.c.bf16 %v6309, %v6308
        %v6335 = vpack.c.bf16 %v6311, %v6310
        %v6336 = vpack.c.bf16 %v6313, %v6312
        %v6337 = vpack.c.bf16 %v6315, %v6314
        %v6338 = vpack.c.bf16 %v6317, %v6316
        %v6339 = vpack.c.bf16 %v6319, %v6318
        %v6340 = vpack.c.bf16 %v6321, %v6320
        %v6341 = vpack.c.bf16 %v6323, %v6322
        %v6342 = vpack.c.bf16 %v6325, %v6324
        %v6343 = vpack.c.bf16 %v6327, %v6326
        %s6344 = scalar_lea.vmem %s5, 512
        %v6345 = vld [vmem:[%s6344] sm:$0xf]
        %v6346 = vld [vmem:[%s6344 + $0x4] sm:$0xf]
        %v6347 = vld [vmem:[%s6344 + $0x8] sm:$0xf]
        %v6348 = vld [vmem:[%s6344 + $0xc] sm:$0xf]
        %v6349 = vld [vmem:[%s6344 + $0x10] sm:$0xf]
        %v6350 = vld [vmem:[%s6344 + $0x14] sm:$0xf]
        %v6351 = vld [vmem:[%s6344 + $0x18] sm:$0xf]
        %v6352 = vld [vmem:[%s6344 + $0x1c] sm:$0xf]
        %v6353 = vld [vmem:[%s6344 + $0x20] sm:$0xf]
        %v6354 = vld [vmem:[%s6344 + $0x24] sm:$0xf]
        %v6355 = vld [vmem:[%s6344 + $0x28] sm:$0xf]
        %v6356 = vld [vmem:[%s6344 + $0x2c] sm:$0xf]
        %v6357 = vld [vmem:[%s6344 + $0x30] sm:$0xf]
        %v6358 = vld [vmem:[%s6344 + $0x34] sm:$0xf]
        %v6359 = vld [vmem:[%s6344 + $0x38] sm:$0xf]
        %v6360 = vld [vmem:[%s6344 + $0x3c] sm:$0xf]
        %v6377 = vunpack.c.l.b16 %v6345
        %v6378 = vunpack.c.l.b16 %v6346
        %v6379 = vunpack.c.l.b16 %v6347
        %v6380 = vunpack.c.l.b16 %v6348
        %v6381 = vunpack.c.l.b16 %v6349
        %v6382 = vunpack.c.l.b16 %v6350
        %v6383 = vunpack.c.l.b16 %v6351
        %v6384 = vunpack.c.l.b16 %v6352
        %v6385 = vunpack.c.l.b16 %v6353
        %v6386 = vunpack.c.l.b16 %v6354
        %v6387 = vunpack.c.l.b16 %v6355
        %v6388 = vunpack.c.l.b16 %v6356
        %v6389 = vunpack.c.l.b16 %v6357
        %v6390 = vunpack.c.l.b16 %v6358
        %v6391 = vunpack.c.l.b16 %v6359
        %v6392 = vunpack.c.l.b16 %v6360
        %v6393 = vpack.c.b16 %v6378, %v6377
        %v6394 = vpack.c.b16 %v6380, %v6379
        %v6395 = vpack.c.b16 %v6382, %v6381
        %v6396 = vpack.c.b16 %v6384, %v6383
        %v6397 = vpack.c.b16 %v6386, %v6385
        %v6398 = vpack.c.b16 %v6388, %v6387
        %v6399 = vpack.c.b16 %v6390, %v6389
        %v6400 = vpack.c.b16 %v6392, %v6391
        %6409 = vmatpush.bf16.msra.mxu0 %v6400
        %6410 = vmatpush.bf16.msra.mxu0 %v6399
        %6411 = vmatpush.bf16.msra.mxu0 %v6398
        %6412 = vmatpush.bf16.msra.mxu0 %v6397
        %6413 = vmatpush.bf16.msra.mxu0 %v6396
        %6414 = vmatpush.bf16.msra.mxu0 %v6395
        %6415 = vmatpush.bf16.msra.mxu0 %v6394
        %6416 = vmatpush.bf16.msra.mxu0 %v6393
        %6417 = vmatmul.bf16.gmra.mxu0 %v6328
        %v6418 = vpop.f32.mrf.mxu0
        %v6419 = vadd.f32 0.0, %v6418
        %v6420 = vpop.f32.mrf.mxu0
        %v6421 = vadd.f32 0.0, %v6420
        %6422 = vmatmul.bf16.gmra.mxu0 %v6329
        %v6423 = vpop.f32.mrf.mxu0
        %v6424 = vadd.f32 0.0, %v6423
        %v6425 = vpop.f32.mrf.mxu0
        %v6426 = vadd.f32 0.0, %v6425
        %6427 = vmatmul.bf16.gmra.mxu0 %v6330
        %v6428 = vpop.f32.mrf.mxu0
        %v6429 = vadd.f32 0.0, %v6428
        %v6430 = vpop.f32.mrf.mxu0
        %v6431 = vadd.f32 0.0, %v6430
        %6432 = vmatmul.bf16.gmra.mxu0 %v6331
        %v6433 = vpop.f32.mrf.mxu0
        %v6434 = vadd.f32 0.0, %v6433
        %v6435 = vpop.f32.mrf.mxu0
        %v6436 = vadd.f32 0.0, %v6435
        %6437 = vmatmul.bf16.gmra.mxu0 %v6332
        %v6438 = vpop.f32.mrf.mxu0
        %v6439 = vadd.f32 0.0, %v6438
        %v6440 = vpop.f32.mrf.mxu0
        %v6441 = vadd.f32 0.0, %v6440
        %6442 = vmatmul.bf16.gmra.mxu0 %v6333
        %v6443 = vpop.f32.mrf.mxu0
        %v6444 = vadd.f32 0.0, %v6443
        %v6445 = vpop.f32.mrf.mxu0
        %v6446 = vadd.f32 0.0, %v6445
        %6447 = vmatmul.bf16.gmra.mxu0 %v6334
        %v6448 = vpop.f32.mrf.mxu0
        %v6449 = vadd.f32 0.0, %v6448
        %v6450 = vpop.f32.mrf.mxu0
        %v6451 = vadd.f32 0.0, %v6450
        %6452 = vmatmul.bf16.gmra.mxu0 %v6335
        %v6453 = vpop.f32.mrf.mxu0
        %v6454 = vadd.f32 0.0, %v6453
        %v6455 = vpop.f32.mrf.mxu0
        %v6456 = vadd.f32 0.0, %v6455
        %6457 = vmatmul.bf16.gmra.mxu0 %v6336
        %v6458 = vpop.f32.mrf.mxu0
        %v6459 = vadd.f32 0.0, %v6458
        %v6460 = vpop.f32.mrf.mxu0
        %v6461 = vadd.f32 0.0, %v6460
        %6462 = vmatmul.bf16.gmra.mxu0 %v6337
        %v6463 = vpop.f32.mrf.mxu0
        %v6464 = vadd.f32 0.0, %v6463
        %v6465 = vpop.f32.mrf.mxu0
        %v6466 = vadd.f32 0.0, %v6465
        %6467 = vmatmul.bf16.gmra.mxu0 %v6338
        %v6468 = vpop.f32.mrf.mxu0
        %v6469 = vadd.f32 0.0, %v6468
        %v6470 = vpop.f32.mrf.mxu0
        %v6471 = vadd.f32 0.0, %v6470
        %6472 = vmatmul.bf16.gmra.mxu0 %v6339
        %v6473 = vpop.f32.mrf.mxu0
        %v6474 = vadd.f32 0.0, %v6473
        %v6475 = vpop.f32.mrf.mxu0
        %v6476 = vadd.f32 0.0, %v6475
        %6477 = vmatmul.bf16.gmra.mxu0 %v6340
        %v6478 = vpop.f32.mrf.mxu0
        %v6479 = vadd.f32 0.0, %v6478
        %v6480 = vpop.f32.mrf.mxu0
        %v6481 = vadd.f32 0.0, %v6480
        %6482 = vmatmul.bf16.gmra.mxu0 %v6341
        %v6483 = vpop.f32.mrf.mxu0
        %v6484 = vadd.f32 0.0, %v6483
        %v6485 = vpop.f32.mrf.mxu0
        %v6486 = vadd.f32 0.0, %v6485
        %6487 = vmatmul.bf16.gmra.mxu0 %v6342
        %v6488 = vpop.f32.mrf.mxu0
        %v6489 = vadd.f32 0.0, %v6488
        %v6490 = vpop.f32.mrf.mxu0
        %v6491 = vadd.f32 0.0, %v6490
        %6492 = vmatmul.bf16.gmra.mxu0 %v6343
        %v6493 = vpop.f32.mrf.mxu0
        %v6494 = vadd.f32 0.0, %v6493
        %v6495 = vpop.f32.mrf.mxu0
        %v6496 = vadd.f32 0.0, %v6495
        %6497 = vdwg.mxu0
        %v6498 = vadd.f32 %v6264, %v6419
        %v6499 = vadd.f32 %v6265, %v6421
        %v6500 = vadd.f32 %v6266, %v6424
        %v6501 = vadd.f32 %v6267, %v6426
        %v6502 = vadd.f32 %v6268, %v6429
        %v6503 = vadd.f32 %v6269, %v6431
        %v6504 = vadd.f32 %v6270, %v6434
        %v6505 = vadd.f32 %v6271, %v6436
        %v6506 = vadd.f32 %v6272, %v6439
        %v6507 = vadd.f32 %v6273, %v6441
        %v6508 = vadd.f32 %v6274, %v6444
        %v6509 = vadd.f32 %v6275, %v6446
        %v6510 = vadd.f32 %v6276, %v6449
        %v6511 = vadd.f32 %v6277, %v6451
        %v6512 = vadd.f32 %v6278, %v6454
        %v6513 = vadd.f32 %v6279, %v6456
        %v6514 = vadd.f32 %v6280, %v6459
        %v6515 = vadd.f32 %v6281, %v6461
        %v6516 = vadd.f32 %v6282, %v6464
        %v6517 = vadd.f32 %v6283, %v6466
        %v6518 = vadd.f32 %v6284, %v6469
        %v6519 = vadd.f32 %v6285, %v6471
        %v6520 = vadd.f32 %v6286, %v6474
        %v6521 = vadd.f32 %v6287, %v6476
        %v6522 = vadd.f32 %v6288, %v6479
        %v6523 = vadd.f32 %v6289, %v6481
        %v6524 = vadd.f32 %v6290, %v6484
        %v6525 = vadd.f32 %v6291, %v6486
        %v6526 = vadd.f32 %v6292, %v6489
        %v6527 = vadd.f32 %v6293, %v6491
        %v6528 = vadd.f32 %v6294, %v6494
        %v6529 = vadd.f32 %v6295, %v6496
        %v6530 = vpack.c.bf16 %v6499, %v6498
        %v6531 = vpack.c.bf16 %v6501, %v6500
        %v6532 = vpack.c.bf16 %v6503, %v6502
        %v6533 = vpack.c.bf16 %v6505, %v6504
        %v6534 = vpack.c.bf16 %v6507, %v6506
        %v6535 = vpack.c.bf16 %v6509, %v6508
        %v6536 = vpack.c.bf16 %v6511, %v6510
        %v6537 = vpack.c.bf16 %v6513, %v6512
        %v6538 = vpack.c.bf16 %v6515, %v6514
        %v6539 = vpack.c.bf16 %v6517, %v6516
        %v6540 = vpack.c.bf16 %v6519, %v6518
        %v6541 = vpack.c.bf16 %v6521, %v6520
        %v6542 = vpack.c.bf16 %v6523, %v6522
        %v6543 = vpack.c.bf16 %v6525, %v6524
        %v6544 = vpack.c.bf16 %v6527, %v6526
        %v6545 = vpack.c.bf16 %v6529, %v6528
        %v6546 = vld [vmem:[%s6] sm:$0xf]
        %v6547 = vld [vmem:[%s6 + $0x4] sm:$0xf]
        %v6548 = vld [vmem:[%s6 + $0x8] sm:$0xf]
        %v6549 = vld [vmem:[%s6 + $0xc] sm:$0xf]
        %v6550 = vld [vmem:[%s6 + $0x10] sm:$0xf]
        %v6551 = vld [vmem:[%s6 + $0x14] sm:$0xf]
        %v6552 = vld [vmem:[%s6 + $0x18] sm:$0xf]
        %v6553 = vld [vmem:[%s6 + $0x1c] sm:$0xf]
        %v6554 = vld [vmem:[%s6 + $0x20] sm:$0xf]
        %v6555 = vld [vmem:[%s6 + $0x24] sm:$0xf]
        %v6556 = vld [vmem:[%s6 + $0x28] sm:$0xf]
        %v6557 = vld [vmem:[%s6 + $0x2c] sm:$0xf]
        %v6558 = vld [vmem:[%s6 + $0x30] sm:$0xf]
        %v6559 = vld [vmem:[%s6 + $0x34] sm:$0xf]
        %v6560 = vld [vmem:[%s6 + $0x38] sm:$0xf]
        %v6561 = vld [vmem:[%s6 + $0x3c] sm:$0xf]
        %v6578 = vunpack.c.l.b16 %v6546
        %v6579 = vunpack.c.l.b16 %v6547
        %v6580 = vunpack.c.l.b16 %v6548
        %v6581 = vunpack.c.l.b16 %v6549
        %v6582 = vunpack.c.l.b16 %v6550
        %v6583 = vunpack.c.l.b16 %v6551
        %v6584 = vunpack.c.l.b16 %v6552
        %v6585 = vunpack.c.l.b16 %v6553
        %v6586 = vunpack.c.l.b16 %v6554
        %v6587 = vunpack.c.l.b16 %v6555
        %v6588 = vunpack.c.l.b16 %v6556
        %v6589 = vunpack.c.l.b16 %v6557
        %v6590 = vunpack.c.l.b16 %v6558
        %v6591 = vunpack.c.l.b16 %v6559
        %v6592 = vunpack.c.l.b16 %v6560
        %v6593 = vunpack.c.l.b16 %v6561
        %v6594 = vpack.c.b16 %v6579, %v6578
        %v6595 = vpack.c.b16 %v6581, %v6580
        %v6596 = vpack.c.b16 %v6583, %v6582
        %v6597 = vpack.c.b16 %v6585, %v6584
        %v6598 = vpack.c.b16 %v6587, %v6586
        %v6599 = vpack.c.b16 %v6589, %v6588
        %v6600 = vpack.c.b16 %v6591, %v6590
        %v6601 = vpack.c.b16 %v6593, %v6592
        %6610 = vmatpush.bf16.msra.mxu0 %v6601
        %6611 = vmatpush.bf16.msra.mxu0 %v6600
        %6612 = vmatpush.bf16.msra.mxu0 %v6599
        %6613 = vmatpush.bf16.msra.mxu0 %v6598
        %6614 = vmatpush.bf16.msra.mxu0 %v6597
        %6615 = vmatpush.bf16.msra.mxu0 %v6596
        %6616 = vmatpush.bf16.msra.mxu0 %v6595
        %6617 = vmatpush.bf16.msra.mxu0 %v6594
        %6618 = vmatmul.bf16.gmra.mxu0 %v6530
        %v6619 = vpop.f32.mrf.mxu0
        %v6620 = vadd.f32 0.0, %v6619
        %v6621 = vpop.f32.mrf.mxu0
        %v6622 = vadd.f32 0.0, %v6621
        %6623 = vmatmul.bf16.gmra.mxu0 %v6531
        %v6624 = vpop.f32.mrf.mxu0
        %v6625 = vadd.f32 0.0, %v6624
        %v6626 = vpop.f32.mrf.mxu0
        %v6627 = vadd.f32 0.0, %v6626
        %6628 = vmatmul.bf16.gmra.mxu0 %v6532
        %v6629 = vpop.f32.mrf.mxu0
        %v6630 = vadd.f32 0.0, %v6629
        %v6631 = vpop.f32.mrf.mxu0
        %v6632 = vadd.f32 0.0, %v6631
        %6633 = vmatmul.bf16.gmra.mxu0 %v6533
        %v6634 = vpop.f32.mrf.mxu0
        %v6635 = vadd.f32 0.0, %v6634
        %v6636 = vpop.f32.mrf.mxu0
        %v6637 = vadd.f32 0.0, %v6636
        %6638 = vmatmul.bf16.gmra.mxu0 %v6534
        %v6639 = vpop.f32.mrf.mxu0
        %v6640 = vadd.f32 0.0, %v6639
        %v6641 = vpop.f32.mrf.mxu0
        %v6642 = vadd.f32 0.0, %v6641
        %6643 = vmatmul.bf16.gmra.mxu0 %v6535
        %v6644 = vpop.f32.mrf.mxu0
        %v6645 = vadd.f32 0.0, %v6644
        %v6646 = vpop.f32.mrf.mxu0
        %v6647 = vadd.f32 0.0, %v6646
        %6648 = vmatmul.bf16.gmra.mxu0 %v6536
        %v6649 = vpop.f32.mrf.mxu0
        %v6650 = vadd.f32 0.0, %v6649
        %v6651 = vpop.f32.mrf.mxu0
        %v6652 = vadd.f32 0.0, %v6651
        %6653 = vmatmul.bf16.gmra.mxu0 %v6537
        %v6654 = vpop.f32.mrf.mxu0
        %v6655 = vadd.f32 0.0, %v6654
        %v6656 = vpop.f32.mrf.mxu0
        %v6657 = vadd.f32 0.0, %v6656
        %6658 = vmatmul.bf16.gmra.mxu0 %v6538
        %v6659 = vpop.f32.mrf.mxu0
        %v6660 = vadd.f32 0.0, %v6659
        %v6661 = vpop.f32.mrf.mxu0
        %v6662 = vadd.f32 0.0, %v6661
        %6663 = vmatmul.bf16.gmra.mxu0 %v6539
        %v6664 = vpop.f32.mrf.mxu0
        %v6665 = vadd.f32 0.0, %v6664
        %v6666 = vpop.f32.mrf.mxu0
        %v6667 = vadd.f32 0.0, %v6666
        %6668 = vmatmul.bf16.gmra.mxu0 %v6540
        %v6669 = vpop.f32.mrf.mxu0
        %v6670 = vadd.f32 0.0, %v6669
        %v6671 = vpop.f32.mrf.mxu0
        %v6672 = vadd.f32 0.0, %v6671
        %6673 = vmatmul.bf16.gmra.mxu0 %v6541
        %v6674 = vpop.f32.mrf.mxu0
        %v6675 = vadd.f32 0.0, %v6674
        %v6676 = vpop.f32.mrf.mxu0
        %v6677 = vadd.f32 0.0, %v6676
        %6678 = vmatmul.bf16.gmra.mxu0 %v6542
        %v6679 = vpop.f32.mrf.mxu0
        %v6680 = vadd.f32 0.0, %v6679
        %v6681 = vpop.f32.mrf.mxu0
        %v6682 = vadd.f32 0.0, %v6681
        %6683 = vmatmul.bf16.gmra.mxu0 %v6543
        %v6684 = vpop.f32.mrf.mxu0
        %v6685 = vadd.f32 0.0, %v6684
        %v6686 = vpop.f32.mrf.mxu0
        %v6687 = vadd.f32 0.0, %v6686
        %6688 = vmatmul.bf16.gmra.mxu0 %v6544
        %v6689 = vpop.f32.mrf.mxu0
        %v6690 = vadd.f32 0.0, %v6689
        %v6691 = vpop.f32.mrf.mxu0
        %v6692 = vadd.f32 0.0, %v6691
        %6693 = vmatmul.bf16.gmra.mxu0 %v6545
        %v6694 = vpop.f32.mrf.mxu0
        %v6695 = vadd.f32 0.0, %v6694
        %v6696 = vpop.f32.mrf.mxu0
        %v6697 = vadd.f32 0.0, %v6696
        %6698 = vdwg.mxu0
        %v6699 = vadd.f32 %v4192, %v6620
        %v6700 = vadd.f32 %v4193, %v6622
        %v6701 = vadd.f32 %v4194, %v6625
        %v6702 = vadd.f32 %v4195, %v6627
        %v6703 = vadd.f32 %v4196, %v6630
        %v6704 = vadd.f32 %v4197, %v6632
        %v6705 = vadd.f32 %v4198, %v6635
        %v6706 = vadd.f32 %v4199, %v6637
        %v6707 = vadd.f32 %v4200, %v6640
        %v6708 = vadd.f32 %v4201, %v6642
        %v6709 = vadd.f32 %v4202, %v6645
        %v6710 = vadd.f32 %v4203, %v6647
        %v6711 = vadd.f32 %v4204, %v6650
        %v6712 = vadd.f32 %v4205, %v6652
        %v6713 = vadd.f32 %v4206, %v6655
        %v6714 = vadd.f32 %v4207, %v6657
        %v6715 = vadd.f32 %v4208, %v6660
        %v6716 = vadd.f32 %v4209, %v6662
        %v6717 = vadd.f32 %v4210, %v6665
        %v6718 = vadd.f32 %v4211, %v6667
        %v6719 = vadd.f32 %v4212, %v6670
        %v6720 = vadd.f32 %v4213, %v6672
        %v6721 = vadd.f32 %v4214, %v6675
        %v6722 = vadd.f32 %v4215, %v6677
        %v6723 = vadd.f32 %v4216, %v6680
        %v6724 = vadd.f32 %v4217, %v6682
        %v6725 = vadd.f32 %v4218, %v6685
        %v6726 = vadd.f32 %v4219, %v6687
        %v6727 = vadd.f32 %v4220, %v6690
        %v6728 = vadd.f32 %v4221, %v6692
        %v6729 = vadd.f32 %v4222, %v6695
        %v6730 = vadd.f32 %v4223, %v6697
        %v6731 = vmax.f32 %v6699, 0.0
        %v6732 = vmax.f32 %v6700, 0.0
        %v6733 = vmax.f32 %v6701, 0.0
        %v6734 = vmax.f32 %v6702, 0.0
        %v6735 = vmax.f32 %v6703, 0.0
        %v6736 = vmax.f32 %v6704, 0.0
        %v6737 = vmax.f32 %v6705, 0.0
        %v6738 = vmax.f32 %v6706, 0.0
        %v6739 = vmax.f32 %v6707, 0.0
        %v6740 = vmax.f32 %v6708, 0.0
        %v6741 = vmax.f32 %v6709, 0.0
        %v6742 = vmax.f32 %v6710, 0.0
        %v6743 = vmax.f32 %v6711, 0.0
        %v6744 = vmax.f32 %v6712, 0.0
        %v6745 = vmax.f32 %v6713, 0.0
        %v6746 = vmax.f32 %v6714, 0.0
        %v6747 = vmax.f32 %v6715, 0.0
        %v6748 = vmax.f32 %v6716, 0.0
        %v6749 = vmax.f32 %v6717, 0.0
        %v6750 = vmax.f32 %v6718, 0.0
        %v6751 = vmax.f32 %v6719, 0.0
        %v6752 = vmax.f32 %v6720, 0.0
        %v6753 = vmax.f32 %v6721, 0.0
        %v6754 = vmax.f32 %v6722, 0.0
        %v6755 = vmax.f32 %v6723, 0.0
        %v6756 = vmax.f32 %v6724, 0.0
        %v6757 = vmax.f32 %v6725, 0.0
        %v6758 = vmax.f32 %v6726, 0.0
        %v6759 = vmax.f32 %v6727, 0.0
        %v6760 = vmax.f32 %v6728, 0.0
        %v6761 = vmax.f32 %v6729, 0.0
        %v6762 = vmax.f32 %v6730, 0.0
        %v6763 = vpack.c.bf16 %v6732, %v6731
        %v6764 = vpack.c.bf16 %v6734, %v6733
        %v6765 = vpack.c.bf16 %v6736, %v6735
        %v6766 = vpack.c.bf16 %v6738, %v6737
        %v6767 = vpack.c.bf16 %v6740, %v6739
        %v6768 = vpack.c.bf16 %v6742, %v6741
        %v6769 = vpack.c.bf16 %v6744, %v6743
        %v6770 = vpack.c.bf16 %v6746, %v6745
        %v6771 = vpack.c.bf16 %v6748, %v6747
        %v6772 = vpack.c.bf16 %v6750, %v6749
        %v6773 = vpack.c.bf16 %v6752, %v6751
        %v6774 = vpack.c.bf16 %v6754, %v6753
        %v6775 = vpack.c.bf16 %v6756, %v6755
        %v6776 = vpack.c.bf16 %v6758, %v6757
        %v6777 = vpack.c.bf16 %v6760, %v6759
        %v6778 = vpack.c.bf16 %v6762, %v6761
        %v6779 = vld [vmem:[%s7] sm:$0xf]
        %v6780 = vld [vmem:[%s7 + $0x4] sm:$0xf]
        %v6781 = vld [vmem:[%s7 + $0x8] sm:$0xf]
        %v6782 = vld [vmem:[%s7 + $0xc] sm:$0xf]
        %v6783 = vld [vmem:[%s7 + $0x10] sm:$0xf]
        %v6784 = vld [vmem:[%s7 + $0x14] sm:$0xf]
        %v6785 = vld [vmem:[%s7 + $0x18] sm:$0xf]
        %v6786 = vld [vmem:[%s7 + $0x1c] sm:$0xf]
        %v6787 = vld [vmem:[%s7 + $0x20] sm:$0xf]
        %v6788 = vld [vmem:[%s7 + $0x24] sm:$0xf]
        %v6789 = vld [vmem:[%s7 + $0x28] sm:$0xf]
        %v6790 = vld [vmem:[%s7 + $0x2c] sm:$0xf]
        %v6791 = vld [vmem:[%s7 + $0x30] sm:$0xf]
        %v6792 = vld [vmem:[%s7 + $0x34] sm:$0xf]
        %v6793 = vld [vmem:[%s7 + $0x38] sm:$0xf]
        %v6794 = vld [vmem:[%s7 + $0x3c] sm:$0xf]
        %v6811 = vunpack.c.l.b16 %v6779
        %v6812 = vunpack.c.l.b16 %v6780
        %v6813 = vunpack.c.l.b16 %v6781
        %v6814 = vunpack.c.l.b16 %v6782
        %v6815 = vunpack.c.l.b16 %v6783
        %v6816 = vunpack.c.l.b16 %v6784
        %v6817 = vunpack.c.l.b16 %v6785
        %v6818 = vunpack.c.l.b16 %v6786
        %v6819 = vunpack.c.l.b16 %v6787
        %v6820 = vunpack.c.l.b16 %v6788
        %v6821 = vunpack.c.l.b16 %v6789
        %v6822 = vunpack.c.l.b16 %v6790
        %v6823 = vunpack.c.l.b16 %v6791
        %v6824 = vunpack.c.l.b16 %v6792
        %v6825 = vunpack.c.l.b16 %v6793
        %v6826 = vunpack.c.l.b16 %v6794
        %v6827 = vpack.c.b16 %v6812, %v6811
        %v6828 = vpack.c.b16 %v6814, %v6813
        %v6829 = vpack.c.b16 %v6816, %v6815
        %v6830 = vpack.c.b16 %v6818, %v6817
        %v6831 = vpack.c.b16 %v6820, %v6819
        %v6832 = vpack.c.b16 %v6822, %v6821
        %v6833 = vpack.c.b16 %v6824, %v6823
        %v6834 = vpack.c.b16 %v6826, %v6825
        %6843 = vmatpush.bf16.msra.mxu0 %v6834
        %6844 = vmatpush.bf16.msra.mxu0 %v6833
        %6845 = vmatpush.bf16.msra.mxu0 %v6832
        %6846 = vmatpush.bf16.msra.mxu0 %v6831
        %6847 = vmatpush.bf16.msra.mxu0 %v6830
        %6848 = vmatpush.bf16.msra.mxu0 %v6829
        %6849 = vmatpush.bf16.msra.mxu0 %v6828
        %6850 = vmatpush.bf16.msra.mxu0 %v6827
        %6851 = vmatmul.bf16.gmra.mxu0 %v6763
        %v6852 = vpop.f32.mrf.mxu0
        %v6853 = vadd.f32 0.0, %v6852
        %v6854 = vpop.f32.mrf.mxu0
        %v6855 = vadd.f32 0.0, %v6854
        %6856 = vmatmul.bf16.gmra.mxu0 %v6764
        %v6857 = vpop.f32.mrf.mxu0
        %v6858 = vadd.f32 0.0, %v6857
        %v6859 = vpop.f32.mrf.mxu0
        %v6860 = vadd.f32 0.0, %v6859
        %6861 = vmatmul.bf16.gmra.mxu0 %v6765
        %v6862 = vpop.f32.mrf.mxu0
        %v6863 = vadd.f32 0.0, %v6862
        %v6864 = vpop.f32.mrf.mxu0
        %v6865 = vadd.f32 0.0, %v6864
        %6866 = vmatmul.bf16.gmra.mxu0 %v6766
        %v6867 = vpop.f32.mrf.mxu0
        %v6868 = vadd.f32 0.0, %v6867
        %v6869 = vpop.f32.mrf.mxu0
        %v6870 = vadd.f32 0.0, %v6869
        %6871 = vmatmul.bf16.gmra.mxu0 %v6767
        %v6872 = vpop.f32.mrf.mxu0
        %v6873 = vadd.f32 0.0, %v6872
        %v6874 = vpop.f32.mrf.mxu0
        %v6875 = vadd.f32 0.0, %v6874
        %6876 = vmatmul.bf16.gmra.mxu0 %v6768
        %v6877 = vpop.f32.mrf.mxu0
        %v6878 = vadd.f32 0.0, %v6877
        %v6879 = vpop.f32.mrf.mxu0
        %v6880 = vadd.f32 0.0, %v6879
        %6881 = vmatmul.bf16.gmra.mxu0 %v6769
        %v6882 = vpop.f32.mrf.mxu0
        %v6883 = vadd.f32 0.0, %v6882
        %v6884 = vpop.f32.mrf.mxu0
        %v6885 = vadd.f32 0.0, %v6884
        %6886 = vmatmul.bf16.gmra.mxu0 %v6770
        %v6887 = vpop.f32.mrf.mxu0
        %v6888 = vadd.f32 0.0, %v6887
        %v6889 = vpop.f32.mrf.mxu0
        %v6890 = vadd.f32 0.0, %v6889
        %6891 = vmatmul.bf16.gmra.mxu0 %v6771
        %v6892 = vpop.f32.mrf.mxu0
        %v6893 = vadd.f32 0.0, %v6892
        %v6894 = vpop.f32.mrf.mxu0
        %v6895 = vadd.f32 0.0, %v6894
        %6896 = vmatmul.bf16.gmra.mxu0 %v6772
        %v6897 = vpop.f32.mrf.mxu0
        %v6898 = vadd.f32 0.0, %v6897
        %v6899 = vpop.f32.mrf.mxu0
        %v6900 = vadd.f32 0.0, %v6899
        %6901 = vmatmul.bf16.gmra.mxu0 %v6773
        %v6902 = vpop.f32.mrf.mxu0
        %v6903 = vadd.f32 0.0, %v6902
        %v6904 = vpop.f32.mrf.mxu0
        %v6905 = vadd.f32 0.0, %v6904
        %6906 = vmatmul.bf16.gmra.mxu0 %v6774
        %v6907 = vpop.f32.mrf.mxu0
        %v6908 = vadd.f32 0.0, %v6907
        %v6909 = vpop.f32.mrf.mxu0
        %v6910 = vadd.f32 0.0, %v6909
        %6911 = vmatmul.bf16.gmra.mxu0 %v6775
        %v6912 = vpop.f32.mrf.mxu0
        %v6913 = vadd.f32 0.0, %v6912
        %v6914 = vpop.f32.mrf.mxu0
        %v6915 = vadd.f32 0.0, %v6914
        %6916 = vmatmul.bf16.gmra.mxu0 %v6776
        %v6917 = vpop.f32.mrf.mxu0
        %v6918 = vadd.f32 0.0, %v6917
        %v6919 = vpop.f32.mrf.mxu0
        %v6920 = vadd.f32 0.0, %v6919
        %6921 = vmatmul.bf16.gmra.mxu0 %v6777
        %v6922 = vpop.f32.mrf.mxu0
        %v6923 = vadd.f32 0.0, %v6922
        %v6924 = vpop.f32.mrf.mxu0
        %v6925 = vadd.f32 0.0, %v6924
        %6926 = vmatmul.bf16.gmra.mxu0 %v6778
        %v6927 = vpop.f32.mrf.mxu0
        %v6928 = vadd.f32 0.0, %v6927
        %v6929 = vpop.f32.mrf.mxu0
        %v6930 = vadd.f32 0.0, %v6929
        %6931 = vdwg.mxu0
        %6932 = vst [vmem:[%s348] sm:$0xff] %v6853
        %6933 = vst [vmem:[%s348 + $0x8] sm:$0xff] %v6855
        %6934 = vst [vmem:[%s348 + $0x10] sm:$0xff] %v6858
        %6935 = vst [vmem:[%s348 + $0x18] sm:$0xff] %v6860
        %6936 = vst [vmem:[%s348 + $0x20] sm:$0xff] %v6863
        %6937 = vst [vmem:[%s348 + $0x28] sm:$0xff] %v6865
        %6938 = vst [vmem:[%s348 + $0x30] sm:$0xff] %v6868
        %6939 = vst [vmem:[%s348 + $0x38] sm:$0xff] %v6870
        %6940 = vst [vmem:[%s348 + $0x40] sm:$0xff] %v6873
        %6941 = vst [vmem:[%s348 + $0x48] sm:$0xff] %v6875
        %6942 = vst [vmem:[%s348 + $0x50] sm:$0xff] %v6878
        %6943 = vst [vmem:[%s348 + $0x58] sm:$0xff] %v6880
        %6944 = vst [vmem:[%s348 + $0x60] sm:$0xff] %v6883
        %6945 = vst [vmem:[%s348 + $0x68] sm:$0xff] %v6885
        %6946 = vst [vmem:[%s348 + $0x70] sm:$0xff] %v6888
        %6947 = vst [vmem:[%s348 + $0x78] sm:$0xff] %v6890
        %6948 = vst [vmem:[%s348 + $0x80] sm:$0xff] %v6893
        %6949 = vst [vmem:[%s348 + $0x88] sm:$0xff] %v6895
        %6950 = vst [vmem:[%s348 + $0x90] sm:$0xff] %v6898
        %6951 = vst [vmem:[%s348 + $0x98] sm:$0xff] %v6900
        %6952 = vst [vmem:[%s348 + $0xa0] sm:$0xff] %v6903
        %6953 = vst [vmem:[%s348 + $0xa8] sm:$0xff] %v6905
        %6954 = vst [vmem:[%s348 + $0xb0] sm:$0xff] %v6908
        %6955 = vst [vmem:[%s348 + $0xb8] sm:$0xff] %v6910
        %6956 = vst [vmem:[%s348 + $0xc0] sm:$0xff] %v6913
        %6957 = vst [vmem:[%s348 + $0xc8] sm:$0xff] %v6915
        %6958 = vst [vmem:[%s348 + $0xd0] sm:$0xff] %v6918
        %6959 = vst [vmem:[%s348 + $0xd8] sm:$0xff] %v6920
        %6960 = vst [vmem:[%s348 + $0xe0] sm:$0xff] %v6923
        %6961 = vst [vmem:[%s348 + $0xe8] sm:$0xff] %v6925
        %6962 = vst [vmem:[%s348 + $0xf0] sm:$0xff] %v6928
        %6963 = vst [vmem:[%s348 + $0xf8] sm:$0xff] %v6930
        %s6964 = sand.u32 %s205, 1
        %s6965 = scalar_lea.sflag [#allocation4], %s6964
        %s6966 = sand.u32 %s205, 1
        %s6967 = smul.addr %s6966, 256
        %s6968 = scalar_lea.vmem [#allocation8], %s6967
        // Predicated region
        $region65: #{residual_block_layer_forward.1} parent=51 // pred_check
          %p6969 = pneg %p215
        $region66: #{residual_block_layer_forward.1} parent=51 // pred_check_branch
          %6971 = sbr.rel (%p6969) target = $region68
        $region67: #{residual_block_layer_forward.1} parent=51 // pred_region
          %6973 = vsyncadd %s6965, 0
          %s6974 = smul.addr %s24, 32
          %s6975 = smul.addr %s6974, 8
          %s6976 = scalar_lea.hbm %s8, %s6975
          %s6977 = sshll.u32 %s6968, 4
          %s6978 = int_to_ptr.vmem [resolvable:$true] %s6977
          %s6979 = sshll.u32 %s6976, 4
          %s6980 = int_to_ptr.hbm [resolvable:$true] %s6979
          %6985 = dma.vmem_to_hbm [thread:$0]  %s6978, 4096, %s6980, %s6965, 128, 128, 8
        $region68: #{residual_block_layer_forward.1} parent=51 // pred_fallthru
          _
      $region52: #{residual_block_layer_forward.1} parent=5 // pred_fallthru
        _
      %p6986 = scmp.le.s32.totalorder 2, %s19
      // Predicated region
      $region69: #{residual_block_layer_forward.1} parent=5 // pred_check
        %p6987 = pneg %p6986
      $region70: #{residual_block_layer_forward.1} parent=5 // pred_check_branch
        %6989 = sbr.rel (%p6987) target = $region72
      $region71: #{residual_block_layer_forward.1} parent=5 // pred_region
        %s6990 = ssub.s32 %s19, 2
        // Predicated region
        $region73: #{residual_block_layer_forward.1} parent=71 // pred_check
          %p6991 = pneg %p221
        $region74: #{residual_block_layer_forward.1} parent=71 // pred_check_branch
          %6993 = sbr.rel (%p6991) target = $region76
        $region75: #{residual_block_layer_forward.1} parent=71 // pred_region
          %s6994 = sand.u32 %s206, 1
          %s6995 = scalar_lea.sflag [#allocation4], %s6994
          %s6996 = sand.u32 %s206, 1
          %s6997 = smul.addr %s6996, 256
          %s6998 = scalar_lea.vmem [#allocation8], %s6997
          %7000 = dma.done %s6995, 4096
        $region76: #{residual_block_layer_forward.1} parent=71 // pred_fallthru
          _
      $region72: #{residual_block_layer_forward.1} parent=5 // pred_fallthru
        _
    $region6: #{residual_block_layer_forward.1} parent=1 // loop_footer
      %s23 = sadd.s32 1, %s19
    $region7: #{residual_block_layer_forward.1} parent=1 // loop_footer_branch
      %18 = sbr.rel target = $region3
    $region8: #{residual_block_layer_forward.1} parent=1 // loop_exit
      _
    %7001 = vsyncpa [#allocation3], 1
    %s7002 = scalar_lea.sflag [#allocation3], 1
    %7003 = vsyncpa %s7002, 1
    %7004 = vsyncpa [#allocation6], 1
    %7005 = vsyncpa [#allocation4], 1
    %s7006 = scalar_lea.sflag [#allocation4], 1
    %7007 = vsyncpa %s7006, 1

</llo_original>
